<compile_context>
chip_gen: v5e
topology: v5e:2x2
jax: 0.10.0
libtpu: 0.0.40
codegen_flags: <defaults>
</compile_context>

<pallas_src>
import functools

import jax
import jax.numpy as jnp
from jax.experimental import pallas as pl
from jax.experimental.pallas import tpu as pltpu

# ------------------------- configuration (small, synthetic) -------------------
B = 2            # batch
CTX = 81         # new context length, hard-coded in TextEncoder.__init__
ORIG_CTX = 16    # clip_model.context_length (source length for pos-embed interp)
D = 32           # transformer width
H = 4            # attention heads
HD = D // H      # head dim
FF = 4 * D       # MLP hidden
NL = 2           # transformer layers
EPS = 1e-5
NEG = -1e30      # finite "masked" score (avoids -inf - -inf = NaN hazards)

QKV_W = 2 * D + H * D       # fused [q | k | v@Wo] output width = 192
ROWS_PER_LAYER = 8          # rows of the packed f32 vector slab per layer
SLAB_W = QKV_W              # slab width (>= FF, >= 2D)
N_ROWS = NL * ROWS_PER_LAYER + 2


# ------------------------------- Pallas kernel --------------------------------
def text_encoder_kernel(prompts_ref, pos_ref, slab_ref, wqkv_ref, wfc_ref, wpr_ref,
                        out_ref, *, bb, use_bf16_act):
    act_dt = jnp.bfloat16 if use_bf16_act else jnp.float32

    def layer_norm(x, w, b):
        mu = jnp.mean(x, axis=-1, keepdims=True)
        xc = x - mu
        var = jnp.mean(xc * xc, axis=-1, keepdims=True)
        return xc * jax.lax.rsqrt(var + EPS) * w + b

    # Causal mask built once per invocation in-kernel (no [CTX, CTX] HBM input).
    row = jax.lax.broadcasted_iota(jnp.int32, (CTX, CTX), 0)
    col = jax.lax.broadcasted_iota(jnp.int32, (CTX, CTX), 1)
    causal = row >= col

    slab = slab_ref[...]                       # [N_ROWS, SLAB_W] f32, all small vectors

    for bi in range(bb):                       # static: bb=1 (gridded) or bb=B (collapsed)
        x = prompts_ref[bi] + pos_ref[...]     # [L, D] f32 residual stream

        for l in range(NL):                    # static unrolled layers
            r = l * ROWS_PER_LAYER

            # ---- attention block (pre-LN).  1/sqrt(HD) folded into q columns,
            #      W_o folded into per-head V columns -> no separate out-proj. ----
            h = layer_norm(x, slab[r + 0, :D], slab[r + 1, :D])
            qkv = jnp.dot(h.astype(jnp.bfloat16), wqkv_ref[l],
                          preferred_element_type=jnp.float32) + slab[r + 2]    # [L, 192]
            vo = qkv[:, 2 * D:].astype(act_dt)                                 # [L, H*D]

            attn = None
            # Softmax + P@V streamed per head: only one [L, L] score tile is live
            # (~11 vregs), avoiding the [H, L, L] f32 register-file blowout.
            for hh in range(H):
                q_h = qkv[:, hh * HD:(hh + 1) * HD]                            # [L, HD]
                k_h = qkv[:, D + hh * HD:D + (hh + 1) * HD]                    # [L, HD]
                s = jax.lax.dot_general(q_h, k_h, (((1,), (1,)), ((), ())),
                                        preferred_element_type=jnp.float32)    # [L, L]
                s = jnp.where(causal, s, NEG)
                s = s - jnp.max(s, axis=-1, keepdims=True)
                p = jnp.exp(s.astype(act_dt))          # bf16 exp on v6e/v7x, f32 on v5e
                inv_den = pl.reciprocal(
                    jnp.sum(p.astype(jnp.float32), axis=-1, keepdims=True),
                    approx=True)
                # Normalize after the narrow P@V matmul (L*D muls instead of L*L).
                pv = jnp.dot(p, vo[:, hh * D:(hh + 1) * D],
                             preferred_element_type=jnp.float32) * inv_den     # [L, D]
                attn = pv if attn is None else attn + pv
            x = x + attn + slab[r + 3, :D]             # + (b_v @ W_o + b_o)

            # ---- MLP block (QuickGELU) ----
            h2 = layer_norm(x, slab[r + 4, :D], slab[r + 5, :D])
            f = jnp.dot(h2.astype(jnp.bfloat16), wfc_ref[l],
                        preferred_element_type=jnp.float32) + slab[r + 6, :FF]
            f = f.astype(act_dt)
            f = f * jax.nn.sigmoid(1.702 * f)          # QuickGELU (bf16 on v6e/v7x)
            m = jnp.dot(f.astype(jnp.bfloat16), wpr_ref[l],
                        preferred_element_type=jnp.float32) + slab[r + 7, :D]
            x = x + m

        # ---- ln_final ----
        x = layer_norm(x, slab[NL * ROWS_PER_LAYER + 0, :D],
                       slab[NL * ROWS_PER_LAYER + 1, :D])
        # TODO(synk): output last dim is 32 (<128) -> masked stores; a lane-dense
        # reshaped output slab would shave a little more on v5e if the consumer allows.
        out_ref[bi] = x


# ----------------------------------- wrapper -----------------------------------
def _tpu_kind():
    try:
        return jax.devices()[0].device_kind.lower()
    except Exception:  # pragma: no cover - defensive
        return ""


def text_encoder_forward(prompts, kernel_params):
    pos, slab, wqkv, wfc, wpr = kernel_params

    kind = _tpu_kind()
    multi_tc = ("v7" in kind) or ("7x" in kind)     # 2 TensorCores / chip
    use_bf16_act = "v5" not in kind                 # bf16 VPU/EUP only on v6e/v7x

    if multi_tc and B > 1:
        grid, bb = (B,), 1      # one batch element per TensorCore
    else:
        grid, bb = (1,), B      # single-TC chips: collapse the serial grid

    # All weight index_maps are constant across the grid, so the pipeliner keeps
    # them resident in VMEM and does not re-DMA them per grid step.
    in_specs = [
        pl.BlockSpec((bb, CTX, D), lambda b: (b, 0, 0)),        # prompts
        pl.BlockSpec((CTX, D), lambda b: (0, 0)),               # positional embedding
        pl.BlockSpec((N_ROWS, SLAB_W), lambda b: (0, 0)),       # packed f32 vector slab
        pl.BlockSpec((NL, D, QKV_W), lambda b: (0, 0, 0)),      # fused W_[q|k|v@Wo] bf16
        pl.BlockSpec((NL, D, FF), lambda b: (0, 0, 0)),         # mlp c_fc bf16
        pl.BlockSpec((NL, FF, D), lambda b: (0, 0, 0)),         # mlp c_proj bf16
    ]
    kernel = functools.partial(text_encoder_kernel, bb=bb, use_bf16_act=use_bf16_act)
    return pl.pallas_call(
        kernel,
        out_shape=jax.ShapeDtypeStruct((B, CTX, D), jnp.float32),
        grid_spec=pltpu.PrefetchScalarGridSpec(
            num_scalar_prefetch=0,
            grid=grid,
            in_specs=in_specs,
            out_specs=pl.BlockSpec((bb, CTX, D), lambda b: (b, 0, 0)),
        ),
        compiler_params=pltpu.CompilerParams(dimension_semantics=("parallel",)),
    )(prompts, pos, slab, wqkv, wfc, wpr)


# -------------------- parameter setup (deterministic, in-script) ---------------
def interpolate_pos_embedding(pos_embed, new_length):
    """torch.nn.functional.interpolate(mode='linear', align_corners=False)."""
    orig_length, _ = pos_embed.shape
    scale = orig_length / new_length
    src = (jnp.arange(new_length, dtype=jnp.float32) + 0.5) * scale - 0.5
    src = jnp.clip(src, 0.0, orig_length - 1)
    i0 = jnp.floor(src).astype(jnp.int32)
    i1 = jnp.minimum(i0 + 1, orig_length - 1)
    w = (src - i0.astype(jnp.float32))[:, None]
    return pos_embed[i0] * (1.0 - w) + pos_embed[i1] * w


def make_params(key):
    ks = jax.random.split(key, 16)
    n = lambda k, shape, s=0.02: (s * jax.random.normal(k, shape)).astype(jnp.float32)

    orig_pos = n(ks[0], (ORIG_CTX, D))                 # clip positional_embedding
    pos = interpolate_pos_embedding(orig_pos, CTX)     # done at __init__ in PyTorch

    ln1w = 1.0 + n(ks[1], (NL, D)); ln1b = n(ks[2], (NL, D))
    ln2w = 1.0 + n(ks[3], (NL, D)); ln2b = n(ks[4], (NL, D))
    lnfw = 1.0 + n(ks[5], (D,));    lnfb = n(ks[6], (D,))

    wq = n(ks[7], (NL, D, D));  bq = n(ks[8], (NL, D))
    wk = n(ks[9], (NL, D, D));  bk = n(ks[10], (NL, D))
    wv = n(ks[11], (NL, D, D)); bv = n(ks[12], (NL, D))
    wo = n(ks[13], (NL, D, D)); bo = n(ks[14], (NL, D))

    kfc, kfcb, kpr, kprb, ktp = jax.random.split(ks[15], 5)
    wfc = n(kfc, (NL, D, FF)); bfc = n(kfcb, (NL, FF))
    wpr = n(kpr, (NL, FF, D)); bpr = n(kprb, (NL, D))

    # text_projection exists on the module but forward() never applies it.
    _text_projection = n(ktp, (D, D))  # noqa: F841
    # TODO(synk): the registered attention_mask buffer (triu at the ORIGINAL
    # context_length) is never used in forward; causal masking at CTX=81 is
    # generated in-kernel instead.

    raw = (pos, ln1w, ln1b, wq, bq, wk, bk, wv, bv, wo, bo,
           ln2w, ln2b, wfc, bfc, wpr, bpr, lnfw, lnfb)

    # ---- fused / packed kernel parameters ----
    scale = 1.0 / (HD ** 0.5)
    # Fold W_o into per-head V columns:  V'_h = W_v[:, h*HD:(h+1)*HD] @ W_o[h*HD:(h+1)*HD, :]
    wv4 = wv.reshape(NL, D, H, HD)                       # [n, i, h, k]
    wo4 = wo.reshape(NL, H, HD, D)                       # [n, h, k, o]
    wvo = jnp.einsum('nihk,nhko->niho', wv4, wo4).reshape(NL, D, H * D)
    w_fused = jnp.concatenate([wq * scale, wk, wvo], axis=-1).astype(jnp.bfloat16)

    b_qkv = jnp.concatenate(
        [bq * scale, bk, jnp.zeros((NL, H * D), jnp.float32)], axis=-1)   # [NL, 192]
    b_attn = jnp.einsum('nd,ndo->no', bv, wo) + bo                        # b_v@W_o + b_o

    def pack(vec):                                       # one vector per slab row
        return jnp.pad(vec, (0, SLAB_W - vec.shape[0]))

    rows = []
    for l in range(NL):
        rows += [pack(ln1w[l]), pack(ln1b[l]), b_qkv[l], pack(b_attn[l]),
                 pack(ln2w[l]), pack(ln2b[l]), pack(bfc[l]), pack(bpr[l])]
    rows += [pack(lnfw), pack(lnfb)]
    slab = jnp.stack(rows, axis=0)                       # [N_ROWS, SLAB_W] f32

    kernel_params = (pos, slab, w_fused,
                     wfc.astype(jnp.bfloat16), wpr.astype(jnp.bfloat16))
    return kernel_params, raw


# --------------------- pure-JAX reference (raw f32 weights) --------------------
def text_encoder_reference(prompts, raw):
    (pos, ln1w, ln1b, wq, bq, wk, bk, wv, bv, wo, bo,
     ln2w, ln2b, wfc, bfc, wpr, bpr, lnfw, lnfb) = raw

    def ln(x, w, b):
        mu = jnp.mean(x, axis=-1, keepdims=True)
        xc = x - mu
        var = jnp.mean(xc * xc, axis=-1, keepdims=True)
        return xc * jax.lax.rsqrt(var + EPS) * w + b

    causal = jnp.tril(jnp.ones((CTX, CTX), bool))
    x = prompts + pos
    for l in range(NL):
        h = ln(x, ln1w[l], ln1b[l])
        q = (h @ wq[l] + bq[l]).reshape(B, CTX, H, HD)
        k = (h @ wk[l] + bk[l]).reshape(B, CTX, H, HD)
        v = (h @ wv[l] + bv[l]).reshape(B, CTX, H, HD)
        s = jnp.einsum('blhd,bmhd->bhlm', q, k) / (HD ** 0.5)
        s = jnp.where(causal, s, -jnp.inf)
        p = jax.nn.softmax(s, axis=-1)
        o = jnp.einsum('bhlm,bmhd->blhd', p, v).reshape(B, CTX, D)
        x = x + o @ wo[l] + bo[l]
        h2 = ln(x, ln2w[l], ln2b[l])
        f = h2 @ wfc[l] + bfc[l]
        f = f * jax.nn.sigmoid(1.702 * f)
        x = x + f @ wpr[l] + bpr[l]
    return ln(x, lnfw, lnfb)


if __name__ == "__main__":
    key = jax.random.PRNGKey(0)
    k_prompt, k_param = jax.random.split(key)

    prompts = jax.random.normal(k_prompt, (B, CTX, D), dtype=jnp.float32)
    kernel_params, raw_params = make_params(k_param)

    out = jax.block_until_ready(text_encoder_forward(prompts, kernel_params))
    assert out.shape == (B, CTX, D)
    assert bool(jnp.all(jnp.isfinite(out)))

    # Tolerant check vs. the unfused f32 reference (bf16 weights/activations and
    # the approximate softmax reciprocal introduce small, expected differences).
    ref = jax.block_until_ready(text_encoder_reference(prompts, raw_params))
    max_err = float(jnp.max(jnp.abs(out - ref)))
    assert max_err < 0.1, f"kernel/reference mismatch: max abs err = {max_err}"

    print("KERNEL_OK")
</pallas_src>

<mosaic_0001>
module attributes {stable_mosaic.version = 11 : i64} {
  func.func @text_encoder_kernel(%arg0: i32, %arg1: memref<2x81x32xf32, #tpu.memory_space<vmem>>, %arg2: memref<81x32xf32, #tpu.memory_space<vmem>>, %arg3: memref<18x192xf32, #tpu.memory_space<vmem>>, %arg4: memref<2x32x192xbf16, #tpu.memory_space<vmem>>, %arg5: memref<2x32x128xbf16, #tpu.memory_space<vmem>>, %arg6: memref<2x128x32xbf16, #tpu.memory_space<vmem>>, %arg7: memref<2x81x32xf32, #tpu.memory_space<vmem>>) attributes {dimension_semantics = [#tpu.dimension_semantics<parallel>], iteration_bounds = array<i64: 1>, scalar_prefetch = 0 : i64, scratch_operands = 0 : i64, tpu.core_type = #tpu.core_type<tc>, window_params = [{transform_indices = @transform_0, window_bounds = array<i64: 2, 81, 32>}, {pipeline_mode = #tpu.pipeline_mode<synchronous>, transform_indices = @transform_1, window_bounds = array<i64: 81, 32>}, {pipeline_mode = #tpu.pipeline_mode<synchronous>, transform_indices = @transform_2, window_bounds = array<i64: 18, 192>}, {pipeline_mode = #tpu.pipeline_mode<synchronous>, transform_indices = @transform_3, window_bounds = array<i64: 2, 32, 192>}, {pipeline_mode = #tpu.pipeline_mode<synchronous>, transform_indices = @transform_4, window_bounds = array<i64: 2, 32, 128>}, {pipeline_mode = #tpu.pipeline_mode<synchronous>, transform_indices = @transform_5, window_bounds = array<i64: 2, 128, 32>}, {transform_indices = @transform_6, window_bounds = array<i64: 2, 81, 32>}]} {
    %0 = tpu.iota {dimensions = array<i32: 0>} : vector<81x81xi32>
    %1 = tpu.iota {dimensions = array<i32: 1>} : vector<81x81xi32>
    %2 = arith.cmpi sge, %0, %1 : vector<81x81xi32>
    %c0 = arith.constant 0 : index
    %c0_0 = arith.constant 0 : index
    %3 = vector.load %arg3[%c0, %c0_0] : memref<18x192xf32, #tpu.memory_space<vmem>>, vector<18x192xf32>
    %c0_1 = arith.constant 0 : index
    %c0_2 = arith.constant 0 : index
    %c0_3 = arith.constant 0 : index
    %4 = vector.load %arg1[%c0_1, %c0_2, %c0_3] : memref<2x81x32xf32, #tpu.memory_space<vmem>>, vector<1x81x32xf32>
    %5 = vector.shape_cast %4 : vector<1x81x32xf32> to vector<81x32xf32>
    %c0_4 = arith.constant 0 : index
    %c0_5 = arith.constant 0 : index
    %6 = vector.load %arg2[%c0_4, %c0_5] : memref<81x32xf32, #tpu.memory_space<vmem>>, vector<81x32xf32>
    %7 = arith.addf %5, %6 : vector<81x32xf32>
    %8 = vector.extract_strided_slice %3 {offsets = [0, 0], sizes = [1, 32], strides = [1, 1]} : vector<18x192xf32> to vector<1x32xf32>
    %9 = vector.shape_cast %8 : vector<1x32xf32> to vector<32xf32>
    %10 = vector.extract_strided_slice %3 {offsets = [1, 0], sizes = [1, 32], strides = [1, 1]} : vector<18x192xf32> to vector<1x32xf32>
    %11 = vector.shape_cast %10 : vector<1x32xf32> to vector<32xf32>
    %cst = arith.constant dense<0.000000e+00> : vector<81xf32>
    %12 = vector.multi_reduction <add>, %7, %cst [1] : vector<81x32xf32> to vector<81xf32>
    %13 = vector.shape_cast %12 : vector<81xf32> to vector<81x1xf32>
    %cst_6 = arith.constant 3.200000e+01 : f32
    %14 = vector.broadcast %cst_6 : f32 to vector<81x1xf32>
    %15 = arith.divf %13, %14 : vector<81x1xf32>
    %16 = vector.broadcast %15 : vector<81x1xf32> to vector<81x32xf32>
    %17 = arith.subf %7, %16 : vector<81x32xf32>
    %18 = arith.mulf %17, %17 : vector<81x32xf32>
    %cst_7 = arith.constant dense<0.000000e+00> : vector<81xf32>
    %19 = vector.multi_reduction <add>, %18, %cst_7 [1] : vector<81x32xf32> to vector<81xf32>
    %20 = vector.shape_cast %19 : vector<81xf32> to vector<81x1xf32>
    %cst_8 = arith.constant 3.200000e+01 : f32
    %21 = vector.broadcast %cst_8 : f32 to vector<81x1xf32>
    %22 = arith.divf %20, %21 : vector<81x1xf32>
    %cst_9 = arith.constant 9.99999974E-6 : f32
    %23 = vector.broadcast %cst_9 : f32 to vector<81x1xf32>
    %24 = arith.addf %22, %23 : vector<81x1xf32>
    %25 = math.rsqrt %24 : vector<81x1xf32>
    %26 = vector.broadcast %25 : vector<81x1xf32> to vector<81x32xf32>
    %27 = arith.mulf %17, %26 : vector<81x32xf32>
    %28 = vector.shape_cast %9 : vector<32xf32> to vector<1x32xf32>
    %29 = vector.broadcast %28 : vector<1x32xf32> to vector<81x32xf32>
    %30 = arith.mulf %27, %29 : vector<81x32xf32>
    %31 = vector.shape_cast %11 : vector<32xf32> to vector<1x32xf32>
    %32 = vector.broadcast %31 : vector<1x32xf32> to vector<81x32xf32>
    %33 = arith.addf %30, %32 : vector<81x32xf32>
    %34 = arith.truncf %33 : vector<81x32xf32> to vector<81x32xbf16>
    %c0_10 = arith.constant 0 : index
    %c0_11 = arith.constant 0 : index
    %c0_12 = arith.constant 0 : index
    %35 = vector.load %arg4[%c0_10, %c0_11, %c0_12] : memref<2x32x192xbf16, #tpu.memory_space<vmem>>, vector<1x32x192xbf16>
    %36 = vector.shape_cast %35 : vector<1x32x192xbf16> to vector<32x192xbf16>
    %cst_13 = arith.constant dense<0.000000e+00> : vector<81x192xf32>
    %37 = tpu.matmul %34, %36, %cst_13 {dimension_numbers = #tpu.dot_dimension_numbers<[1], [0], [0], [1], [0, 0, 1, 1], [], []>} : vector<81x32xbf16>, vector<32x192xbf16>, vector<81x192xf32> -> vector<81x192xf32>
    %38 = vector.extract_strided_slice %3 {offsets = [2, 0], sizes = [1, 192], strides = [1, 1]} : vector<18x192xf32> to vector<1x192xf32>
    %39 = vector.shape_cast %38 : vector<1x192xf32> to vector<192xf32>
    %40 = vector.shape_cast %39 : vector<192xf32> to vector<1x192xf32>
    %41 = vector.broadcast %40 : vector<1x192xf32> to vector<81x192xf32>
    %42 = arith.addf %37, %41 : vector<81x192xf32>
    %43 = vector.extract_strided_slice %42 {offsets = [0, 64], sizes = [81, 128], strides = [1, 1]} : vector<81x192xf32> to vector<81x128xf32>
    %44 = arith.truncf %43 : vector<81x128xf32> to vector<81x128xbf16>
    %45 = vector.extract_strided_slice %42 {offsets = [0, 0], sizes = [81, 8], strides = [1, 1]} : vector<81x192xf32> to vector<81x8xf32>
    %46 = vector.extract_strided_slice %42 {offsets = [0, 32], sizes = [81, 8], strides = [1, 1]} : vector<81x192xf32> to vector<81x8xf32>
    %cst_14 = arith.constant dense<0.000000e+00> : vector<81x81xf32>
    %47 = tpu.matmul %45, %46, %cst_14 {dimension_numbers = #tpu.dot_dimension_numbers<[1], [1], [0], [0], [0, 0, 1, 0], [], []>} : vector<81x8xf32>, vector<81x8xf32>, vector<81x81xf32> -> vector<81x81xf32>
    %cst_15 = arith.constant -1.000000e+30 : f32
    %48 = vector.broadcast %cst_15 : f32 to vector<81x81xf32>
    %49 = arith.select %2, %47, %48 : vector<81x81xi1>, vector<81x81xf32>
    %cst_16 = arith.constant dense<0xFF800000> : vector<81xf32>
    %50 = vector.multi_reduction <maximumf>, %49, %cst_16 [1] : vector<81x81xf32> to vector<81xf32>
    %51 = vector.shape_cast %50 : vector<81xf32> to vector<81x1xf32>
    %52 = vector.broadcast %51 : vector<81x1xf32> to vector<81x81xf32>
    %53 = arith.subf %49, %52 : vector<81x81xf32>
    %54 = arith.truncf %53 : vector<81x81xf32> to vector<81x81xbf16>
    %55 = math.exp %54 : vector<81x81xbf16>
    %56 = arith.extf %55 : vector<81x81xbf16> to vector<81x81xf32>
    %cst_17 = arith.constant dense<0.000000e+00> : vector<81xf32>
    %57 = vector.multi_reduction <add>, %56, %cst_17 [1] : vector<81x81xf32> to vector<81xf32>
    %58 = vector.shape_cast %57 : vector<81xf32> to vector<81x1xf32>
    %59 = tpu.reciprocal %58 {approx = true} : vector<81x1xf32> -> vector<81x1xf32>
    %60 = vector.extract_strided_slice %44 {offsets = [0, 0], sizes = [81, 32], strides = [1, 1]} : vector<81x128xbf16> to vector<81x32xbf16>
    %cst_18 = arith.constant dense<0.000000e+00> : vector<81x32xf32>
    %61 = tpu.matmul %55, %60, %cst_18 {dimension_numbers = #tpu.dot_dimension_numbers<[1], [0], [0], [1], [0, 0, 1, 1], [], []>} : vector<81x81xbf16>, vector<81x32xbf16>, vector<81x32xf32> -> vector<81x32xf32>
    %62 = vector.broadcast %59 : vector<81x1xf32> to vector<81x32xf32>
    %63 = arith.mulf %61, %62 : vector<81x32xf32>
    %64 = vector.extract_strided_slice %42 {offsets = [0, 8], sizes = [81, 8], strides = [1, 1]} : vector<81x192xf32> to vector<81x8xf32>
    %65 = vector.extract_strided_slice %42 {offsets = [0, 40], sizes = [81, 8], strides = [1, 1]} : vector<81x192xf32> to vector<81x8xf32>
    %cst_19 = arith.constant dense<0.000000e+00> : vector<81x81xf32>
    %66 = tpu.matmul %64, %65, %cst_19 {dimension_numbers = #tpu.dot_dimension_numbers<[1], [1], [0], [0], [0, 0, 1, 0], [], []>} : vector<81x8xf32>, vector<81x8xf32>, vector<81x81xf32> -> vector<81x81xf32>
    %cst_20 = arith.constant -1.000000e+30 : f32
    %67 = vector.broadcast %cst_20 : f32 to vector<81x81xf32>
    %68 = arith.select %2, %66, %67 : vector<81x81xi1>, vector<81x81xf32>
    %cst_21 = arith.constant dense<0xFF800000> : vector<81xf32>
    %69 = vector.multi_reduction <maximumf>, %68, %cst_21 [1] : vector<81x81xf32> to vector<81xf32>
    %70 = vector.shape_cast %69 : vector<81xf32> to vector<81x1xf32>
    %71 = vector.broadcast %70 : vector<81x1xf32> to vector<81x81xf32>
    %72 = arith.subf %68, %71 : vector<81x81xf32>
    %73 = arith.truncf %72 : vector<81x81xf32> to vector<81x81xbf16>
    %74 = math.exp %73 : vector<81x81xbf16>
    %75 = arith.extf %74 : vector<81x81xbf16> to vector<81x81xf32>
    %cst_22 = arith.constant dense<0.000000e+00> : vector<81xf32>
    %76 = vector.multi_reduction <add>, %75, %cst_22 [1] : vector<81x81xf32> to vector<81xf32>
    %77 = vector.shape_cast %76 : vector<81xf32> to vector<81x1xf32>
    %78 = tpu.reciprocal %77 {approx = true} : vector<81x1xf32> -> vector<81x1xf32>
    %79 = vector.extract_strided_slice %44 {offsets = [0, 32], sizes = [81, 32], strides = [1, 1]} : vector<81x128xbf16> to vector<81x32xbf16>
    %cst_23 = arith.constant dense<0.000000e+00> : vector<81x32xf32>
    %80 = tpu.matmul %74, %79, %cst_23 {dimension_numbers = #tpu.dot_dimension_numbers<[1], [0], [0], [1], [0, 0, 1, 1], [], []>} : vector<81x81xbf16>, vector<81x32xbf16>, vector<81x32xf32> -> vector<81x32xf32>
    %81 = vector.broadcast %78 : vector<81x1xf32> to vector<81x32xf32>
    %82 = arith.mulf %80, %81 : vector<81x32xf32>
    %83 = arith.addf %63, %82 : vector<81x32xf32>
    %84 = vector.extract_strided_slice %42 {offsets = [0, 16], sizes = [81, 8], strides = [1, 1]} : vector<81x192xf32> to vector<81x8xf32>
    %85 = vector.extract_strided_slice %42 {offsets = [0, 48], sizes = [81, 8], strides = [1, 1]} : vector<81x192xf32> to vector<81x8xf32>
    %cst_24 = arith.constant dense<0.000000e+00> : vector<81x81xf32>
    %86 = tpu.matmul %84, %85, %cst_24 {dimension_numbers = #tpu.dot_dimension_numbers<[1], [1], [0], [0], [0, 0, 1, 0], [], []>} : vector<81x8xf32>, vector<81x8xf32>, vector<81x81xf32> -> vector<81x81xf32>
    %cst_25 = arith.constant -1.000000e+30 : f32
    %87 = vector.broadcast %cst_25 : f32 to vector<81x81xf32>
    %88 = arith.select %2, %86, %87 : vector<81x81xi1>, vector<81x81xf32>
    %cst_26 = arith.constant dense<0xFF800000> : vector<81xf32>
    %89 = vector.multi_reduction <maximumf>, %88, %cst_26 [1] : vector<81x81xf32> to vector<81xf32>
    %90 = vector.shape_cast %89 : vector<81xf32> to vector<81x1xf32>
    %91 = vector.broadcast %90 : vector<81x1xf32> to vector<81x81xf32>
    %92 = arith.subf %88, %91 : vector<81x81xf32>
    %93 = arith.truncf %92 : vector<81x81xf32> to vector<81x81xbf16>
    %94 = math.exp %93 : vector<81x81xbf16>
    %95 = arith.extf %94 : vector<81x81xbf16> to vector<81x81xf32>
    %cst_27 = arith.constant dense<0.000000e+00> : vector<81xf32>
    %96 = vector.multi_reduction <add>, %95, %cst_27 [1] : vector<81x81xf32> to vector<81xf32>
    %97 = vector.shape_cast %96 : vector<81xf32> to vector<81x1xf32>
    %98 = tpu.reciprocal %97 {approx = true} : vector<81x1xf32> -> vector<81x1xf32>
    %99 = vector.extract_strided_slice %44 {offsets = [0, 64], sizes = [81, 32], strides = [1, 1]} : vector<81x128xbf16> to vector<81x32xbf16>
    %cst_28 = arith.constant dense<0.000000e+00> : vector<81x32xf32>
    %100 = tpu.matmul %94, %99, %cst_28 {dimension_numbers = #tpu.dot_dimension_numbers<[1], [0], [0], [1], [0, 0, 1, 1], [], []>} : vector<81x81xbf16>, vector<81x32xbf16>, vector<81x32xf32> -> vector<81x32xf32>
    %101 = vector.broadcast %98 : vector<81x1xf32> to vector<81x32xf32>
    %102 = arith.mulf %100, %101 : vector<81x32xf32>
    %103 = arith.addf %83, %102 : vector<81x32xf32>
    %104 = vector.extract_strided_slice %42 {offsets = [0, 24], sizes = [81, 8], strides = [1, 1]} : vector<81x192xf32> to vector<81x8xf32>
    %105 = vector.extract_strided_slice %42 {offsets = [0, 56], sizes = [81, 8], strides = [1, 1]} : vector<81x192xf32> to vector<81x8xf32>
    %cst_29 = arith.constant dense<0.000000e+00> : vector<81x81xf32>
    %106 = tpu.matmul %104, %105, %cst_29 {dimension_numbers = #tpu.dot_dimension_numbers<[1], [1], [0], [0], [0, 0, 1, 0], [], []>} : vector<81x8xf32>, vector<81x8xf32>, vector<81x81xf32> -> vector<81x81xf32>
    %cst_30 = arith.constant -1.000000e+30 : f32
    %107 = vector.broadcast %cst_30 : f32 to vector<81x81xf32>
    %108 = arith.select %2, %106, %107 : vector<81x81xi1>, vector<81x81xf32>
    %cst_31 = arith.constant dense<0xFF800000> : vector<81xf32>
    %109 = vector.multi_reduction <maximumf>, %108, %cst_31 [1] : vector<81x81xf32> to vector<81xf32>
    %110 = vector.shape_cast %109 : vector<81xf32> to vector<81x1xf32>
    %111 = vector.broadcast %110 : vector<81x1xf32> to vector<81x81xf32>
    %112 = arith.subf %108, %111 : vector<81x81xf32>
    %113 = arith.truncf %112 : vector<81x81xf32> to vector<81x81xbf16>
    %114 = math.exp %113 : vector<81x81xbf16>
    %115 = arith.extf %114 : vector<81x81xbf16> to vector<81x81xf32>
    %cst_32 = arith.constant dense<0.000000e+00> : vector<81xf32>
    %116 = vector.multi_reduction <add>, %115, %cst_32 [1] : vector<81x81xf32> to vector<81xf32>
    %117 = vector.shape_cast %116 : vector<81xf32> to vector<81x1xf32>
    %118 = tpu.reciprocal %117 {approx = true} : vector<81x1xf32> -> vector<81x1xf32>
    %119 = vector.extract_strided_slice %44 {offsets = [0, 96], sizes = [81, 32], strides = [1, 1]} : vector<81x128xbf16> to vector<81x32xbf16>
    %cst_33 = arith.constant dense<0.000000e+00> : vector<81x32xf32>
    %120 = tpu.matmul %114, %119, %cst_33 {dimension_numbers = #tpu.dot_dimension_numbers<[1], [0], [0], [1], [0, 0, 1, 1], [], []>} : vector<81x81xbf16>, vector<81x32xbf16>, vector<81x32xf32> -> vector<81x32xf32>
    %121 = vector.broadcast %118 : vector<81x1xf32> to vector<81x32xf32>
    %122 = arith.mulf %120, %121 : vector<81x32xf32>
    %123 = arith.addf %103, %122 : vector<81x32xf32>
    %124 = arith.addf %7, %123 : vector<81x32xf32>
    %125 = vector.extract_strided_slice %3 {offsets = [3, 0], sizes = [1, 32], strides = [1, 1]} : vector<18x192xf32> to vector<1x32xf32>
    %126 = vector.shape_cast %125 : vector<1x32xf32> to vector<32xf32>
    %127 = vector.shape_cast %126 : vector<32xf32> to vector<1x32xf32>
    %128 = vector.broadcast %127 : vector<1x32xf32> to vector<81x32xf32>
    %129 = arith.addf %124, %128 : vector<81x32xf32>
    %130 = vector.extract_strided_slice %3 {offsets = [4, 0], sizes = [1, 32], strides = [1, 1]} : vector<18x192xf32> to vector<1x32xf32>
    %131 = vector.shape_cast %130 : vector<1x32xf32> to vector<32xf32>
    %132 = vector.extract_strided_slice %3 {offsets = [5, 0], sizes = [1, 32], strides = [1, 1]} : vector<18x192xf32> to vector<1x32xf32>
    %133 = vector.shape_cast %132 : vector<1x32xf32> to vector<32xf32>
    %cst_34 = arith.constant dense<0.000000e+00> : vector<81xf32>
    %134 = vector.multi_reduction <add>, %129, %cst_34 [1] : vector<81x32xf32> to vector<81xf32>
    %135 = vector.shape_cast %134 : vector<81xf32> to vector<81x1xf32>
    %cst_35 = arith.constant 3.200000e+01 : f32
    %136 = vector.broadcast %cst_35 : f32 to vector<81x1xf32>
    %137 = arith.divf %135, %136 : vector<81x1xf32>
    %138 = vector.broadcast %137 : vector<81x1xf32> to vector<81x32xf32>
    %139 = arith.subf %129, %138 : vector<81x32xf32>
    %140 = arith.mulf %139, %139 : vector<81x32xf32>
    %cst_36 = arith.constant dense<0.000000e+00> : vector<81xf32>
    %141 = vector.multi_reduction <add>, %140, %cst_36 [1] : vector<81x32xf32> to vector<81xf32>
    %142 = vector.shape_cast %141 : vector<81xf32> to vector<81x1xf32>
    %cst_37 = arith.constant 3.200000e+01 : f32
    %143 = vector.broadcast %cst_37 : f32 to vector<81x1xf32>
    %144 = arith.divf %142, %143 : vector<81x1xf32>
    %cst_38 = arith.constant 9.99999974E-6 : f32
    %145 = vector.broadcast %cst_38 : f32 to vector<81x1xf32>
    %146 = arith.addf %144, %145 : vector<81x1xf32>
    %147 = math.rsqrt %146 : vector<81x1xf32>
    %148 = vector.broadcast %147 : vector<81x1xf32> to vector<81x32xf32>
    %149 = arith.mulf %139, %148 : vector<81x32xf32>
    %150 = vector.shape_cast %131 : vector<32xf32> to vector<1x32xf32>
    %151 = vector.broadcast %150 : vector<1x32xf32> to vector<81x32xf32>
    %152 = arith.mulf %149, %151 : vector<81x32xf32>
    %153 = vector.shape_cast %133 : vector<32xf32> to vector<1x32xf32>
    %154 = vector.broadcast %153 : vector<1x32xf32> to vector<81x32xf32>
    %155 = arith.addf %152, %154 : vector<81x32xf32>
    %156 = arith.truncf %155 : vector<81x32xf32> to vector<81x32xbf16>
    %c0_39 = arith.constant 0 : index
    %c0_40 = arith.constant 0 : index
    %c0_41 = arith.constant 0 : index
    %157 = vector.load %arg5[%c0_39, %c0_40, %c0_41] : memref<2x32x128xbf16, #tpu.memory_space<vmem>>, vector<1x32x128xbf16>
    %158 = vector.shape_cast %157 : vector<1x32x128xbf16> to vector<32x128xbf16>
    %cst_42 = arith.constant dense<0.000000e+00> : vector<81x128xf32>
    %159 = tpu.matmul %156, %158, %cst_42 {dimension_numbers = #tpu.dot_dimension_numbers<[1], [0], [0], [1], [0, 0, 1, 1], [], []>} : vector<81x32xbf16>, vector<32x128xbf16>, vector<81x128xf32> -> vector<81x128xf32>
    %160 = vector.extract_strided_slice %3 {offsets = [6, 0], sizes = [1, 128], strides = [1, 1]} : vector<18x192xf32> to vector<1x128xf32>
    %161 = vector.shape_cast %160 : vector<1x128xf32> to vector<128xf32>
    %162 = vector.shape_cast %161 : vector<128xf32> to vector<1x128xf32>
    %163 = vector.broadcast %162 : vector<1x128xf32> to vector<81x128xf32>
    %164 = arith.addf %159, %163 : vector<81x128xf32>
    %165 = arith.truncf %164 : vector<81x128xf32> to vector<81x128xbf16>
    %cst_43 = arith.constant 1.703130e+00 : bf16
    %166 = vector.broadcast %cst_43 : bf16 to vector<81x128xbf16>
    %167 = arith.mulf %166, %165 : vector<81x128xbf16>
    %168 = arith.negf %167 : vector<81x128xbf16>
    %169 = math.exp %168 : vector<81x128xbf16>
    %cst_44 = arith.constant 1.000000e+00 : bf16
    %170 = vector.broadcast %cst_44 : bf16 to vector<81x128xbf16>
    %171 = arith.addf %170, %169 : vector<81x128xbf16>
    %172 = arith.divf %170, %171 : vector<81x128xbf16>
    %173 = arith.mulf %165, %172 : vector<81x128xbf16>
    %c0_45 = arith.constant 0 : index
    %c0_46 = arith.constant 0 : index
    %c0_47 = arith.constant 0 : index
    %174 = vector.load %arg6[%c0_45, %c0_46, %c0_47] : memref<2x128x32xbf16, #tpu.memory_space<vmem>>, vector<1x128x32xbf16>
    %175 = vector.shape_cast %174 : vector<1x128x32xbf16> to vector<128x32xbf16>
    %cst_48 = arith.constant dense<0.000000e+00> : vector<81x32xf32>
    %176 = tpu.matmul %173, %175, %cst_48 {dimension_numbers = #tpu.dot_dimension_numbers<[1], [0], [0], [1], [0, 0, 1, 1], [], []>} : vector<81x128xbf16>, vector<128x32xbf16>, vector<81x32xf32> -> vector<81x32xf32>
    %177 = vector.extract_strided_slice %3 {offsets = [7, 0], sizes = [1, 32], strides = [1, 1]} : vector<18x192xf32> to vector<1x32xf32>
    %178 = vector.shape_cast %177 : vector<1x32xf32> to vector<32xf32>
    %179 = vector.shape_cast %178 : vector<32xf32> to vector<1x32xf32>
    %180 = vector.broadcast %179 : vector<1x32xf32> to vector<81x32xf32>
    %181 = arith.addf %176, %180 : vector<81x32xf32>
    %182 = arith.addf %129, %181 : vector<81x32xf32>
    %183 = vector.extract_strided_slice %3 {offsets = [8, 0], sizes = [1, 32], strides = [1, 1]} : vector<18x192xf32> to vector<1x32xf32>
    %184 = vector.shape_cast %183 : vector<1x32xf32> to vector<32xf32>
    %185 = vector.extract_strided_slice %3 {offsets = [9, 0], sizes = [1, 32], strides = [1, 1]} : vector<18x192xf32> to vector<1x32xf32>
    %186 = vector.shape_cast %185 : vector<1x32xf32> to vector<32xf32>
    %cst_49 = arith.constant dense<0.000000e+00> : vector<81xf32>
    %187 = vector.multi_reduction <add>, %182, %cst_49 [1] : vector<81x32xf32> to vector<81xf32>
    %188 = vector.shape_cast %187 : vector<81xf32> to vector<81x1xf32>
    %cst_50 = arith.constant 3.200000e+01 : f32
    %189 = vector.broadcast %cst_50 : f32 to vector<81x1xf32>
    %190 = arith.divf %188, %189 : vector<81x1xf32>
    %191 = vector.broadcast %190 : vector<81x1xf32> to vector<81x32xf32>
    %192 = arith.subf %182, %191 : vector<81x32xf32>
    %193 = arith.mulf %192, %192 : vector<81x32xf32>
    %cst_51 = arith.constant dense<0.000000e+00> : vector<81xf32>
    %194 = vector.multi_reduction <add>, %193, %cst_51 [1] : vector<81x32xf32> to vector<81xf32>
    %195 = vector.shape_cast %194 : vector<81xf32> to vector<81x1xf32>
    %cst_52 = arith.constant 3.200000e+01 : f32
    %196 = vector.broadcast %cst_52 : f32 to vector<81x1xf32>
    %197 = arith.divf %195, %196 : vector<81x1xf32>
    %cst_53 = arith.constant 9.99999974E-6 : f32
    %198 = vector.broadcast %cst_53 : f32 to vector<81x1xf32>
    %199 = arith.addf %197, %198 : vector<81x1xf32>
    %200 = math.rsqrt %199 : vector<81x1xf32>
    %201 = vector.broadcast %200 : vector<81x1xf32> to vector<81x32xf32>
    %202 = arith.mulf %192, %201 : vector<81x32xf32>
    %203 = vector.shape_cast %184 : vector<32xf32> to vector<1x32xf32>
    %204 = vector.broadcast %203 : vector<1x32xf32> to vector<81x32xf32>
    %205 = arith.mulf %202, %204 : vector<81x32xf32>
    %206 = vector.shape_cast %186 : vector<32xf32> to vector<1x32xf32>
    %207 = vector.broadcast %206 : vector<1x32xf32> to vector<81x32xf32>
    %208 = arith.addf %205, %207 : vector<81x32xf32>
    %209 = arith.truncf %208 : vector<81x32xf32> to vector<81x32xbf16>
    %c1 = arith.constant 1 : index
    %c0_54 = arith.constant 0 : index
    %c0_55 = arith.constant 0 : index
    %210 = vector.load %arg4[%c1, %c0_54, %c0_55] : memref<2x32x192xbf16, #tpu.memory_space<vmem>>, vector<1x32x192xbf16>
    %211 = vector.shape_cast %210 : vector<1x32x192xbf16> to vector<32x192xbf16>
    %cst_56 = arith.constant dense<0.000000e+00> : vector<81x192xf32>
    %212 = tpu.matmul %209, %211, %cst_56 {dimension_numbers = #tpu.dot_dimension_numbers<[1], [0], [0], [1], [0, 0, 1, 1], [], []>} : vector<81x32xbf16>, vector<32x192xbf16>, vector<81x192xf32> -> vector<81x192xf32>
    %213 = vector.extract_strided_slice %3 {offsets = [10, 0], sizes = [1, 192], strides = [1, 1]} : vector<18x192xf32> to vector<1x192xf32>
    %214 = vector.shape_cast %213 : vector<1x192xf32> to vector<192xf32>
    %215 = vector.shape_cast %214 : vector<192xf32> to vector<1x192xf32>
    %216 = vector.broadcast %215 : vector<1x192xf32> to vector<81x192xf32>
    %217 = arith.addf %212, %216 : vector<81x192xf32>
    %218 = vector.extract_strided_slice %217 {offsets = [0, 64], sizes = [81, 128], strides = [1, 1]} : vector<81x192xf32> to vector<81x128xf32>
    %219 = arith.truncf %218 : vector<81x128xf32> to vector<81x128xbf16>
    %220 = vector.extract_strided_slice %217 {offsets = [0, 0], sizes = [81, 8], strides = [1, 1]} : vector<81x192xf32> to vector<81x8xf32>
    %221 = vector.extract_strided_slice %217 {offsets = [0, 32], sizes = [81, 8], strides = [1, 1]} : vector<81x192xf32> to vector<81x8xf32>
    %cst_57 = arith.constant dense<0.000000e+00> : vector<81x81xf32>
    %222 = tpu.matmul %220, %221, %cst_57 {dimension_numbers = #tpu.dot_dimension_numbers<[1], [1], [0], [0], [0, 0, 1, 0], [], []>} : vector<81x8xf32>, vector<81x8xf32>, vector<81x81xf32> -> vector<81x81xf32>
    %cst_58 = arith.constant -1.000000e+30 : f32
    %223 = vector.broadcast %cst_58 : f32 to vector<81x81xf32>
    %224 = arith.select %2, %222, %223 : vector<81x81xi1>, vector<81x81xf32>
    %cst_59 = arith.constant dense<0xFF800000> : vector<81xf32>
    %225 = vector.multi_reduction <maximumf>, %224, %cst_59 [1] : vector<81x81xf32> to vector<81xf32>
    %226 = vector.shape_cast %225 : vector<81xf32> to vector<81x1xf32>
    %227 = vector.broadcast %226 : vector<81x1xf32> to vector<81x81xf32>
    %228 = arith.subf %224, %227 : vector<81x81xf32>
    %229 = arith.truncf %228 : vector<81x81xf32> to vector<81x81xbf16>
    %230 = math.exp %229 : vector<81x81xbf16>
    %231 = arith.extf %230 : vector<81x81xbf16> to vector<81x81xf32>
    %cst_60 = arith.constant dense<0.000000e+00> : vector<81xf32>
    %232 = vector.multi_reduction <add>, %231, %cst_60 [1] : vector<81x81xf32> to vector<81xf32>
    %233 = vector.shape_cast %232 : vector<81xf32> to vector<81x1xf32>
    %234 = tpu.reciprocal %233 {approx = true} : vector<81x1xf32> -> vector<81x1xf32>
    %235 = vector.extract_strided_slice %219 {offsets = [0, 0], sizes = [81, 32], strides = [1, 1]} : vector<81x128xbf16> to vector<81x32xbf16>
    %cst_61 = arith.constant dense<0.000000e+00> : vector<81x32xf32>
    %236 = tpu.matmul %230, %235, %cst_61 {dimension_numbers = #tpu.dot_dimension_numbers<[1], [0], [0], [1], [0, 0, 1, 1], [], []>} : vector<81x81xbf16>, vector<81x32xbf16>, vector<81x32xf32> -> vector<81x32xf32>
    %237 = vector.broadcast %234 : vector<81x1xf32> to vector<81x32xf32>
    %238 = arith.mulf %236, %237 : vector<81x32xf32>
    %239 = vector.extract_strided_slice %217 {offsets = [0, 8], sizes = [81, 8], strides = [1, 1]} : vector<81x192xf32> to vector<81x8xf32>
    %240 = vector.extract_strided_slice %217 {offsets = [0, 40], sizes = [81, 8], strides = [1, 1]} : vector<81x192xf32> to vector<81x8xf32>
    %cst_62 = arith.constant dense<0.000000e+00> : vector<81x81xf32>
    %241 = tpu.matmul %239, %240, %cst_62 {dimension_numbers = #tpu.dot_dimension_numbers<[1], [1], [0], [0], [0, 0, 1, 0], [], []>} : vector<81x8xf32>, vector<81x8xf32>, vector<81x81xf32> -> vector<81x81xf32>
    %cst_63 = arith.constant -1.000000e+30 : f32
    %242 = vector.broadcast %cst_63 : f32 to vector<81x81xf32>
    %243 = arith.select %2, %241, %242 : vector<81x81xi1>, vector<81x81xf32>
    %cst_64 = arith.constant dense<0xFF800000> : vector<81xf32>
    %244 = vector.multi_reduction <maximumf>, %243, %cst_64 [1] : vector<81x81xf32> to vector<81xf32>
    %245 = vector.shape_cast %244 : vector<81xf32> to vector<81x1xf32>
    %246 = vector.broadcast %245 : vector<81x1xf32> to vector<81x81xf32>
    %247 = arith.subf %243, %246 : vector<81x81xf32>
    %248 = arith.truncf %247 : vector<81x81xf32> to vector<81x81xbf16>
    %249 = math.exp %248 : vector<81x81xbf16>
    %250 = arith.extf %249 : vector<81x81xbf16> to vector<81x81xf32>
    %cst_65 = arith.constant dense<0.000000e+00> : vector<81xf32>
    %251 = vector.multi_reduction <add>, %250, %cst_65 [1] : vector<81x81xf32> to vector<81xf32>
    %252 = vector.shape_cast %251 : vector<81xf32> to vector<81x1xf32>
    %253 = tpu.reciprocal %252 {approx = true} : vector<81x1xf32> -> vector<81x1xf32>
    %254 = vector.extract_strided_slice %219 {offsets = [0, 32], sizes = [81, 32], strides = [1, 1]} : vector<81x128xbf16> to vector<81x32xbf16>
    %cst_66 = arith.constant dense<0.000000e+00> : vector<81x32xf32>
    %255 = tpu.matmul %249, %254, %cst_66 {dimension_numbers = #tpu.dot_dimension_numbers<[1], [0], [0], [1], [0, 0, 1, 1], [], []>} : vector<81x81xbf16>, vector<81x32xbf16>, vector<81x32xf32> -> vector<81x32xf32>
    %256 = vector.broadcast %253 : vector<81x1xf32> to vector<81x32xf32>
    %257 = arith.mulf %255, %256 : vector<81x32xf32>
    %258 = arith.addf %238, %257 : vector<81x32xf32>
    %259 = vector.extract_strided_slice %217 {offsets = [0, 16], sizes = [81, 8], strides = [1, 1]} : vector<81x192xf32> to vector<81x8xf32>
    %260 = vector.extract_strided_slice %217 {offsets = [0, 48], sizes = [81, 8], strides = [1, 1]} : vector<81x192xf32> to vector<81x8xf32>
    %cst_67 = arith.constant dense<0.000000e+00> : vector<81x81xf32>
    %261 = tpu.matmul %259, %260, %cst_67 {dimension_numbers = #tpu.dot_dimension_numbers<[1], [1], [0], [0], [0, 0, 1, 0], [], []>} : vector<81x8xf32>, vector<81x8xf32>, vector<81x81xf32> -> vector<81x81xf32>
    %cst_68 = arith.constant -1.000000e+30 : f32
    %262 = vector.broadcast %cst_68 : f32 to vector<81x81xf32>
    %263 = arith.select %2, %261, %262 : vector<81x81xi1>, vector<81x81xf32>
    %cst_69 = arith.constant dense<0xFF800000> : vector<81xf32>
    %264 = vector.multi_reduction <maximumf>, %263, %cst_69 [1] : vector<81x81xf32> to vector<81xf32>
    %265 = vector.shape_cast %264 : vector<81xf32> to vector<81x1xf32>
    %266 = vector.broadcast %265 : vector<81x1xf32> to vector<81x81xf32>
    %267 = arith.subf %263, %266 : vector<81x81xf32>
    %268 = arith.truncf %267 : vector<81x81xf32> to vector<81x81xbf16>
    %269 = math.exp %268 : vector<81x81xbf16>
    %270 = arith.extf %269 : vector<81x81xbf16> to vector<81x81xf32>
    %cst_70 = arith.constant dense<0.000000e+00> : vector<81xf32>
    %271 = vector.multi_reduction <add>, %270, %cst_70 [1] : vector<81x81xf32> to vector<81xf32>
    %272 = vector.shape_cast %271 : vector<81xf32> to vector<81x1xf32>
    %273 = tpu.reciprocal %272 {approx = true} : vector<81x1xf32> -> vector<81x1xf32>
    %274 = vector.extract_strided_slice %219 {offsets = [0, 64], sizes = [81, 32], strides = [1, 1]} : vector<81x128xbf16> to vector<81x32xbf16>
    %cst_71 = arith.constant dense<0.000000e+00> : vector<81x32xf32>
    %275 = tpu.matmul %269, %274, %cst_71 {dimension_numbers = #tpu.dot_dimension_numbers<[1], [0], [0], [1], [0, 0, 1, 1], [], []>} : vector<81x81xbf16>, vector<81x32xbf16>, vector<81x32xf32> -> vector<81x32xf32>
    %276 = vector.broadcast %273 : vector<81x1xf32> to vector<81x32xf32>
    %277 = arith.mulf %275, %276 : vector<81x32xf32>
    %278 = arith.addf %258, %277 : vector<81x32xf32>
    %279 = vector.extract_strided_slice %217 {offsets = [0, 24], sizes = [81, 8], strides = [1, 1]} : vector<81x192xf32> to vector<81x8xf32>
    %280 = vector.extract_strided_slice %217 {offsets = [0, 56], sizes = [81, 8], strides = [1, 1]} : vector<81x192xf32> to vector<81x8xf32>
    %cst_72 = arith.constant dense<0.000000e+00> : vector<81x81xf32>
    %281 = tpu.matmul %279, %280, %cst_72 {dimension_numbers = #tpu.dot_dimension_numbers<[1], [1], [0], [0], [0, 0, 1, 0], [], []>} : vector<81x8xf32>, vector<81x8xf32>, vector<81x81xf32> -> vector<81x81xf32>
    %cst_73 = arith.constant -1.000000e+30 : f32
    %282 = vector.broadcast %cst_73 : f32 to vector<81x81xf32>
    %283 = arith.select %2, %281, %282 : vector<81x81xi1>, vector<81x81xf32>
    %cst_74 = arith.constant dense<0xFF800000> : vector<81xf32>
    %284 = vector.multi_reduction <maximumf>, %283, %cst_74 [1] : vector<81x81xf32> to vector<81xf32>
    %285 = vector.shape_cast %284 : vector<81xf32> to vector<81x1xf32>
    %286 = vector.broadcast %285 : vector<81x1xf32> to vector<81x81xf32>
    %287 = arith.subf %283, %286 : vector<81x81xf32>
    %288 = arith.truncf %287 : vector<81x81xf32> to vector<81x81xbf16>
    %289 = math.exp %288 : vector<81x81xbf16>
    %290 = arith.extf %289 : vector<81x81xbf16> to vector<81x81xf32>
    %cst_75 = arith.constant dense<0.000000e+00> : vector<81xf32>
    %291 = vector.multi_reduction <add>, %290, %cst_75 [1] : vector<81x81xf32> to vector<81xf32>
    %292 = vector.shape_cast %291 : vector<81xf32> to vector<81x1xf32>
    %293 = tpu.reciprocal %292 {approx = true} : vector<81x1xf32> -> vector<81x1xf32>
    %294 = vector.extract_strided_slice %219 {offsets = [0, 96], sizes = [81, 32], strides = [1, 1]} : vector<81x128xbf16> to vector<81x32xbf16>
    %cst_76 = arith.constant dense<0.000000e+00> : vector<81x32xf32>
    %295 = tpu.matmul %289, %294, %cst_76 {dimension_numbers = #tpu.dot_dimension_numbers<[1], [0], [0], [1], [0, 0, 1, 1], [], []>} : vector<81x81xbf16>, vector<81x32xbf16>, vector<81x32xf32> -> vector<81x32xf32>
    %296 = vector.broadcast %293 : vector<81x1xf32> to vector<81x32xf32>
    %297 = arith.mulf %295, %296 : vector<81x32xf32>
    %298 = arith.addf %278, %297 : vector<81x32xf32>
    %299 = arith.addf %182, %298 : vector<81x32xf32>
    %300 = vector.extract_strided_slice %3 {offsets = [11, 0], sizes = [1, 32], strides = [1, 1]} : vector<18x192xf32> to vector<1x32xf32>
    %301 = vector.shape_cast %300 : vector<1x32xf32> to vector<32xf32>
    %302 = vector.shape_cast %301 : vector<32xf32> to vector<1x32xf32>
    %303 = vector.broadcast %302 : vector<1x32xf32> to vector<81x32xf32>
    %304 = arith.addf %299, %303 : vector<81x32xf32>
    %305 = vector.extract_strided_slice %3 {offsets = [12, 0], sizes = [1, 32], strides = [1, 1]} : vector<18x192xf32> to vector<1x32xf32>
    %306 = vector.shape_cast %305 : vector<1x32xf32> to vector<32xf32>
    %307 = vector.extract_strided_slice %3 {offsets = [13, 0], sizes = [1, 32], strides = [1, 1]} : vector<18x192xf32> to vector<1x32xf32>
    %308 = vector.shape_cast %307 : vector<1x32xf32> to vector<32xf32>
    %cst_77 = arith.constant dense<0.000000e+00> : vector<81xf32>
    %309 = vector.multi_reduction <add>, %304, %cst_77 [1] : vector<81x32xf32> to vector<81xf32>
    %310 = vector.shape_cast %309 : vector<81xf32> to vector<81x1xf32>
    %cst_78 = arith.constant 3.200000e+01 : f32
    %311 = vector.broadcast %cst_78 : f32 to vector<81x1xf32>
    %312 = arith.divf %310, %311 : vector<81x1xf32>
    %313 = vector.broadcast %312 : vector<81x1xf32> to vector<81x32xf32>
    %314 = arith.subf %304, %313 : vector<81x32xf32>
    %315 = arith.mulf %314, %314 : vector<81x32xf32>
    %cst_79 = arith.constant dense<0.000000e+00> : vector<81xf32>
    %316 = vector.multi_reduction <add>, %315, %cst_79 [1] : vector<81x32xf32> to vector<81xf32>
    %317 = vector.shape_cast %316 : vector<81xf32> to vector<81x1xf32>
    %cst_80 = arith.constant 3.200000e+01 : f32
    %318 = vector.broadcast %cst_80 : f32 to vector<81x1xf32>
    %319 = arith.divf %317, %318 : vector<81x1xf32>
    %cst_81 = arith.constant 9.99999974E-6 : f32
    %320 = vector.broadcast %cst_81 : f32 to vector<81x1xf32>
    %321 = arith.addf %319, %320 : vector<81x1xf32>
    %322 = math.rsqrt %321 : vector<81x1xf32>
    %323 = vector.broadcast %322 : vector<81x1xf32> to vector<81x32xf32>
    %324 = arith.mulf %314, %323 : vector<81x32xf32>
    %325 = vector.shape_cast %306 : vector<32xf32> to vector<1x32xf32>
    %326 = vector.broadcast %325 : vector<1x32xf32> to vector<81x32xf32>
    %327 = arith.mulf %324, %326 : vector<81x32xf32>
    %328 = vector.shape_cast %308 : vector<32xf32> to vector<1x32xf32>
    %329 = vector.broadcast %328 : vector<1x32xf32> to vector<81x32xf32>
    %330 = arith.addf %327, %329 : vector<81x32xf32>
    %331 = arith.truncf %330 : vector<81x32xf32> to vector<81x32xbf16>
    %c1_82 = arith.constant 1 : index
    %c0_83 = arith.constant 0 : index
    %c0_84 = arith.constant 0 : index
    %332 = vector.load %arg5[%c1_82, %c0_83, %c0_84] : memref<2x32x128xbf16, #tpu.memory_space<vmem>>, vector<1x32x128xbf16>
    %333 = vector.shape_cast %332 : vector<1x32x128xbf16> to vector<32x128xbf16>
    %cst_85 = arith.constant dense<0.000000e+00> : vector<81x128xf32>
    %334 = tpu.matmul %331, %333, %cst_85 {dimension_numbers = #tpu.dot_dimension_numbers<[1], [0], [0], [1], [0, 0, 1, 1], [], []>} : vector<81x32xbf16>, vector<32x128xbf16>, vector<81x128xf32> -> vector<81x128xf32>
    %335 = vector.extract_strided_slice %3 {offsets = [14, 0], sizes = [1, 128], strides = [1, 1]} : vector<18x192xf32> to vector<1x128xf32>
    %336 = vector.shape_cast %335 : vector<1x128xf32> to vector<128xf32>
    %337 = vector.shape_cast %336 : vector<128xf32> to vector<1x128xf32>
    %338 = vector.broadcast %337 : vector<1x128xf32> to vector<81x128xf32>
    %339 = arith.addf %334, %338 : vector<81x128xf32>
    %340 = arith.truncf %339 : vector<81x128xf32> to vector<81x128xbf16>
    %cst_86 = arith.constant 1.703130e+00 : bf16
    %341 = vector.broadcast %cst_86 : bf16 to vector<81x128xbf16>
    %342 = arith.mulf %341, %340 : vector<81x128xbf16>
    %343 = arith.negf %342 : vector<81x128xbf16>
    %344 = math.exp %343 : vector<81x128xbf16>
    %cst_87 = arith.constant 1.000000e+00 : bf16
    %345 = vector.broadcast %cst_87 : bf16 to vector<81x128xbf16>
    %346 = arith.addf %345, %344 : vector<81x128xbf16>
    %347 = arith.divf %345, %346 : vector<81x128xbf16>
    %348 = arith.mulf %340, %347 : vector<81x128xbf16>
    %c1_88 = arith.constant 1 : index
    %c0_89 = arith.constant 0 : index
    %c0_90 = arith.constant 0 : index
    %349 = vector.load %arg6[%c1_88, %c0_89, %c0_90] : memref<2x128x32xbf16, #tpu.memory_space<vmem>>, vector<1x128x32xbf16>
    %350 = vector.shape_cast %349 : vector<1x128x32xbf16> to vector<128x32xbf16>
    %cst_91 = arith.constant dense<0.000000e+00> : vector<81x32xf32>
    %351 = tpu.matmul %348, %350, %cst_91 {dimension_numbers = #tpu.dot_dimension_numbers<[1], [0], [0], [1], [0, 0, 1, 1], [], []>} : vector<81x128xbf16>, vector<128x32xbf16>, vector<81x32xf32> -> vector<81x32xf32>
    %352 = vector.extract_strided_slice %3 {offsets = [15, 0], sizes = [1, 32], strides = [1, 1]} : vector<18x192xf32> to vector<1x32xf32>
    %353 = vector.shape_cast %352 : vector<1x32xf32> to vector<32xf32>
    %354 = vector.shape_cast %353 : vector<32xf32> to vector<1x32xf32>
    %355 = vector.broadcast %354 : vector<1x32xf32> to vector<81x32xf32>
    %356 = arith.addf %351, %355 : vector<81x32xf32>
    %357 = arith.addf %304, %356 : vector<81x32xf32>
    %358 = vector.extract_strided_slice %3 {offsets = [16, 0], sizes = [1, 32], strides = [1, 1]} : vector<18x192xf32> to vector<1x32xf32>
    %359 = vector.shape_cast %358 : vector<1x32xf32> to vector<32xf32>
    %360 = vector.extract_strided_slice %3 {offsets = [17, 0], sizes = [1, 32], strides = [1, 1]} : vector<18x192xf32> to vector<1x32xf32>
    %361 = vector.shape_cast %360 : vector<1x32xf32> to vector<32xf32>
    %cst_92 = arith.constant dense<0.000000e+00> : vector<81xf32>
    %362 = vector.multi_reduction <add>, %357, %cst_92 [1] : vector<81x32xf32> to vector<81xf32>
    %363 = vector.shape_cast %362 : vector<81xf32> to vector<81x1xf32>
    %cst_93 = arith.constant 3.200000e+01 : f32
    %364 = vector.broadcast %cst_93 : f32 to vector<81x1xf32>
    %365 = arith.divf %363, %364 : vector<81x1xf32>
    %366 = vector.broadcast %365 : vector<81x1xf32> to vector<81x32xf32>
    %367 = arith.subf %357, %366 : vector<81x32xf32>
    %368 = arith.mulf %367, %367 : vector<81x32xf32>
    %cst_94 = arith.constant dense<0.000000e+00> : vector<81xf32>
    %369 = vector.multi_reduction <add>, %368, %cst_94 [1] : vector<81x32xf32> to vector<81xf32>
    %370 = vector.shape_cast %369 : vector<81xf32> to vector<81x1xf32>
    %cst_95 = arith.constant 3.200000e+01 : f32
    %371 = vector.broadcast %cst_95 : f32 to vector<81x1xf32>
    %372 = arith.divf %370, %371 : vector<81x1xf32>
    %cst_96 = arith.constant 9.99999974E-6 : f32
    %373 = vector.broadcast %cst_96 : f32 to vector<81x1xf32>
    %374 = arith.addf %372, %373 : vector<81x1xf32>
    %375 = math.rsqrt %374 : vector<81x1xf32>
    %376 = vector.broadcast %375 : vector<81x1xf32> to vector<81x32xf32>
    %377 = arith.mulf %367, %376 : vector<81x32xf32>
    %378 = vector.shape_cast %359 : vector<32xf32> to vector<1x32xf32>
    %379 = vector.broadcast %378 : vector<1x32xf32> to vector<81x32xf32>
    %380 = arith.mulf %377, %379 : vector<81x32xf32>
    %381 = vector.shape_cast %361 : vector<32xf32> to vector<1x32xf32>
    %382 = vector.broadcast %381 : vector<1x32xf32> to vector<81x32xf32>
    %383 = arith.addf %380, %382 : vector<81x32xf32>
    %c0_97 = arith.constant 0 : index
    %c0_98 = arith.constant 0 : index
    %c0_99 = arith.constant 0 : index
    %384 = vector.load %arg7[%c0_97, %c0_98, %c0_99] : memref<2x81x32xf32, #tpu.memory_space<vmem>>, vector<1x81x32xf32>
    %385 = vector.shape_cast %384 : vector<1x81x32xf32> to vector<81x32xf32>
    %386 = vector.shape_cast %383 : vector<81x32xf32> to vector<1x81x32xf32>
    tpu.vector_store %arg7[%c0_97, %c0_98, %c0_99], %386 {strides = array<i32>} : memref<2x81x32xf32, #tpu.memory_space<vmem>>, vector<1x81x32xf32>,
    %c1_100 = arith.constant 1 : index
    %c0_101 = arith.constant 0 : index
    %c0_102 = arith.constant 0 : index
    %387 = vector.load %arg1[%c1_100, %c0_101, %c0_102] : memref<2x81x32xf32, #tpu.memory_space<vmem>>, vector<1x81x32xf32>
    %388 = vector.shape_cast %387 : vector<1x81x32xf32> to vector<81x32xf32>
    %c0_103 = arith.constant 0 : index
    %c0_104 = arith.constant 0 : index
    %389 = vector.load %arg2[%c0_103, %c0_104] : memref<81x32xf32, #tpu.memory_space<vmem>>, vector<81x32xf32>
    %390 = arith.addf %388, %389 : vector<81x32xf32>
    %391 = vector.extract_strided_slice %3 {offsets = [0, 0], sizes = [1, 32], strides = [1, 1]} : vector<18x192xf32> to vector<1x32xf32>
    %392 = vector.shape_cast %391 : vector<1x32xf32> to vector<32xf32>
    %393 = vector.extract_strided_slice %3 {offsets = [1, 0], sizes = [1, 32], strides = [1, 1]} : vector<18x192xf32> to vector<1x32xf32>
    %394 = vector.shape_cast %393 : vector<1x32xf32> to vector<32xf32>
    %cst_105 = arith.constant dense<0.000000e+00> : vector<81xf32>
    %395 = vector.multi_reduction <add>, %390, %cst_105 [1] : vector<81x32xf32> to vector<81xf32>
    %396 = vector.shape_cast %395 : vector<81xf32> to vector<81x1xf32>
    %cst_106 = arith.constant 3.200000e+01 : f32
    %397 = vector.broadcast %cst_106 : f32 to vector<81x1xf32>
    %398 = arith.divf %396, %397 : vector<81x1xf32>
    %399 = vector.broadcast %398 : vector<81x1xf32> to vector<81x32xf32>
    %400 = arith.subf %390, %399 : vector<81x32xf32>
    %401 = arith.mulf %400, %400 : vector<81x32xf32>
    %cst_107 = arith.constant dense<0.000000e+00> : vector<81xf32>
    %402 = vector.multi_reduction <add>, %401, %cst_107 [1] : vector<81x32xf32> to vector<81xf32>
    %403 = vector.shape_cast %402 : vector<81xf32> to vector<81x1xf32>
    %cst_108 = arith.constant 3.200000e+01 : f32
    %404 = vector.broadcast %cst_108 : f32 to vector<81x1xf32>
    %405 = arith.divf %403, %404 : vector<81x1xf32>
    %cst_109 = arith.constant 9.99999974E-6 : f32
    %406 = vector.broadcast %cst_109 : f32 to vector<81x1xf32>
    %407 = arith.addf %405, %406 : vector<81x1xf32>
    %408 = math.rsqrt %407 : vector<81x1xf32>
    %409 = vector.broadcast %408 : vector<81x1xf32> to vector<81x32xf32>
    %410 = arith.mulf %400, %409 : vector<81x32xf32>
    %411 = vector.shape_cast %392 : vector<32xf32> to vector<1x32xf32>
    %412 = vector.broadcast %411 : vector<1x32xf32> to vector<81x32xf32>
    %413 = arith.mulf %410, %412 : vector<81x32xf32>
    %414 = vector.shape_cast %394 : vector<32xf32> to vector<1x32xf32>
    %415 = vector.broadcast %414 : vector<1x32xf32> to vector<81x32xf32>
    %416 = arith.addf %413, %415 : vector<81x32xf32>
    %417 = arith.truncf %416 : vector<81x32xf32> to vector<81x32xbf16>
    %c0_110 = arith.constant 0 : index
    %c0_111 = arith.constant 0 : index
    %c0_112 = arith.constant 0 : index
    %418 = vector.load %arg4[%c0_110, %c0_111, %c0_112] : memref<2x32x192xbf16, #tpu.memory_space<vmem>>, vector<1x32x192xbf16>
    %419 = vector.shape_cast %418 : vector<1x32x192xbf16> to vector<32x192xbf16>
    %cst_113 = arith.constant dense<0.000000e+00> : vector<81x192xf32>
    %420 = tpu.matmul %417, %419, %cst_113 {dimension_numbers = #tpu.dot_dimension_numbers<[1], [0], [0], [1], [0, 0, 1, 1], [], []>} : vector<81x32xbf16>, vector<32x192xbf16>, vector<81x192xf32> -> vector<81x192xf32>
    %421 = vector.extract_strided_slice %3 {offsets = [2, 0], sizes = [1, 192], strides = [1, 1]} : vector<18x192xf32> to vector<1x192xf32>
    %422 = vector.shape_cast %421 : vector<1x192xf32> to vector<192xf32>
    %423 = vector.shape_cast %422 : vector<192xf32> to vector<1x192xf32>
    %424 = vector.broadcast %423 : vector<1x192xf32> to vector<81x192xf32>
    %425 = arith.addf %420, %424 : vector<81x192xf32>
    %426 = vector.extract_strided_slice %425 {offsets = [0, 64], sizes = [81, 128], strides = [1, 1]} : vector<81x192xf32> to vector<81x128xf32>
    %427 = arith.truncf %426 : vector<81x128xf32> to vector<81x128xbf16>
    %428 = vector.extract_strided_slice %425 {offsets = [0, 0], sizes = [81, 8], strides = [1, 1]} : vector<81x192xf32> to vector<81x8xf32>
    %429 = vector.extract_strided_slice %425 {offsets = [0, 32], sizes = [81, 8], strides = [1, 1]} : vector<81x192xf32> to vector<81x8xf32>
    %cst_114 = arith.constant dense<0.000000e+00> : vector<81x81xf32>
    %430 = tpu.matmul %428, %429, %cst_114 {dimension_numbers = #tpu.dot_dimension_numbers<[1], [1], [0], [0], [0, 0, 1, 0], [], []>} : vector<81x8xf32>, vector<81x8xf32>, vector<81x81xf32> -> vector<81x81xf32>
    %cst_115 = arith.constant -1.000000e+30 : f32
    %431 = vector.broadcast %cst_115 : f32 to vector<81x81xf32>
    %432 = arith.select %2, %430, %431 : vector<81x81xi1>, vector<81x81xf32>
    %cst_116 = arith.constant dense<0xFF800000> : vector<81xf32>
    %433 = vector.multi_reduction <maximumf>, %432, %cst_116 [1] : vector<81x81xf32> to vector<81xf32>
    %434 = vector.shape_cast %433 : vector<81xf32> to vector<81x1xf32>
    %435 = vector.broadcast %434 : vector<81x1xf32> to vector<81x81xf32>
    %436 = arith.subf %432, %435 : vector<81x81xf32>
    %437 = arith.truncf %436 : vector<81x81xf32> to vector<81x81xbf16>
    %438 = math.exp %437 : vector<81x81xbf16>
    %439 = arith.extf %438 : vector<81x81xbf16> to vector<81x81xf32>
    %cst_117 = arith.constant dense<0.000000e+00> : vector<81xf32>
    %440 = vector.multi_reduction <add>, %439, %cst_117 [1] : vector<81x81xf32> to vector<81xf32>
    %441 = vector.shape_cast %440 : vector<81xf32> to vector<81x1xf32>
    %442 = tpu.reciprocal %441 {approx = true} : vector<81x1xf32> -> vector<81x1xf32>
    %443 = vector.extract_strided_slice %427 {offsets = [0, 0], sizes = [81, 32], strides = [1, 1]} : vector<81x128xbf16> to vector<81x32xbf16>
    %cst_118 = arith.constant dense<0.000000e+00> : vector<81x32xf32>
    %444 = tpu.matmul %438, %443, %cst_118 {dimension_numbers = #tpu.dot_dimension_numbers<[1], [0], [0], [1], [0, 0, 1, 1], [], []>} : vector<81x81xbf16>, vector<81x32xbf16>, vector<81x32xf32> -> vector<81x32xf32>
    %445 = vector.broadcast %442 : vector<81x1xf32> to vector<81x32xf32>
    %446 = arith.mulf %444, %445 : vector<81x32xf32>
    %447 = vector.extract_strided_slice %425 {offsets = [0, 8], sizes = [81, 8], strides = [1, 1]} : vector<81x192xf32> to vector<81x8xf32>
    %448 = vector.extract_strided_slice %425 {offsets = [0, 40], sizes = [81, 8], strides = [1, 1]} : vector<81x192xf32> to vector<81x8xf32>
    %cst_119 = arith.constant dense<0.000000e+00> : vector<81x81xf32>
    %449 = tpu.matmul %447, %448, %cst_119 {dimension_numbers = #tpu.dot_dimension_numbers<[1], [1], [0], [0], [0, 0, 1, 0], [], []>} : vector<81x8xf32>, vector<81x8xf32>, vector<81x81xf32> -> vector<81x81xf32>
    %cst_120 = arith.constant -1.000000e+30 : f32
    %450 = vector.broadcast %cst_120 : f32 to vector<81x81xf32>
    %451 = arith.select %2, %449, %450 : vector<81x81xi1>, vector<81x81xf32>
    %cst_121 = arith.constant dense<0xFF800000> : vector<81xf32>
    %452 = vector.multi_reduction <maximumf>, %451, %cst_121 [1] : vector<81x81xf32> to vector<81xf32>
    %453 = vector.shape_cast %452 : vector<81xf32> to vector<81x1xf32>
    %454 = vector.broadcast %453 : vector<81x1xf32> to vector<81x81xf32>
    %455 = arith.subf %451, %454 : vector<81x81xf32>
    %456 = arith.truncf %455 : vector<81x81xf32> to vector<81x81xbf16>
    %457 = math.exp %456 : vector<81x81xbf16>
    %458 = arith.extf %457 : vector<81x81xbf16> to vector<81x81xf32>
    %cst_122 = arith.constant dense<0.000000e+00> : vector<81xf32>
    %459 = vector.multi_reduction <add>, %458, %cst_122 [1] : vector<81x81xf32> to vector<81xf32>
    %460 = vector.shape_cast %459 : vector<81xf32> to vector<81x1xf32>
    %461 = tpu.reciprocal %460 {approx = true} : vector<81x1xf32> -> vector<81x1xf32>
    %462 = vector.extract_strided_slice %427 {offsets = [0, 32], sizes = [81, 32], strides = [1, 1]} : vector<81x128xbf16> to vector<81x32xbf16>
    %cst_123 = arith.constant dense<0.000000e+00> : vector<81x32xf32>
    %463 = tpu.matmul %457, %462, %cst_123 {dimension_numbers = #tpu.dot_dimension_numbers<[1], [0], [0], [1], [0, 0, 1, 1], [], []>} : vector<81x81xbf16>, vector<81x32xbf16>, vector<81x32xf32> -> vector<81x32xf32>
    %464 = vector.broadcast %461 : vector<81x1xf32> to vector<81x32xf32>
    %465 = arith.mulf %463, %464 : vector<81x32xf32>
    %466 = arith.addf %446, %465 : vector<81x32xf32>
    %467 = vector.extract_strided_slice %425 {offsets = [0, 16], sizes = [81, 8], strides = [1, 1]} : vector<81x192xf32> to vector<81x8xf32>
    %468 = vector.extract_strided_slice %425 {offsets = [0, 48], sizes = [81, 8], strides = [1, 1]} : vector<81x192xf32> to vector<81x8xf32>
    %cst_124 = arith.constant dense<0.000000e+00> : vector<81x81xf32>
    %469 = tpu.matmul %467, %468, %cst_124 {dimension_numbers = #tpu.dot_dimension_numbers<[1], [1], [0], [0], [0, 0, 1, 0], [], []>} : vector<81x8xf32>, vector<81x8xf32>, vector<81x81xf32> -> vector<81x81xf32>
    %cst_125 = arith.constant -1.000000e+30 : f32
    %470 = vector.broadcast %cst_125 : f32 to vector<81x81xf32>
    %471 = arith.select %2, %469, %470 : vector<81x81xi1>, vector<81x81xf32>
    %cst_126 = arith.constant dense<0xFF800000> : vector<81xf32>
    %472 = vector.multi_reduction <maximumf>, %471, %cst_126 [1] : vector<81x81xf32> to vector<81xf32>
    %473 = vector.shape_cast %472 : vector<81xf32> to vector<81x1xf32>
    %474 = vector.broadcast %473 : vector<81x1xf32> to vector<81x81xf32>
    %475 = arith.subf %471, %474 : vector<81x81xf32>
    %476 = arith.truncf %475 : vector<81x81xf32> to vector<81x81xbf16>
    %477 = math.exp %476 : vector<81x81xbf16>
    %478 = arith.extf %477 : vector<81x81xbf16> to vector<81x81xf32>
    %cst_127 = arith.constant dense<0.000000e+00> : vector<81xf32>
    %479 = vector.multi_reduction <add>, %478, %cst_127 [1] : vector<81x81xf32> to vector<81xf32>
    %480 = vector.shape_cast %479 : vector<81xf32> to vector<81x1xf32>
    %481 = tpu.reciprocal %480 {approx = true} : vector<81x1xf32> -> vector<81x1xf32>
    %482 = vector.extract_strided_slice %427 {offsets = [0, 64], sizes = [81, 32], strides = [1, 1]} : vector<81x128xbf16> to vector<81x32xbf16>
    %cst_128 = arith.constant dense<0.000000e+00> : vector<81x32xf32>
    %483 = tpu.matmul %477, %482, %cst_128 {dimension_numbers = #tpu.dot_dimension_numbers<[1], [0], [0], [1], [0, 0, 1, 1], [], []>} : vector<81x81xbf16>, vector<81x32xbf16>, vector<81x32xf32> -> vector<81x32xf32>
    %484 = vector.broadcast %481 : vector<81x1xf32> to vector<81x32xf32>
    %485 = arith.mulf %483, %484 : vector<81x32xf32>
    %486 = arith.addf %466, %485 : vector<81x32xf32>
    %487 = vector.extract_strided_slice %425 {offsets = [0, 24], sizes = [81, 8], strides = [1, 1]} : vector<81x192xf32> to vector<81x8xf32>
    %488 = vector.extract_strided_slice %425 {offsets = [0, 56], sizes = [81, 8], strides = [1, 1]} : vector<81x192xf32> to vector<81x8xf32>
    %cst_129 = arith.constant dense<0.000000e+00> : vector<81x81xf32>
    %489 = tpu.matmul %487, %488, %cst_129 {dimension_numbers = #tpu.dot_dimension_numbers<[1], [1], [0], [0], [0, 0, 1, 0], [], []>} : vector<81x8xf32>, vector<81x8xf32>, vector<81x81xf32> -> vector<81x81xf32>
    %cst_130 = arith.constant -1.000000e+30 : f32
    %490 = vector.broadcast %cst_130 : f32 to vector<81x81xf32>
    %491 = arith.select %2, %489, %490 : vector<81x81xi1>, vector<81x81xf32>
    %cst_131 = arith.constant dense<0xFF800000> : vector<81xf32>
    %492 = vector.multi_reduction <maximumf>, %491, %cst_131 [1] : vector<81x81xf32> to vector<81xf32>
    %493 = vector.shape_cast %492 : vector<81xf32> to vector<81x1xf32>
    %494 = vector.broadcast %493 : vector<81x1xf32> to vector<81x81xf32>
    %495 = arith.subf %491, %494 : vector<81x81xf32>
    %496 = arith.truncf %495 : vector<81x81xf32> to vector<81x81xbf16>
    %497 = math.exp %496 : vector<81x81xbf16>
    %498 = arith.extf %497 : vector<81x81xbf16> to vector<81x81xf32>
    %cst_132 = arith.constant dense<0.000000e+00> : vector<81xf32>
    %499 = vector.multi_reduction <add>, %498, %cst_132 [1] : vector<81x81xf32> to vector<81xf32>
    %500 = vector.shape_cast %499 : vector<81xf32> to vector<81x1xf32>
    %501 = tpu.reciprocal %500 {approx = true} : vector<81x1xf32> -> vector<81x1xf32>
    %502 = vector.extract_strided_slice %427 {offsets = [0, 96], sizes = [81, 32], strides = [1, 1]} : vector<81x128xbf16> to vector<81x32xbf16>
    %cst_133 = arith.constant dense<0.000000e+00> : vector<81x32xf32>
    %503 = tpu.matmul %497, %502, %cst_133 {dimension_numbers = #tpu.dot_dimension_numbers<[1], [0], [0], [1], [0, 0, 1, 1], [], []>} : vector<81x81xbf16>, vector<81x32xbf16>, vector<81x32xf32> -> vector<81x32xf32>
    %504 = vector.broadcast %501 : vector<81x1xf32> to vector<81x32xf32>
    %505 = arith.mulf %503, %504 : vector<81x32xf32>
    %506 = arith.addf %486, %505 : vector<81x32xf32>
    %507 = arith.addf %390, %506 : vector<81x32xf32>
    %508 = vector.extract_strided_slice %3 {offsets = [3, 0], sizes = [1, 32], strides = [1, 1]} : vector<18x192xf32> to vector<1x32xf32>
    %509 = vector.shape_cast %508 : vector<1x32xf32> to vector<32xf32>
    %510 = vector.shape_cast %509 : vector<32xf32> to vector<1x32xf32>
    %511 = vector.broadcast %510 : vector<1x32xf32> to vector<81x32xf32>
    %512 = arith.addf %507, %511 : vector<81x32xf32>
    %513 = vector.extract_strided_slice %3 {offsets = [4, 0], sizes = [1, 32], strides = [1, 1]} : vector<18x192xf32> to vector<1x32xf32>
    %514 = vector.shape_cast %513 : vector<1x32xf32> to vector<32xf32>
    %515 = vector.extract_strided_slice %3 {offsets = [5, 0], sizes = [1, 32], strides = [1, 1]} : vector<18x192xf32> to vector<1x32xf32>
    %516 = vector.shape_cast %515 : vector<1x32xf32> to vector<32xf32>
    %cst_134 = arith.constant dense<0.000000e+00> : vector<81xf32>
    %517 = vector.multi_reduction <add>, %512, %cst_134 [1] : vector<81x32xf32> to vector<81xf32>
    %518 = vector.shape_cast %517 : vector<81xf32> to vector<81x1xf32>
    %cst_135 = arith.constant 3.200000e+01 : f32
    %519 = vector.broadcast %cst_135 : f32 to vector<81x1xf32>
    %520 = arith.divf %518, %519 : vector<81x1xf32>
    %521 = vector.broadcast %520 : vector<81x1xf32> to vector<81x32xf32>
    %522 = arith.subf %512, %521 : vector<81x32xf32>
    %523 = arith.mulf %522, %522 : vector<81x32xf32>
    %cst_136 = arith.constant dense<0.000000e+00> : vector<81xf32>
    %524 = vector.multi_reduction <add>, %523, %cst_136 [1] : vector<81x32xf32> to vector<81xf32>
    %525 = vector.shape_cast %524 : vector<81xf32> to vector<81x1xf32>
    %cst_137 = arith.constant 3.200000e+01 : f32
    %526 = vector.broadcast %cst_137 : f32 to vector<81x1xf32>
    %527 = arith.divf %525, %526 : vector<81x1xf32>
    %cst_138 = arith.constant 9.99999974E-6 : f32
    %528 = vector.broadcast %cst_138 : f32 to vector<81x1xf32>
    %529 = arith.addf %527, %528 : vector<81x1xf32>
    %530 = math.rsqrt %529 : vector<81x1xf32>
    %531 = vector.broadcast %530 : vector<81x1xf32> to vector<81x32xf32>
    %532 = arith.mulf %522, %531 : vector<81x32xf32>
    %533 = vector.shape_cast %514 : vector<32xf32> to vector<1x32xf32>
    %534 = vector.broadcast %533 : vector<1x32xf32> to vector<81x32xf32>
    %535 = arith.mulf %532, %534 : vector<81x32xf32>
    %536 = vector.shape_cast %516 : vector<32xf32> to vector<1x32xf32>
    %537 = vector.broadcast %536 : vector<1x32xf32> to vector<81x32xf32>
    %538 = arith.addf %535, %537 : vector<81x32xf32>
    %539 = arith.truncf %538 : vector<81x32xf32> to vector<81x32xbf16>
    %c0_139 = arith.constant 0 : index
    %c0_140 = arith.constant 0 : index
    %c0_141 = arith.constant 0 : index
    %540 = vector.load %arg5[%c0_139, %c0_140, %c0_141] : memref<2x32x128xbf16, #tpu.memory_space<vmem>>, vector<1x32x128xbf16>
    %541 = vector.shape_cast %540 : vector<1x32x128xbf16> to vector<32x128xbf16>
    %cst_142 = arith.constant dense<0.000000e+00> : vector<81x128xf32>
    %542 = tpu.matmul %539, %541, %cst_142 {dimension_numbers = #tpu.dot_dimension_numbers<[1], [0], [0], [1], [0, 0, 1, 1], [], []>} : vector<81x32xbf16>, vector<32x128xbf16>, vector<81x128xf32> -> vector<81x128xf32>
    %543 = vector.extract_strided_slice %3 {offsets = [6, 0], sizes = [1, 128], strides = [1, 1]} : vector<18x192xf32> to vector<1x128xf32>
    %544 = vector.shape_cast %543 : vector<1x128xf32> to vector<128xf32>
    %545 = vector.shape_cast %544 : vector<128xf32> to vector<1x128xf32>
    %546 = vector.broadcast %545 : vector<1x128xf32> to vector<81x128xf32>
    %547 = arith.addf %542, %546 : vector<81x128xf32>
    %548 = arith.truncf %547 : vector<81x128xf32> to vector<81x128xbf16>
    %cst_143 = arith.constant 1.703130e+00 : bf16
    %549 = vector.broadcast %cst_143 : bf16 to vector<81x128xbf16>
    %550 = arith.mulf %549, %548 : vector<81x128xbf16>
    %551 = arith.negf %550 : vector<81x128xbf16>
    %552 = math.exp %551 : vector<81x128xbf16>
    %cst_144 = arith.constant 1.000000e+00 : bf16
    %553 = vector.broadcast %cst_144 : bf16 to vector<81x128xbf16>
    %554 = arith.addf %553, %552 : vector<81x128xbf16>
    %555 = arith.divf %553, %554 : vector<81x128xbf16>
    %556 = arith.mulf %548, %555 : vector<81x128xbf16>
    %c0_145 = arith.constant 0 : index
    %c0_146 = arith.constant 0 : index
    %c0_147 = arith.constant 0 : index
    %557 = vector.load %arg6[%c0_145, %c0_146, %c0_147] : memref<2x128x32xbf16, #tpu.memory_space<vmem>>, vector<1x128x32xbf16>
    %558 = vector.shape_cast %557 : vector<1x128x32xbf16> to vector<128x32xbf16>
    %cst_148 = arith.constant dense<0.000000e+00> : vector<81x32xf32>
    %559 = tpu.matmul %556, %558, %cst_148 {dimension_numbers = #tpu.dot_dimension_numbers<[1], [0], [0], [1], [0, 0, 1, 1], [], []>} : vector<81x128xbf16>, vector<128x32xbf16>, vector<81x32xf32> -> vector<81x32xf32>
    %560 = vector.extract_strided_slice %3 {offsets = [7, 0], sizes = [1, 32], strides = [1, 1]} : vector<18x192xf32> to vector<1x32xf32>
    %561 = vector.shape_cast %560 : vector<1x32xf32> to vector<32xf32>
    %562 = vector.shape_cast %561 : vector<32xf32> to vector<1x32xf32>
    %563 = vector.broadcast %562 : vector<1x32xf32> to vector<81x32xf32>
    %564 = arith.addf %559, %563 : vector<81x32xf32>
    %565 = arith.addf %512, %564 : vector<81x32xf32>
    %566 = vector.extract_strided_slice %3 {offsets = [8, 0], sizes = [1, 32], strides = [1, 1]} : vector<18x192xf32> to vector<1x32xf32>
    %567 = vector.shape_cast %566 : vector<1x32xf32> to vector<32xf32>
    %568 = vector.extract_strided_slice %3 {offsets = [9, 0], sizes = [1, 32], strides = [1, 1]} : vector<18x192xf32> to vector<1x32xf32>
    %569 = vector.shape_cast %568 : vector<1x32xf32> to vector<32xf32>
    %cst_149 = arith.constant dense<0.000000e+00> : vector<81xf32>
    %570 = vector.multi_reduction <add>, %565, %cst_149 [1] : vector<81x32xf32> to vector<81xf32>
    %571 = vector.shape_cast %570 : vector<81xf32> to vector<81x1xf32>
    %cst_150 = arith.constant 3.200000e+01 : f32
    %572 = vector.broadcast %cst_150 : f32 to vector<81x1xf32>
    %573 = arith.divf %571, %572 : vector<81x1xf32>
    %574 = vector.broadcast %573 : vector<81x1xf32> to vector<81x32xf32>
    %575 = arith.subf %565, %574 : vector<81x32xf32>
    %576 = arith.mulf %575, %575 : vector<81x32xf32>
    %cst_151 = arith.constant dense<0.000000e+00> : vector<81xf32>
    %577 = vector.multi_reduction <add>, %576, %cst_151 [1] : vector<81x32xf32> to vector<81xf32>
    %578 = vector.shape_cast %577 : vector<81xf32> to vector<81x1xf32>
    %cst_152 = arith.constant 3.200000e+01 : f32
    %579 = vector.broadcast %cst_152 : f32 to vector<81x1xf32>
    %580 = arith.divf %578, %579 : vector<81x1xf32>
    %cst_153 = arith.constant 9.99999974E-6 : f32
    %581 = vector.broadcast %cst_153 : f32 to vector<81x1xf32>
    %582 = arith.addf %580, %581 : vector<81x1xf32>
    %583 = math.rsqrt %582 : vector<81x1xf32>
    %584 = vector.broadcast %583 : vector<81x1xf32> to vector<81x32xf32>
    %585 = arith.mulf %575, %584 : vector<81x32xf32>
    %586 = vector.shape_cast %567 : vector<32xf32> to vector<1x32xf32>
    %587 = vector.broadcast %586 : vector<1x32xf32> to vector<81x32xf32>
    %588 = arith.mulf %585, %587 : vector<81x32xf32>
    %589 = vector.shape_cast %569 : vector<32xf32> to vector<1x32xf32>
    %590 = vector.broadcast %589 : vector<1x32xf32> to vector<81x32xf32>
    %591 = arith.addf %588, %590 : vector<81x32xf32>
    %592 = arith.truncf %591 : vector<81x32xf32> to vector<81x32xbf16>
    %c1_154 = arith.constant 1 : index
    %c0_155 = arith.constant 0 : index
    %c0_156 = arith.constant 0 : index
    %593 = vector.load %arg4[%c1_154, %c0_155, %c0_156] : memref<2x32x192xbf16, #tpu.memory_space<vmem>>, vector<1x32x192xbf16>
    %594 = vector.shape_cast %593 : vector<1x32x192xbf16> to vector<32x192xbf16>
    %cst_157 = arith.constant dense<0.000000e+00> : vector<81x192xf32>
    %595 = tpu.matmul %592, %594, %cst_157 {dimension_numbers = #tpu.dot_dimension_numbers<[1], [0], [0], [1], [0, 0, 1, 1], [], []>} : vector<81x32xbf16>, vector<32x192xbf16>, vector<81x192xf32> -> vector<81x192xf32>
    %596 = vector.extract_strided_slice %3 {offsets = [10, 0], sizes = [1, 192], strides = [1, 1]} : vector<18x192xf32> to vector<1x192xf32>
    %597 = vector.shape_cast %596 : vector<1x192xf32> to vector<192xf32>
    %598 = vector.shape_cast %597 : vector<192xf32> to vector<1x192xf32>
    %599 = vector.broadcast %598 : vector<1x192xf32> to vector<81x192xf32>
    %600 = arith.addf %595, %599 : vector<81x192xf32>
    %601 = vector.extract_strided_slice %600 {offsets = [0, 64], sizes = [81, 128], strides = [1, 1]} : vector<81x192xf32> to vector<81x128xf32>
    %602 = arith.truncf %601 : vector<81x128xf32> to vector<81x128xbf16>
    %603 = vector.extract_strided_slice %600 {offsets = [0, 0], sizes = [81, 8], strides = [1, 1]} : vector<81x192xf32> to vector<81x8xf32>
    %604 = vector.extract_strided_slice %600 {offsets = [0, 32], sizes = [81, 8], strides = [1, 1]} : vector<81x192xf32> to vector<81x8xf32>
    %cst_158 = arith.constant dense<0.000000e+00> : vector<81x81xf32>
    %605 = tpu.matmul %603, %604, %cst_158 {dimension_numbers = #tpu.dot_dimension_numbers<[1], [1], [0], [0], [0, 0, 1, 0], [], []>} : vector<81x8xf32>, vector<81x8xf32>, vector<81x81xf32> -> vector<81x81xf32>
    %cst_159 = arith.constant -1.000000e+30 : f32
    %606 = vector.broadcast %cst_159 : f32 to vector<81x81xf32>
    %607 = arith.select %2, %605, %606 : vector<81x81xi1>, vector<81x81xf32>
    %cst_160 = arith.constant dense<0xFF800000> : vector<81xf32>
    %608 = vector.multi_reduction <maximumf>, %607, %cst_160 [1] : vector<81x81xf32> to vector<81xf32>
    %609 = vector.shape_cast %608 : vector<81xf32> to vector<81x1xf32>
    %610 = vector.broadcast %609 : vector<81x1xf32> to vector<81x81xf32>
    %611 = arith.subf %607, %610 : vector<81x81xf32>
    %612 = arith.truncf %611 : vector<81x81xf32> to vector<81x81xbf16>
    %613 = math.exp %612 : vector<81x81xbf16>
    %614 = arith.extf %613 : vector<81x81xbf16> to vector<81x81xf32>
    %cst_161 = arith.constant dense<0.000000e+00> : vector<81xf32>
    %615 = vector.multi_reduction <add>, %614, %cst_161 [1] : vector<81x81xf32> to vector<81xf32>
    %616 = vector.shape_cast %615 : vector<81xf32> to vector<81x1xf32>
    %617 = tpu.reciprocal %616 {approx = true} : vector<81x1xf32> -> vector<81x1xf32>
    %618 = vector.extract_strided_slice %602 {offsets = [0, 0], sizes = [81, 32], strides = [1, 1]} : vector<81x128xbf16> to vector<81x32xbf16>
    %cst_162 = arith.constant dense<0.000000e+00> : vector<81x32xf32>
    %619 = tpu.matmul %613, %618, %cst_162 {dimension_numbers = #tpu.dot_dimension_numbers<[1], [0], [0], [1], [0, 0, 1, 1], [], []>} : vector<81x81xbf16>, vector<81x32xbf16>, vector<81x32xf32> -> vector<81x32xf32>
    %620 = vector.broadcast %617 : vector<81x1xf32> to vector<81x32xf32>
    %621 = arith.mulf %619, %620 : vector<81x32xf32>
    %622 = vector.extract_strided_slice %600 {offsets = [0, 8], sizes = [81, 8], strides = [1, 1]} : vector<81x192xf32> to vector<81x8xf32>
    %623 = vector.extract_strided_slice %600 {offsets = [0, 40], sizes = [81, 8], strides = [1, 1]} : vector<81x192xf32> to vector<81x8xf32>
    %cst_163 = arith.constant dense<0.000000e+00> : vector<81x81xf32>
    %624 = tpu.matmul %622, %623, %cst_163 {dimension_numbers = #tpu.dot_dimension_numbers<[1], [1], [0], [0], [0, 0, 1, 0], [], []>} : vector<81x8xf32>, vector<81x8xf32>, vector<81x81xf32> -> vector<81x81xf32>
    %cst_164 = arith.constant -1.000000e+30 : f32
    %625 = vector.broadcast %cst_164 : f32 to vector<81x81xf32>
    %626 = arith.select %2, %624, %625 : vector<81x81xi1>, vector<81x81xf32>
    %cst_165 = arith.constant dense<0xFF800000> : vector<81xf32>
    %627 = vector.multi_reduction <maximumf>, %626, %cst_165 [1] : vector<81x81xf32> to vector<81xf32>
    %628 = vector.shape_cast %627 : vector<81xf32> to vector<81x1xf32>
    %629 = vector.broadcast %628 : vector<81x1xf32> to vector<81x81xf32>
    %630 = arith.subf %626, %629 : vector<81x81xf32>
    %631 = arith.truncf %630 : vector<81x81xf32> to vector<81x81xbf16>
    %632 = math.exp %631 : vector<81x81xbf16>
    %633 = arith.extf %632 : vector<81x81xbf16> to vector<81x81xf32>
    %cst_166 = arith.constant dense<0.000000e+00> : vector<81xf32>
    %634 = vector.multi_reduction <add>, %633, %cst_166 [1] : vector<81x81xf32> to vector<81xf32>
    %635 = vector.shape_cast %634 : vector<81xf32> to vector<81x1xf32>
    %636 = tpu.reciprocal %635 {approx = true} : vector<81x1xf32> -> vector<81x1xf32>
    %637 = vector.extract_strided_slice %602 {offsets = [0, 32], sizes = [81, 32], strides = [1, 1]} : vector<81x128xbf16> to vector<81x32xbf16>
    %cst_167 = arith.constant dense<0.000000e+00> : vector<81x32xf32>
    %638 = tpu.matmul %632, %637, %cst_167 {dimension_numbers = #tpu.dot_dimension_numbers<[1], [0], [0], [1], [0, 0, 1, 1], [], []>} : vector<81x81xbf16>, vector<81x32xbf16>, vector<81x32xf32> -> vector<81x32xf32>
    %639 = vector.broadcast %636 : vector<81x1xf32> to vector<81x32xf32>
    %640 = arith.mulf %638, %639 : vector<81x32xf32>
    %641 = arith.addf %621, %640 : vector<81x32xf32>
    %642 = vector.extract_strided_slice %600 {offsets = [0, 16], sizes = [81, 8], strides = [1, 1]} : vector<81x192xf32> to vector<81x8xf32>
    %643 = vector.extract_strided_slice %600 {offsets = [0, 48], sizes = [81, 8], strides = [1, 1]} : vector<81x192xf32> to vector<81x8xf32>
    %cst_168 = arith.constant dense<0.000000e+00> : vector<81x81xf32>
    %644 = tpu.matmul %642, %643, %cst_168 {dimension_numbers = #tpu.dot_dimension_numbers<[1], [1], [0], [0], [0, 0, 1, 0], [], []>} : vector<81x8xf32>, vector<81x8xf32>, vector<81x81xf32> -> vector<81x81xf32>
    %cst_169 = arith.constant -1.000000e+30 : f32
    %645 = vector.broadcast %cst_169 : f32 to vector<81x81xf32>
    %646 = arith.select %2, %644, %645 : vector<81x81xi1>, vector<81x81xf32>
    %cst_170 = arith.constant dense<0xFF800000> : vector<81xf32>
    %647 = vector.multi_reduction <maximumf>, %646, %cst_170 [1] : vector<81x81xf32> to vector<81xf32>
    %648 = vector.shape_cast %647 : vector<81xf32> to vector<81x1xf32>
    %649 = vector.broadcast %648 : vector<81x1xf32> to vector<81x81xf32>
    %650 = arith.subf %646, %649 : vector<81x81xf32>
    %651 = arith.truncf %650 : vector<81x81xf32> to vector<81x81xbf16>
    %652 = math.exp %651 : vector<81x81xbf16>
    %653 = arith.extf %652 : vector<81x81xbf16> to vector<81x81xf32>
    %cst_171 = arith.constant dense<0.000000e+00> : vector<81xf32>
    %654 = vector.multi_reduction <add>, %653, %cst_171 [1] : vector<81x81xf32> to vector<81xf32>
    %655 = vector.shape_cast %654 : vector<81xf32> to vector<81x1xf32>
    %656 = tpu.reciprocal %655 {approx = true} : vector<81x1xf32> -> vector<81x1xf32>
    %657 = vector.extract_strided_slice %602 {offsets = [0, 64], sizes = [81, 32], strides = [1, 1]} : vector<81x128xbf16> to vector<81x32xbf16>
    %cst_172 = arith.constant dense<0.000000e+00> : vector<81x32xf32>
    %658 = tpu.matmul %652, %657, %cst_172 {dimension_numbers = #tpu.dot_dimension_numbers<[1], [0], [0], [1], [0, 0, 1, 1], [], []>} : vector<81x81xbf16>, vector<81x32xbf16>, vector<81x32xf32> -> vector<81x32xf32>
    %659 = vector.broadcast %656 : vector<81x1xf32> to vector<81x32xf32>
    %660 = arith.mulf %658, %659 : vector<81x32xf32>
    %661 = arith.addf %641, %660 : vector<81x32xf32>
    %662 = vector.extract_strided_slice %600 {offsets = [0, 24], sizes = [81, 8], strides = [1, 1]} : vector<81x192xf32> to vector<81x8xf32>
    %663 = vector.extract_strided_slice %600 {offsets = [0, 56], sizes = [81, 8], strides = [1, 1]} : vector<81x192xf32> to vector<81x8xf32>
    %cst_173 = arith.constant dense<0.000000e+00> : vector<81x81xf32>
    %664 = tpu.matmul %662, %663, %cst_173 {dimension_numbers = #tpu.dot_dimension_numbers<[1], [1], [0], [0], [0, 0, 1, 0], [], []>} : vector<81x8xf32>, vector<81x8xf32>, vector<81x81xf32> -> vector<81x81xf32>
    %cst_174 = arith.constant -1.000000e+30 : f32
    %665 = vector.broadcast %cst_174 : f32 to vector<81x81xf32>
    %666 = arith.select %2, %664, %665 : vector<81x81xi1>, vector<81x81xf32>
    %cst_175 = arith.constant dense<0xFF800000> : vector<81xf32>
    %667 = vector.multi_reduction <maximumf>, %666, %cst_175 [1] : vector<81x81xf32> to vector<81xf32>
    %668 = vector.shape_cast %667 : vector<81xf32> to vector<81x1xf32>
    %669 = vector.broadcast %668 : vector<81x1xf32> to vector<81x81xf32>
    %670 = arith.subf %666, %669 : vector<81x81xf32>
    %671 = arith.truncf %670 : vector<81x81xf32> to vector<81x81xbf16>
    %672 = math.exp %671 : vector<81x81xbf16>
    %673 = arith.extf %672 : vector<81x81xbf16> to vector<81x81xf32>
    %cst_176 = arith.constant dense<0.000000e+00> : vector<81xf32>
    %674 = vector.multi_reduction <add>, %673, %cst_176 [1] : vector<81x81xf32> to vector<81xf32>
    %675 = vector.shape_cast %674 : vector<81xf32> to vector<81x1xf32>
    %676 = tpu.reciprocal %675 {approx = true} : vector<81x1xf32> -> vector<81x1xf32>
    %677 = vector.extract_strided_slice %602 {offsets = [0, 96], sizes = [81, 32], strides = [1, 1]} : vector<81x128xbf16> to vector<81x32xbf16>
    %cst_177 = arith.constant dense<0.000000e+00> : vector<81x32xf32>
    %678 = tpu.matmul %672, %677, %cst_177 {dimension_numbers = #tpu.dot_dimension_numbers<[1], [0], [0], [1], [0, 0, 1, 1], [], []>} : vector<81x81xbf16>, vector<81x32xbf16>, vector<81x32xf32> -> vector<81x32xf32>
    %679 = vector.broadcast %676 : vector<81x1xf32> to vector<81x32xf32>
    %680 = arith.mulf %678, %679 : vector<81x32xf32>
    %681 = arith.addf %661, %680 : vector<81x32xf32>
    %682 = arith.addf %565, %681 : vector<81x32xf32>
    %683 = vector.extract_strided_slice %3 {offsets = [11, 0], sizes = [1, 32], strides = [1, 1]} : vector<18x192xf32> to vector<1x32xf32>
    %684 = vector.shape_cast %683 : vector<1x32xf32> to vector<32xf32>
    %685 = vector.shape_cast %684 : vector<32xf32> to vector<1x32xf32>
    %686 = vector.broadcast %685 : vector<1x32xf32> to vector<81x32xf32>
    %687 = arith.addf %682, %686 : vector<81x32xf32>
    %688 = vector.extract_strided_slice %3 {offsets = [12, 0], sizes = [1, 32], strides = [1, 1]} : vector<18x192xf32> to vector<1x32xf32>
    %689 = vector.shape_cast %688 : vector<1x32xf32> to vector<32xf32>
    %690 = vector.extract_strided_slice %3 {offsets = [13, 0], sizes = [1, 32], strides = [1, 1]} : vector<18x192xf32> to vector<1x32xf32>
    %691 = vector.shape_cast %690 : vector<1x32xf32> to vector<32xf32>
    %cst_178 = arith.constant dense<0.000000e+00> : vector<81xf32>
    %692 = vector.multi_reduction <add>, %687, %cst_178 [1] : vector<81x32xf32> to vector<81xf32>
    %693 = vector.shape_cast %692 : vector<81xf32> to vector<81x1xf32>
    %cst_179 = arith.constant 3.200000e+01 : f32
    %694 = vector.broadcast %cst_179 : f32 to vector<81x1xf32>
    %695 = arith.divf %693, %694 : vector<81x1xf32>
    %696 = vector.broadcast %695 : vector<81x1xf32> to vector<81x32xf32>
    %697 = arith.subf %687, %696 : vector<81x32xf32>
    %698 = arith.mulf %697, %697 : vector<81x32xf32>
    %cst_180 = arith.constant dense<0.000000e+00> : vector<81xf32>
    %699 = vector.multi_reduction <add>, %698, %cst_180 [1] : vector<81x32xf32> to vector<81xf32>
    %700 = vector.shape_cast %699 : vector<81xf32> to vector<81x1xf32>
    %cst_181 = arith.constant 3.200000e+01 : f32
    %701 = vector.broadcast %cst_181 : f32 to vector<81x1xf32>
    %702 = arith.divf %700, %701 : vector<81x1xf32>
    %cst_182 = arith.constant 9.99999974E-6 : f32
    %703 = vector.broadcast %cst_182 : f32 to vector<81x1xf32>
    %704 = arith.addf %702, %703 : vector<81x1xf32>
    %705 = math.rsqrt %704 : vector<81x1xf32>
    %706 = vector.broadcast %705 : vector<81x1xf32> to vector<81x32xf32>
    %707 = arith.mulf %697, %706 : vector<81x32xf32>
    %708 = vector.shape_cast %689 : vector<32xf32> to vector<1x32xf32>
    %709 = vector.broadcast %708 : vector<1x32xf32> to vector<81x32xf32>
    %710 = arith.mulf %707, %709 : vector<81x32xf32>
    %711 = vector.shape_cast %691 : vector<32xf32> to vector<1x32xf32>
    %712 = vector.broadcast %711 : vector<1x32xf32> to vector<81x32xf32>
    %713 = arith.addf %710, %712 : vector<81x32xf32>
    %714 = arith.truncf %713 : vector<81x32xf32> to vector<81x32xbf16>
    %c1_183 = arith.constant 1 : index
    %c0_184 = arith.constant 0 : index
    %c0_185 = arith.constant 0 : index
    %715 = vector.load %arg5[%c1_183, %c0_184, %c0_185] : memref<2x32x128xbf16, #tpu.memory_space<vmem>>, vector<1x32x128xbf16>
    %716 = vector.shape_cast %715 : vector<1x32x128xbf16> to vector<32x128xbf16>
    %cst_186 = arith.constant dense<0.000000e+00> : vector<81x128xf32>
    %717 = tpu.matmul %714, %716, %cst_186 {dimension_numbers = #tpu.dot_dimension_numbers<[1], [0], [0], [1], [0, 0, 1, 1], [], []>} : vector<81x32xbf16>, vector<32x128xbf16>, vector<81x128xf32> -> vector<81x128xf32>
    %718 = vector.extract_strided_slice %3 {offsets = [14, 0], sizes = [1, 128], strides = [1, 1]} : vector<18x192xf32> to vector<1x128xf32>
    %719 = vector.shape_cast %718 : vector<1x128xf32> to vector<128xf32>
    %720 = vector.shape_cast %719 : vector<128xf32> to vector<1x128xf32>
    %721 = vector.broadcast %720 : vector<1x128xf32> to vector<81x128xf32>
    %722 = arith.addf %717, %721 : vector<81x128xf32>
    %723 = arith.truncf %722 : vector<81x128xf32> to vector<81x128xbf16>
    %cst_187 = arith.constant 1.703130e+00 : bf16
    %724 = vector.broadcast %cst_187 : bf16 to vector<81x128xbf16>
    %725 = arith.mulf %724, %723 : vector<81x128xbf16>
    %726 = arith.negf %725 : vector<81x128xbf16>
    %727 = math.exp %726 : vector<81x128xbf16>
    %cst_188 = arith.constant 1.000000e+00 : bf16
    %728 = vector.broadcast %cst_188 : bf16 to vector<81x128xbf16>
    %729 = arith.addf %728, %727 : vector<81x128xbf16>
    %730 = arith.divf %728, %729 : vector<81x128xbf16>
    %731 = arith.mulf %723, %730 : vector<81x128xbf16>
    %c1_189 = arith.constant 1 : index
    %c0_190 = arith.constant 0 : index
    %c0_191 = arith.constant 0 : index
    %732 = vector.load %arg6[%c1_189, %c0_190, %c0_191] : memref<2x128x32xbf16, #tpu.memory_space<vmem>>, vector<1x128x32xbf16>
    %733 = vector.shape_cast %732 : vector<1x128x32xbf16> to vector<128x32xbf16>
    %cst_192 = arith.constant dense<0.000000e+00> : vector<81x32xf32>
    %734 = tpu.matmul %731, %733, %cst_192 {dimension_numbers = #tpu.dot_dimension_numbers<[1], [0], [0], [1], [0, 0, 1, 1], [], []>} : vector<81x128xbf16>, vector<128x32xbf16>, vector<81x32xf32> -> vector<81x32xf32>
    %735 = vector.extract_strided_slice %3 {offsets = [15, 0], sizes = [1, 32], strides = [1, 1]} : vector<18x192xf32> to vector<1x32xf32>
    %736 = vector.shape_cast %735 : vector<1x32xf32> to vector<32xf32>
    %737 = vector.shape_cast %736 : vector<32xf32> to vector<1x32xf32>
    %738 = vector.broadcast %737 : vector<1x32xf32> to vector<81x32xf32>
    %739 = arith.addf %734, %738 : vector<81x32xf32>
    %740 = arith.addf %687, %739 : vector<81x32xf32>
    %741 = vector.extract_strided_slice %3 {offsets = [16, 0], sizes = [1, 32], strides = [1, 1]} : vector<18x192xf32> to vector<1x32xf32>
    %742 = vector.shape_cast %741 : vector<1x32xf32> to vector<32xf32>
    %743 = vector.extract_strided_slice %3 {offsets = [17, 0], sizes = [1, 32], strides = [1, 1]} : vector<18x192xf32> to vector<1x32xf32>
    %744 = vector.shape_cast %743 : vector<1x32xf32> to vector<32xf32>
    %cst_193 = arith.constant dense<0.000000e+00> : vector<81xf32>
    %745 = vector.multi_reduction <add>, %740, %cst_193 [1] : vector<81x32xf32> to vector<81xf32>
    %746 = vector.shape_cast %745 : vector<81xf32> to vector<81x1xf32>
    %cst_194 = arith.constant 3.200000e+01 : f32
    %747 = vector.broadcast %cst_194 : f32 to vector<81x1xf32>
    %748 = arith.divf %746, %747 : vector<81x1xf32>
    %749 = vector.broadcast %748 : vector<81x1xf32> to vector<81x32xf32>
    %750 = arith.subf %740, %749 : vector<81x32xf32>
    %751 = arith.mulf %750, %750 : vector<81x32xf32>
    %cst_195 = arith.constant dense<0.000000e+00> : vector<81xf32>
    %752 = vector.multi_reduction <add>, %751, %cst_195 [1] : vector<81x32xf32> to vector<81xf32>
    %753 = vector.shape_cast %752 : vector<81xf32> to vector<81x1xf32>
    %cst_196 = arith.constant 3.200000e+01 : f32
    %754 = vector.broadcast %cst_196 : f32 to vector<81x1xf32>
    %755 = arith.divf %753, %754 : vector<81x1xf32>
    %cst_197 = arith.constant 9.99999974E-6 : f32
    %756 = vector.broadcast %cst_197 : f32 to vector<81x1xf32>
    %757 = arith.addf %755, %756 : vector<81x1xf32>
    %758 = math.rsqrt %757 : vector<81x1xf32>
    %759 = vector.broadcast %758 : vector<81x1xf32> to vector<81x32xf32>
    %760 = arith.mulf %750, %759 : vector<81x32xf32>
    %761 = vector.shape_cast %742 : vector<32xf32> to vector<1x32xf32>
    %762 = vector.broadcast %761 : vector<1x32xf32> to vector<81x32xf32>
    %763 = arith.mulf %760, %762 : vector<81x32xf32>
    %764 = vector.shape_cast %744 : vector<32xf32> to vector<1x32xf32>
    %765 = vector.broadcast %764 : vector<1x32xf32> to vector<81x32xf32>
    %766 = arith.addf %763, %765 : vector<81x32xf32>
    %c1_198 = arith.constant 1 : index
    %c0_199 = arith.constant 0 : index
    %c0_200 = arith.constant 0 : index
    %767 = vector.load %arg7[%c1_198, %c0_199, %c0_200] : memref<2x81x32xf32, #tpu.memory_space<vmem>>, vector<1x81x32xf32>
    %768 = vector.shape_cast %767 : vector<1x81x32xf32> to vector<81x32xf32>
    %769 = vector.shape_cast %766 : vector<81x32xf32> to vector<1x81x32xf32>
    tpu.vector_store %arg7[%c1_198, %c0_199, %c0_200], %769 {strides = array<i32>} : memref<2x81x32xf32, #tpu.memory_space<vmem>>, vector<1x81x32xf32>,
    return
  }
  func.func @transform_0(%arg0: i32) -> (i32, i32, i32) {
    %c0_i32 = arith.constant 0 : i32
    %c0_i32_0 = arith.constant 0 : i32
    %c0_i32_1 = arith.constant 0 : i32
    return %arg0, %c0_i32, %c0_i32_0 : i32, i32, i32
  }
  func.func @transform_1(%arg0: i32) -> (i32, i32) {
    %c0_i32 = arith.constant 0 : i32
    %c0_i32_0 = arith.constant 0 : i32
    %c0_i32_1 = arith.constant 0 : i32
    return %c0_i32, %c0_i32_0 : i32, i32
  }
  func.func @transform_2(%arg0: i32) -> (i32, i32) {
    %c0_i32 = arith.constant 0 : i32
    %c0_i32_0 = arith.constant 0 : i32
    %c0_i32_1 = arith.constant 0 : i32
    return %c0_i32, %c0_i32_0 : i32, i32
  }
  func.func @transform_3(%arg0: i32) -> (i32, i32, i32) {
    %c0_i32 = arith.constant 0 : i32
    %c0_i32_0 = arith.constant 0 : i32
    %c0_i32_1 = arith.constant 0 : i32
    %c0_i32_2 = arith.constant 0 : i32
    return %c0_i32, %c0_i32_0, %c0_i32_1 : i32, i32, i32
  }
  func.func @transform_4(%arg0: i32) -> (i32, i32, i32) {
    %c0_i32 = arith.constant 0 : i32
    %c0_i32_0 = arith.constant 0 : i32
    %c0_i32_1 = arith.constant 0 : i32
    %c0_i32_2 = arith.constant 0 : i32
    return %c0_i32, %c0_i32_0, %c0_i32_1 : i32, i32, i32
  }
  func.func @transform_5(%arg0: i32) -> (i32, i32, i32) {
    %c0_i32 = arith.constant 0 : i32
    %c0_i32_0 = arith.constant 0 : i32
    %c0_i32_1 = arith.constant 0 : i32
    %c0_i32_2 = arith.constant 0 : i32
    return %c0_i32, %c0_i32_0, %c0_i32_1 : i32, i32, i32
  }
  func.func @transform_6(%arg0: i32) -> (i32, i32, i32) {
    %c0_i32 = arith.constant 0 : i32
    %c0_i32_0 = arith.constant 0 : i32
    %c0_i32_1 = arith.constant 0 : i32
    return %arg0, %c0_i32, %c0_i32_0 : i32, i32, i32
  }
}

</mosaic_0001>

<llo_original>
// kernel: tpu_custom_call.1
$region0: #{tpu_custom_call.1}
  #allocation0 [shape = 'u32[]', space=smem, size = 0x4, offset = 0x4, fixed_abs, tag = 'smem constant byte address 0x4 - core index']
  #allocation1 [shape = 'u32[72,128]{1,0:T(1,128)}', space=vmem, size = 0x9000, scoped, tag = 'internal scratch']
  %s0 = inlined_call_operand.vmem [shape: f32[2,81,32], index: 0, kind: input, shape index: {}]
  %s1 = inlined_call_operand.vmem [shape: f32[81,32], index: 1, kind: input, shape index: {}]
  %s2 = inlined_call_operand.vmem [shape: f32[18,192], index: 2, kind: input, shape index: {}]
  %s3 = inlined_call_operand.vmem [shape: bf16[2,32,192], index: 3, kind: input, shape index: {}]
  %s4 = inlined_call_operand.vmem [shape: bf16[2,32,128], index: 4, kind: input, shape index: {}]
  %s5 = inlined_call_operand.vmem [shape: bf16[2,128,32], index: 5, kind: input, shape index: {}]
  %s6 = inlined_call_operand.vmem [shape: f32[2,81,32], index: 6, kind: output, shape index: {}]
  %s7 = sld [smem:[#allocation0]]
  $region34: #{tpu_custom_call.1} parent=0
    _
  %s9 = ssub.s32 1, %s7
  %s10 = scalar_select 0, %s9, %s7
  // Predicated region
  $region2: #{tpu_custom_call.1} parent=0 // pred_check
    _
  $region3: #{tpu_custom_call.1} parent=0 // pred_check_branch
    %12 = sbr.rel (0) target = $region5
  $region4: #{tpu_custom_call.1} parent=0 // pred_region
    _
  $region5: #{tpu_custom_call.1} parent=0 // pred_fallthru
    _
  // Predicated region
  $region6: #{tpu_custom_call.1} parent=0 // pred_check
    _
  $region7: #{tpu_custom_call.1} parent=0 // pred_check_branch
    %14 = sbr.rel (0) target = $region9
  $region8: #{tpu_custom_call.1} parent=0 // pred_region
    _
  $region9: #{tpu_custom_call.1} parent=0 // pred_fallthru
    _
  // Predicated region
  $region10: #{tpu_custom_call.1} parent=0 // pred_check
    _
  $region11: #{tpu_custom_call.1} parent=0 // pred_check_branch
    %16 = sbr.rel (0) target = $region13
  $region12: #{tpu_custom_call.1} parent=0 // pred_region
    _
  $region13: #{tpu_custom_call.1} parent=0 // pred_fallthru
    _
  // Predicated region
  $region14: #{tpu_custom_call.1} parent=0 // pred_check
    _
  $region15: #{tpu_custom_call.1} parent=0 // pred_check_branch
    %18 = sbr.rel (0) target = $region17
  $region16: #{tpu_custom_call.1} parent=0 // pred_region
    _
  $region17: #{tpu_custom_call.1} parent=0 // pred_fallthru
    _
  // Predicated region
  $region18: #{tpu_custom_call.1} parent=0 // pred_check
    _
  $region19: #{tpu_custom_call.1} parent=0 // pred_check_branch
    %20 = sbr.rel (0) target = $region21
  $region20: #{tpu_custom_call.1} parent=0 // pred_region
    _
  $region21: #{tpu_custom_call.1} parent=0 // pred_fallthru
    _
  // Predicated region
  $region22: #{tpu_custom_call.1} parent=0 // pred_check
    _
  $region23: #{tpu_custom_call.1} parent=0 // pred_check_branch
    %22 = sbr.rel (0) target = $region25
  $region24: #{tpu_custom_call.1} parent=0 // pred_region
    _
  $region25: #{tpu_custom_call.1} parent=0 // pred_fallthru
    _
  %v25 = vlaneseq
  %v26 = vshrl.u32 %v25, 7
  %v27 = vadd.s32 %v26, 8
  %v28 = vadd.s32 %v26, 16
  %v29 = vadd.s32 %v26, 24
  %v30 = vadd.s32 %v26, 32
  %v31 = vadd.s32 %v26, 40
  %v32 = vadd.s32 %v26, 48
  %v33 = vadd.s32 %v26, 56
  %v34 = vadd.s32 %v26, 64
  %v35 = vadd.s32 %v26, 72
  %v36 = vadd.s32 %v26, 80
  %v37 = vlaneseq
  %v38 = vand.u32 %v37, 127
  %vm39 = vcmp.ge.s32.totalorder %v26, %v38
  %vm40 = vcmp.ge.s32.totalorder %v27, %v38
  %vm41 = vcmp.ge.s32.totalorder %v28, %v38
  %vm42 = vcmp.ge.s32.totalorder %v29, %v38
  %vm43 = vcmp.ge.s32.totalorder %v30, %v38
  %vm44 = vcmp.ge.s32.totalorder %v31, %v38
  %vm45 = vcmp.ge.s32.totalorder %v32, %v38
  %vm46 = vcmp.ge.s32.totalorder %v33, %v38
  %vm47 = vcmp.ge.s32.totalorder %v34, %v38
  %vm48 = vcmp.ge.s32.totalorder %v35, %v38
  %vm49 = vcmp.ge.s32.totalorder %v36, %v38
  %v50 = vld [vmem:[%s2] sm:$0xff]
  %v51 = vld [vmem:[%s2 + $0x8] sm:$0xff]
  %v52 = vld [vmem:[%s2 + $0x10] sm:$0xff]
  %v53 = vld [vmem:[%s2 + $0x18] sm:$0xff]
  %v54 = vld [vmem:[%s2 + $0x20] sm:$0x3]
  %v55 = vld [vmem:[%s0] sm:$0xff]
  %v56 = vld [vmem:[%s0 + $0x8] sm:$0xff]
  %v57 = vld [vmem:[%s0 + $0x10] sm:$0xff]
  %v58 = vld [vmem:[%s0 + $0x18] sm:$0xff]
  %v59 = vld [vmem:[%s0 + $0x20] sm:$0xff]
  %v60 = vld [vmem:[%s0 + $0x28] sm:$0xff]
  %v61 = vld [vmem:[%s0 + $0x30] sm:$0xff]
  %v62 = vld [vmem:[%s0 + $0x38] sm:$0xff]
  %v63 = vld [vmem:[%s0 + $0x40] sm:$0xff]
  %v64 = vld [vmem:[%s0 + $0x48] sm:$0xff]
  %v65 = vld [vmem:[%s0 + $0x50] sm:$0x1]
  %v66 = vld [vmem:[%s1] sm:$0xff]
  %v67 = vld [vmem:[%s1 + $0x8] sm:$0xff]
  %v68 = vld [vmem:[%s1 + $0x10] sm:$0xff]
  %v69 = vld [vmem:[%s1 + $0x18] sm:$0xff]
  %v70 = vld [vmem:[%s1 + $0x20] sm:$0xff]
  %v71 = vld [vmem:[%s1 + $0x28] sm:$0xff]
  %v72 = vld [vmem:[%s1 + $0x30] sm:$0xff]
  %v73 = vld [vmem:[%s1 + $0x38] sm:$0xff]
  %v74 = vld [vmem:[%s1 + $0x40] sm:$0xff]
  %v75 = vld [vmem:[%s1 + $0x48] sm:$0xff]
  %v76 = vld [vmem:[%s1 + $0x50] sm:$0x1]
  %v77 = vadd.f32 %v55, %v66
  %v78 = vadd.f32 %v56, %v67
  %v79 = vadd.f32 %v57, %v68
  %v80 = vadd.f32 %v58, %v69
  %v81 = vadd.f32 %v59, %v70
  %v82 = vadd.f32 %v60, %v71
  %v83 = vadd.f32 %v61, %v72
  %v84 = vadd.f32 %v62, %v73
  %v85 = vadd.f32 %v63, %v74
  %v86 = vadd.f32 %v64, %v75
  %v87 = vadd.f32 %v65, %v76
  %vm88 = vcmask 261120
  %v89 = vsel %vm88, %v77, 0.0
  %90 = vadd.xlane.f32.xlu0 %v89
  %v91 = vpop.xlane.xlu0 %90
  %v92 = vsel %vm88, %v78, 0.0
  %93 = vadd.xlane.f32.xlu0 %v92
  %v94 = vpop.xlane.xlu0 %93
  %v95 = vsel %vm88, %v79, 0.0
  %96 = vadd.xlane.f32.xlu0 %v95
  %v97 = vpop.xlane.xlu0 %96
  %v98 = vsel %vm88, %v80, 0.0
  %99 = vadd.xlane.f32.xlu0 %v98
  %v100 = vpop.xlane.xlu0 %99
  %v101 = vsel %vm88, %v81, 0.0
  %102 = vadd.xlane.f32.xlu0 %v101
  %v103 = vpop.xlane.xlu0 %102
  %v104 = vsel %vm88, %v82, 0.0
  %105 = vadd.xlane.f32.xlu0 %v104
  %v106 = vpop.xlane.xlu0 %105
  %v107 = vsel %vm88, %v83, 0.0
  %108 = vadd.xlane.f32.xlu0 %v107
  %v109 = vpop.xlane.xlu0 %108
  %v110 = vsel %vm88, %v84, 0.0
  %111 = vadd.xlane.f32.xlu0 %v110
  %v112 = vpop.xlane.xlu0 %111
  %v113 = vsel %vm88, %v85, 0.0
  %114 = vadd.xlane.f32.xlu0 %v113
  %v115 = vpop.xlane.xlu0 %114
  %v116 = vsel %vm88, %v86, 0.0
  %117 = vadd.xlane.f32.xlu0 %v116
  %v118 = vpop.xlane.xlu0 %117
  %vm119 = vcmask 253952
  %v120 = vsel %vm119, %v87, 0.0
  %121 = vadd.xlane.f32.xlu0 %v120
  %v122 = vpop.xlane.xlu0 %121
  %v123 = vrcp.pop 32.0
  %v124 = vmul.f32 32.0, %v123
  %v125 = vsub.f32 1.0, %v124
  %v126 = vmul.f32 %v123, %v125
  %v127 = vadd.f32 %v123, %v126
  %vm128 = vweird.f32 %v123
  %v129 = vsel %vm128, %v123, %v127
  %v130 = vmul.f32 %v91, %v129
  %v131 = vmul.f32 %v94, %v129
  %v132 = vmul.f32 %v97, %v129
  %v133 = vmul.f32 %v100, %v129
  %v134 = vmul.f32 %v103, %v129
  %v135 = vmul.f32 %v106, %v129
  %v136 = vmul.f32 %v109, %v129
  %v137 = vmul.f32 %v112, %v129
  %v138 = vmul.f32 %v115, %v129
  %v139 = vmul.f32 %v118, %v129
  %v140 = vmul.f32 %v122, %v129
  %v141 = vsub.f32 %v77, %v130
  %v142 = vsub.f32 %v78, %v131
  %v143 = vsub.f32 %v79, %v132
  %v144 = vsub.f32 %v80, %v133
  %v145 = vsub.f32 %v81, %v134
  %v146 = vsub.f32 %v82, %v135
  %v147 = vsub.f32 %v83, %v136
  %v148 = vsub.f32 %v84, %v137
  %v149 = vsub.f32 %v85, %v138
  %v150 = vsub.f32 %v86, %v139
  %v151 = vsub.f32 %v87, %v140
  %v152 = vmul.f32 %v141, %v141
  %v153 = vmul.f32 %v142, %v142
  %v154 = vmul.f32 %v143, %v143
  %v155 = vmul.f32 %v144, %v144
  %v156 = vmul.f32 %v145, %v145
  %v157 = vmul.f32 %v146, %v146
  %v158 = vmul.f32 %v147, %v147
  %v159 = vmul.f32 %v148, %v148
  %v160 = vmul.f32 %v149, %v149
  %v161 = vmul.f32 %v150, %v150
  %v162 = vmul.f32 %v151, %v151
  %v163 = vsel %vm88, %v152, 0.0
  %164 = vadd.xlane.f32.xlu0 %v163
  %v165 = vpop.xlane.xlu0 %164
  %v166 = vsel %vm88, %v153, 0.0
  %167 = vadd.xlane.f32.xlu0 %v166
  %v168 = vpop.xlane.xlu0 %167
  %v169 = vsel %vm88, %v154, 0.0
  %170 = vadd.xlane.f32.xlu0 %v169
  %v171 = vpop.xlane.xlu0 %170
  %v172 = vsel %vm88, %v155, 0.0
  %173 = vadd.xlane.f32.xlu0 %v172
  %v174 = vpop.xlane.xlu0 %173
  %v175 = vsel %vm88, %v156, 0.0
  %176 = vadd.xlane.f32.xlu0 %v175
  %v177 = vpop.xlane.xlu0 %176
  %v178 = vsel %vm88, %v157, 0.0
  %179 = vadd.xlane.f32.xlu0 %v178
  %v180 = vpop.xlane.xlu0 %179
  %v181 = vsel %vm88, %v158, 0.0
  %182 = vadd.xlane.f32.xlu0 %v181
  %v183 = vpop.xlane.xlu0 %182
  %v184 = vsel %vm88, %v159, 0.0
  %185 = vadd.xlane.f32.xlu0 %v184
  %v186 = vpop.xlane.xlu0 %185
  %v187 = vsel %vm88, %v160, 0.0
  %188 = vadd.xlane.f32.xlu0 %v187
  %v189 = vpop.xlane.xlu0 %188
  %v190 = vsel %vm88, %v161, 0.0
  %191 = vadd.xlane.f32.xlu0 %v190
  %v192 = vpop.xlane.xlu0 %191
  %v193 = vsel %vm119, %v162, 0.0
  %194 = vadd.xlane.f32.xlu0 %v193
  %v195 = vpop.xlane.xlu0 %194
  %v196 = vmul.f32 %v165, %v129
  %v197 = vmul.f32 %v168, %v129
  %v198 = vmul.f32 %v171, %v129
  %v199 = vmul.f32 %v174, %v129
  %v200 = vmul.f32 %v177, %v129
  %v201 = vmul.f32 %v180, %v129
  %v202 = vmul.f32 %v183, %v129
  %v203 = vmul.f32 %v186, %v129
  %v204 = vmul.f32 %v189, %v129
  %v205 = vmul.f32 %v192, %v129
  %v206 = vmul.f32 %v195, %v129
  %v207 = vadd.f32 %v196, 1e-05
  %v208 = vadd.f32 %v197, 1e-05
  %v209 = vadd.f32 %v198, 1e-05
  %v210 = vadd.f32 %v199, 1e-05
  %v211 = vadd.f32 %v200, 1e-05
  %v212 = vadd.f32 %v201, 1e-05
  %v213 = vadd.f32 %v202, 1e-05
  %v214 = vadd.f32 %v203, 1e-05
  %v215 = vadd.f32 %v204, 1e-05
  %v216 = vadd.f32 %v205, 1e-05
  %v217 = vadd.f32 %v206, 1e-05
  %v218 = vrsqrt.pop %v207
  %v219 = vmul.f32 %v218, %v207
  %v220 = vmul.f32 %v219, %v218
  %v221 = vmul.f32 0.5, %v220
  %v222 = vsub.f32 1.5, %v221
  %v223 = vmul.f32 %v218, %v222
  %vm224 = vweird.f32 %v207
  %vm225 = vweird.f32 %v218
  %vm226 = vmor %vm224, %vm225
  %v227 = vsel %vm226, %v218, %v223
  %v228 = vrsqrt.pop %v208
  %v229 = vmul.f32 %v228, %v208
  %v230 = vmul.f32 %v229, %v228
  %v231 = vmul.f32 0.5, %v230
  %v232 = vsub.f32 1.5, %v231
  %v233 = vmul.f32 %v228, %v232
  %vm234 = vweird.f32 %v208
  %vm235 = vweird.f32 %v228
  %vm236 = vmor %vm234, %vm235
  %v237 = vsel %vm236, %v228, %v233
  %v238 = vrsqrt.pop %v209
  %v239 = vmul.f32 %v238, %v209
  %v240 = vmul.f32 %v239, %v238
  %v241 = vmul.f32 0.5, %v240
  %v242 = vsub.f32 1.5, %v241
  %v243 = vmul.f32 %v238, %v242
  %vm244 = vweird.f32 %v209
  %vm245 = vweird.f32 %v238
  %vm246 = vmor %vm244, %vm245
  %v247 = vsel %vm246, %v238, %v243
  %v248 = vrsqrt.pop %v210
  %v249 = vmul.f32 %v248, %v210
  %v250 = vmul.f32 %v249, %v248
  %v251 = vmul.f32 0.5, %v250
  %v252 = vsub.f32 1.5, %v251
  %v253 = vmul.f32 %v248, %v252
  %vm254 = vweird.f32 %v210
  %vm255 = vweird.f32 %v248
  %vm256 = vmor %vm254, %vm255
  %v257 = vsel %vm256, %v248, %v253
  %v258 = vrsqrt.pop %v211
  %v259 = vmul.f32 %v258, %v211
  %v260 = vmul.f32 %v259, %v258
  %v261 = vmul.f32 0.5, %v260
  %v262 = vsub.f32 1.5, %v261
  %v263 = vmul.f32 %v258, %v262
  %vm264 = vweird.f32 %v211
  %vm265 = vweird.f32 %v258
  %vm266 = vmor %vm264, %vm265
  %v267 = vsel %vm266, %v258, %v263
  %v268 = vrsqrt.pop %v212
  %v269 = vmul.f32 %v268, %v212
  %v270 = vmul.f32 %v269, %v268
  %v271 = vmul.f32 0.5, %v270
  %v272 = vsub.f32 1.5, %v271
  %v273 = vmul.f32 %v268, %v272
  %vm274 = vweird.f32 %v212
  %vm275 = vweird.f32 %v268
  %vm276 = vmor %vm274, %vm275
  %v277 = vsel %vm276, %v268, %v273
  %v278 = vrsqrt.pop %v213
  %v279 = vmul.f32 %v278, %v213
  %v280 = vmul.f32 %v279, %v278
  %v281 = vmul.f32 0.5, %v280
  %v282 = vsub.f32 1.5, %v281
  %v283 = vmul.f32 %v278, %v282
  %vm284 = vweird.f32 %v213
  %vm285 = vweird.f32 %v278
  %vm286 = vmor %vm284, %vm285
  %v287 = vsel %vm286, %v278, %v283
  %v288 = vrsqrt.pop %v214
  %v289 = vmul.f32 %v288, %v214
  %v290 = vmul.f32 %v289, %v288
  %v291 = vmul.f32 0.5, %v290
  %v292 = vsub.f32 1.5, %v291
  %v293 = vmul.f32 %v288, %v292
  %vm294 = vweird.f32 %v214
  %vm295 = vweird.f32 %v288
  %vm296 = vmor %vm294, %vm295
  %v297 = vsel %vm296, %v288, %v293
  %v298 = vrsqrt.pop %v215
  %v299 = vmul.f32 %v298, %v215
  %v300 = vmul.f32 %v299, %v298
  %v301 = vmul.f32 0.5, %v300
  %v302 = vsub.f32 1.5, %v301
  %v303 = vmul.f32 %v298, %v302
  %vm304 = vweird.f32 %v215
  %vm305 = vweird.f32 %v298
  %vm306 = vmor %vm304, %vm305
  %v307 = vsel %vm306, %v298, %v303
  %v308 = vrsqrt.pop %v216
  %v309 = vmul.f32 %v308, %v216
  %v310 = vmul.f32 %v309, %v308
  %v311 = vmul.f32 0.5, %v310
  %v312 = vsub.f32 1.5, %v311
  %v313 = vmul.f32 %v308, %v312
  %vm314 = vweird.f32 %v216
  %vm315 = vweird.f32 %v308
  %vm316 = vmor %vm314, %vm315
  %v317 = vsel %vm316, %v308, %v313
  %v318 = vrsqrt.pop %v217
  %v319 = vmul.f32 %v318, %v217
  %v320 = vmul.f32 %v319, %v318
  %v321 = vmul.f32 0.5, %v320
  %v322 = vsub.f32 1.5, %v321
  %v323 = vmul.f32 %v318, %v322
  %vm324 = vweird.f32 %v217
  %vm325 = vweird.f32 %v318
  %vm326 = vmor %vm324, %vm325
  %v327 = vsel %vm326, %v318, %v323
  %v328 = vmul.f32 %v141, %v227
  %v329 = vmul.f32 %v142, %v237
  %v330 = vmul.f32 %v143, %v247
  %v331 = vmul.f32 %v144, %v257
  %v332 = vmul.f32 %v145, %v267
  %v333 = vmul.f32 %v146, %v277
  %v334 = vmul.f32 %v147, %v287
  %v335 = vmul.f32 %v148, %v297
  %v336 = vmul.f32 %v149, %v307
  %v337 = vmul.f32 %v150, %v317
  %v338 = vmul.f32 %v151, %v327
  %v339 = vperm.slane %v50, 0
  %v340 = vmul.f32 %v328, %v339
  %v341 = vmul.f32 %v329, %v339
  %v342 = vmul.f32 %v330, %v339
  %v343 = vmul.f32 %v331, %v339
  %v344 = vmul.f32 %v332, %v339
  %v345 = vmul.f32 %v333, %v339
  %v346 = vmul.f32 %v334, %v339
  %v347 = vmul.f32 %v335, %v339
  %v348 = vmul.f32 %v336, %v339
  %v349 = vmul.f32 %v337, %v339
  %v350 = vmul.f32 %v338, %v339
  %v351 = vperm.slane %v50, 1
  %v352 = vadd.f32 %v340, %v351
  %v353 = vadd.f32 %v341, %v351
  %v354 = vadd.f32 %v342, %v351
  %v355 = vadd.f32 %v343, %v351
  %v356 = vadd.f32 %v344, %v351
  %v357 = vadd.f32 %v345, %v351
  %v358 = vadd.f32 %v346, %v351
  %v359 = vadd.f32 %v347, %v351
  %v360 = vadd.f32 %v348, %v351
  %v361 = vadd.f32 %v349, %v351
  %v362 = vadd.f32 %v350, %v351
  %v363 = vpack.c.bf16 %v353, %v352
  %v364 = vpack.c.bf16 %v355, %v354
  %v365 = vpack.c.bf16 %v357, %v356
  %v366 = vpack.c.bf16 %v359, %v358
  %v367 = vpack.c.bf16 %v361, %v360
  %v368 = vpack.c.bf16 %v362, %v362
  %v369 = vld [vmem:[%s3] sm:$0xff]
  %v370 = vld [vmem:[%s3 + $0x8] sm:$0xff]
  %v371 = vld [vmem:[%s3 + $0x10] sm:$0xff]
  %v372 = vld [vmem:[%s3 + $0x18] sm:$0xff]
  %v373 = vperm.slane %v50, 2
  %v374 = vperm.slane %v51, 2
  %v379 = vunpack.c.l.b16 %v369
  %v380 = vunpack.c.h.b16 %v369
  %v381 = vunpack.c.l.b16 %v370
  %v382 = vunpack.c.h.b16 %v370
  %v383 = vunpack.c.l.b16 %v371
  %v384 = vunpack.c.h.b16 %v371
  %v385 = vunpack.c.l.b16 %v372
  %v386 = vunpack.c.h.b16 %v372
  %v387 = vpack.c.b16 %v381, %v379
  %v388 = vpack.c.b16 %v382, %v380
  %v389 = vpack.c.b16 %v385, %v383
  %v390 = vpack.c.b16 %v386, %v384
  %v396 = vsel %vm88, %v363, 0
  %v399 = vsel %vm88, %v364, 0
  %v402 = vsel %vm88, %v365, 0
  %v405 = vsel %vm88, %v366, 0
  %v408 = vsel %vm88, %v367, 0
  %v411 = vsel %vm88, %v368, 0
  %413 = vmatpush.bf16.msra.mxu0 0
  %414 = vmatpush.bf16.msra.mxu0 0
  %415 = vmatpush.bf16.msra.mxu0 0
  %416 = vmatpush.bf16.msra.mxu0 0
  %417 = vmatpush.bf16.msra.mxu0 0
  %418 = vmatpush.bf16.msra.mxu0 0
  %419 = vmatpush.bf16.msra.mxu0 %v389
  %420 = vmatpush.bf16.msra.mxu0 %v387
  %421 = vmatmul.bf16.gmra.mxu0 %v396
  %v422 = vpop.f32.mrf.mxu0
  %v423 = vadd.f32 %v373, %v422
  %v424 = vpop.f32.mrf.mxu0
  %v425 = vadd.f32 %v373, %v424
  %426 = vmatmul.bf16.gmra.mxu0 %v399
  %v427 = vpop.f32.mrf.mxu0
  %v428 = vadd.f32 %v373, %v427
  %v429 = vpop.f32.mrf.mxu0
  %v430 = vadd.f32 %v373, %v429
  %431 = vmatmul.bf16.gmra.mxu0 %v402
  %v432 = vpop.f32.mrf.mxu0
  %v433 = vadd.f32 %v373, %v432
  %v434 = vpop.f32.mrf.mxu0
  %v435 = vadd.f32 %v373, %v434
  %436 = vmatmul.bf16.gmra.mxu0 %v405
  %v437 = vpop.f32.mrf.mxu0
  %v438 = vadd.f32 %v373, %v437
  %v439 = vpop.f32.mrf.mxu0
  %v440 = vadd.f32 %v373, %v439
  %441 = vmatmul.bf16.gmra.mxu0 %v408
  %v442 = vpop.f32.mrf.mxu0
  %v443 = vadd.f32 %v373, %v442
  %v444 = vpop.f32.mrf.mxu0
  %v445 = vadd.f32 %v373, %v444
  %446 = vmatmul.bf16.gmra.mxu0 %v411
  %v447 = vpop.f32.mrf.mxu0
  %v448 = vadd.f32 %v373, %v447
  %v449 = vpop.f32.mrf.mxu0
  %450 = vdwg.mxu0
  %451 = vmatpush.bf16.msra.mxu0 0
  %452 = vmatpush.bf16.msra.mxu0 0
  %453 = vmatpush.bf16.msra.mxu0 0
  %454 = vmatpush.bf16.msra.mxu0 0
  %455 = vmatpush.bf16.msra.mxu0 0
  %456 = vmatpush.bf16.msra.mxu0 0
  %457 = vmatpush.bf16.msra.mxu0 %v390
  %458 = vmatpush.bf16.msra.mxu0 %v388
  %459 = vmatmul.bf16.gmra.mxu0 %v396
  %v460 = vpop.f32.mrf.mxu0
  %v461 = vadd.f32 %v374, %v460
  %v462 = vpop.f32.mrf.mxu0
  %v463 = vadd.f32 %v374, %v462
  %464 = vmatmul.bf16.gmra.mxu0 %v399
  %v465 = vpop.f32.mrf.mxu0
  %v466 = vadd.f32 %v374, %v465
  %v467 = vpop.f32.mrf.mxu0
  %v468 = vadd.f32 %v374, %v467
  %469 = vmatmul.bf16.gmra.mxu0 %v402
  %v470 = vpop.f32.mrf.mxu0
  %v471 = vadd.f32 %v374, %v470
  %v472 = vpop.f32.mrf.mxu0
  %v473 = vadd.f32 %v374, %v472
  %474 = vmatmul.bf16.gmra.mxu0 %v405
  %v475 = vpop.f32.mrf.mxu0
  %v476 = vadd.f32 %v374, %v475
  %v477 = vpop.f32.mrf.mxu0
  %v478 = vadd.f32 %v374, %v477
  %479 = vmatmul.bf16.gmra.mxu0 %v408
  %v480 = vpop.f32.mrf.mxu0
  %v481 = vadd.f32 %v374, %v480
  %v482 = vpop.f32.mrf.mxu0
  %v483 = vadd.f32 %v374, %v482
  %484 = vmatmul.bf16.gmra.mxu0 %v411
  %v485 = vpop.f32.mrf.mxu0
  %v486 = vadd.f32 %v374, %v485
  %v487 = vpop.f32.mrf.mxu0
  %488 = vdwg.mxu0
  %v489 = vpack.c.bf16 %v461, %v423
  %v490 = vpack.c.bf16 %v463, %v425
  %v491 = vpack.c.bf16 %v466, %v428
  %v492 = vpack.c.bf16 %v468, %v430
  %v493 = vpack.c.bf16 %v471, %v433
  %v494 = vpack.c.bf16 %v473, %v435
  %v495 = vpack.c.bf16 %v476, %v438
  %v496 = vpack.c.bf16 %v478, %v440
  %v497 = vpack.c.bf16 %v481, %v443
  %v498 = vpack.c.bf16 %v483, %v445
  %v499 = vpack.c.bf16 %v486, %v448
  %511 = vrot.lane.b32.xlu0 %v423, 96
  %v512 = vpop.permute.xlu0 %511
  %513 = vrot.lane.b32.xlu0 %v425, 96
  %v514 = vpop.permute.xlu0 %513
  %515 = vrot.lane.b32.xlu0 %v428, 96
  %v516 = vpop.permute.xlu0 %515
  %517 = vrot.lane.b32.xlu0 %v430, 96
  %v518 = vpop.permute.xlu0 %517
  %519 = vrot.lane.b32.xlu0 %v433, 96
  %v520 = vpop.permute.xlu0 %519
  %521 = vrot.lane.b32.xlu0 %v435, 96
  %v522 = vpop.permute.xlu0 %521
  %523 = vrot.lane.b32.xlu0 %v438, 96
  %v524 = vpop.permute.xlu0 %523
  %525 = vrot.lane.b32.xlu0 %v440, 96
  %v526 = vpop.permute.xlu0 %525
  %527 = vrot.lane.b32.xlu0 %v443, 96
  %v528 = vpop.permute.xlu0 %527
  %529 = vrot.lane.b32.xlu0 %v445, 96
  %v530 = vpop.permute.xlu0 %529
  %531 = vrot.lane.b32.xlu0 %v448, 96
  %v532 = vpop.permute.xlu0 %531
  %vm533 = vcmask 64512
  %v534 = vsel %vm533, %v423, 0
  %v536 = vsel %vm533, %v425, 0
  %v538 = vsel %vm533, %v428, 0
  %v540 = vsel %vm533, %v430, 0
  %v542 = vsel %vm533, %v433, 0
  %v544 = vsel %vm533, %v435, 0
  %v546 = vsel %vm533, %v438, 0
  %v548 = vsel %vm533, %v440, 0
  %v550 = vsel %vm533, %v443, 0
  %v552 = vsel %vm533, %v445, 0
  %v554 = vsel %vm533, %v448, 0
  %v556 = vsel %vm533, %v512, 0
  %v558 = vsel %vm533, %v514, 0
  %v560 = vsel %vm533, %v516, 0
  %v562 = vsel %vm533, %v518, 0
  %v564 = vsel %vm533, %v520, 0
  %v566 = vsel %vm533, %v522, 0
  %v568 = vsel %vm533, %v524, 0
  %v570 = vsel %vm533, %v526, 0
  %v572 = vsel %vm533, %v528, 0
  %v574 = vsel %vm533, %v530, 0
  %v576 = vsel %vm533, %v532, 0
  %578 = vmatpush.xpose.msra.mxu0 0.0
  %579 = vmatpush.xpose.msra.mxu0 0.0
  %580 = vmatpush.xpose.msra.mxu0 0.0
  %581 = vmatpush.xpose.msra.mxu0 0.0
  %582 = vmatpush.xpose.msra.mxu0 0.0
  %583 = vmatpush.xpose.msra.mxu0 %v576
  %584 = vmatpush.xpose.msra.mxu0 %v574
  %585 = vmatpush.xpose.msra.mxu0 %v572
  %586 = vmatpush.xpose.msra.mxu0 %v570
  %587 = vmatpush.xpose.msra.mxu0 %v568
  %588 = vmatpush.xpose.msra.mxu0 %v566
  %589 = vmatpush.xpose.msra.mxu0 %v564
  %590 = vmatpush.xpose.msra.mxu0 %v562
  %591 = vmatpush.xpose.msra.mxu0 %v560
  %592 = vmatpush.xpose.msra.mxu0 %v558
  %593 = vmatpush.xpose.msra.mxu0 %v556
  %594 = vmatmul.f32.gmra.mxu0 %v534
  %v595 = vpop.f32.mrf.mxu0
  %v596 = vadd.f32 0.0, %v595
  %597 = vmatmul.f32.gmra.mxu0 %v536
  %v598 = vpop.f32.mrf.mxu0
  %v599 = vadd.f32 0.0, %v598
  %600 = vmatmul.f32.gmra.mxu0 %v538
  %v601 = vpop.f32.mrf.mxu0
  %v602 = vadd.f32 0.0, %v601
  %603 = vmatmul.f32.gmra.mxu0 %v540
  %v604 = vpop.f32.mrf.mxu0
  %v605 = vadd.f32 0.0, %v604
  %606 = vmatmul.f32.gmra.mxu0 %v542
  %v607 = vpop.f32.mrf.mxu0
  %v608 = vadd.f32 0.0, %v607
  %609 = vmatmul.f32.gmra.mxu0 %v544
  %v610 = vpop.f32.mrf.mxu0
  %v611 = vadd.f32 0.0, %v610
  %612 = vmatmul.f32.gmra.mxu0 %v546
  %v613 = vpop.f32.mrf.mxu0
  %v614 = vadd.f32 0.0, %v613
  %615 = vmatmul.f32.gmra.mxu0 %v548
  %v616 = vpop.f32.mrf.mxu0
  %v617 = vadd.f32 0.0, %v616
  %618 = vmatmul.f32.gmra.mxu0 %v550
  %v619 = vpop.f32.mrf.mxu0
  %v620 = vadd.f32 0.0, %v619
  %621 = vmatmul.f32.gmra.mxu0 %v552
  %v622 = vpop.f32.mrf.mxu0
  %v623 = vadd.f32 0.0, %v622
  %624 = vmatmul.f32.gmra.mxu0 %v554
  %v625 = vpop.f32.mrf.mxu0
  %v626 = vadd.f32 0.0, %v625
  %627 = vdwg.mxu0
  %v628 = vsel %vm39, %v596, -1e+30
  %v629 = vsel %vm40, %v599, -1e+30
  %v630 = vsel %vm41, %v602, -1e+30
  %v631 = vsel %vm42, %v605, -1e+30
  %v632 = vsel %vm43, %v608, -1e+30
  %v633 = vsel %vm44, %v611, -1e+30
  %v634 = vsel %vm45, %v614, -1e+30
  %v635 = vsel %vm46, %v617, -1e+30
  %v636 = vsel %vm47, %v620, -1e+30
  %v637 = vsel %vm48, %v623, -1e+30
  %v638 = vsel %vm49, %v626, -1e+30
  %vm639 = vcmask 662528
  %v640 = vsel %vm639, %v628, -inf
  %641 = vmax.xlane.f32.xlu0 %v640
  %v642 = vpop.xlane.xlu0 %641
  %v643 = vsel %vm639, %v629, -inf
  %644 = vmax.xlane.f32.xlu0 %v643
  %v645 = vpop.xlane.xlu0 %644
  %v646 = vsel %vm639, %v630, -inf
  %647 = vmax.xlane.f32.xlu0 %v646
  %v648 = vpop.xlane.xlu0 %647
  %v649 = vsel %vm639, %v631, -inf
  %650 = vmax.xlane.f32.xlu0 %v649
  %v651 = vpop.xlane.xlu0 %650
  %v652 = vsel %vm639, %v632, -inf
  %653 = vmax.xlane.f32.xlu0 %v652
  %v654 = vpop.xlane.xlu0 %653
  %v655 = vsel %vm639, %v633, -inf
  %656 = vmax.xlane.f32.xlu0 %v655
  %v657 = vpop.xlane.xlu0 %656
  %v658 = vsel %vm639, %v634, -inf
  %659 = vmax.xlane.f32.xlu0 %v658
  %v660 = vpop.xlane.xlu0 %659
  %v661 = vsel %vm639, %v635, -inf
  %662 = vmax.xlane.f32.xlu0 %v661
  %v663 = vpop.xlane.xlu0 %662
  %v664 = vsel %vm639, %v636, -inf
  %665 = vmax.xlane.f32.xlu0 %v664
  %v666 = vpop.xlane.xlu0 %665
  %v667 = vsel %vm639, %v637, -inf
  %668 = vmax.xlane.f32.xlu0 %v667
  %v669 = vpop.xlane.xlu0 %668
  %vm670 = vcmask 655360
  %v671 = vsel %vm670, %v638, -inf
  %672 = vmax.xlane.f32.xlu0 %v671
  %v673 = vpop.xlane.xlu0 %672
  %v674 = vsub.f32 %v628, %v642
  %v675 = vsub.f32 %v629, %v645
  %v676 = vsub.f32 %v630, %v648
  %v677 = vsub.f32 %v631, %v651
  %v678 = vsub.f32 %v632, %v654
  %v679 = vsub.f32 %v633, %v657
  %v680 = vsub.f32 %v634, %v660
  %v681 = vsub.f32 %v635, %v663
  %v682 = vsub.f32 %v636, %v666
  %v683 = vsub.f32 %v637, %v669
  %v684 = vsub.f32 %v638, %v673
  %v685 = vpack.c.bf16 %v675, %v674
  %v686 = vpack.c.bf16 %v677, %v676
  %v687 = vpack.c.bf16 %v679, %v678
  %v688 = vpack.c.bf16 %v681, %v680
  %v689 = vpack.c.bf16 %v683, %v682
  %v690 = vpack.c.bf16 %v684, %v684
  %v691 = vunpack.c.l.bf16 %v685
  %v692 = vunpack.c.h.bf16 %v685
  %v693 = vunpack.c.l.bf16 %v686
  %v694 = vunpack.c.h.bf16 %v686
  %v695 = vunpack.c.l.bf16 %v687
  %v696 = vunpack.c.h.bf16 %v687
  %v697 = vunpack.c.l.bf16 %v688
  %v698 = vunpack.c.h.bf16 %v688
  %v699 = vunpack.c.l.bf16 %v689
  %v700 = vunpack.c.h.bf16 %v689
  %v701 = vunpack.c.l.bf16 %v690
  %v702 = vmul.f32 %v691, 1.442695
  %v703 = vpow.pop %v702
  %v704 = vmul.f32 %v692, 1.442695
  %v705 = vpow.pop %v704
  %v706 = vmul.f32 %v693, 1.442695
  %v707 = vpow.pop %v706
  %v708 = vmul.f32 %v694, 1.442695
  %v709 = vpow.pop %v708
  %v710 = vmul.f32 %v695, 1.442695
  %v711 = vpow.pop %v710
  %v712 = vmul.f32 %v696, 1.442695
  %v713 = vpow.pop %v712
  %v714 = vmul.f32 %v697, 1.442695
  %v715 = vpow.pop %v714
  %v716 = vmul.f32 %v698, 1.442695
  %v717 = vpow.pop %v716
  %v718 = vmul.f32 %v699, 1.442695
  %v719 = vpow.pop %v718
  %v720 = vmul.f32 %v700, 1.442695
  %v721 = vpow.pop %v720
  %v722 = vmul.f32 %v701, 1.442695
  %v723 = vpow.pop %v722
  %v724 = vpack.c.bf16 %v705, %v703
  %v725 = vpack.c.bf16 %v709, %v707
  %v726 = vpack.c.bf16 %v713, %v711
  %v727 = vpack.c.bf16 %v717, %v715
  %v728 = vpack.c.bf16 %v721, %v719
  %v729 = vpack.c.bf16 %v723, %v723
  %v730 = vunpack.c.l.bf16 %v724
  %v731 = vunpack.c.h.bf16 %v724
  %v732 = vunpack.c.l.bf16 %v725
  %v733 = vunpack.c.h.bf16 %v725
  %v734 = vunpack.c.l.bf16 %v726
  %v735 = vunpack.c.h.bf16 %v726
  %v736 = vunpack.c.l.bf16 %v727
  %v737 = vunpack.c.h.bf16 %v727
  %v738 = vunpack.c.l.bf16 %v728
  %v739 = vunpack.c.h.bf16 %v728
  %v740 = vunpack.c.l.bf16 %v729
  %v741 = vsel %vm639, %v730, 0.0
  %742 = vadd.xlane.f32.xlu0 %v741
  %v743 = vpop.xlane.xlu0 %742
  %v744 = vsel %vm639, %v731, 0.0
  %745 = vadd.xlane.f32.xlu0 %v744
  %v746 = vpop.xlane.xlu0 %745
  %v747 = vsel %vm639, %v732, 0.0
  %748 = vadd.xlane.f32.xlu0 %v747
  %v749 = vpop.xlane.xlu0 %748
  %v750 = vsel %vm639, %v733, 0.0
  %751 = vadd.xlane.f32.xlu0 %v750
  %v752 = vpop.xlane.xlu0 %751
  %v753 = vsel %vm639, %v734, 0.0
  %754 = vadd.xlane.f32.xlu0 %v753
  %v755 = vpop.xlane.xlu0 %754
  %v756 = vsel %vm639, %v735, 0.0
  %757 = vadd.xlane.f32.xlu0 %v756
  %v758 = vpop.xlane.xlu0 %757
  %v759 = vsel %vm639, %v736, 0.0
  %760 = vadd.xlane.f32.xlu0 %v759
  %v761 = vpop.xlane.xlu0 %760
  %v762 = vsel %vm639, %v737, 0.0
  %763 = vadd.xlane.f32.xlu0 %v762
  %v764 = vpop.xlane.xlu0 %763
  %v765 = vsel %vm639, %v738, 0.0
  %766 = vadd.xlane.f32.xlu0 %v765
  %v767 = vpop.xlane.xlu0 %766
  %v768 = vsel %vm639, %v739, 0.0
  %769 = vadd.xlane.f32.xlu0 %v768
  %v770 = vpop.xlane.xlu0 %769
  %v771 = vsel %vm670, %v740, 0.0
  %772 = vadd.xlane.f32.xlu0 %v771
  %v773 = vpop.xlane.xlu0 %772
  %v774 = vrcp.pop %v743
  %v775 = vrcp.pop %v746
  %v776 = vrcp.pop %v749
  %v777 = vrcp.pop %v752
  %v778 = vrcp.pop %v755
  %v779 = vrcp.pop %v758
  %v780 = vrcp.pop %v761
  %v781 = vrcp.pop %v764
  %v782 = vrcp.pop %v767
  %v783 = vrcp.pop %v770
  %v784 = vrcp.pop %v773
  %v796 = vunpack.c.l.b16 %v489
  %v797 = vunpack.c.l.b16 %v490
  %v798 = vunpack.c.l.b16 %v491
  %v799 = vunpack.c.l.b16 %v492
  %v800 = vunpack.c.l.b16 %v493
  %v801 = vunpack.c.l.b16 %v494
  %v802 = vunpack.c.l.b16 %v495
  %v803 = vunpack.c.l.b16 %v496
  %v804 = vunpack.c.l.b16 %v497
  %v805 = vunpack.c.l.b16 %v498
  %v806 = vunpack.c.l.b16 %v499
  %v807 = vpack.c.b16 %v797, %v796
  %v808 = vpack.c.b16 %v799, %v798
  %v809 = vpack.c.b16 %v801, %v800
  %v810 = vpack.c.b16 %v803, %v802
  %v811 = vpack.c.b16 %v805, %v804
  %v812 = vpack.c.b16 %v806, %v806
  %813 = vrot.lane.b32.xlu0 %v807, 64
  %v814 = vpop.permute.xlu0 %813
  %815 = vrot.lane.b32.xlu0 %v808, 64
  %v816 = vpop.permute.xlu0 %815
  %817 = vrot.lane.b32.xlu0 %v809, 64
  %v818 = vpop.permute.xlu0 %817
  %819 = vrot.lane.b32.xlu0 %v810, 64
  %v820 = vpop.permute.xlu0 %819
  %821 = vrot.lane.b32.xlu0 %v811, 64
  %v822 = vpop.permute.xlu0 %821
  %823 = vrot.lane.b32.xlu0 %v812, 64
  %v824 = vpop.permute.xlu0 %823
  %v831 = vsel %vm639, %v724, 0
  %v834 = vsel %vm639, %v725, 0
  %v837 = vsel %vm639, %v726, 0
  %v840 = vsel %vm639, %v727, 0
  %v843 = vsel %vm639, %v728, 0
  %v846 = vsel %vm639, %v729, 0
  %vm848 = vcmask 1040384
  %v849 = vsel 0, 4294967295, 65535
  %v850 = vsel %vm848, %v849, 0
  %v852 = vand.u32 %v824, %v850
  %854 = vmatpush.bf16.msra.mxu0 0
  %855 = vmatpush.bf16.msra.mxu0 0
  %856 = vmatpush.bf16.msra.mxu0 %v852
  %857 = vmatpush.bf16.msra.mxu0 %v822
  %858 = vmatpush.bf16.msra.mxu0 %v820
  %859 = vmatpush.bf16.msra.mxu0 %v818
  %860 = vmatpush.bf16.msra.mxu0 %v816
  %861 = vmatpush.bf16.msra.mxu0 %v814
  %862 = vmatmul.bf16.gmra.mxu0 %v831
  %v863 = vpop.f32.mrf.mxu0
  %v864 = vadd.f32 0.0, %v863
  %v865 = vpop.f32.mrf.mxu0
  %v866 = vadd.f32 0.0, %v865
  %867 = vmatmul.bf16.gmra.mxu0 %v834
  %v868 = vpop.f32.mrf.mxu0
  %v869 = vadd.f32 0.0, %v868
  %v870 = vpop.f32.mrf.mxu0
  %v871 = vadd.f32 0.0, %v870
  %872 = vmatmul.bf16.gmra.mxu0 %v837
  %v873 = vpop.f32.mrf.mxu0
  %v874 = vadd.f32 0.0, %v873
  %v875 = vpop.f32.mrf.mxu0
  %v876 = vadd.f32 0.0, %v875
  %877 = vmatmul.bf16.gmra.mxu0 %v840
  %v878 = vpop.f32.mrf.mxu0
  %v879 = vadd.f32 0.0, %v878
  %v880 = vpop.f32.mrf.mxu0
  %v881 = vadd.f32 0.0, %v880
  %882 = vmatmul.bf16.gmra.mxu0 %v843
  %v883 = vpop.f32.mrf.mxu0
  %v884 = vadd.f32 0.0, %v883
  %v885 = vpop.f32.mrf.mxu0
  %v886 = vadd.f32 0.0, %v885
  %887 = vmatmul.bf16.gmra.mxu0 %v846
  %v888 = vpop.f32.mrf.mxu0
  %v889 = vadd.f32 0.0, %v888
  %v890 = vpop.f32.mrf.mxu0
  %891 = vdwg.mxu0
  %v892 = vmul.f32 %v864, %v774
  %v893 = vmul.f32 %v866, %v775
  %v894 = vmul.f32 %v869, %v776
  %v895 = vmul.f32 %v871, %v777
  %v896 = vmul.f32 %v874, %v778
  %v897 = vmul.f32 %v876, %v779
  %v898 = vmul.f32 %v879, %v780
  %v899 = vmul.f32 %v881, %v781
  %v900 = vmul.f32 %v884, %v782
  %v901 = vmul.f32 %v886, %v783
  %v902 = vmul.f32 %v889, %v784
  %903 = vrot.lane.b32.xlu0 %v423, 120
  %v904 = vpop.permute.xlu0 %903
  %905 = vrot.lane.b32.xlu0 %v425, 120
  %v906 = vpop.permute.xlu0 %905
  %907 = vrot.lane.b32.xlu0 %v428, 120
  %v908 = vpop.permute.xlu0 %907
  %909 = vrot.lane.b32.xlu0 %v430, 120
  %v910 = vpop.permute.xlu0 %909
  %911 = vrot.lane.b32.xlu0 %v433, 120
  %v912 = vpop.permute.xlu0 %911
  %913 = vrot.lane.b32.xlu0 %v435, 120
  %v914 = vpop.permute.xlu0 %913
  %915 = vrot.lane.b32.xlu0 %v438, 120
  %v916 = vpop.permute.xlu0 %915
  %917 = vrot.lane.b32.xlu0 %v440, 120
  %v918 = vpop.permute.xlu0 %917
  %919 = vrot.lane.b32.xlu0 %v443, 120
  %v920 = vpop.permute.xlu0 %919
  %921 = vrot.lane.b32.xlu0 %v445, 120
  %v922 = vpop.permute.xlu0 %921
  %923 = vrot.lane.b32.xlu0 %v448, 120
  %v924 = vpop.permute.xlu0 %923
  %925 = vrot.lane.b32.xlu0 %v423, 88
  %v926 = vpop.permute.xlu0 %925
  %927 = vrot.lane.b32.xlu0 %v425, 88
  %v928 = vpop.permute.xlu0 %927
  %929 = vrot.lane.b32.xlu0 %v428, 88
  %v930 = vpop.permute.xlu0 %929
  %931 = vrot.lane.b32.xlu0 %v430, 88
  %v932 = vpop.permute.xlu0 %931
  %933 = vrot.lane.b32.xlu0 %v433, 88
  %v934 = vpop.permute.xlu0 %933
  %935 = vrot.lane.b32.xlu0 %v435, 88
  %v936 = vpop.permute.xlu0 %935
  %937 = vrot.lane.b32.xlu0 %v438, 88
  %v938 = vpop.permute.xlu0 %937
  %939 = vrot.lane.b32.xlu0 %v440, 88
  %v940 = vpop.permute.xlu0 %939
  %941 = vrot.lane.b32.xlu0 %v443, 88
  %v942 = vpop.permute.xlu0 %941
  %943 = vrot.lane.b32.xlu0 %v445, 88
  %v944 = vpop.permute.xlu0 %943
  %945 = vrot.lane.b32.xlu0 %v448, 88
  %v946 = vpop.permute.xlu0 %945
  %v947 = vsel %vm533, %v904, 0
  %v949 = vsel %vm533, %v906, 0
  %v951 = vsel %vm533, %v908, 0
  %v953 = vsel %vm533, %v910, 0
  %v955 = vsel %vm533, %v912, 0
  %v957 = vsel %vm533, %v914, 0
  %v959 = vsel %vm533, %v916, 0
  %v961 = vsel %vm533, %v918, 0
  %v963 = vsel %vm533, %v920, 0
  %v965 = vsel %vm533, %v922, 0
  %v967 = vsel %vm533, %v924, 0
  %v969 = vsel %vm533, %v926, 0
  %v971 = vsel %vm533, %v928, 0
  %v973 = vsel %vm533, %v930, 0
  %v975 = vsel %vm533, %v932, 0
  %v977 = vsel %vm533, %v934, 0
  %v979 = vsel %vm533, %v936, 0
  %v981 = vsel %vm533, %v938, 0
  %v983 = vsel %vm533, %v940, 0
  %v985 = vsel %vm533, %v942, 0
  %v987 = vsel %vm533, %v944, 0
  %v989 = vsel %vm533, %v946, 0
  %991 = vmatpush.xpose.msra.mxu0 0.0
  %992 = vmatpush.xpose.msra.mxu0 0.0
  %993 = vmatpush.xpose.msra.mxu0 0.0
  %994 = vmatpush.xpose.msra.mxu0 0.0
  %995 = vmatpush.xpose.msra.mxu0 0.0
  %996 = vmatpush.xpose.msra.mxu0 %v989
  %997 = vmatpush.xpose.msra.mxu0 %v987
  %998 = vmatpush.xpose.msra.mxu0 %v985
  %999 = vmatpush.xpose.msra.mxu0 %v983
  %1000 = vmatpush.xpose.msra.mxu0 %v981
  %1001 = vmatpush.xpose.msra.mxu0 %v979
  %1002 = vmatpush.xpose.msra.mxu0 %v977
  %1003 = vmatpush.xpose.msra.mxu0 %v975
  %1004 = vmatpush.xpose.msra.mxu0 %v973
  %1005 = vmatpush.xpose.msra.mxu0 %v971
  %1006 = vmatpush.xpose.msra.mxu0 %v969
  %1007 = vmatmul.f32.gmra.mxu0 %v947
  %v1008 = vpop.f32.mrf.mxu0
  %v1009 = vadd.f32 0.0, %v1008
  %1010 = vmatmul.f32.gmra.mxu0 %v949
  %v1011 = vpop.f32.mrf.mxu0
  %v1012 = vadd.f32 0.0, %v1011
  %1013 = vmatmul.f32.gmra.mxu0 %v951
  %v1014 = vpop.f32.mrf.mxu0
  %v1015 = vadd.f32 0.0, %v1014
  %1016 = vmatmul.f32.gmra.mxu0 %v953
  %v1017 = vpop.f32.mrf.mxu0
  %v1018 = vadd.f32 0.0, %v1017
  %1019 = vmatmul.f32.gmra.mxu0 %v955
  %v1020 = vpop.f32.mrf.mxu0
  %v1021 = vadd.f32 0.0, %v1020
  %1022 = vmatmul.f32.gmra.mxu0 %v957
  %v1023 = vpop.f32.mrf.mxu0
  %v1024 = vadd.f32 0.0, %v1023
  %1025 = vmatmul.f32.gmra.mxu0 %v959
  %v1026 = vpop.f32.mrf.mxu0
  %v1027 = vadd.f32 0.0, %v1026
  %1028 = vmatmul.f32.gmra.mxu0 %v961
  %v1029 = vpop.f32.mrf.mxu0
  %v1030 = vadd.f32 0.0, %v1029
  %1031 = vmatmul.f32.gmra.mxu0 %v963
  %v1032 = vpop.f32.mrf.mxu0
  %v1033 = vadd.f32 0.0, %v1032
  %1034 = vmatmul.f32.gmra.mxu0 %v965
  %v1035 = vpop.f32.mrf.mxu0
  %v1036 = vadd.f32 0.0, %v1035
  %1037 = vmatmul.f32.gmra.mxu0 %v967
  %v1038 = vpop.f32.mrf.mxu0
  %v1039 = vadd.f32 0.0, %v1038
  %1040 = vdwg.mxu0
  %v1041 = vsel %vm39, %v1009, -1e+30
  %v1042 = vsel %vm40, %v1012, -1e+30
  %v1043 = vsel %vm41, %v1015, -1e+30
  %v1044 = vsel %vm42, %v1018, -1e+30
  %v1045 = vsel %vm43, %v1021, -1e+30
  %v1046 = vsel %vm44, %v1024, -1e+30
  %v1047 = vsel %vm45, %v1027, -1e+30
  %v1048 = vsel %vm46, %v1030, -1e+30
  %v1049 = vsel %vm47, %v1033, -1e+30
  %v1050 = vsel %vm48, %v1036, -1e+30
  %v1051 = vsel %vm49, %v1039, -1e+30
  %v1052 = vsel %vm639, %v1041, -inf
  %1053 = vmax.xlane.f32.xlu0 %v1052
  %v1054 = vpop.xlane.xlu0 %1053
  %v1055 = vsel %vm639, %v1042, -inf
  %1056 = vmax.xlane.f32.xlu0 %v1055
  %v1057 = vpop.xlane.xlu0 %1056
  %v1058 = vsel %vm639, %v1043, -inf
  %1059 = vmax.xlane.f32.xlu0 %v1058
  %v1060 = vpop.xlane.xlu0 %1059
  %v1061 = vsel %vm639, %v1044, -inf
  %1062 = vmax.xlane.f32.xlu0 %v1061
  %v1063 = vpop.xlane.xlu0 %1062
  %v1064 = vsel %vm639, %v1045, -inf
  %1065 = vmax.xlane.f32.xlu0 %v1064
  %v1066 = vpop.xlane.xlu0 %1065
  %v1067 = vsel %vm639, %v1046, -inf
  %1068 = vmax.xlane.f32.xlu0 %v1067
  %v1069 = vpop.xlane.xlu0 %1068
  %v1070 = vsel %vm639, %v1047, -inf
  %1071 = vmax.xlane.f32.xlu0 %v1070
  %v1072 = vpop.xlane.xlu0 %1071
  %v1073 = vsel %vm639, %v1048, -inf
  %1074 = vmax.xlane.f32.xlu0 %v1073
  %v1075 = vpop.xlane.xlu0 %1074
  %v1076 = vsel %vm639, %v1049, -inf
  %1077 = vmax.xlane.f32.xlu0 %v1076
  %v1078 = vpop.xlane.xlu0 %1077
  %v1079 = vsel %vm639, %v1050, -inf
  %1080 = vmax.xlane.f32.xlu0 %v1079
  %v1081 = vpop.xlane.xlu0 %1080
  %v1082 = vsel %vm670, %v1051, -inf
  %1083 = vmax.xlane.f32.xlu0 %v1082
  %v1084 = vpop.xlane.xlu0 %1083
  %v1085 = vsub.f32 %v1041, %v1054
  %v1086 = vsub.f32 %v1042, %v1057
  %v1087 = vsub.f32 %v1043, %v1060
  %v1088 = vsub.f32 %v1044, %v1063
  %v1089 = vsub.f32 %v1045, %v1066
  %v1090 = vsub.f32 %v1046, %v1069
  %v1091 = vsub.f32 %v1047, %v1072
  %v1092 = vsub.f32 %v1048, %v1075
  %v1093 = vsub.f32 %v1049, %v1078
  %v1094 = vsub.f32 %v1050, %v1081
  %v1095 = vsub.f32 %v1051, %v1084
  %v1096 = vpack.c.bf16 %v1086, %v1085
  %v1097 = vpack.c.bf16 %v1088, %v1087
  %v1098 = vpack.c.bf16 %v1090, %v1089
  %v1099 = vpack.c.bf16 %v1092, %v1091
  %v1100 = vpack.c.bf16 %v1094, %v1093
  %v1101 = vpack.c.bf16 %v1095, %v1095
  %v1102 = vunpack.c.l.bf16 %v1096
  %v1103 = vunpack.c.h.bf16 %v1096
  %v1104 = vunpack.c.l.bf16 %v1097
  %v1105 = vunpack.c.h.bf16 %v1097
  %v1106 = vunpack.c.l.bf16 %v1098
  %v1107 = vunpack.c.h.bf16 %v1098
  %v1108 = vunpack.c.l.bf16 %v1099
  %v1109 = vunpack.c.h.bf16 %v1099
  %v1110 = vunpack.c.l.bf16 %v1100
  %v1111 = vunpack.c.h.bf16 %v1100
  %v1112 = vunpack.c.l.bf16 %v1101
  %v1113 = vmul.f32 %v1102, 1.442695
  %v1114 = vpow.pop %v1113
  %v1115 = vmul.f32 %v1103, 1.442695
  %v1116 = vpow.pop %v1115
  %v1117 = vmul.f32 %v1104, 1.442695
  %v1118 = vpow.pop %v1117
  %v1119 = vmul.f32 %v1105, 1.442695
  %v1120 = vpow.pop %v1119
  %v1121 = vmul.f32 %v1106, 1.442695
  %v1122 = vpow.pop %v1121
  %v1123 = vmul.f32 %v1107, 1.442695
  %v1124 = vpow.pop %v1123
  %v1125 = vmul.f32 %v1108, 1.442695
  %v1126 = vpow.pop %v1125
  %v1127 = vmul.f32 %v1109, 1.442695
  %v1128 = vpow.pop %v1127
  %v1129 = vmul.f32 %v1110, 1.442695
  %v1130 = vpow.pop %v1129
  %v1131 = vmul.f32 %v1111, 1.442695
  %v1132 = vpow.pop %v1131
  %v1133 = vmul.f32 %v1112, 1.442695
  %v1134 = vpow.pop %v1133
  %v1135 = vpack.c.bf16 %v1116, %v1114
  %v1136 = vpack.c.bf16 %v1120, %v1118
  %v1137 = vpack.c.bf16 %v1124, %v1122
  %v1138 = vpack.c.bf16 %v1128, %v1126
  %v1139 = vpack.c.bf16 %v1132, %v1130
  %v1140 = vpack.c.bf16 %v1134, %v1134
  %v1141 = vunpack.c.l.bf16 %v1135
  %v1142 = vunpack.c.h.bf16 %v1135
  %v1143 = vunpack.c.l.bf16 %v1136
  %v1144 = vunpack.c.h.bf16 %v1136
  %v1145 = vunpack.c.l.bf16 %v1137
  %v1146 = vunpack.c.h.bf16 %v1137
  %v1147 = vunpack.c.l.bf16 %v1138
  %v1148 = vunpack.c.h.bf16 %v1138
  %v1149 = vunpack.c.l.bf16 %v1139
  %v1150 = vunpack.c.h.bf16 %v1139
  %v1151 = vunpack.c.l.bf16 %v1140
  %v1152 = vsel %vm639, %v1141, 0.0
  %1153 = vadd.xlane.f32.xlu0 %v1152
  %v1154 = vpop.xlane.xlu0 %1153
  %v1155 = vsel %vm639, %v1142, 0.0
  %1156 = vadd.xlane.f32.xlu0 %v1155
  %v1157 = vpop.xlane.xlu0 %1156
  %v1158 = vsel %vm639, %v1143, 0.0
  %1159 = vadd.xlane.f32.xlu0 %v1158
  %v1160 = vpop.xlane.xlu0 %1159
  %v1161 = vsel %vm639, %v1144, 0.0
  %1162 = vadd.xlane.f32.xlu0 %v1161
  %v1163 = vpop.xlane.xlu0 %1162
  %v1164 = vsel %vm639, %v1145, 0.0
  %1165 = vadd.xlane.f32.xlu0 %v1164
  %v1166 = vpop.xlane.xlu0 %1165
  %v1167 = vsel %vm639, %v1146, 0.0
  %1168 = vadd.xlane.f32.xlu0 %v1167
  %v1169 = vpop.xlane.xlu0 %1168
  %v1170 = vsel %vm639, %v1147, 0.0
  %1171 = vadd.xlane.f32.xlu0 %v1170
  %v1172 = vpop.xlane.xlu0 %1171
  %v1173 = vsel %vm639, %v1148, 0.0
  %1174 = vadd.xlane.f32.xlu0 %v1173
  %v1175 = vpop.xlane.xlu0 %1174
  %v1176 = vsel %vm639, %v1149, 0.0
  %1177 = vadd.xlane.f32.xlu0 %v1176
  %v1178 = vpop.xlane.xlu0 %1177
  %v1179 = vsel %vm639, %v1150, 0.0
  %1180 = vadd.xlane.f32.xlu0 %v1179
  %v1181 = vpop.xlane.xlu0 %1180
  %v1182 = vsel %vm670, %v1151, 0.0
  %1183 = vadd.xlane.f32.xlu0 %v1182
  %v1184 = vpop.xlane.xlu0 %1183
  %v1185 = vrcp.pop %v1154
  %v1186 = vrcp.pop %v1157
  %v1187 = vrcp.pop %v1160
  %v1188 = vrcp.pop %v1163
  %v1189 = vrcp.pop %v1166
  %v1190 = vrcp.pop %v1169
  %v1191 = vrcp.pop %v1172
  %v1192 = vrcp.pop %v1175
  %v1193 = vrcp.pop %v1178
  %v1194 = vrcp.pop %v1181
  %v1195 = vrcp.pop %v1184
  %1196 = vrot.lane.b32.xlu0 %v807, 32
  %v1197 = vpop.permute.xlu0 %1196
  %1198 = vrot.lane.b32.xlu0 %v808, 32
  %v1199 = vpop.permute.xlu0 %1198
  %1200 = vrot.lane.b32.xlu0 %v809, 32
  %v1201 = vpop.permute.xlu0 %1200
  %1202 = vrot.lane.b32.xlu0 %v810, 32
  %v1203 = vpop.permute.xlu0 %1202
  %1204 = vrot.lane.b32.xlu0 %v811, 32
  %v1205 = vpop.permute.xlu0 %1204
  %1206 = vrot.lane.b32.xlu0 %v812, 32
  %v1207 = vpop.permute.xlu0 %1206
  %v1214 = vsel %vm639, %v1135, 0
  %v1217 = vsel %vm639, %v1136, 0
  %v1220 = vsel %vm639, %v1137, 0
  %v1223 = vsel %vm639, %v1138, 0
  %v1226 = vsel %vm639, %v1139, 0
  %v1229 = vsel %vm639, %v1140, 0
  %v1232 = vand.u32 %v1207, %v850
  %1234 = vmatpush.bf16.msra.mxu0 0
  %1235 = vmatpush.bf16.msra.mxu0 0
  %1236 = vmatpush.bf16.msra.mxu0 %v1232
  %1237 = vmatpush.bf16.msra.mxu0 %v1205
  %1238 = vmatpush.bf16.msra.mxu0 %v1203
  %1239 = vmatpush.bf16.msra.mxu0 %v1201
  %1240 = vmatpush.bf16.msra.mxu0 %v1199
  %1241 = vmatpush.bf16.msra.mxu0 %v1197
  %1242 = vmatmul.bf16.gmra.mxu0 %v1214
  %v1243 = vpop.f32.mrf.mxu0
  %v1244 = vadd.f32 0.0, %v1243
  %v1245 = vpop.f32.mrf.mxu0
  %v1246 = vadd.f32 0.0, %v1245
  %1247 = vmatmul.bf16.gmra.mxu0 %v1217
  %v1248 = vpop.f32.mrf.mxu0
  %v1249 = vadd.f32 0.0, %v1248
  %v1250 = vpop.f32.mrf.mxu0
  %v1251 = vadd.f32 0.0, %v1250
  %1252 = vmatmul.bf16.gmra.mxu0 %v1220
  %v1253 = vpop.f32.mrf.mxu0
  %v1254 = vadd.f32 0.0, %v1253
  %v1255 = vpop.f32.mrf.mxu0
  %v1256 = vadd.f32 0.0, %v1255
  %1257 = vmatmul.bf16.gmra.mxu0 %v1223
  %v1258 = vpop.f32.mrf.mxu0
  %v1259 = vadd.f32 0.0, %v1258
  %v1260 = vpop.f32.mrf.mxu0
  %v1261 = vadd.f32 0.0, %v1260
  %1262 = vmatmul.bf16.gmra.mxu0 %v1226
  %v1263 = vpop.f32.mrf.mxu0
  %v1264 = vadd.f32 0.0, %v1263
  %v1265 = vpop.f32.mrf.mxu0
  %v1266 = vadd.f32 0.0, %v1265
  %1267 = vmatmul.bf16.gmra.mxu0 %v1229
  %v1268 = vpop.f32.mrf.mxu0
  %v1269 = vadd.f32 0.0, %v1268
  %v1270 = vpop.f32.mrf.mxu0
  %1271 = vdwg.mxu0
  %v1272 = vmul.f32 %v1244, %v1185
  %v1273 = vmul.f32 %v1246, %v1186
  %v1274 = vmul.f32 %v1249, %v1187
  %v1275 = vmul.f32 %v1251, %v1188
  %v1276 = vmul.f32 %v1254, %v1189
  %v1277 = vmul.f32 %v1256, %v1190
  %v1278 = vmul.f32 %v1259, %v1191
  %v1279 = vmul.f32 %v1261, %v1192
  %v1280 = vmul.f32 %v1264, %v1193
  %v1281 = vmul.f32 %v1266, %v1194
  %v1282 = vmul.f32 %v1269, %v1195
  %v1283 = vadd.f32 %v892, %v1272
  %v1284 = vadd.f32 %v893, %v1273
  %v1285 = vadd.f32 %v894, %v1274
  %v1286 = vadd.f32 %v895, %v1275
  %v1287 = vadd.f32 %v896, %v1276
  %v1288 = vadd.f32 %v897, %v1277
  %v1289 = vadd.f32 %v898, %v1278
  %v1290 = vadd.f32 %v899, %v1279
  %v1291 = vadd.f32 %v900, %v1280
  %v1292 = vadd.f32 %v901, %v1281
  %v1293 = vadd.f32 %v902, %v1282
  %1294 = vrot.lane.b32.xlu0 %v423, 112
  %v1295 = vpop.permute.xlu0 %1294
  %1296 = vrot.lane.b32.xlu0 %v425, 112
  %v1297 = vpop.permute.xlu0 %1296
  %1298 = vrot.lane.b32.xlu0 %v428, 112
  %v1299 = vpop.permute.xlu0 %1298
  %1300 = vrot.lane.b32.xlu0 %v430, 112
  %v1301 = vpop.permute.xlu0 %1300
  %1302 = vrot.lane.b32.xlu0 %v433, 112
  %v1303 = vpop.permute.xlu0 %1302
  %1304 = vrot.lane.b32.xlu0 %v435, 112
  %v1305 = vpop.permute.xlu0 %1304
  %1306 = vrot.lane.b32.xlu0 %v438, 112
  %v1307 = vpop.permute.xlu0 %1306
  %1308 = vrot.lane.b32.xlu0 %v440, 112
  %v1309 = vpop.permute.xlu0 %1308
  %1310 = vrot.lane.b32.xlu0 %v443, 112
  %v1311 = vpop.permute.xlu0 %1310
  %1312 = vrot.lane.b32.xlu0 %v445, 112
  %v1313 = vpop.permute.xlu0 %1312
  %1314 = vrot.lane.b32.xlu0 %v448, 112
  %v1315 = vpop.permute.xlu0 %1314
  %1316 = vrot.lane.b32.xlu0 %v423, 80
  %v1317 = vpop.permute.xlu0 %1316
  %1318 = vrot.lane.b32.xlu0 %v425, 80
  %v1319 = vpop.permute.xlu0 %1318
  %1320 = vrot.lane.b32.xlu0 %v428, 80
  %v1321 = vpop.permute.xlu0 %1320
  %1322 = vrot.lane.b32.xlu0 %v430, 80
  %v1323 = vpop.permute.xlu0 %1322
  %1324 = vrot.lane.b32.xlu0 %v433, 80
  %v1325 = vpop.permute.xlu0 %1324
  %1326 = vrot.lane.b32.xlu0 %v435, 80
  %v1327 = vpop.permute.xlu0 %1326
  %1328 = vrot.lane.b32.xlu0 %v438, 80
  %v1329 = vpop.permute.xlu0 %1328
  %1330 = vrot.lane.b32.xlu0 %v440, 80
  %v1331 = vpop.permute.xlu0 %1330
  %1332 = vrot.lane.b32.xlu0 %v443, 80
  %v1333 = vpop.permute.xlu0 %1332
  %1334 = vrot.lane.b32.xlu0 %v445, 80
  %v1335 = vpop.permute.xlu0 %1334
  %1336 = vrot.lane.b32.xlu0 %v448, 80
  %v1337 = vpop.permute.xlu0 %1336
  %v1338 = vsel %vm533, %v1295, 0
  %v1340 = vsel %vm533, %v1297, 0
  %v1342 = vsel %vm533, %v1299, 0
  %v1344 = vsel %vm533, %v1301, 0
  %v1346 = vsel %vm533, %v1303, 0
  %v1348 = vsel %vm533, %v1305, 0
  %v1350 = vsel %vm533, %v1307, 0
  %v1352 = vsel %vm533, %v1309, 0
  %v1354 = vsel %vm533, %v1311, 0
  %v1356 = vsel %vm533, %v1313, 0
  %v1358 = vsel %vm533, %v1315, 0
  %v1360 = vsel %vm533, %v1317, 0
  %v1362 = vsel %vm533, %v1319, 0
  %v1364 = vsel %vm533, %v1321, 0
  %v1366 = vsel %vm533, %v1323, 0
  %v1368 = vsel %vm533, %v1325, 0
  %v1370 = vsel %vm533, %v1327, 0
  %v1372 = vsel %vm533, %v1329, 0
  %v1374 = vsel %vm533, %v1331, 0
  %v1376 = vsel %vm533, %v1333, 0
  %v1378 = vsel %vm533, %v1335, 0
  %v1380 = vsel %vm533, %v1337, 0
  %1382 = vmatpush.xpose.msra.mxu0 0.0
  %1383 = vmatpush.xpose.msra.mxu0 0.0
  %1384 = vmatpush.xpose.msra.mxu0 0.0
  %1385 = vmatpush.xpose.msra.mxu0 0.0
  %1386 = vmatpush.xpose.msra.mxu0 0.0
  %1387 = vmatpush.xpose.msra.mxu0 %v1380
  %1388 = vmatpush.xpose.msra.mxu0 %v1378
  %1389 = vmatpush.xpose.msra.mxu0 %v1376
  %1390 = vmatpush.xpose.msra.mxu0 %v1374
  %1391 = vmatpush.xpose.msra.mxu0 %v1372
  %1392 = vmatpush.xpose.msra.mxu0 %v1370
  %1393 = vmatpush.xpose.msra.mxu0 %v1368
  %1394 = vmatpush.xpose.msra.mxu0 %v1366
  %1395 = vmatpush.xpose.msra.mxu0 %v1364
  %1396 = vmatpush.xpose.msra.mxu0 %v1362
  %1397 = vmatpush.xpose.msra.mxu0 %v1360
  %1398 = vmatmul.f32.gmra.mxu0 %v1338
  %v1399 = vpop.f32.mrf.mxu0
  %v1400 = vadd.f32 0.0, %v1399
  %1401 = vmatmul.f32.gmra.mxu0 %v1340
  %v1402 = vpop.f32.mrf.mxu0
  %v1403 = vadd.f32 0.0, %v1402
  %1404 = vmatmul.f32.gmra.mxu0 %v1342
  %v1405 = vpop.f32.mrf.mxu0
  %v1406 = vadd.f32 0.0, %v1405
  %1407 = vmatmul.f32.gmra.mxu0 %v1344
  %v1408 = vpop.f32.mrf.mxu0
  %v1409 = vadd.f32 0.0, %v1408
  %1410 = vmatmul.f32.gmra.mxu0 %v1346
  %v1411 = vpop.f32.mrf.mxu0
  %v1412 = vadd.f32 0.0, %v1411
  %1413 = vmatmul.f32.gmra.mxu0 %v1348
  %v1414 = vpop.f32.mrf.mxu0
  %v1415 = vadd.f32 0.0, %v1414
  %1416 = vmatmul.f32.gmra.mxu0 %v1350
  %v1417 = vpop.f32.mrf.mxu0
  %v1418 = vadd.f32 0.0, %v1417
  %1419 = vmatmul.f32.gmra.mxu0 %v1352
  %v1420 = vpop.f32.mrf.mxu0
  %v1421 = vadd.f32 0.0, %v1420
  %1422 = vmatmul.f32.gmra.mxu0 %v1354
  %v1423 = vpop.f32.mrf.mxu0
  %v1424 = vadd.f32 0.0, %v1423
  %1425 = vmatmul.f32.gmra.mxu0 %v1356
  %v1426 = vpop.f32.mrf.mxu0
  %v1427 = vadd.f32 0.0, %v1426
  %1428 = vmatmul.f32.gmra.mxu0 %v1358
  %v1429 = vpop.f32.mrf.mxu0
  %v1430 = vadd.f32 0.0, %v1429
  %1431 = vdwg.mxu0
  %v1432 = vsel %vm39, %v1400, -1e+30
  %v1433 = vsel %vm40, %v1403, -1e+30
  %v1434 = vsel %vm41, %v1406, -1e+30
  %v1435 = vsel %vm42, %v1409, -1e+30
  %v1436 = vsel %vm43, %v1412, -1e+30
  %v1437 = vsel %vm44, %v1415, -1e+30
  %v1438 = vsel %vm45, %v1418, -1e+30
  %v1439 = vsel %vm46, %v1421, -1e+30
  %v1440 = vsel %vm47, %v1424, -1e+30
  %v1441 = vsel %vm48, %v1427, -1e+30
  %v1442 = vsel %vm49, %v1430, -1e+30
  %v1443 = vsel %vm639, %v1432, -inf
  %1444 = vmax.xlane.f32.xlu0 %v1443
  %v1445 = vpop.xlane.xlu0 %1444
  %v1446 = vsel %vm639, %v1433, -inf
  %1447 = vmax.xlane.f32.xlu0 %v1446
  %v1448 = vpop.xlane.xlu0 %1447
  %v1449 = vsel %vm639, %v1434, -inf
  %1450 = vmax.xlane.f32.xlu0 %v1449
  %v1451 = vpop.xlane.xlu0 %1450
  %v1452 = vsel %vm639, %v1435, -inf
  %1453 = vmax.xlane.f32.xlu0 %v1452
  %v1454 = vpop.xlane.xlu0 %1453
  %v1455 = vsel %vm639, %v1436, -inf
  %1456 = vmax.xlane.f32.xlu0 %v1455
  %v1457 = vpop.xlane.xlu0 %1456
  %v1458 = vsel %vm639, %v1437, -inf
  %1459 = vmax.xlane.f32.xlu0 %v1458
  %v1460 = vpop.xlane.xlu0 %1459
  %v1461 = vsel %vm639, %v1438, -inf
  %1462 = vmax.xlane.f32.xlu0 %v1461
  %v1463 = vpop.xlane.xlu0 %1462
  %v1464 = vsel %vm639, %v1439, -inf
  %1465 = vmax.xlane.f32.xlu0 %v1464
  %v1466 = vpop.xlane.xlu0 %1465
  %v1467 = vsel %vm639, %v1440, -inf
  %1468 = vmax.xlane.f32.xlu0 %v1467
  %v1469 = vpop.xlane.xlu0 %1468
  %v1470 = vsel %vm639, %v1441, -inf
  %1471 = vmax.xlane.f32.xlu0 %v1470
  %v1472 = vpop.xlane.xlu0 %1471
  %v1473 = vsel %vm670, %v1442, -inf
  %1474 = vmax.xlane.f32.xlu0 %v1473
  %v1475 = vpop.xlane.xlu0 %1474
  %v1476 = vsub.f32 %v1432, %v1445
  %v1477 = vsub.f32 %v1433, %v1448
  %v1478 = vsub.f32 %v1434, %v1451
  %v1479 = vsub.f32 %v1435, %v1454
  %v1480 = vsub.f32 %v1436, %v1457
  %v1481 = vsub.f32 %v1437, %v1460
  %v1482 = vsub.f32 %v1438, %v1463
  %v1483 = vsub.f32 %v1439, %v1466
  %v1484 = vsub.f32 %v1440, %v1469
  %v1485 = vsub.f32 %v1441, %v1472
  %v1486 = vsub.f32 %v1442, %v1475
  %v1487 = vpack.c.bf16 %v1477, %v1476
  %v1488 = vpack.c.bf16 %v1479, %v1478
  %v1489 = vpack.c.bf16 %v1481, %v1480
  %v1490 = vpack.c.bf16 %v1483, %v1482
  %v1491 = vpack.c.bf16 %v1485, %v1484
  %v1492 = vpack.c.bf16 %v1486, %v1486
  %v1493 = vunpack.c.l.bf16 %v1487
  %v1494 = vunpack.c.h.bf16 %v1487
  %v1495 = vunpack.c.l.bf16 %v1488
  %v1496 = vunpack.c.h.bf16 %v1488
  %v1497 = vunpack.c.l.bf16 %v1489
  %v1498 = vunpack.c.h.bf16 %v1489
  %v1499 = vunpack.c.l.bf16 %v1490
  %v1500 = vunpack.c.h.bf16 %v1490
  %v1501 = vunpack.c.l.bf16 %v1491
  %v1502 = vunpack.c.h.bf16 %v1491
  %v1503 = vunpack.c.l.bf16 %v1492
  %v1504 = vmul.f32 %v1493, 1.442695
  %v1505 = vpow.pop %v1504
  %v1506 = vmul.f32 %v1494, 1.442695
  %v1507 = vpow.pop %v1506
  %v1508 = vmul.f32 %v1495, 1.442695
  %v1509 = vpow.pop %v1508
  %v1510 = vmul.f32 %v1496, 1.442695
  %v1511 = vpow.pop %v1510
  %v1512 = vmul.f32 %v1497, 1.442695
  %v1513 = vpow.pop %v1512
  %v1514 = vmul.f32 %v1498, 1.442695
  %v1515 = vpow.pop %v1514
  %v1516 = vmul.f32 %v1499, 1.442695
  %v1517 = vpow.pop %v1516
  %v1518 = vmul.f32 %v1500, 1.442695
  %v1519 = vpow.pop %v1518
  %v1520 = vmul.f32 %v1501, 1.442695
  %v1521 = vpow.pop %v1520
  %v1522 = vmul.f32 %v1502, 1.442695
  %v1523 = vpow.pop %v1522
  %v1524 = vmul.f32 %v1503, 1.442695
  %v1525 = vpow.pop %v1524
  %v1526 = vpack.c.bf16 %v1507, %v1505
  %v1527 = vpack.c.bf16 %v1511, %v1509
  %v1528 = vpack.c.bf16 %v1515, %v1513
  %v1529 = vpack.c.bf16 %v1519, %v1517
  %v1530 = vpack.c.bf16 %v1523, %v1521
  %v1531 = vpack.c.bf16 %v1525, %v1525
  %v1532 = vunpack.c.l.bf16 %v1526
  %v1533 = vunpack.c.h.bf16 %v1526
  %v1534 = vunpack.c.l.bf16 %v1527
  %v1535 = vunpack.c.h.bf16 %v1527
  %v1536 = vunpack.c.l.bf16 %v1528
  %v1537 = vunpack.c.h.bf16 %v1528
  %v1538 = vunpack.c.l.bf16 %v1529
  %v1539 = vunpack.c.h.bf16 %v1529
  %v1540 = vunpack.c.l.bf16 %v1530
  %v1541 = vunpack.c.h.bf16 %v1530
  %v1542 = vunpack.c.l.bf16 %v1531
  %v1543 = vsel %vm639, %v1532, 0.0
  %1544 = vadd.xlane.f32.xlu0 %v1543
  %v1545 = vpop.xlane.xlu0 %1544
  %v1546 = vsel %vm639, %v1533, 0.0
  %1547 = vadd.xlane.f32.xlu0 %v1546
  %v1548 = vpop.xlane.xlu0 %1547
  %v1549 = vsel %vm639, %v1534, 0.0
  %1550 = vadd.xlane.f32.xlu0 %v1549
  %v1551 = vpop.xlane.xlu0 %1550
  %v1552 = vsel %vm639, %v1535, 0.0
  %1553 = vadd.xlane.f32.xlu0 %v1552
  %v1554 = vpop.xlane.xlu0 %1553
  %v1555 = vsel %vm639, %v1536, 0.0
  %1556 = vadd.xlane.f32.xlu0 %v1555
  %v1557 = vpop.xlane.xlu0 %1556
  %v1558 = vsel %vm639, %v1537, 0.0
  %1559 = vadd.xlane.f32.xlu0 %v1558
  %v1560 = vpop.xlane.xlu0 %1559
  %v1561 = vsel %vm639, %v1538, 0.0
  %1562 = vadd.xlane.f32.xlu0 %v1561
  %v1563 = vpop.xlane.xlu0 %1562
  %v1564 = vsel %vm639, %v1539, 0.0
  %1565 = vadd.xlane.f32.xlu0 %v1564
  %v1566 = vpop.xlane.xlu0 %1565
  %v1567 = vsel %vm639, %v1540, 0.0
  %1568 = vadd.xlane.f32.xlu0 %v1567
  %v1569 = vpop.xlane.xlu0 %1568
  %v1570 = vsel %vm639, %v1541, 0.0
  %1571 = vadd.xlane.f32.xlu0 %v1570
  %v1572 = vpop.xlane.xlu0 %1571
  %v1573 = vsel %vm670, %v1542, 0.0
  %1574 = vadd.xlane.f32.xlu0 %v1573
  %v1575 = vpop.xlane.xlu0 %1574
  %v1576 = vrcp.pop %v1545
  %v1577 = vrcp.pop %v1548
  %v1578 = vrcp.pop %v1551
  %v1579 = vrcp.pop %v1554
  %v1580 = vrcp.pop %v1557
  %v1581 = vrcp.pop %v1560
  %v1582 = vrcp.pop %v1563
  %v1583 = vrcp.pop %v1566
  %v1584 = vrcp.pop %v1569
  %v1585 = vrcp.pop %v1572
  %v1586 = vrcp.pop %v1575
  %v1587 = vunpack.c.h.b16 %v489
  %v1588 = vunpack.c.h.b16 %v490
  %v1589 = vunpack.c.h.b16 %v491
  %v1590 = vunpack.c.h.b16 %v492
  %v1591 = vunpack.c.h.b16 %v493
  %v1592 = vunpack.c.h.b16 %v494
  %v1593 = vunpack.c.h.b16 %v495
  %v1594 = vunpack.c.h.b16 %v496
  %v1595 = vunpack.c.h.b16 %v497
  %v1596 = vunpack.c.h.b16 %v498
  %v1597 = vunpack.c.h.b16 %v499
  %v1598 = vpack.c.b16 %v1588, %v1587
  %v1599 = vpack.c.b16 %v1590, %v1589
  %v1600 = vpack.c.b16 %v1592, %v1591
  %v1601 = vpack.c.b16 %v1594, %v1593
  %v1602 = vpack.c.b16 %v1596, %v1595
  %v1603 = vpack.c.b16 %v1597, %v1597
  %v1610 = vsel %vm639, %v1526, 0
  %v1613 = vsel %vm639, %v1527, 0
  %v1616 = vsel %vm639, %v1528, 0
  %v1619 = vsel %vm639, %v1529, 0
  %v1622 = vsel %vm639, %v1530, 0
  %v1625 = vsel %vm639, %v1531, 0
  %v1628 = vand.u32 %v1603, %v850
  %1630 = vmatpush.bf16.msra.mxu0 0
  %1631 = vmatpush.bf16.msra.mxu0 0
  %1632 = vmatpush.bf16.msra.mxu0 %v1628
  %1633 = vmatpush.bf16.msra.mxu0 %v1602
  %1634 = vmatpush.bf16.msra.mxu0 %v1601
  %1635 = vmatpush.bf16.msra.mxu0 %v1600
  %1636 = vmatpush.bf16.msra.mxu0 %v1599
  %1637 = vmatpush.bf16.msra.mxu0 %v1598
  %1638 = vmatmul.bf16.gmra.mxu0 %v1610
  %v1639 = vpop.f32.mrf.mxu0
  %v1640 = vadd.f32 0.0, %v1639
  %v1641 = vpop.f32.mrf.mxu0
  %v1642 = vadd.f32 0.0, %v1641
  %1643 = vmatmul.bf16.gmra.mxu0 %v1613
  %v1644 = vpop.f32.mrf.mxu0
  %v1645 = vadd.f32 0.0, %v1644
  %v1646 = vpop.f32.mrf.mxu0
  %v1647 = vadd.f32 0.0, %v1646
  %1648 = vmatmul.bf16.gmra.mxu0 %v1616
  %v1649 = vpop.f32.mrf.mxu0
  %v1650 = vadd.f32 0.0, %v1649
  %v1651 = vpop.f32.mrf.mxu0
  %v1652 = vadd.f32 0.0, %v1651
  %1653 = vmatmul.bf16.gmra.mxu0 %v1619
  %v1654 = vpop.f32.mrf.mxu0
  %v1655 = vadd.f32 0.0, %v1654
  %v1656 = vpop.f32.mrf.mxu0
  %v1657 = vadd.f32 0.0, %v1656
  %1658 = vmatmul.bf16.gmra.mxu0 %v1622
  %v1659 = vpop.f32.mrf.mxu0
  %v1660 = vadd.f32 0.0, %v1659
  %v1661 = vpop.f32.mrf.mxu0
  %v1662 = vadd.f32 0.0, %v1661
  %1663 = vmatmul.bf16.gmra.mxu0 %v1625
  %v1664 = vpop.f32.mrf.mxu0
  %v1665 = vadd.f32 0.0, %v1664
  %v1666 = vpop.f32.mrf.mxu0
  %1667 = vdwg.mxu0
  %v1668 = vmul.f32 %v1640, %v1576
  %v1669 = vmul.f32 %v1642, %v1577
  %v1670 = vmul.f32 %v1645, %v1578
  %v1671 = vmul.f32 %v1647, %v1579
  %v1672 = vmul.f32 %v1650, %v1580
  %v1673 = vmul.f32 %v1652, %v1581
  %v1674 = vmul.f32 %v1655, %v1582
  %v1675 = vmul.f32 %v1657, %v1583
  %v1676 = vmul.f32 %v1660, %v1584
  %v1677 = vmul.f32 %v1662, %v1585
  %v1678 = vmul.f32 %v1665, %v1586
  %v1679 = vadd.f32 %v1283, %v1668
  %v1680 = vadd.f32 %v1284, %v1669
  %v1681 = vadd.f32 %v1285, %v1670
  %v1682 = vadd.f32 %v1286, %v1671
  %v1683 = vadd.f32 %v1287, %v1672
  %v1684 = vadd.f32 %v1288, %v1673
  %v1685 = vadd.f32 %v1289, %v1674
  %v1686 = vadd.f32 %v1290, %v1675
  %v1687 = vadd.f32 %v1291, %v1676
  %v1688 = vadd.f32 %v1292, %v1677
  %v1689 = vadd.f32 %v1293, %v1678
  %1690 = vrot.lane.b32.xlu0 %v423, 104
  %v1691 = vpop.permute.xlu0 %1690
  %1692 = vrot.lane.b32.xlu0 %v425, 104
  %v1693 = vpop.permute.xlu0 %1692
  %1694 = vrot.lane.b32.xlu0 %v428, 104
  %v1695 = vpop.permute.xlu0 %1694
  %1696 = vrot.lane.b32.xlu0 %v430, 104
  %v1697 = vpop.permute.xlu0 %1696
  %1698 = vrot.lane.b32.xlu0 %v433, 104
  %v1699 = vpop.permute.xlu0 %1698
  %1700 = vrot.lane.b32.xlu0 %v435, 104
  %v1701 = vpop.permute.xlu0 %1700
  %1702 = vrot.lane.b32.xlu0 %v438, 104
  %v1703 = vpop.permute.xlu0 %1702
  %1704 = vrot.lane.b32.xlu0 %v440, 104
  %v1705 = vpop.permute.xlu0 %1704
  %1706 = vrot.lane.b32.xlu0 %v443, 104
  %v1707 = vpop.permute.xlu0 %1706
  %1708 = vrot.lane.b32.xlu0 %v445, 104
  %v1709 = vpop.permute.xlu0 %1708
  %1710 = vrot.lane.b32.xlu0 %v448, 104
  %v1711 = vpop.permute.xlu0 %1710
  %1712 = vrot.lane.b32.xlu0 %v423, 72
  %v1713 = vpop.permute.xlu0 %1712
  %1714 = vrot.lane.b32.xlu0 %v425, 72
  %v1715 = vpop.permute.xlu0 %1714
  %1716 = vrot.lane.b32.xlu0 %v428, 72
  %v1717 = vpop.permute.xlu0 %1716
  %1718 = vrot.lane.b32.xlu0 %v430, 72
  %v1719 = vpop.permute.xlu0 %1718
  %1720 = vrot.lane.b32.xlu0 %v433, 72
  %v1721 = vpop.permute.xlu0 %1720
  %1722 = vrot.lane.b32.xlu0 %v435, 72
  %v1723 = vpop.permute.xlu0 %1722
  %1724 = vrot.lane.b32.xlu0 %v438, 72
  %v1725 = vpop.permute.xlu0 %1724
  %1726 = vrot.lane.b32.xlu0 %v440, 72
  %v1727 = vpop.permute.xlu0 %1726
  %1728 = vrot.lane.b32.xlu0 %v443, 72
  %v1729 = vpop.permute.xlu0 %1728
  %1730 = vrot.lane.b32.xlu0 %v445, 72
  %v1731 = vpop.permute.xlu0 %1730
  %1732 = vrot.lane.b32.xlu0 %v448, 72
  %v1733 = vpop.permute.xlu0 %1732
  %v1734 = vsel %vm533, %v1691, 0
  %v1736 = vsel %vm533, %v1693, 0
  %v1738 = vsel %vm533, %v1695, 0
  %v1740 = vsel %vm533, %v1697, 0
  %v1742 = vsel %vm533, %v1699, 0
  %v1744 = vsel %vm533, %v1701, 0
  %v1746 = vsel %vm533, %v1703, 0
  %v1748 = vsel %vm533, %v1705, 0
  %v1750 = vsel %vm533, %v1707, 0
  %v1752 = vsel %vm533, %v1709, 0
  %v1754 = vsel %vm533, %v1711, 0
  %v1756 = vsel %vm533, %v1713, 0
  %v1758 = vsel %vm533, %v1715, 0
  %v1760 = vsel %vm533, %v1717, 0
  %v1762 = vsel %vm533, %v1719, 0
  %v1764 = vsel %vm533, %v1721, 0
  %v1766 = vsel %vm533, %v1723, 0
  %v1768 = vsel %vm533, %v1725, 0
  %v1770 = vsel %vm533, %v1727, 0
  %v1772 = vsel %vm533, %v1729, 0
  %v1774 = vsel %vm533, %v1731, 0
  %v1776 = vsel %vm533, %v1733, 0
  %1778 = vmatpush.xpose.msra.mxu0 0.0
  %1779 = vmatpush.xpose.msra.mxu0 0.0
  %1780 = vmatpush.xpose.msra.mxu0 0.0
  %1781 = vmatpush.xpose.msra.mxu0 0.0
  %1782 = vmatpush.xpose.msra.mxu0 0.0
  %1783 = vmatpush.xpose.msra.mxu0 %v1776
  %1784 = vmatpush.xpose.msra.mxu0 %v1774
  %1785 = vmatpush.xpose.msra.mxu0 %v1772
  %1786 = vmatpush.xpose.msra.mxu0 %v1770
  %1787 = vmatpush.xpose.msra.mxu0 %v1768
  %1788 = vmatpush.xpose.msra.mxu0 %v1766
  %1789 = vmatpush.xpose.msra.mxu0 %v1764
  %1790 = vmatpush.xpose.msra.mxu0 %v1762
  %1791 = vmatpush.xpose.msra.mxu0 %v1760
  %1792 = vmatpush.xpose.msra.mxu0 %v1758
  %1793 = vmatpush.xpose.msra.mxu0 %v1756
  %1794 = vmatmul.f32.gmra.mxu0 %v1734
  %v1795 = vpop.f32.mrf.mxu0
  %v1796 = vadd.f32 0.0, %v1795
  %1797 = vmatmul.f32.gmra.mxu0 %v1736
  %v1798 = vpop.f32.mrf.mxu0
  %v1799 = vadd.f32 0.0, %v1798
  %1800 = vmatmul.f32.gmra.mxu0 %v1738
  %v1801 = vpop.f32.mrf.mxu0
  %v1802 = vadd.f32 0.0, %v1801
  %1803 = vmatmul.f32.gmra.mxu0 %v1740
  %v1804 = vpop.f32.mrf.mxu0
  %v1805 = vadd.f32 0.0, %v1804
  %1806 = vmatmul.f32.gmra.mxu0 %v1742
  %v1807 = vpop.f32.mrf.mxu0
  %v1808 = vadd.f32 0.0, %v1807
  %1809 = vmatmul.f32.gmra.mxu0 %v1744
  %v1810 = vpop.f32.mrf.mxu0
  %v1811 = vadd.f32 0.0, %v1810
  %1812 = vmatmul.f32.gmra.mxu0 %v1746
  %v1813 = vpop.f32.mrf.mxu0
  %v1814 = vadd.f32 0.0, %v1813
  %1815 = vmatmul.f32.gmra.mxu0 %v1748
  %v1816 = vpop.f32.mrf.mxu0
  %v1817 = vadd.f32 0.0, %v1816
  %1818 = vmatmul.f32.gmra.mxu0 %v1750
  %v1819 = vpop.f32.mrf.mxu0
  %v1820 = vadd.f32 0.0, %v1819
  %1821 = vmatmul.f32.gmra.mxu0 %v1752
  %v1822 = vpop.f32.mrf.mxu0
  %v1823 = vadd.f32 0.0, %v1822
  %1824 = vmatmul.f32.gmra.mxu0 %v1754
  %v1825 = vpop.f32.mrf.mxu0
  %v1826 = vadd.f32 0.0, %v1825
  %1827 = vdwg.mxu0
  %v1828 = vsel %vm39, %v1796, -1e+30
  %v1829 = vsel %vm40, %v1799, -1e+30
  %v1830 = vsel %vm41, %v1802, -1e+30
  %v1831 = vsel %vm42, %v1805, -1e+30
  %v1832 = vsel %vm43, %v1808, -1e+30
  %v1833 = vsel %vm44, %v1811, -1e+30
  %v1834 = vsel %vm45, %v1814, -1e+30
  %v1835 = vsel %vm46, %v1817, -1e+30
  %v1836 = vsel %vm47, %v1820, -1e+30
  %v1837 = vsel %vm48, %v1823, -1e+30
  %v1838 = vsel %vm49, %v1826, -1e+30
  %v1839 = vsel %vm639, %v1828, -inf
  %1840 = vmax.xlane.f32.xlu0 %v1839
  %v1841 = vpop.xlane.xlu0 %1840
  %v1842 = vsel %vm639, %v1829, -inf
  %1843 = vmax.xlane.f32.xlu0 %v1842
  %v1844 = vpop.xlane.xlu0 %1843
  %v1845 = vsel %vm639, %v1830, -inf
  %1846 = vmax.xlane.f32.xlu0 %v1845
  %v1847 = vpop.xlane.xlu0 %1846
  %v1848 = vsel %vm639, %v1831, -inf
  %1849 = vmax.xlane.f32.xlu0 %v1848
  %v1850 = vpop.xlane.xlu0 %1849
  %v1851 = vsel %vm639, %v1832, -inf
  %1852 = vmax.xlane.f32.xlu0 %v1851
  %v1853 = vpop.xlane.xlu0 %1852
  %v1854 = vsel %vm639, %v1833, -inf
  %1855 = vmax.xlane.f32.xlu0 %v1854
  %v1856 = vpop.xlane.xlu0 %1855
  %v1857 = vsel %vm639, %v1834, -inf
  %1858 = vmax.xlane.f32.xlu0 %v1857
  %v1859 = vpop.xlane.xlu0 %1858
  %v1860 = vsel %vm639, %v1835, -inf
  %1861 = vmax.xlane.f32.xlu0 %v1860
  %v1862 = vpop.xlane.xlu0 %1861
  %v1863 = vsel %vm639, %v1836, -inf
  %1864 = vmax.xlane.f32.xlu0 %v1863
  %v1865 = vpop.xlane.xlu0 %1864
  %v1866 = vsel %vm639, %v1837, -inf
  %1867 = vmax.xlane.f32.xlu0 %v1866
  %v1868 = vpop.xlane.xlu0 %1867
  %v1869 = vsel %vm670, %v1838, -inf
  %1870 = vmax.xlane.f32.xlu0 %v1869
  %v1871 = vpop.xlane.xlu0 %1870
  %v1872 = vsub.f32 %v1828, %v1841
  %v1873 = vsub.f32 %v1829, %v1844
  %v1874 = vsub.f32 %v1830, %v1847
  %v1875 = vsub.f32 %v1831, %v1850
  %v1876 = vsub.f32 %v1832, %v1853
  %v1877 = vsub.f32 %v1833, %v1856
  %v1878 = vsub.f32 %v1834, %v1859
  %v1879 = vsub.f32 %v1835, %v1862
  %v1880 = vsub.f32 %v1836, %v1865
  %v1881 = vsub.f32 %v1837, %v1868
  %v1882 = vsub.f32 %v1838, %v1871
  %v1883 = vpack.c.bf16 %v1873, %v1872
  %v1884 = vpack.c.bf16 %v1875, %v1874
  %v1885 = vpack.c.bf16 %v1877, %v1876
  %v1886 = vpack.c.bf16 %v1879, %v1878
  %v1887 = vpack.c.bf16 %v1881, %v1880
  %v1888 = vpack.c.bf16 %v1882, %v1882
  %v1889 = vunpack.c.l.bf16 %v1883
  %v1890 = vunpack.c.h.bf16 %v1883
  %v1891 = vunpack.c.l.bf16 %v1884
  %v1892 = vunpack.c.h.bf16 %v1884
  %v1893 = vunpack.c.l.bf16 %v1885
  %v1894 = vunpack.c.h.bf16 %v1885
  %v1895 = vunpack.c.l.bf16 %v1886
  %v1896 = vunpack.c.h.bf16 %v1886
  %v1897 = vunpack.c.l.bf16 %v1887
  %v1898 = vunpack.c.h.bf16 %v1887
  %v1899 = vunpack.c.l.bf16 %v1888
  %v1900 = vmul.f32 %v1889, 1.442695
  %v1901 = vpow.pop %v1900
  %v1902 = vmul.f32 %v1890, 1.442695
  %v1903 = vpow.pop %v1902
  %v1904 = vmul.f32 %v1891, 1.442695
  %v1905 = vpow.pop %v1904
  %v1906 = vmul.f32 %v1892, 1.442695
  %v1907 = vpow.pop %v1906
  %v1908 = vmul.f32 %v1893, 1.442695
  %v1909 = vpow.pop %v1908
  %v1910 = vmul.f32 %v1894, 1.442695
  %v1911 = vpow.pop %v1910
  %v1912 = vmul.f32 %v1895, 1.442695
  %v1913 = vpow.pop %v1912
  %v1914 = vmul.f32 %v1896, 1.442695
  %v1915 = vpow.pop %v1914
  %v1916 = vmul.f32 %v1897, 1.442695
  %v1917 = vpow.pop %v1916
  %v1918 = vmul.f32 %v1898, 1.442695
  %v1919 = vpow.pop %v1918
  %v1920 = vmul.f32 %v1899, 1.442695
  %v1921 = vpow.pop %v1920
  %v1922 = vpack.c.bf16 %v1903, %v1901
  %v1923 = vpack.c.bf16 %v1907, %v1905
  %v1924 = vpack.c.bf16 %v1911, %v1909
  %v1925 = vpack.c.bf16 %v1915, %v1913
  %v1926 = vpack.c.bf16 %v1919, %v1917
  %v1927 = vpack.c.bf16 %v1921, %v1921
  %v1928 = vunpack.c.l.bf16 %v1922
  %v1929 = vunpack.c.h.bf16 %v1922
  %v1930 = vunpack.c.l.bf16 %v1923
  %v1931 = vunpack.c.h.bf16 %v1923
  %v1932 = vunpack.c.l.bf16 %v1924
  %v1933 = vunpack.c.h.bf16 %v1924
  %v1934 = vunpack.c.l.bf16 %v1925
  %v1935 = vunpack.c.h.bf16 %v1925
  %v1936 = vunpack.c.l.bf16 %v1926
  %v1937 = vunpack.c.h.bf16 %v1926
  %v1938 = vunpack.c.l.bf16 %v1927
  %v1939 = vsel %vm639, %v1928, 0.0
  %1940 = vadd.xlane.f32.xlu0 %v1939
  %v1941 = vpop.xlane.xlu0 %1940
  %v1942 = vsel %vm639, %v1929, 0.0
  %1943 = vadd.xlane.f32.xlu0 %v1942
  %v1944 = vpop.xlane.xlu0 %1943
  %v1945 = vsel %vm639, %v1930, 0.0
  %1946 = vadd.xlane.f32.xlu0 %v1945
  %v1947 = vpop.xlane.xlu0 %1946
  %v1948 = vsel %vm639, %v1931, 0.0
  %1949 = vadd.xlane.f32.xlu0 %v1948
  %v1950 = vpop.xlane.xlu0 %1949
  %v1951 = vsel %vm639, %v1932, 0.0
  %1952 = vadd.xlane.f32.xlu0 %v1951
  %v1953 = vpop.xlane.xlu0 %1952
  %v1954 = vsel %vm639, %v1933, 0.0
  %1955 = vadd.xlane.f32.xlu0 %v1954
  %v1956 = vpop.xlane.xlu0 %1955
  %v1957 = vsel %vm639, %v1934, 0.0
  %1958 = vadd.xlane.f32.xlu0 %v1957
  %v1959 = vpop.xlane.xlu0 %1958
  %v1960 = vsel %vm639, %v1935, 0.0
  %1961 = vadd.xlane.f32.xlu0 %v1960
  %v1962 = vpop.xlane.xlu0 %1961
  %v1963 = vsel %vm639, %v1936, 0.0
  %1964 = vadd.xlane.f32.xlu0 %v1963
  %v1965 = vpop.xlane.xlu0 %1964
  %v1966 = vsel %vm639, %v1937, 0.0
  %1967 = vadd.xlane.f32.xlu0 %v1966
  %v1968 = vpop.xlane.xlu0 %1967
  %v1969 = vsel %vm670, %v1938, 0.0
  %1970 = vadd.xlane.f32.xlu0 %v1969
  %v1971 = vpop.xlane.xlu0 %1970
  %v1972 = vrcp.pop %v1941
  %v1973 = vrcp.pop %v1944
  %v1974 = vrcp.pop %v1947
  %v1975 = vrcp.pop %v1950
  %v1976 = vrcp.pop %v1953
  %v1977 = vrcp.pop %v1956
  %v1978 = vrcp.pop %v1959
  %v1979 = vrcp.pop %v1962
  %v1980 = vrcp.pop %v1965
  %v1981 = vrcp.pop %v1968
  %v1982 = vrcp.pop %v1971
  %1983 = vrot.lane.b32.xlu0 %v1598, 96
  %v1984 = vpop.permute.xlu0 %1983
  %1985 = vrot.lane.b32.xlu0 %v1599, 96
  %v1986 = vpop.permute.xlu0 %1985
  %1987 = vrot.lane.b32.xlu0 %v1600, 96
  %v1988 = vpop.permute.xlu0 %1987
  %1989 = vrot.lane.b32.xlu0 %v1601, 96
  %v1990 = vpop.permute.xlu0 %1989
  %1991 = vrot.lane.b32.xlu0 %v1602, 96
  %v1992 = vpop.permute.xlu0 %1991
  %1993 = vrot.lane.b32.xlu0 %v1603, 96
  %v1994 = vpop.permute.xlu0 %1993
  %v2001 = vsel %vm639, %v1922, 0
  %v2004 = vsel %vm639, %v1923, 0
  %v2007 = vsel %vm639, %v1924, 0
  %v2010 = vsel %vm639, %v1925, 0
  %v2013 = vsel %vm639, %v1926, 0
  %v2016 = vsel %vm639, %v1927, 0
  %v2019 = vand.u32 %v1994, %v850
  %2021 = vmatpush.bf16.msra.mxu0 0
  %2022 = vmatpush.bf16.msra.mxu0 0
  %2023 = vmatpush.bf16.msra.mxu0 %v2019
  %2024 = vmatpush.bf16.msra.mxu0 %v1992
  %2025 = vmatpush.bf16.msra.mxu0 %v1990
  %2026 = vmatpush.bf16.msra.mxu0 %v1988
  %2027 = vmatpush.bf16.msra.mxu0 %v1986
  %2028 = vmatpush.bf16.msra.mxu0 %v1984
  %2029 = vmatmul.bf16.gmra.mxu0 %v2001
  %v2030 = vpop.f32.mrf.mxu0
  %v2031 = vadd.f32 0.0, %v2030
  %v2032 = vpop.f32.mrf.mxu0
  %v2033 = vadd.f32 0.0, %v2032
  %2034 = vmatmul.bf16.gmra.mxu0 %v2004
  %v2035 = vpop.f32.mrf.mxu0
  %v2036 = vadd.f32 0.0, %v2035
  %v2037 = vpop.f32.mrf.mxu0
  %v2038 = vadd.f32 0.0, %v2037
  %2039 = vmatmul.bf16.gmra.mxu0 %v2007
  %v2040 = vpop.f32.mrf.mxu0
  %v2041 = vadd.f32 0.0, %v2040
  %v2042 = vpop.f32.mrf.mxu0
  %v2043 = vadd.f32 0.0, %v2042
  %2044 = vmatmul.bf16.gmra.mxu0 %v2010
  %v2045 = vpop.f32.mrf.mxu0
  %v2046 = vadd.f32 0.0, %v2045
  %v2047 = vpop.f32.mrf.mxu0
  %v2048 = vadd.f32 0.0, %v2047
  %2049 = vmatmul.bf16.gmra.mxu0 %v2013
  %v2050 = vpop.f32.mrf.mxu0
  %v2051 = vadd.f32 0.0, %v2050
  %v2052 = vpop.f32.mrf.mxu0
  %v2053 = vadd.f32 0.0, %v2052
  %2054 = vmatmul.bf16.gmra.mxu0 %v2016
  %v2055 = vpop.f32.mrf.mxu0
  %v2056 = vadd.f32 0.0, %v2055
  %v2057 = vpop.f32.mrf.mxu0
  %2058 = vdwg.mxu0
  %v2059 = vmul.f32 %v2031, %v1972
  %v2060 = vmul.f32 %v2033, %v1973
  %v2061 = vmul.f32 %v2036, %v1974
  %v2062 = vmul.f32 %v2038, %v1975
  %v2063 = vmul.f32 %v2041, %v1976
  %v2064 = vmul.f32 %v2043, %v1977
  %v2065 = vmul.f32 %v2046, %v1978
  %v2066 = vmul.f32 %v2048, %v1979
  %v2067 = vmul.f32 %v2051, %v1980
  %v2068 = vmul.f32 %v2053, %v1981
  %v2069 = vmul.f32 %v2056, %v1982
  %v2070 = vadd.f32 %v1679, %v2059
  %v2071 = vadd.f32 %v1680, %v2060
  %v2072 = vadd.f32 %v1681, %v2061
  %v2073 = vadd.f32 %v1682, %v2062
  %v2074 = vadd.f32 %v1683, %v2063
  %v2075 = vadd.f32 %v1684, %v2064
  %v2076 = vadd.f32 %v1685, %v2065
  %v2077 = vadd.f32 %v1686, %v2066
  %v2078 = vadd.f32 %v1687, %v2067
  %v2079 = vadd.f32 %v1688, %v2068
  %v2080 = vadd.f32 %v1689, %v2069
  %v2081 = vadd.f32 %v77, %v2070
  %v2082 = vadd.f32 %v78, %v2071
  %v2083 = vadd.f32 %v79, %v2072
  %v2084 = vadd.f32 %v80, %v2073
  %v2085 = vadd.f32 %v81, %v2074
  %v2086 = vadd.f32 %v82, %v2075
  %v2087 = vadd.f32 %v83, %v2076
  %v2088 = vadd.f32 %v84, %v2077
  %v2089 = vadd.f32 %v85, %v2078
  %v2090 = vadd.f32 %v86, %v2079
  %v2091 = vadd.f32 %v87, %v2080
  %v2092 = vperm.slane %v50, 3
  %v2093 = vadd.f32 %v2081, %v2092
  %v2094 = vadd.f32 %v2082, %v2092
  %v2095 = vadd.f32 %v2083, %v2092
  %v2096 = vadd.f32 %v2084, %v2092
  %v2097 = vadd.f32 %v2085, %v2092
  %v2098 = vadd.f32 %v2086, %v2092
  %v2099 = vadd.f32 %v2087, %v2092
  %v2100 = vadd.f32 %v2088, %v2092
  %v2101 = vadd.f32 %v2089, %v2092
  %v2102 = vadd.f32 %v2090, %v2092
  %v2103 = vadd.f32 %v2091, %v2092
  %v2104 = vsel %vm88, %v2093, 0.0
  %2105 = vadd.xlane.f32.xlu0 %v2104
  %v2106 = vpop.xlane.xlu0 %2105
  %v2107 = vsel %vm88, %v2094, 0.0
  %2108 = vadd.xlane.f32.xlu0 %v2107
  %v2109 = vpop.xlane.xlu0 %2108
  %v2110 = vsel %vm88, %v2095, 0.0
  %2111 = vadd.xlane.f32.xlu0 %v2110
  %v2112 = vpop.xlane.xlu0 %2111
  %v2113 = vsel %vm88, %v2096, 0.0
  %2114 = vadd.xlane.f32.xlu0 %v2113
  %v2115 = vpop.xlane.xlu0 %2114
  %v2116 = vsel %vm88, %v2097, 0.0
  %2117 = vadd.xlane.f32.xlu0 %v2116
  %v2118 = vpop.xlane.xlu0 %2117
  %v2119 = vsel %vm88, %v2098, 0.0
  %2120 = vadd.xlane.f32.xlu0 %v2119
  %v2121 = vpop.xlane.xlu0 %2120
  %v2122 = vsel %vm88, %v2099, 0.0
  %2123 = vadd.xlane.f32.xlu0 %v2122
  %v2124 = vpop.xlane.xlu0 %2123
  %v2125 = vsel %vm88, %v2100, 0.0
  %2126 = vadd.xlane.f32.xlu0 %v2125
  %v2127 = vpop.xlane.xlu0 %2126
  %v2128 = vsel %vm88, %v2101, 0.0
  %2129 = vadd.xlane.f32.xlu0 %v2128
  %v2130 = vpop.xlane.xlu0 %2129
  %v2131 = vsel %vm88, %v2102, 0.0
  %2132 = vadd.xlane.f32.xlu0 %v2131
  %v2133 = vpop.xlane.xlu0 %2132
  %v2134 = vsel %vm119, %v2103, 0.0
  %2135 = vadd.xlane.f32.xlu0 %v2134
  %v2136 = vpop.xlane.xlu0 %2135
  %v2137 = vmul.f32 %v2106, %v129
  %v2138 = vmul.f32 %v2109, %v129
  %v2139 = vmul.f32 %v2112, %v129
  %v2140 = vmul.f32 %v2115, %v129
  %v2141 = vmul.f32 %v2118, %v129
  %v2142 = vmul.f32 %v2121, %v129
  %v2143 = vmul.f32 %v2124, %v129
  %v2144 = vmul.f32 %v2127, %v129
  %v2145 = vmul.f32 %v2130, %v129
  %v2146 = vmul.f32 %v2133, %v129
  %v2147 = vmul.f32 %v2136, %v129
  %v2148 = vsub.f32 %v2093, %v2137
  %v2149 = vsub.f32 %v2094, %v2138
  %v2150 = vsub.f32 %v2095, %v2139
  %v2151 = vsub.f32 %v2096, %v2140
  %v2152 = vsub.f32 %v2097, %v2141
  %v2153 = vsub.f32 %v2098, %v2142
  %v2154 = vsub.f32 %v2099, %v2143
  %v2155 = vsub.f32 %v2100, %v2144
  %v2156 = vsub.f32 %v2101, %v2145
  %v2157 = vsub.f32 %v2102, %v2146
  %v2158 = vsub.f32 %v2103, %v2147
  %v2159 = vmul.f32 %v2148, %v2148
  %v2160 = vmul.f32 %v2149, %v2149
  %v2161 = vmul.f32 %v2150, %v2150
  %v2162 = vmul.f32 %v2151, %v2151
  %v2163 = vmul.f32 %v2152, %v2152
  %v2164 = vmul.f32 %v2153, %v2153
  %v2165 = vmul.f32 %v2154, %v2154
  %v2166 = vmul.f32 %v2155, %v2155
  %v2167 = vmul.f32 %v2156, %v2156
  %v2168 = vmul.f32 %v2157, %v2157
  %v2169 = vmul.f32 %v2158, %v2158
  %v2170 = vsel %vm88, %v2159, 0.0
  %2171 = vadd.xlane.f32.xlu0 %v2170
  %v2172 = vpop.xlane.xlu0 %2171
  %v2173 = vsel %vm88, %v2160, 0.0
  %2174 = vadd.xlane.f32.xlu0 %v2173
  %v2175 = vpop.xlane.xlu0 %2174
  %v2176 = vsel %vm88, %v2161, 0.0
  %2177 = vadd.xlane.f32.xlu0 %v2176
  %v2178 = vpop.xlane.xlu0 %2177
  %v2179 = vsel %vm88, %v2162, 0.0
  %2180 = vadd.xlane.f32.xlu0 %v2179
  %v2181 = vpop.xlane.xlu0 %2180
  %v2182 = vsel %vm88, %v2163, 0.0
  %2183 = vadd.xlane.f32.xlu0 %v2182
  %v2184 = vpop.xlane.xlu0 %2183
  %v2185 = vsel %vm88, %v2164, 0.0
  %2186 = vadd.xlane.f32.xlu0 %v2185
  %v2187 = vpop.xlane.xlu0 %2186
  %v2188 = vsel %vm88, %v2165, 0.0
  %2189 = vadd.xlane.f32.xlu0 %v2188
  %v2190 = vpop.xlane.xlu0 %2189
  %v2191 = vsel %vm88, %v2166, 0.0
  %2192 = vadd.xlane.f32.xlu0 %v2191
  %v2193 = vpop.xlane.xlu0 %2192
  %v2194 = vsel %vm88, %v2167, 0.0
  %2195 = vadd.xlane.f32.xlu0 %v2194
  %v2196 = vpop.xlane.xlu0 %2195
  %v2197 = vsel %vm88, %v2168, 0.0
  %2198 = vadd.xlane.f32.xlu0 %v2197
  %v2199 = vpop.xlane.xlu0 %2198
  %v2200 = vsel %vm119, %v2169, 0.0
  %2201 = vadd.xlane.f32.xlu0 %v2200
  %v2202 = vpop.xlane.xlu0 %2201
  %v2203 = vmul.f32 %v2172, %v129
  %v2204 = vmul.f32 %v2175, %v129
  %v2205 = vmul.f32 %v2178, %v129
  %v2206 = vmul.f32 %v2181, %v129
  %v2207 = vmul.f32 %v2184, %v129
  %v2208 = vmul.f32 %v2187, %v129
  %v2209 = vmul.f32 %v2190, %v129
  %v2210 = vmul.f32 %v2193, %v129
  %v2211 = vmul.f32 %v2196, %v129
  %v2212 = vmul.f32 %v2199, %v129
  %v2213 = vmul.f32 %v2202, %v129
  %v2214 = vadd.f32 %v2203, 1e-05
  %v2215 = vadd.f32 %v2204, 1e-05
  %v2216 = vadd.f32 %v2205, 1e-05
  %v2217 = vadd.f32 %v2206, 1e-05
  %v2218 = vadd.f32 %v2207, 1e-05
  %v2219 = vadd.f32 %v2208, 1e-05
  %v2220 = vadd.f32 %v2209, 1e-05
  %v2221 = vadd.f32 %v2210, 1e-05
  %v2222 = vadd.f32 %v2211, 1e-05
  %v2223 = vadd.f32 %v2212, 1e-05
  %v2224 = vadd.f32 %v2213, 1e-05
  %v2225 = vrsqrt.pop %v2214
  %v2226 = vmul.f32 %v2225, %v2214
  %v2227 = vmul.f32 %v2226, %v2225
  %v2228 = vmul.f32 0.5, %v2227
  %v2229 = vsub.f32 1.5, %v2228
  %v2230 = vmul.f32 %v2225, %v2229
  %vm2231 = vweird.f32 %v2214
  %vm2232 = vweird.f32 %v2225
  %vm2233 = vmor %vm2231, %vm2232
  %v2234 = vsel %vm2233, %v2225, %v2230
  %v2235 = vrsqrt.pop %v2215
  %v2236 = vmul.f32 %v2235, %v2215
  %v2237 = vmul.f32 %v2236, %v2235
  %v2238 = vmul.f32 0.5, %v2237
  %v2239 = vsub.f32 1.5, %v2238
  %v2240 = vmul.f32 %v2235, %v2239
  %vm2241 = vweird.f32 %v2215
  %vm2242 = vweird.f32 %v2235
  %vm2243 = vmor %vm2241, %vm2242
  %v2244 = vsel %vm2243, %v2235, %v2240
  %v2245 = vrsqrt.pop %v2216
  %v2246 = vmul.f32 %v2245, %v2216
  %v2247 = vmul.f32 %v2246, %v2245
  %v2248 = vmul.f32 0.5, %v2247
  %v2249 = vsub.f32 1.5, %v2248
  %v2250 = vmul.f32 %v2245, %v2249
  %vm2251 = vweird.f32 %v2216
  %vm2252 = vweird.f32 %v2245
  %vm2253 = vmor %vm2251, %vm2252
  %v2254 = vsel %vm2253, %v2245, %v2250
  %v2255 = vrsqrt.pop %v2217
  %v2256 = vmul.f32 %v2255, %v2217
  %v2257 = vmul.f32 %v2256, %v2255
  %v2258 = vmul.f32 0.5, %v2257
  %v2259 = vsub.f32 1.5, %v2258
  %v2260 = vmul.f32 %v2255, %v2259
  %vm2261 = vweird.f32 %v2217
  %vm2262 = vweird.f32 %v2255
  %vm2263 = vmor %vm2261, %vm2262
  %v2264 = vsel %vm2263, %v2255, %v2260
  %v2265 = vrsqrt.pop %v2218
  %v2266 = vmul.f32 %v2265, %v2218
  %v2267 = vmul.f32 %v2266, %v2265
  %v2268 = vmul.f32 0.5, %v2267
  %v2269 = vsub.f32 1.5, %v2268
  %v2270 = vmul.f32 %v2265, %v2269
  %vm2271 = vweird.f32 %v2218
  %vm2272 = vweird.f32 %v2265
  %vm2273 = vmor %vm2271, %vm2272
  %v2274 = vsel %vm2273, %v2265, %v2270
  %v2275 = vrsqrt.pop %v2219
  %v2276 = vmul.f32 %v2275, %v2219
  %v2277 = vmul.f32 %v2276, %v2275
  %v2278 = vmul.f32 0.5, %v2277
  %v2279 = vsub.f32 1.5, %v2278
  %v2280 = vmul.f32 %v2275, %v2279
  %vm2281 = vweird.f32 %v2219
  %vm2282 = vweird.f32 %v2275
  %vm2283 = vmor %vm2281, %vm2282
  %v2284 = vsel %vm2283, %v2275, %v2280
  %v2285 = vrsqrt.pop %v2220
  %v2286 = vmul.f32 %v2285, %v2220
  %v2287 = vmul.f32 %v2286, %v2285
  %v2288 = vmul.f32 0.5, %v2287
  %v2289 = vsub.f32 1.5, %v2288
  %v2290 = vmul.f32 %v2285, %v2289
  %vm2291 = vweird.f32 %v2220
  %vm2292 = vweird.f32 %v2285
  %vm2293 = vmor %vm2291, %vm2292
  %v2294 = vsel %vm2293, %v2285, %v2290
  %v2295 = vrsqrt.pop %v2221
  %v2296 = vmul.f32 %v2295, %v2221
  %v2297 = vmul.f32 %v2296, %v2295
  %v2298 = vmul.f32 0.5, %v2297
  %v2299 = vsub.f32 1.5, %v2298
  %v2300 = vmul.f32 %v2295, %v2299
  %vm2301 = vweird.f32 %v2221
  %vm2302 = vweird.f32 %v2295
  %vm2303 = vmor %vm2301, %vm2302
  %v2304 = vsel %vm2303, %v2295, %v2300
  %v2305 = vrsqrt.pop %v2222
  %v2306 = vmul.f32 %v2305, %v2222
  %v2307 = vmul.f32 %v2306, %v2305
  %v2308 = vmul.f32 0.5, %v2307
  %v2309 = vsub.f32 1.5, %v2308
  %v2310 = vmul.f32 %v2305, %v2309
  %vm2311 = vweird.f32 %v2222
  %vm2312 = vweird.f32 %v2305
  %vm2313 = vmor %vm2311, %vm2312
  %v2314 = vsel %vm2313, %v2305, %v2310
  %v2315 = vrsqrt.pop %v2223
  %v2316 = vmul.f32 %v2315, %v2223
  %v2317 = vmul.f32 %v2316, %v2315
  %v2318 = vmul.f32 0.5, %v2317
  %v2319 = vsub.f32 1.5, %v2318
  %v2320 = vmul.f32 %v2315, %v2319
  %vm2321 = vweird.f32 %v2223
  %vm2322 = vweird.f32 %v2315
  %vm2323 = vmor %vm2321, %vm2322
  %v2324 = vsel %vm2323, %v2315, %v2320
  %v2325 = vrsqrt.pop %v2224
  %v2326 = vmul.f32 %v2325, %v2224
  %v2327 = vmul.f32 %v2326, %v2325
  %v2328 = vmul.f32 0.5, %v2327
  %v2329 = vsub.f32 1.5, %v2328
  %v2330 = vmul.f32 %v2325, %v2329
  %vm2331 = vweird.f32 %v2224
  %vm2332 = vweird.f32 %v2325
  %vm2333 = vmor %vm2331, %vm2332
  %v2334 = vsel %vm2333, %v2325, %v2330
  %v2335 = vmul.f32 %v2148, %v2234
  %v2336 = vmul.f32 %v2149, %v2244
  %v2337 = vmul.f32 %v2150, %v2254
  %v2338 = vmul.f32 %v2151, %v2264
  %v2339 = vmul.f32 %v2152, %v2274
  %v2340 = vmul.f32 %v2153, %v2284
  %v2341 = vmul.f32 %v2154, %v2294
  %v2342 = vmul.f32 %v2155, %v2304
  %v2343 = vmul.f32 %v2156, %v2314
  %v2344 = vmul.f32 %v2157, %v2324
  %v2345 = vmul.f32 %v2158, %v2334
  %v2346 = vperm.slane %v50, 4
  %v2347 = vmul.f32 %v2335, %v2346
  %v2348 = vmul.f32 %v2336, %v2346
  %v2349 = vmul.f32 %v2337, %v2346
  %v2350 = vmul.f32 %v2338, %v2346
  %v2351 = vmul.f32 %v2339, %v2346
  %v2352 = vmul.f32 %v2340, %v2346
  %v2353 = vmul.f32 %v2341, %v2346
  %v2354 = vmul.f32 %v2342, %v2346
  %v2355 = vmul.f32 %v2343, %v2346
  %v2356 = vmul.f32 %v2344, %v2346
  %v2357 = vmul.f32 %v2345, %v2346
  %v2358 = vperm.slane %v50, 5
  %v2359 = vadd.f32 %v2347, %v2358
  %v2360 = vadd.f32 %v2348, %v2358
  %v2361 = vadd.f32 %v2349, %v2358
  %v2362 = vadd.f32 %v2350, %v2358
  %v2363 = vadd.f32 %v2351, %v2358
  %v2364 = vadd.f32 %v2352, %v2358
  %v2365 = vadd.f32 %v2353, %v2358
  %v2366 = vadd.f32 %v2354, %v2358
  %v2367 = vadd.f32 %v2355, %v2358
  %v2368 = vadd.f32 %v2356, %v2358
  %v2369 = vadd.f32 %v2357, %v2358
  %v2370 = vpack.c.bf16 %v2360, %v2359
  %v2371 = vpack.c.bf16 %v2362, %v2361
  %v2372 = vpack.c.bf16 %v2364, %v2363
  %v2373 = vpack.c.bf16 %v2366, %v2365
  %v2374 = vpack.c.bf16 %v2368, %v2367
  %v2375 = vpack.c.bf16 %v2369, %v2369
  %v2376 = vld [vmem:[%s4] sm:$0xf]
  %v2377 = vld [vmem:[%s4 + $0x4] sm:$0xf]
  %v2378 = vld [vmem:[%s4 + $0x8] sm:$0xf]
  %v2379 = vld [vmem:[%s4 + $0xc] sm:$0xf]
  %v2380 = vperm.slane %v50, 6
  %v2385 = vunpack.c.l.b16 %v2376
  %v2386 = vunpack.c.l.b16 %v2377
  %v2387 = vunpack.c.l.b16 %v2378
  %v2388 = vunpack.c.l.b16 %v2379
  %v2389 = vpack.c.b16 %v2386, %v2385
  %v2390 = vpack.c.b16 %v2388, %v2387
  %v2394 = vsel %vm88, %v2370, 0
  %v2397 = vsel %vm88, %v2371, 0
  %v2400 = vsel %vm88, %v2372, 0
  %v2403 = vsel %vm88, %v2373, 0
  %v2406 = vsel %vm88, %v2374, 0
  %v2409 = vsel %vm88, %v2375, 0
  %2411 = vmatpush.bf16.msra.mxu0 0
  %2412 = vmatpush.bf16.msra.mxu0 0
  %2413 = vmatpush.bf16.msra.mxu0 0
  %2414 = vmatpush.bf16.msra.mxu0 0
  %2415 = vmatpush.bf16.msra.mxu0 0
  %2416 = vmatpush.bf16.msra.mxu0 0
  %2417 = vmatpush.bf16.msra.mxu0 %v2390
  %2418 = vmatpush.bf16.msra.mxu0 %v2389
  %2419 = vmatmul.bf16.gmra.mxu0 %v2394
  %v2420 = vpop.f32.mrf.mxu0
  %v2421 = vadd.f32 %v2380, %v2420
  %v2422 = vpop.f32.mrf.mxu0
  %v2423 = vadd.f32 %v2380, %v2422
  %2424 = vmatmul.bf16.gmra.mxu0 %v2397
  %v2425 = vpop.f32.mrf.mxu0
  %v2426 = vadd.f32 %v2380, %v2425
  %v2427 = vpop.f32.mrf.mxu0
  %v2428 = vadd.f32 %v2380, %v2427
  %2429 = vmatmul.bf16.gmra.mxu0 %v2400
  %v2430 = vpop.f32.mrf.mxu0
  %v2431 = vadd.f32 %v2380, %v2430
  %v2432 = vpop.f32.mrf.mxu0
  %v2433 = vadd.f32 %v2380, %v2432
  %2434 = vmatmul.bf16.gmra.mxu0 %v2403
  %v2435 = vpop.f32.mrf.mxu0
  %v2436 = vadd.f32 %v2380, %v2435
  %v2437 = vpop.f32.mrf.mxu0
  %v2438 = vadd.f32 %v2380, %v2437
  %2439 = vmatmul.bf16.gmra.mxu0 %v2406
  %v2440 = vpop.f32.mrf.mxu0
  %v2441 = vadd.f32 %v2380, %v2440
  %v2442 = vpop.f32.mrf.mxu0
  %v2443 = vadd.f32 %v2380, %v2442
  %2444 = vmatmul.bf16.gmra.mxu0 %v2409
  %v2445 = vpop.f32.mrf.mxu0
  %v2446 = vadd.f32 %v2380, %v2445
  %v2447 = vpop.f32.mrf.mxu0
  %2448 = vdwg.mxu0
  %v2449 = vpack.c.bf16 %v2421, %v2421
  %v2450 = vpack.c.bf16 %v2423, %v2423
  %v2451 = vpack.c.bf16 %v2426, %v2426
  %v2452 = vpack.c.bf16 %v2428, %v2428
  %v2453 = vpack.c.bf16 %v2431, %v2431
  %v2454 = vpack.c.bf16 %v2433, %v2433
  %v2455 = vpack.c.bf16 %v2436, %v2436
  %v2456 = vpack.c.bf16 %v2438, %v2438
  %v2457 = vpack.c.bf16 %v2441, %v2441
  %v2458 = vpack.c.bf16 %v2443, %v2443
  %v2459 = vpack.c.bf16 %v2446, %v2446
  %v2460 = vunpack.c.l.bf16 %v2449
  %v2461 = vunpack.c.l.bf16 %v2450
  %v2462 = vunpack.c.l.bf16 %v2451
  %v2463 = vunpack.c.l.bf16 %v2452
  %v2464 = vunpack.c.l.bf16 %v2453
  %v2465 = vunpack.c.l.bf16 %v2454
  %v2466 = vunpack.c.l.bf16 %v2455
  %v2467 = vunpack.c.l.bf16 %v2456
  %v2468 = vunpack.c.l.bf16 %v2457
  %v2469 = vunpack.c.l.bf16 %v2458
  %v2470 = vunpack.c.l.bf16 %v2459
  %v2471 = vmul.f32 %v2460, 1.703125
  %v2472 = vmul.f32 %v2461, 1.703125
  %v2473 = vmul.f32 %v2462, 1.703125
  %v2474 = vmul.f32 %v2463, 1.703125
  %v2475 = vmul.f32 %v2464, 1.703125
  %v2476 = vmul.f32 %v2465, 1.703125
  %v2477 = vmul.f32 %v2466, 1.703125
  %v2478 = vmul.f32 %v2467, 1.703125
  %v2479 = vmul.f32 %v2468, 1.703125
  %v2480 = vmul.f32 %v2469, 1.703125
  %v2481 = vmul.f32 %v2470, 1.703125
  %v2482 = vpack.c.bf16 %v2471, %v2471
  %v2483 = vpack.c.bf16 %v2472, %v2472
  %v2484 = vpack.c.bf16 %v2473, %v2473
  %v2485 = vpack.c.bf16 %v2474, %v2474
  %v2486 = vpack.c.bf16 %v2475, %v2475
  %v2487 = vpack.c.bf16 %v2476, %v2476
  %v2488 = vpack.c.bf16 %v2477, %v2477
  %v2489 = vpack.c.bf16 %v2478, %v2478
  %v2490 = vpack.c.bf16 %v2479, %v2479
  %v2491 = vpack.c.bf16 %v2480, %v2480
  %v2492 = vpack.c.bf16 %v2481, %v2481
  %v2493 = vxor.u32 %v2482, 2147516416
  %v2494 = vxor.u32 %v2483, 2147516416
  %v2495 = vxor.u32 %v2484, 2147516416
  %v2496 = vxor.u32 %v2485, 2147516416
  %v2497 = vxor.u32 %v2486, 2147516416
  %v2498 = vxor.u32 %v2487, 2147516416
  %v2499 = vxor.u32 %v2488, 2147516416
  %v2500 = vxor.u32 %v2489, 2147516416
  %v2501 = vxor.u32 %v2490, 2147516416
  %v2502 = vxor.u32 %v2491, 2147516416
  %v2503 = vxor.u32 %v2492, 2147516416
  %v2504 = vunpack.c.l.bf16 %v2493
  %v2505 = vunpack.c.l.bf16 %v2494
  %v2506 = vunpack.c.l.bf16 %v2495
  %v2507 = vunpack.c.l.bf16 %v2496
  %v2508 = vunpack.c.l.bf16 %v2497
  %v2509 = vunpack.c.l.bf16 %v2498
  %v2510 = vunpack.c.l.bf16 %v2499
  %v2511 = vunpack.c.l.bf16 %v2500
  %v2512 = vunpack.c.l.bf16 %v2501
  %v2513 = vunpack.c.l.bf16 %v2502
  %v2514 = vunpack.c.l.bf16 %v2503
  %v2515 = vmul.f32 %v2504, 1.442695
  %v2516 = vpow.pop %v2515
  %v2517 = vmul.f32 %v2505, 1.442695
  %v2518 = vpow.pop %v2517
  %v2519 = vmul.f32 %v2506, 1.442695
  %v2520 = vpow.pop %v2519
  %v2521 = vmul.f32 %v2507, 1.442695
  %v2522 = vpow.pop %v2521
  %v2523 = vmul.f32 %v2508, 1.442695
  %v2524 = vpow.pop %v2523
  %v2525 = vmul.f32 %v2509, 1.442695
  %v2526 = vpow.pop %v2525
  %v2527 = vmul.f32 %v2510, 1.442695
  %v2528 = vpow.pop %v2527
  %v2529 = vmul.f32 %v2511, 1.442695
  %v2530 = vpow.pop %v2529
  %v2531 = vmul.f32 %v2512, 1.442695
  %v2532 = vpow.pop %v2531
  %v2533 = vmul.f32 %v2513, 1.442695
  %v2534 = vpow.pop %v2533
  %v2535 = vmul.f32 %v2514, 1.442695
  %v2536 = vpow.pop %v2535
  %v2537 = vpack.c.bf16 %v2516, %v2516
  %v2538 = vpack.c.bf16 %v2518, %v2518
  %v2539 = vpack.c.bf16 %v2520, %v2520
  %v2540 = vpack.c.bf16 %v2522, %v2522
  %v2541 = vpack.c.bf16 %v2524, %v2524
  %v2542 = vpack.c.bf16 %v2526, %v2526
  %v2543 = vpack.c.bf16 %v2528, %v2528
  %v2544 = vpack.c.bf16 %v2530, %v2530
  %v2545 = vpack.c.bf16 %v2532, %v2532
  %v2546 = vpack.c.bf16 %v2534, %v2534
  %v2547 = vpack.c.bf16 %v2536, %v2536
  %v2548 = vunpack.c.l.bf16 %v2537
  %v2549 = vunpack.c.l.bf16 %v2538
  %v2550 = vunpack.c.l.bf16 %v2539
  %v2551 = vunpack.c.l.bf16 %v2540
  %v2552 = vunpack.c.l.bf16 %v2541
  %v2553 = vunpack.c.l.bf16 %v2542
  %v2554 = vunpack.c.l.bf16 %v2543
  %v2555 = vunpack.c.l.bf16 %v2544
  %v2556 = vunpack.c.l.bf16 %v2545
  %v2557 = vunpack.c.l.bf16 %v2546
  %v2558 = vunpack.c.l.bf16 %v2547
  %v2559 = vadd.f32 %v2548, 1.0
  %v2560 = vadd.f32 %v2549, 1.0
  %v2561 = vadd.f32 %v2550, 1.0
  %v2562 = vadd.f32 %v2551, 1.0
  %v2563 = vadd.f32 %v2552, 1.0
  %v2564 = vadd.f32 %v2553, 1.0
  %v2565 = vadd.f32 %v2554, 1.0
  %v2566 = vadd.f32 %v2555, 1.0
  %v2567 = vadd.f32 %v2556, 1.0
  %v2568 = vadd.f32 %v2557, 1.0
  %v2569 = vadd.f32 %v2558, 1.0
  %v2570 = vpack.c.bf16 %v2559, %v2559
  %v2571 = vpack.c.bf16 %v2560, %v2560
  %v2572 = vpack.c.bf16 %v2561, %v2561
  %v2573 = vpack.c.bf16 %v2562, %v2562
  %v2574 = vpack.c.bf16 %v2563, %v2563
  %v2575 = vpack.c.bf16 %v2564, %v2564
  %v2576 = vpack.c.bf16 %v2565, %v2565
  %v2577 = vpack.c.bf16 %v2566, %v2566
  %v2578 = vpack.c.bf16 %v2567, %v2567
  %v2579 = vpack.c.bf16 %v2568, %v2568
  %v2580 = vpack.c.bf16 %v2569, %v2569
  %v2581 = vunpack.c.h.bf16 1065369472
  %v2582 = vunpack.c.l.bf16 1065369472
  %v2583 = vunpack.c.h.bf16 %v2570
  %v2584 = vunpack.c.l.bf16 %v2570
  %v2585 = vrcp.pop %v2583
  %v2586 = vmul.f32 %v2581, %v2585
  %v2587 = vrcp.pop %v2584
  %v2588 = vmul.f32 %v2582, %v2587
  %v2589 = vpack.c.bf16 %v2586, %v2588
  %v2590 = vunpack.c.h.bf16 %v2571
  %v2591 = vunpack.c.l.bf16 %v2571
  %v2592 = vrcp.pop %v2590
  %v2593 = vmul.f32 %v2581, %v2592
  %v2594 = vrcp.pop %v2591
  %v2595 = vmul.f32 %v2582, %v2594
  %v2596 = vpack.c.bf16 %v2593, %v2595
  %v2597 = vunpack.c.h.bf16 %v2572
  %v2598 = vunpack.c.l.bf16 %v2572
  %v2599 = vrcp.pop %v2597
  %v2600 = vmul.f32 %v2581, %v2599
  %v2601 = vrcp.pop %v2598
  %v2602 = vmul.f32 %v2582, %v2601
  %v2603 = vpack.c.bf16 %v2600, %v2602
  %v2604 = vunpack.c.h.bf16 %v2573
  %v2605 = vunpack.c.l.bf16 %v2573
  %v2606 = vrcp.pop %v2604
  %v2607 = vmul.f32 %v2581, %v2606
  %v2608 = vrcp.pop %v2605
  %v2609 = vmul.f32 %v2582, %v2608
  %v2610 = vpack.c.bf16 %v2607, %v2609
  %v2611 = vunpack.c.h.bf16 %v2574
  %v2612 = vunpack.c.l.bf16 %v2574
  %v2613 = vrcp.pop %v2611
  %v2614 = vmul.f32 %v2581, %v2613
  %v2615 = vrcp.pop %v2612
  %v2616 = vmul.f32 %v2582, %v2615
  %v2617 = vpack.c.bf16 %v2614, %v2616
  %v2618 = vunpack.c.h.bf16 %v2575
  %v2619 = vunpack.c.l.bf16 %v2575
  %v2620 = vrcp.pop %v2618
  %v2621 = vmul.f32 %v2581, %v2620
  %v2622 = vrcp.pop %v2619
  %v2623 = vmul.f32 %v2582, %v2622
  %v2624 = vpack.c.bf16 %v2621, %v2623
  %v2625 = vunpack.c.h.bf16 %v2576
  %v2626 = vunpack.c.l.bf16 %v2576
  %v2627 = vrcp.pop %v2625
  %v2628 = vmul.f32 %v2581, %v2627
  %v2629 = vrcp.pop %v2626
  %v2630 = vmul.f32 %v2582, %v2629
  %v2631 = vpack.c.bf16 %v2628, %v2630
  %v2632 = vunpack.c.h.bf16 %v2577
  %v2633 = vunpack.c.l.bf16 %v2577
  %v2634 = vrcp.pop %v2632
  %v2635 = vmul.f32 %v2581, %v2634
  %v2636 = vrcp.pop %v2633
  %v2637 = vmul.f32 %v2582, %v2636
  %v2638 = vpack.c.bf16 %v2635, %v2637
  %v2639 = vunpack.c.h.bf16 %v2578
  %v2640 = vunpack.c.l.bf16 %v2578
  %v2641 = vrcp.pop %v2639
  %v2642 = vmul.f32 %v2581, %v2641
  %v2643 = vrcp.pop %v2640
  %v2644 = vmul.f32 %v2582, %v2643
  %v2645 = vpack.c.bf16 %v2642, %v2644
  %v2646 = vunpack.c.h.bf16 %v2579
  %v2647 = vunpack.c.l.bf16 %v2579
  %v2648 = vrcp.pop %v2646
  %v2649 = vmul.f32 %v2581, %v2648
  %v2650 = vrcp.pop %v2647
  %v2651 = vmul.f32 %v2582, %v2650
  %v2652 = vpack.c.bf16 %v2649, %v2651
  %v2653 = vunpack.c.h.bf16 %v2580
  %v2654 = vunpack.c.l.bf16 %v2580
  %v2655 = vrcp.pop %v2653
  %v2656 = vmul.f32 %v2581, %v2655
  %v2657 = vrcp.pop %v2654
  %v2658 = vmul.f32 %v2582, %v2657
  %v2659 = vpack.c.bf16 %v2656, %v2658
  %v2660 = vunpack.c.l.bf16 %v2589
  %v2661 = vunpack.c.l.bf16 %v2596
  %v2662 = vunpack.c.l.bf16 %v2603
  %v2663 = vunpack.c.l.bf16 %v2610
  %v2664 = vunpack.c.l.bf16 %v2617
  %v2665 = vunpack.c.l.bf16 %v2624
  %v2666 = vunpack.c.l.bf16 %v2631
  %v2667 = vunpack.c.l.bf16 %v2638
  %v2668 = vunpack.c.l.bf16 %v2645
  %v2669 = vunpack.c.l.bf16 %v2652
  %v2670 = vunpack.c.l.bf16 %v2659
  %v2671 = vmul.f32 %v2460, %v2660
  %v2672 = vmul.f32 %v2461, %v2661
  %v2673 = vmul.f32 %v2462, %v2662
  %v2674 = vmul.f32 %v2463, %v2663
  %v2675 = vmul.f32 %v2464, %v2664
  %v2676 = vmul.f32 %v2465, %v2665
  %v2677 = vmul.f32 %v2466, %v2666
  %v2678 = vmul.f32 %v2467, %v2667
  %v2679 = vmul.f32 %v2468, %v2668
  %v2680 = vmul.f32 %v2469, %v2669
  %v2681 = vmul.f32 %v2470, %v2670
  %v2682 = vpack.c.bf16 %v2672, %v2671
  %v2683 = vpack.c.bf16 %v2674, %v2673
  %v2684 = vpack.c.bf16 %v2676, %v2675
  %v2685 = vpack.c.bf16 %v2678, %v2677
  %v2686 = vpack.c.bf16 %v2680, %v2679
  %v2687 = vpack.c.bf16 %v2681, %v2681
  %v2688 = vld [vmem:[%s5] sm:$0xf]
  %v2689 = vld [vmem:[%s5 + $0x4] sm:$0xf]
  %v2690 = vld [vmem:[%s5 + $0x8] sm:$0xf]
  %v2691 = vld [vmem:[%s5 + $0xc] sm:$0xf]
  %v2692 = vld [vmem:[%s5 + $0x10] sm:$0xf]
  %v2693 = vld [vmem:[%s5 + $0x14] sm:$0xf]
  %v2694 = vld [vmem:[%s5 + $0x18] sm:$0xf]
  %v2695 = vld [vmem:[%s5 + $0x1c] sm:$0xf]
  %v2696 = vld [vmem:[%s5 + $0x20] sm:$0xf]
  %v2697 = vld [vmem:[%s5 + $0x24] sm:$0xf]
  %v2698 = vld [vmem:[%s5 + $0x28] sm:$0xf]
  %v2699 = vld [vmem:[%s5 + $0x2c] sm:$0xf]
  %v2700 = vld [vmem:[%s5 + $0x30] sm:$0xf]
  %v2701 = vld [vmem:[%s5 + $0x34] sm:$0xf]
  %v2702 = vld [vmem:[%s5 + $0x38] sm:$0xf]
  %v2703 = vld [vmem:[%s5 + $0x3c] sm:$0xf]
  %v2704 = vperm.slane %v50, 7
  %v2721 = vunpack.c.l.b16 %v2688
  %v2722 = vunpack.c.l.b16 %v2689
  %v2723 = vunpack.c.l.b16 %v2690
  %v2724 = vunpack.c.l.b16 %v2691
  %v2725 = vunpack.c.l.b16 %v2692
  %v2726 = vunpack.c.l.b16 %v2693
  %v2727 = vunpack.c.l.b16 %v2694
  %v2728 = vunpack.c.l.b16 %v2695
  %v2729 = vunpack.c.l.b16 %v2696
  %v2730 = vunpack.c.l.b16 %v2697
  %v2731 = vunpack.c.l.b16 %v2698
  %v2732 = vunpack.c.l.b16 %v2699
  %v2733 = vunpack.c.l.b16 %v2700
  %v2734 = vunpack.c.l.b16 %v2701
  %v2735 = vunpack.c.l.b16 %v2702
  %v2736 = vunpack.c.l.b16 %v2703
  %v2737 = vpack.c.b16 %v2722, %v2721
  %v2738 = vpack.c.b16 %v2724, %v2723
  %v2739 = vpack.c.b16 %v2726, %v2725
  %v2740 = vpack.c.b16 %v2728, %v2727
  %v2741 = vpack.c.b16 %v2730, %v2729
  %v2742 = vpack.c.b16 %v2732, %v2731
  %v2743 = vpack.c.b16 %v2734, %v2733
  %v2744 = vpack.c.b16 %v2736, %v2735
  %2753 = vmatpush.bf16.msra.mxu0 %v2744
  %2754 = vmatpush.bf16.msra.mxu0 %v2743
  %2755 = vmatpush.bf16.msra.mxu0 %v2742
  %2756 = vmatpush.bf16.msra.mxu0 %v2741
  %2757 = vmatpush.bf16.msra.mxu0 %v2740
  %2758 = vmatpush.bf16.msra.mxu0 %v2739
  %2759 = vmatpush.bf16.msra.mxu0 %v2738
  %2760 = vmatpush.bf16.msra.mxu0 %v2737
  %2761 = vmatmul.bf16.gmra.mxu0 %v2682
  %v2762 = vpop.f32.mrf.mxu0
  %v2763 = vadd.f32 %v2704, %v2762
  %v2764 = vpop.f32.mrf.mxu0
  %v2765 = vadd.f32 %v2704, %v2764
  %2766 = vmatmul.bf16.gmra.mxu0 %v2683
  %v2767 = vpop.f32.mrf.mxu0
  %v2768 = vadd.f32 %v2704, %v2767
  %v2769 = vpop.f32.mrf.mxu0
  %v2770 = vadd.f32 %v2704, %v2769
  %2771 = vmatmul.bf16.gmra.mxu0 %v2684
  %v2772 = vpop.f32.mrf.mxu0
  %v2773 = vadd.f32 %v2704, %v2772
  %v2774 = vpop.f32.mrf.mxu0
  %v2775 = vadd.f32 %v2704, %v2774
  %2776 = vmatmul.bf16.gmra.mxu0 %v2685
  %v2777 = vpop.f32.mrf.mxu0
  %v2778 = vadd.f32 %v2704, %v2777
  %v2779 = vpop.f32.mrf.mxu0
  %v2780 = vadd.f32 %v2704, %v2779
  %2781 = vmatmul.bf16.gmra.mxu0 %v2686
  %v2782 = vpop.f32.mrf.mxu0
  %v2783 = vadd.f32 %v2704, %v2782
  %v2784 = vpop.f32.mrf.mxu0
  %v2785 = vadd.f32 %v2704, %v2784
  %2786 = vmatmul.bf16.gmra.mxu0 %v2687
  %v2787 = vpop.f32.mrf.mxu0
  %v2788 = vadd.f32 %v2704, %v2787
  %v2789 = vpop.f32.mrf.mxu0
  %2790 = vdwg.mxu0
  %v2791 = vadd.f32 %v2093, %v2763
  %v2792 = vadd.f32 %v2094, %v2765
  %v2793 = vadd.f32 %v2095, %v2768
  %v2794 = vadd.f32 %v2096, %v2770
  %v2795 = vadd.f32 %v2097, %v2773
  %v2796 = vadd.f32 %v2098, %v2775
  %v2797 = vadd.f32 %v2099, %v2778
  %v2798 = vadd.f32 %v2100, %v2780
  %v2799 = vadd.f32 %v2101, %v2783
  %v2800 = vadd.f32 %v2102, %v2785
  %v2801 = vadd.f32 %v2103, %v2788
  %v2802 = vsel %vm88, %v2791, 0.0
  %2803 = vadd.xlane.f32.xlu0 %v2802
  %v2804 = vpop.xlane.xlu0 %2803
  %v2805 = vsel %vm88, %v2792, 0.0
  %2806 = vadd.xlane.f32.xlu0 %v2805
  %v2807 = vpop.xlane.xlu0 %2806
  %v2808 = vsel %vm88, %v2793, 0.0
  %2809 = vadd.xlane.f32.xlu0 %v2808
  %v2810 = vpop.xlane.xlu0 %2809
  %v2811 = vsel %vm88, %v2794, 0.0
  %2812 = vadd.xlane.f32.xlu0 %v2811
  %v2813 = vpop.xlane.xlu0 %2812
  %v2814 = vsel %vm88, %v2795, 0.0
  %2815 = vadd.xlane.f32.xlu0 %v2814
  %v2816 = vpop.xlane.xlu0 %2815
  %v2817 = vsel %vm88, %v2796, 0.0
  %2818 = vadd.xlane.f32.xlu0 %v2817
  %v2819 = vpop.xlane.xlu0 %2818
  %v2820 = vsel %vm88, %v2797, 0.0
  %2821 = vadd.xlane.f32.xlu0 %v2820
  %v2822 = vpop.xlane.xlu0 %2821
  %v2823 = vsel %vm88, %v2798, 0.0
  %2824 = vadd.xlane.f32.xlu0 %v2823
  %v2825 = vpop.xlane.xlu0 %2824
  %v2826 = vsel %vm88, %v2799, 0.0
  %2827 = vadd.xlane.f32.xlu0 %v2826
  %v2828 = vpop.xlane.xlu0 %2827
  %v2829 = vsel %vm88, %v2800, 0.0
  %2830 = vadd.xlane.f32.xlu0 %v2829
  %v2831 = vpop.xlane.xlu0 %2830
  %v2832 = vsel %vm119, %v2801, 0.0
  %2833 = vadd.xlane.f32.xlu0 %v2832
  %v2834 = vpop.xlane.xlu0 %2833
  %v2835 = vmul.f32 %v2804, %v129
  %v2836 = vmul.f32 %v2807, %v129
  %v2837 = vmul.f32 %v2810, %v129
  %v2838 = vmul.f32 %v2813, %v129
  %v2839 = vmul.f32 %v2816, %v129
  %v2840 = vmul.f32 %v2819, %v129
  %v2841 = vmul.f32 %v2822, %v129
  %v2842 = vmul.f32 %v2825, %v129
  %v2843 = vmul.f32 %v2828, %v129
  %v2844 = vmul.f32 %v2831, %v129
  %v2845 = vmul.f32 %v2834, %v129
  %v2846 = vsub.f32 %v2791, %v2835
  %v2847 = vsub.f32 %v2792, %v2836
  %v2848 = vsub.f32 %v2793, %v2837
  %v2849 = vsub.f32 %v2794, %v2838
  %v2850 = vsub.f32 %v2795, %v2839
  %v2851 = vsub.f32 %v2796, %v2840
  %v2852 = vsub.f32 %v2797, %v2841
  %v2853 = vsub.f32 %v2798, %v2842
  %v2854 = vsub.f32 %v2799, %v2843
  %v2855 = vsub.f32 %v2800, %v2844
  %v2856 = vsub.f32 %v2801, %v2845
  %v2857 = vmul.f32 %v2846, %v2846
  %v2858 = vmul.f32 %v2847, %v2847
  %v2859 = vmul.f32 %v2848, %v2848
  %v2860 = vmul.f32 %v2849, %v2849
  %v2861 = vmul.f32 %v2850, %v2850
  %v2862 = vmul.f32 %v2851, %v2851
  %v2863 = vmul.f32 %v2852, %v2852
  %v2864 = vmul.f32 %v2853, %v2853
  %v2865 = vmul.f32 %v2854, %v2854
  %v2866 = vmul.f32 %v2855, %v2855
  %v2867 = vmul.f32 %v2856, %v2856
  %v2868 = vsel %vm88, %v2857, 0.0
  %2869 = vadd.xlane.f32.xlu0 %v2868
  %v2870 = vpop.xlane.xlu0 %2869
  %v2871 = vsel %vm88, %v2858, 0.0
  %2872 = vadd.xlane.f32.xlu0 %v2871
  %v2873 = vpop.xlane.xlu0 %2872
  %v2874 = vsel %vm88, %v2859, 0.0
  %2875 = vadd.xlane.f32.xlu0 %v2874
  %v2876 = vpop.xlane.xlu0 %2875
  %v2877 = vsel %vm88, %v2860, 0.0
  %2878 = vadd.xlane.f32.xlu0 %v2877
  %v2879 = vpop.xlane.xlu0 %2878
  %v2880 = vsel %vm88, %v2861, 0.0
  %2881 = vadd.xlane.f32.xlu0 %v2880
  %v2882 = vpop.xlane.xlu0 %2881
  %v2883 = vsel %vm88, %v2862, 0.0
  %2884 = vadd.xlane.f32.xlu0 %v2883
  %v2885 = vpop.xlane.xlu0 %2884
  %v2886 = vsel %vm88, %v2863, 0.0
  %2887 = vadd.xlane.f32.xlu0 %v2886
  %v2888 = vpop.xlane.xlu0 %2887
  %v2889 = vsel %vm88, %v2864, 0.0
  %2890 = vadd.xlane.f32.xlu0 %v2889
  %v2891 = vpop.xlane.xlu0 %2890
  %v2892 = vsel %vm88, %v2865, 0.0
  %2893 = vadd.xlane.f32.xlu0 %v2892
  %v2894 = vpop.xlane.xlu0 %2893
  %v2895 = vsel %vm88, %v2866, 0.0
  %2896 = vadd.xlane.f32.xlu0 %v2895
  %v2897 = vpop.xlane.xlu0 %2896
  %v2898 = vsel %vm119, %v2867, 0.0
  %2899 = vadd.xlane.f32.xlu0 %v2898
  %v2900 = vpop.xlane.xlu0 %2899
  %v2901 = vmul.f32 %v2870, %v129
  %v2902 = vmul.f32 %v2873, %v129
  %v2903 = vmul.f32 %v2876, %v129
  %v2904 = vmul.f32 %v2879, %v129
  %v2905 = vmul.f32 %v2882, %v129
  %v2906 = vmul.f32 %v2885, %v129
  %v2907 = vmul.f32 %v2888, %v129
  %v2908 = vmul.f32 %v2891, %v129
  %v2909 = vmul.f32 %v2894, %v129
  %v2910 = vmul.f32 %v2897, %v129
  %v2911 = vmul.f32 %v2900, %v129
  %v2912 = vadd.f32 %v2901, 1e-05
  %v2913 = vadd.f32 %v2902, 1e-05
  %v2914 = vadd.f32 %v2903, 1e-05
  %v2915 = vadd.f32 %v2904, 1e-05
  %v2916 = vadd.f32 %v2905, 1e-05
  %v2917 = vadd.f32 %v2906, 1e-05
  %v2918 = vadd.f32 %v2907, 1e-05
  %v2919 = vadd.f32 %v2908, 1e-05
  %v2920 = vadd.f32 %v2909, 1e-05
  %v2921 = vadd.f32 %v2910, 1e-05
  %v2922 = vadd.f32 %v2911, 1e-05
  %v2923 = vrsqrt.pop %v2912
  %v2924 = vmul.f32 %v2923, %v2912
  %v2925 = vmul.f32 %v2924, %v2923
  %v2926 = vmul.f32 0.5, %v2925
  %v2927 = vsub.f32 1.5, %v2926
  %v2928 = vmul.f32 %v2923, %v2927
  %vm2929 = vweird.f32 %v2912
  %vm2930 = vweird.f32 %v2923
  %vm2931 = vmor %vm2929, %vm2930
  %v2932 = vsel %vm2931, %v2923, %v2928
  %v2933 = vrsqrt.pop %v2913
  %v2934 = vmul.f32 %v2933, %v2913
  %v2935 = vmul.f32 %v2934, %v2933
  %v2936 = vmul.f32 0.5, %v2935
  %v2937 = vsub.f32 1.5, %v2936
  %v2938 = vmul.f32 %v2933, %v2937
  %vm2939 = vweird.f32 %v2913
  %vm2940 = vweird.f32 %v2933
  %vm2941 = vmor %vm2939, %vm2940
  %v2942 = vsel %vm2941, %v2933, %v2938
  %v2943 = vrsqrt.pop %v2914
  %v2944 = vmul.f32 %v2943, %v2914
  %v2945 = vmul.f32 %v2944, %v2943
  %v2946 = vmul.f32 0.5, %v2945
  %v2947 = vsub.f32 1.5, %v2946
  %v2948 = vmul.f32 %v2943, %v2947
  %vm2949 = vweird.f32 %v2914
  %vm2950 = vweird.f32 %v2943
  %vm2951 = vmor %vm2949, %vm2950
  %v2952 = vsel %vm2951, %v2943, %v2948
  %v2953 = vrsqrt.pop %v2915
  %v2954 = vmul.f32 %v2953, %v2915
  %v2955 = vmul.f32 %v2954, %v2953
  %v2956 = vmul.f32 0.5, %v2955
  %v2957 = vsub.f32 1.5, %v2956
  %v2958 = vmul.f32 %v2953, %v2957
  %vm2959 = vweird.f32 %v2915
  %vm2960 = vweird.f32 %v2953
  %vm2961 = vmor %vm2959, %vm2960
  %v2962 = vsel %vm2961, %v2953, %v2958
  %v2963 = vrsqrt.pop %v2916
  %v2964 = vmul.f32 %v2963, %v2916
  %v2965 = vmul.f32 %v2964, %v2963
  %v2966 = vmul.f32 0.5, %v2965
  %v2967 = vsub.f32 1.5, %v2966
  %v2968 = vmul.f32 %v2963, %v2967
  %vm2969 = vweird.f32 %v2916
  %vm2970 = vweird.f32 %v2963
  %vm2971 = vmor %vm2969, %vm2970
  %v2972 = vsel %vm2971, %v2963, %v2968
  %v2973 = vrsqrt.pop %v2917
  %v2974 = vmul.f32 %v2973, %v2917
  %v2975 = vmul.f32 %v2974, %v2973
  %v2976 = vmul.f32 0.5, %v2975
  %v2977 = vsub.f32 1.5, %v2976
  %v2978 = vmul.f32 %v2973, %v2977
  %vm2979 = vweird.f32 %v2917
  %vm2980 = vweird.f32 %v2973
  %vm2981 = vmor %vm2979, %vm2980
  %v2982 = vsel %vm2981, %v2973, %v2978
  %v2983 = vrsqrt.pop %v2918
  %v2984 = vmul.f32 %v2983, %v2918
  %v2985 = vmul.f32 %v2984, %v2983
  %v2986 = vmul.f32 0.5, %v2985
  %v2987 = vsub.f32 1.5, %v2986
  %v2988 = vmul.f32 %v2983, %v2987
  %vm2989 = vweird.f32 %v2918
  %vm2990 = vweird.f32 %v2983
  %vm2991 = vmor %vm2989, %vm2990
  %v2992 = vsel %vm2991, %v2983, %v2988
  %v2993 = vrsqrt.pop %v2919
  %v2994 = vmul.f32 %v2993, %v2919
  %v2995 = vmul.f32 %v2994, %v2993
  %v2996 = vmul.f32 0.5, %v2995
  %v2997 = vsub.f32 1.5, %v2996
  %v2998 = vmul.f32 %v2993, %v2997
  %vm2999 = vweird.f32 %v2919
  %vm3000 = vweird.f32 %v2993
  %vm3001 = vmor %vm2999, %vm3000
  %v3002 = vsel %vm3001, %v2993, %v2998
  %v3003 = vrsqrt.pop %v2920
  %v3004 = vmul.f32 %v3003, %v2920
  %v3005 = vmul.f32 %v3004, %v3003
  %v3006 = vmul.f32 0.5, %v3005
  %v3007 = vsub.f32 1.5, %v3006
  %v3008 = vmul.f32 %v3003, %v3007
  %vm3009 = vweird.f32 %v2920
  %vm3010 = vweird.f32 %v3003
  %vm3011 = vmor %vm3009, %vm3010
  %v3012 = vsel %vm3011, %v3003, %v3008
  %v3013 = vrsqrt.pop %v2921
  %v3014 = vmul.f32 %v3013, %v2921
  %v3015 = vmul.f32 %v3014, %v3013
  %v3016 = vmul.f32 0.5, %v3015
  %v3017 = vsub.f32 1.5, %v3016
  %v3018 = vmul.f32 %v3013, %v3017
  %vm3019 = vweird.f32 %v2921
  %vm3020 = vweird.f32 %v3013
  %vm3021 = vmor %vm3019, %vm3020
  %v3022 = vsel %vm3021, %v3013, %v3018
  %v3023 = vrsqrt.pop %v2922
  %v3024 = vmul.f32 %v3023, %v2922
  %v3025 = vmul.f32 %v3024, %v3023
  %v3026 = vmul.f32 0.5, %v3025
  %v3027 = vsub.f32 1.5, %v3026
  %v3028 = vmul.f32 %v3023, %v3027
  %vm3029 = vweird.f32 %v2922
  %vm3030 = vweird.f32 %v3023
  %vm3031 = vmor %vm3029, %vm3030
  %v3032 = vsel %vm3031, %v3023, %v3028
  %v3033 = vmul.f32 %v2846, %v2932
  %v3034 = vmul.f32 %v2847, %v2942
  %v3035 = vmul.f32 %v2848, %v2952
  %v3036 = vmul.f32 %v2849, %v2962
  %v3037 = vmul.f32 %v2850, %v2972
  %v3038 = vmul.f32 %v2851, %v2982
  %v3039 = vmul.f32 %v2852, %v2992
  %v3040 = vmul.f32 %v2853, %v3002
  %v3041 = vmul.f32 %v2854, %v3012
  %v3042 = vmul.f32 %v2855, %v3022
  %v3043 = vmul.f32 %v2856, %v3032
  %v3044 = vperm.slane %v52, 0
  %v3045 = vmul.f32 %v3033, %v3044
  %v3046 = vmul.f32 %v3034, %v3044
  %v3047 = vmul.f32 %v3035, %v3044
  %v3048 = vmul.f32 %v3036, %v3044
  %v3049 = vmul.f32 %v3037, %v3044
  %v3050 = vmul.f32 %v3038, %v3044
  %v3051 = vmul.f32 %v3039, %v3044
  %v3052 = vmul.f32 %v3040, %v3044
  %v3053 = vmul.f32 %v3041, %v3044
  %v3054 = vmul.f32 %v3042, %v3044
  %v3055 = vmul.f32 %v3043, %v3044
  %v3056 = vperm.slane %v52, 1
  %v3057 = vadd.f32 %v3045, %v3056
  %v3058 = vadd.f32 %v3046, %v3056
  %v3059 = vadd.f32 %v3047, %v3056
  %v3060 = vadd.f32 %v3048, %v3056
  %v3061 = vadd.f32 %v3049, %v3056
  %v3062 = vadd.f32 %v3050, %v3056
  %v3063 = vadd.f32 %v3051, %v3056
  %v3064 = vadd.f32 %v3052, %v3056
  %v3065 = vadd.f32 %v3053, %v3056
  %v3066 = vadd.f32 %v3054, %v3056
  %v3067 = vadd.f32 %v3055, %v3056
  %v3068 = vpack.c.bf16 %v3058, %v3057
  %v3069 = vpack.c.bf16 %v3060, %v3059
  %v3070 = vpack.c.bf16 %v3062, %v3061
  %v3071 = vpack.c.bf16 %v3064, %v3063
  %v3072 = vpack.c.bf16 %v3066, %v3065
  %v3073 = vpack.c.bf16 %v3067, %v3067
  %s3074 = scalar_lea.vmem %s3, 32
  %v3075 = vld [vmem:[%s3074] sm:$0xff]
  %v3076 = vld [vmem:[%s3074 + $0x8] sm:$0xff]
  %v3077 = vld [vmem:[%s3074 + $0x10] sm:$0xff]
  %v3078 = vld [vmem:[%s3074 + $0x18] sm:$0xff]
  %v3079 = vperm.slane %v52, 2
  %v3080 = vperm.slane %v53, 2
  %v3085 = vunpack.c.l.b16 %v3075
  %v3086 = vunpack.c.h.b16 %v3075
  %v3087 = vunpack.c.l.b16 %v3076
  %v3088 = vunpack.c.h.b16 %v3076
  %v3089 = vunpack.c.l.b16 %v3077
  %v3090 = vunpack.c.h.b16 %v3077
  %v3091 = vunpack.c.l.b16 %v3078
  %v3092 = vunpack.c.h.b16 %v3078
  %v3093 = vpack.c.b16 %v3087, %v3085
  %v3094 = vpack.c.b16 %v3088, %v3086
  %v3095 = vpack.c.b16 %v3091, %v3089
  %v3096 = vpack.c.b16 %v3092, %v3090
  %v3102 = vsel %vm88, %v3068, 0
  %v3105 = vsel %vm88, %v3069, 0
  %v3108 = vsel %vm88, %v3070, 0
  %v3111 = vsel %vm88, %v3071, 0
  %v3114 = vsel %vm88, %v3072, 0
  %v3117 = vsel %vm88, %v3073, 0
  %3119 = vmatpush.bf16.msra.mxu0 0
  %3120 = vmatpush.bf16.msra.mxu0 0
  %3121 = vmatpush.bf16.msra.mxu0 0
  %3122 = vmatpush.bf16.msra.mxu0 0
  %3123 = vmatpush.bf16.msra.mxu0 0
  %3124 = vmatpush.bf16.msra.mxu0 0
  %3125 = vmatpush.bf16.msra.mxu0 %v3095
  %3126 = vmatpush.bf16.msra.mxu0 %v3093
  %3127 = vmatmul.bf16.gmra.mxu0 %v3102
  %v3128 = vpop.f32.mrf.mxu0
  %v3129 = vadd.f32 %v3079, %v3128
  %v3130 = vpop.f32.mrf.mxu0
  %v3131 = vadd.f32 %v3079, %v3130
  %3132 = vmatmul.bf16.gmra.mxu0 %v3105
  %v3133 = vpop.f32.mrf.mxu0
  %v3134 = vadd.f32 %v3079, %v3133
  %v3135 = vpop.f32.mrf.mxu0
  %v3136 = vadd.f32 %v3079, %v3135
  %3137 = vmatmul.bf16.gmra.mxu0 %v3108
  %v3138 = vpop.f32.mrf.mxu0
  %v3139 = vadd.f32 %v3079, %v3138
  %v3140 = vpop.f32.mrf.mxu0
  %v3141 = vadd.f32 %v3079, %v3140
  %3142 = vmatmul.bf16.gmra.mxu0 %v3111
  %v3143 = vpop.f32.mrf.mxu0
  %v3144 = vadd.f32 %v3079, %v3143
  %v3145 = vpop.f32.mrf.mxu0
  %v3146 = vadd.f32 %v3079, %v3145
  %3147 = vmatmul.bf16.gmra.mxu0 %v3114
  %v3148 = vpop.f32.mrf.mxu0
  %v3149 = vadd.f32 %v3079, %v3148
  %v3150 = vpop.f32.mrf.mxu0
  %v3151 = vadd.f32 %v3079, %v3150
  %3152 = vmatmul.bf16.gmra.mxu0 %v3117
  %v3153 = vpop.f32.mrf.mxu0
  %v3154 = vadd.f32 %v3079, %v3153
  %v3155 = vpop.f32.mrf.mxu0
  %3156 = vdwg.mxu0
  %3157 = vmatpush.bf16.msra.mxu0 0
  %3158 = vmatpush.bf16.msra.mxu0 0
  %3159 = vmatpush.bf16.msra.mxu0 0
  %3160 = vmatpush.bf16.msra.mxu0 0
  %3161 = vmatpush.bf16.msra.mxu0 0
  %3162 = vmatpush.bf16.msra.mxu0 0
  %3163 = vmatpush.bf16.msra.mxu0 %v3096
  %3164 = vmatpush.bf16.msra.mxu0 %v3094
  %3165 = vmatmul.bf16.gmra.mxu0 %v3102
  %v3166 = vpop.f32.mrf.mxu0
  %v3167 = vadd.f32 %v3080, %v3166
  %v3168 = vpop.f32.mrf.mxu0
  %v3169 = vadd.f32 %v3080, %v3168
  %3170 = vmatmul.bf16.gmra.mxu0 %v3105
  %v3171 = vpop.f32.mrf.mxu0
  %v3172 = vadd.f32 %v3080, %v3171
  %v3173 = vpop.f32.mrf.mxu0
  %v3174 = vadd.f32 %v3080, %v3173
  %3175 = vmatmul.bf16.gmra.mxu0 %v3108
  %v3176 = vpop.f32.mrf.mxu0
  %v3177 = vadd.f32 %v3080, %v3176
  %v3178 = vpop.f32.mrf.mxu0
  %v3179 = vadd.f32 %v3080, %v3178
  %3180 = vmatmul.bf16.gmra.mxu0 %v3111
  %v3181 = vpop.f32.mrf.mxu0
  %v3182 = vadd.f32 %v3080, %v3181
  %v3183 = vpop.f32.mrf.mxu0
  %v3184 = vadd.f32 %v3080, %v3183
  %3185 = vmatmul.bf16.gmra.mxu0 %v3114
  %v3186 = vpop.f32.mrf.mxu0
  %v3187 = vadd.f32 %v3080, %v3186
  %v3188 = vpop.f32.mrf.mxu0
  %v3189 = vadd.f32 %v3080, %v3188
  %3190 = vmatmul.bf16.gmra.mxu0 %v3117
  %v3191 = vpop.f32.mrf.mxu0
  %v3192 = vadd.f32 %v3080, %v3191
  %v3193 = vpop.f32.mrf.mxu0
  %3194 = vdwg.mxu0
  %v3195 = vpack.c.bf16 %v3167, %v3129
  %v3196 = vpack.c.bf16 %v3169, %v3131
  %v3197 = vpack.c.bf16 %v3172, %v3134
  %v3198 = vpack.c.bf16 %v3174, %v3136
  %v3199 = vpack.c.bf16 %v3177, %v3139
  %v3200 = vpack.c.bf16 %v3179, %v3141
  %v3201 = vpack.c.bf16 %v3182, %v3144
  %v3202 = vpack.c.bf16 %v3184, %v3146
  %v3203 = vpack.c.bf16 %v3187, %v3149
  %v3204 = vpack.c.bf16 %v3189, %v3151
  %v3205 = vpack.c.bf16 %v3192, %v3154
  %3217 = vrot.lane.b32.xlu0 %v3129, 96
  %v3218 = vpop.permute.xlu0 %3217
  %3219 = vrot.lane.b32.xlu0 %v3131, 96
  %v3220 = vpop.permute.xlu0 %3219
  %3221 = vrot.lane.b32.xlu0 %v3134, 96
  %v3222 = vpop.permute.xlu0 %3221
  %3223 = vrot.lane.b32.xlu0 %v3136, 96
  %v3224 = vpop.permute.xlu0 %3223
  %3225 = vrot.lane.b32.xlu0 %v3139, 96
  %v3226 = vpop.permute.xlu0 %3225
  %3227 = vrot.lane.b32.xlu0 %v3141, 96
  %v3228 = vpop.permute.xlu0 %3227
  %3229 = vrot.lane.b32.xlu0 %v3144, 96
  %v3230 = vpop.permute.xlu0 %3229
  %3231 = vrot.lane.b32.xlu0 %v3146, 96
  %v3232 = vpop.permute.xlu0 %3231
  %3233 = vrot.lane.b32.xlu0 %v3149, 96
  %v3234 = vpop.permute.xlu0 %3233
  %3235 = vrot.lane.b32.xlu0 %v3151, 96
  %v3236 = vpop.permute.xlu0 %3235
  %3237 = vrot.lane.b32.xlu0 %v3154, 96
  %v3238 = vpop.permute.xlu0 %3237
  %v3239 = vsel %vm533, %v3129, 0
  %v3241 = vsel %vm533, %v3131, 0
  %v3243 = vsel %vm533, %v3134, 0
  %v3245 = vsel %vm533, %v3136, 0
  %v3247 = vsel %vm533, %v3139, 0
  %v3249 = vsel %vm533, %v3141, 0
  %v3251 = vsel %vm533, %v3144, 0
  %v3253 = vsel %vm533, %v3146, 0
  %v3255 = vsel %vm533, %v3149, 0
  %v3257 = vsel %vm533, %v3151, 0
  %v3259 = vsel %vm533, %v3154, 0
  %v3261 = vsel %vm533, %v3218, 0
  %v3263 = vsel %vm533, %v3220, 0
  %v3265 = vsel %vm533, %v3222, 0
  %v3267 = vsel %vm533, %v3224, 0
  %v3269 = vsel %vm533, %v3226, 0
  %v3271 = vsel %vm533, %v3228, 0
  %v3273 = vsel %vm533, %v3230, 0
  %v3275 = vsel %vm533, %v3232, 0
  %v3277 = vsel %vm533, %v3234, 0
  %v3279 = vsel %vm533, %v3236, 0
  %v3281 = vsel %vm533, %v3238, 0
  %3283 = vmatpush.xpose.msra.mxu0 0.0
  %3284 = vmatpush.xpose.msra.mxu0 0.0
  %3285 = vmatpush.xpose.msra.mxu0 0.0
  %3286 = vmatpush.xpose.msra.mxu0 0.0
  %3287 = vmatpush.xpose.msra.mxu0 0.0
  %3288 = vmatpush.xpose.msra.mxu0 %v3281
  %3289 = vmatpush.xpose.msra.mxu0 %v3279
  %3290 = vmatpush.xpose.msra.mxu0 %v3277
  %3291 = vmatpush.xpose.msra.mxu0 %v3275
  %3292 = vmatpush.xpose.msra.mxu0 %v3273
  %3293 = vmatpush.xpose.msra.mxu0 %v3271
  %3294 = vmatpush.xpose.msra.mxu0 %v3269
  %3295 = vmatpush.xpose.msra.mxu0 %v3267
  %3296 = vmatpush.xpose.msra.mxu0 %v3265
  %3297 = vmatpush.xpose.msra.mxu0 %v3263
  %3298 = vmatpush.xpose.msra.mxu0 %v3261
  %3299 = vmatmul.f32.gmra.mxu0 %v3239
  %v3300 = vpop.f32.mrf.mxu0
  %v3301 = vadd.f32 0.0, %v3300
  %3302 = vmatmul.f32.gmra.mxu0 %v3241
  %v3303 = vpop.f32.mrf.mxu0
  %v3304 = vadd.f32 0.0, %v3303
  %3305 = vmatmul.f32.gmra.mxu0 %v3243
  %v3306 = vpop.f32.mrf.mxu0
  %v3307 = vadd.f32 0.0, %v3306
  %3308 = vmatmul.f32.gmra.mxu0 %v3245
  %v3309 = vpop.f32.mrf.mxu0
  %v3310 = vadd.f32 0.0, %v3309
  %3311 = vmatmul.f32.gmra.mxu0 %v3247
  %v3312 = vpop.f32.mrf.mxu0
  %v3313 = vadd.f32 0.0, %v3312
  %3314 = vmatmul.f32.gmra.mxu0 %v3249
  %v3315 = vpop.f32.mrf.mxu0
  %v3316 = vadd.f32 0.0, %v3315
  %3317 = vmatmul.f32.gmra.mxu0 %v3251
  %v3318 = vpop.f32.mrf.mxu0
  %v3319 = vadd.f32 0.0, %v3318
  %3320 = vmatmul.f32.gmra.mxu0 %v3253
  %v3321 = vpop.f32.mrf.mxu0
  %v3322 = vadd.f32 0.0, %v3321
  %3323 = vmatmul.f32.gmra.mxu0 %v3255
  %v3324 = vpop.f32.mrf.mxu0
  %v3325 = vadd.f32 0.0, %v3324
  %3326 = vmatmul.f32.gmra.mxu0 %v3257
  %v3327 = vpop.f32.mrf.mxu0
  %v3328 = vadd.f32 0.0, %v3327
  %3329 = vmatmul.f32.gmra.mxu0 %v3259
  %v3330 = vpop.f32.mrf.mxu0
  %v3331 = vadd.f32 0.0, %v3330
  %3332 = vdwg.mxu0
  %v3333 = vsel %vm39, %v3301, -1e+30
  %v3334 = vsel %vm40, %v3304, -1e+30
  %v3335 = vsel %vm41, %v3307, -1e+30
  %v3336 = vsel %vm42, %v3310, -1e+30
  %v3337 = vsel %vm43, %v3313, -1e+30
  %v3338 = vsel %vm44, %v3316, -1e+30
  %v3339 = vsel %vm45, %v3319, -1e+30
  %v3340 = vsel %vm46, %v3322, -1e+30
  %v3341 = vsel %vm47, %v3325, -1e+30
  %v3342 = vsel %vm48, %v3328, -1e+30
  %v3343 = vsel %vm49, %v3331, -1e+30
  %v3344 = vsel %vm639, %v3333, -inf
  %3345 = vmax.xlane.f32.xlu0 %v3344
  %v3346 = vpop.xlane.xlu0 %3345
  %v3347 = vsel %vm639, %v3334, -inf
  %3348 = vmax.xlane.f32.xlu0 %v3347
  %v3349 = vpop.xlane.xlu0 %3348
  %v3350 = vsel %vm639, %v3335, -inf
  %3351 = vmax.xlane.f32.xlu0 %v3350
  %v3352 = vpop.xlane.xlu0 %3351
  %v3353 = vsel %vm639, %v3336, -inf
  %3354 = vmax.xlane.f32.xlu0 %v3353
  %v3355 = vpop.xlane.xlu0 %3354
  %v3356 = vsel %vm639, %v3337, -inf
  %3357 = vmax.xlane.f32.xlu0 %v3356
  %v3358 = vpop.xlane.xlu0 %3357
  %v3359 = vsel %vm639, %v3338, -inf
  %3360 = vmax.xlane.f32.xlu0 %v3359
  %v3361 = vpop.xlane.xlu0 %3360
  %v3362 = vsel %vm639, %v3339, -inf
  %3363 = vmax.xlane.f32.xlu0 %v3362
  %v3364 = vpop.xlane.xlu0 %3363
  %v3365 = vsel %vm639, %v3340, -inf
  %3366 = vmax.xlane.f32.xlu0 %v3365
  %v3367 = vpop.xlane.xlu0 %3366
  %v3368 = vsel %vm639, %v3341, -inf
  %3369 = vmax.xlane.f32.xlu0 %v3368
  %v3370 = vpop.xlane.xlu0 %3369
  %v3371 = vsel %vm639, %v3342, -inf
  %3372 = vmax.xlane.f32.xlu0 %v3371
  %v3373 = vpop.xlane.xlu0 %3372
  %v3374 = vsel %vm670, %v3343, -inf
  %3375 = vmax.xlane.f32.xlu0 %v3374
  %v3376 = vpop.xlane.xlu0 %3375
  %v3377 = vsub.f32 %v3333, %v3346
  %v3378 = vsub.f32 %v3334, %v3349
  %v3379 = vsub.f32 %v3335, %v3352
  %v3380 = vsub.f32 %v3336, %v3355
  %v3381 = vsub.f32 %v3337, %v3358
  %v3382 = vsub.f32 %v3338, %v3361
  %v3383 = vsub.f32 %v3339, %v3364
  %v3384 = vsub.f32 %v3340, %v3367
  %v3385 = vsub.f32 %v3341, %v3370
  %v3386 = vsub.f32 %v3342, %v3373
  %v3387 = vsub.f32 %v3343, %v3376
  %v3388 = vpack.c.bf16 %v3378, %v3377
  %v3389 = vpack.c.bf16 %v3380, %v3379
  %v3390 = vpack.c.bf16 %v3382, %v3381
  %v3391 = vpack.c.bf16 %v3384, %v3383
  %v3392 = vpack.c.bf16 %v3386, %v3385
  %v3393 = vpack.c.bf16 %v3387, %v3387
  %v3394 = vunpack.c.l.bf16 %v3388
  %v3395 = vunpack.c.h.bf16 %v3388
  %v3396 = vunpack.c.l.bf16 %v3389
  %v3397 = vunpack.c.h.bf16 %v3389
  %v3398 = vunpack.c.l.bf16 %v3390
  %v3399 = vunpack.c.h.bf16 %v3390
  %v3400 = vunpack.c.l.bf16 %v3391
  %v3401 = vunpack.c.h.bf16 %v3391
  %v3402 = vunpack.c.l.bf16 %v3392
  %v3403 = vunpack.c.h.bf16 %v3392
  %v3404 = vunpack.c.l.bf16 %v3393
  %v3405 = vmul.f32 %v3394, 1.442695
  %v3406 = vpow.pop %v3405
  %v3407 = vmul.f32 %v3395, 1.442695
  %v3408 = vpow.pop %v3407
  %v3409 = vmul.f32 %v3396, 1.442695
  %v3410 = vpow.pop %v3409
  %v3411 = vmul.f32 %v3397, 1.442695
  %v3412 = vpow.pop %v3411
  %v3413 = vmul.f32 %v3398, 1.442695
  %v3414 = vpow.pop %v3413
  %v3415 = vmul.f32 %v3399, 1.442695
  %v3416 = vpow.pop %v3415
  %v3417 = vmul.f32 %v3400, 1.442695
  %v3418 = vpow.pop %v3417
  %v3419 = vmul.f32 %v3401, 1.442695
  %v3420 = vpow.pop %v3419
  %v3421 = vmul.f32 %v3402, 1.442695
  %v3422 = vpow.pop %v3421
  %v3423 = vmul.f32 %v3403, 1.442695
  %v3424 = vpow.pop %v3423
  %v3425 = vmul.f32 %v3404, 1.442695
  %v3426 = vpow.pop %v3425
  %v3427 = vpack.c.bf16 %v3408, %v3406
  %v3428 = vpack.c.bf16 %v3412, %v3410
  %v3429 = vpack.c.bf16 %v3416, %v3414
  %v3430 = vpack.c.bf16 %v3420, %v3418
  %v3431 = vpack.c.bf16 %v3424, %v3422
  %v3432 = vpack.c.bf16 %v3426, %v3426
  %v3433 = vunpack.c.l.bf16 %v3427
  %v3434 = vunpack.c.h.bf16 %v3427
  %v3435 = vunpack.c.l.bf16 %v3428
  %v3436 = vunpack.c.h.bf16 %v3428
  %v3437 = vunpack.c.l.bf16 %v3429
  %v3438 = vunpack.c.h.bf16 %v3429
  %v3439 = vunpack.c.l.bf16 %v3430
  %v3440 = vunpack.c.h.bf16 %v3430
  %v3441 = vunpack.c.l.bf16 %v3431
  %v3442 = vunpack.c.h.bf16 %v3431
  %v3443 = vunpack.c.l.bf16 %v3432
  %v3444 = vsel %vm639, %v3433, 0.0
  %3445 = vadd.xlane.f32.xlu0 %v3444
  %v3446 = vpop.xlane.xlu0 %3445
  %v3447 = vsel %vm639, %v3434, 0.0
  %3448 = vadd.xlane.f32.xlu0 %v3447
  %v3449 = vpop.xlane.xlu0 %3448
  %v3450 = vsel %vm639, %v3435, 0.0
  %3451 = vadd.xlane.f32.xlu0 %v3450
  %v3452 = vpop.xlane.xlu0 %3451
  %v3453 = vsel %vm639, %v3436, 0.0
  %3454 = vadd.xlane.f32.xlu0 %v3453
  %v3455 = vpop.xlane.xlu0 %3454
  %v3456 = vsel %vm639, %v3437, 0.0
  %3457 = vadd.xlane.f32.xlu0 %v3456
  %v3458 = vpop.xlane.xlu0 %3457
  %v3459 = vsel %vm639, %v3438, 0.0
  %3460 = vadd.xlane.f32.xlu0 %v3459
  %v3461 = vpop.xlane.xlu0 %3460
  %v3462 = vsel %vm639, %v3439, 0.0
  %3463 = vadd.xlane.f32.xlu0 %v3462
  %v3464 = vpop.xlane.xlu0 %3463
  %v3465 = vsel %vm639, %v3440, 0.0
  %3466 = vadd.xlane.f32.xlu0 %v3465
  %v3467 = vpop.xlane.xlu0 %3466
  %v3468 = vsel %vm639, %v3441, 0.0
  %3469 = vadd.xlane.f32.xlu0 %v3468
  %v3470 = vpop.xlane.xlu0 %3469
  %v3471 = vsel %vm639, %v3442, 0.0
  %3472 = vadd.xlane.f32.xlu0 %v3471
  %v3473 = vpop.xlane.xlu0 %3472
  %v3474 = vsel %vm670, %v3443, 0.0
  %3475 = vadd.xlane.f32.xlu0 %v3474
  %v3476 = vpop.xlane.xlu0 %3475
  %v3477 = vrcp.pop %v3446
  %v3478 = vrcp.pop %v3449
  %v3479 = vrcp.pop %v3452
  %v3480 = vrcp.pop %v3455
  %v3481 = vrcp.pop %v3458
  %v3482 = vrcp.pop %v3461
  %v3483 = vrcp.pop %v3464
  %v3484 = vrcp.pop %v3467
  %v3485 = vrcp.pop %v3470
  %v3486 = vrcp.pop %v3473
  %v3487 = vrcp.pop %v3476
  %v3499 = vunpack.c.l.b16 %v3195
  %v3500 = vunpack.c.l.b16 %v3196
  %v3501 = vunpack.c.l.b16 %v3197
  %v3502 = vunpack.c.l.b16 %v3198
  %v3503 = vunpack.c.l.b16 %v3199
  %v3504 = vunpack.c.l.b16 %v3200
  %v3505 = vunpack.c.l.b16 %v3201
  %v3506 = vunpack.c.l.b16 %v3202
  %v3507 = vunpack.c.l.b16 %v3203
  %v3508 = vunpack.c.l.b16 %v3204
  %v3509 = vunpack.c.l.b16 %v3205
  %v3510 = vpack.c.b16 %v3500, %v3499
  %v3511 = vpack.c.b16 %v3502, %v3501
  %v3512 = vpack.c.b16 %v3504, %v3503
  %v3513 = vpack.c.b16 %v3506, %v3505
  %v3514 = vpack.c.b16 %v3508, %v3507
  %v3515 = vpack.c.b16 %v3509, %v3509
  %3516 = vrot.lane.b32.xlu0 %v3510, 64
  %v3517 = vpop.permute.xlu0 %3516
  %3518 = vrot.lane.b32.xlu0 %v3511, 64
  %v3519 = vpop.permute.xlu0 %3518
  %3520 = vrot.lane.b32.xlu0 %v3512, 64
  %v3521 = vpop.permute.xlu0 %3520
  %3522 = vrot.lane.b32.xlu0 %v3513, 64
  %v3523 = vpop.permute.xlu0 %3522
  %3524 = vrot.lane.b32.xlu0 %v3514, 64
  %v3525 = vpop.permute.xlu0 %3524
  %3526 = vrot.lane.b32.xlu0 %v3515, 64
  %v3527 = vpop.permute.xlu0 %3526
  %v3534 = vsel %vm639, %v3427, 0
  %v3537 = vsel %vm639, %v3428, 0
  %v3540 = vsel %vm639, %v3429, 0
  %v3543 = vsel %vm639, %v3430, 0
  %v3546 = vsel %vm639, %v3431, 0
  %v3549 = vsel %vm639, %v3432, 0
  %v3552 = vand.u32 %v3527, %v850
  %3554 = vmatpush.bf16.msra.mxu0 0
  %3555 = vmatpush.bf16.msra.mxu0 0
  %3556 = vmatpush.bf16.msra.mxu0 %v3552
  %3557 = vmatpush.bf16.msra.mxu0 %v3525
  %3558 = vmatpush.bf16.msra.mxu0 %v3523
  %3559 = vmatpush.bf16.msra.mxu0 %v3521
  %3560 = vmatpush.bf16.msra.mxu0 %v3519
  %3561 = vmatpush.bf16.msra.mxu0 %v3517
  %3562 = vmatmul.bf16.gmra.mxu0 %v3534
  %v3563 = vpop.f32.mrf.mxu0
  %v3564 = vadd.f32 0.0, %v3563
  %v3565 = vpop.f32.mrf.mxu0
  %v3566 = vadd.f32 0.0, %v3565
  %3567 = vmatmul.bf16.gmra.mxu0 %v3537
  %v3568 = vpop.f32.mrf.mxu0
  %v3569 = vadd.f32 0.0, %v3568
  %v3570 = vpop.f32.mrf.mxu0
  %v3571 = vadd.f32 0.0, %v3570
  %3572 = vmatmul.bf16.gmra.mxu0 %v3540
  %v3573 = vpop.f32.mrf.mxu0
  %v3574 = vadd.f32 0.0, %v3573
  %v3575 = vpop.f32.mrf.mxu0
  %v3576 = vadd.f32 0.0, %v3575
  %3577 = vmatmul.bf16.gmra.mxu0 %v3543
  %v3578 = vpop.f32.mrf.mxu0
  %v3579 = vadd.f32 0.0, %v3578
  %v3580 = vpop.f32.mrf.mxu0
  %v3581 = vadd.f32 0.0, %v3580
  %3582 = vmatmul.bf16.gmra.mxu0 %v3546
  %v3583 = vpop.f32.mrf.mxu0
  %v3584 = vadd.f32 0.0, %v3583
  %v3585 = vpop.f32.mrf.mxu0
  %v3586 = vadd.f32 0.0, %v3585
  %3587 = vmatmul.bf16.gmra.mxu0 %v3549
  %v3588 = vpop.f32.mrf.mxu0
  %v3589 = vadd.f32 0.0, %v3588
  %v3590 = vpop.f32.mrf.mxu0
  %3591 = vdwg.mxu0
  %v3592 = vmul.f32 %v3564, %v3477
  %v3593 = vmul.f32 %v3566, %v3478
  %v3594 = vmul.f32 %v3569, %v3479
  %v3595 = vmul.f32 %v3571, %v3480
  %v3596 = vmul.f32 %v3574, %v3481
  %v3597 = vmul.f32 %v3576, %v3482
  %v3598 = vmul.f32 %v3579, %v3483
  %v3599 = vmul.f32 %v3581, %v3484
  %v3600 = vmul.f32 %v3584, %v3485
  %v3601 = vmul.f32 %v3586, %v3486
  %v3602 = vmul.f32 %v3589, %v3487
  %3603 = vrot.lane.b32.xlu0 %v3129, 120
  %v3604 = vpop.permute.xlu0 %3603
  %3605 = vrot.lane.b32.xlu0 %v3131, 120
  %v3606 = vpop.permute.xlu0 %3605
  %3607 = vrot.lane.b32.xlu0 %v3134, 120
  %v3608 = vpop.permute.xlu0 %3607
  %3609 = vrot.lane.b32.xlu0 %v3136, 120
  %v3610 = vpop.permute.xlu0 %3609
  %3611 = vrot.lane.b32.xlu0 %v3139, 120
  %v3612 = vpop.permute.xlu0 %3611
  %3613 = vrot.lane.b32.xlu0 %v3141, 120
  %v3614 = vpop.permute.xlu0 %3613
  %3615 = vrot.lane.b32.xlu0 %v3144, 120
  %v3616 = vpop.permute.xlu0 %3615
  %3617 = vrot.lane.b32.xlu0 %v3146, 120
  %v3618 = vpop.permute.xlu0 %3617
  %3619 = vrot.lane.b32.xlu0 %v3149, 120
  %v3620 = vpop.permute.xlu0 %3619
  %3621 = vrot.lane.b32.xlu0 %v3151, 120
  %v3622 = vpop.permute.xlu0 %3621
  %3623 = vrot.lane.b32.xlu0 %v3154, 120
  %v3624 = vpop.permute.xlu0 %3623
  %3625 = vrot.lane.b32.xlu0 %v3129, 88
  %v3626 = vpop.permute.xlu0 %3625
  %3627 = vrot.lane.b32.xlu0 %v3131, 88
  %v3628 = vpop.permute.xlu0 %3627
  %3629 = vrot.lane.b32.xlu0 %v3134, 88
  %v3630 = vpop.permute.xlu0 %3629
  %3631 = vrot.lane.b32.xlu0 %v3136, 88
  %v3632 = vpop.permute.xlu0 %3631
  %3633 = vrot.lane.b32.xlu0 %v3139, 88
  %v3634 = vpop.permute.xlu0 %3633
  %3635 = vrot.lane.b32.xlu0 %v3141, 88
  %v3636 = vpop.permute.xlu0 %3635
  %3637 = vrot.lane.b32.xlu0 %v3144, 88
  %v3638 = vpop.permute.xlu0 %3637
  %3639 = vrot.lane.b32.xlu0 %v3146, 88
  %v3640 = vpop.permute.xlu0 %3639
  %3641 = vrot.lane.b32.xlu0 %v3149, 88
  %v3642 = vpop.permute.xlu0 %3641
  %3643 = vrot.lane.b32.xlu0 %v3151, 88
  %v3644 = vpop.permute.xlu0 %3643
  %3645 = vrot.lane.b32.xlu0 %v3154, 88
  %v3646 = vpop.permute.xlu0 %3645
  %v3647 = vsel %vm533, %v3604, 0
  %v3649 = vsel %vm533, %v3606, 0
  %v3651 = vsel %vm533, %v3608, 0
  %v3653 = vsel %vm533, %v3610, 0
  %v3655 = vsel %vm533, %v3612, 0
  %v3657 = vsel %vm533, %v3614, 0
  %v3659 = vsel %vm533, %v3616, 0
  %v3661 = vsel %vm533, %v3618, 0
  %v3663 = vsel %vm533, %v3620, 0
  %v3665 = vsel %vm533, %v3622, 0
  %v3667 = vsel %vm533, %v3624, 0
  %v3669 = vsel %vm533, %v3626, 0
  %v3671 = vsel %vm533, %v3628, 0
  %v3673 = vsel %vm533, %v3630, 0
  %v3675 = vsel %vm533, %v3632, 0
  %v3677 = vsel %vm533, %v3634, 0
  %v3679 = vsel %vm533, %v3636, 0
  %v3681 = vsel %vm533, %v3638, 0
  %v3683 = vsel %vm533, %v3640, 0
  %v3685 = vsel %vm533, %v3642, 0
  %v3687 = vsel %vm533, %v3644, 0
  %v3689 = vsel %vm533, %v3646, 0
  %3691 = vmatpush.xpose.msra.mxu0 0.0
  %3692 = vmatpush.xpose.msra.mxu0 0.0
  %3693 = vmatpush.xpose.msra.mxu0 0.0
  %3694 = vmatpush.xpose.msra.mxu0 0.0
  %3695 = vmatpush.xpose.msra.mxu0 0.0
  %3696 = vmatpush.xpose.msra.mxu0 %v3689
  %3697 = vmatpush.xpose.msra.mxu0 %v3687
  %3698 = vmatpush.xpose.msra.mxu0 %v3685
  %3699 = vmatpush.xpose.msra.mxu0 %v3683
  %3700 = vmatpush.xpose.msra.mxu0 %v3681
  %3701 = vmatpush.xpose.msra.mxu0 %v3679
  %3702 = vmatpush.xpose.msra.mxu0 %v3677
  %3703 = vmatpush.xpose.msra.mxu0 %v3675
  %3704 = vmatpush.xpose.msra.mxu0 %v3673
  %3705 = vmatpush.xpose.msra.mxu0 %v3671
  %3706 = vmatpush.xpose.msra.mxu0 %v3669
  %3707 = vmatmul.f32.gmra.mxu0 %v3647
  %v3708 = vpop.f32.mrf.mxu0
  %v3709 = vadd.f32 0.0, %v3708
  %3710 = vmatmul.f32.gmra.mxu0 %v3649
  %v3711 = vpop.f32.mrf.mxu0
  %v3712 = vadd.f32 0.0, %v3711
  %3713 = vmatmul.f32.gmra.mxu0 %v3651
  %v3714 = vpop.f32.mrf.mxu0
  %v3715 = vadd.f32 0.0, %v3714
  %3716 = vmatmul.f32.gmra.mxu0 %v3653
  %v3717 = vpop.f32.mrf.mxu0
  %v3718 = vadd.f32 0.0, %v3717
  %3719 = vmatmul.f32.gmra.mxu0 %v3655
  %v3720 = vpop.f32.mrf.mxu0
  %v3721 = vadd.f32 0.0, %v3720
  %3722 = vmatmul.f32.gmra.mxu0 %v3657
  %v3723 = vpop.f32.mrf.mxu0
  %v3724 = vadd.f32 0.0, %v3723
  %3725 = vmatmul.f32.gmra.mxu0 %v3659
  %v3726 = vpop.f32.mrf.mxu0
  %v3727 = vadd.f32 0.0, %v3726
  %3728 = vmatmul.f32.gmra.mxu0 %v3661
  %v3729 = vpop.f32.mrf.mxu0
  %v3730 = vadd.f32 0.0, %v3729
  %3731 = vmatmul.f32.gmra.mxu0 %v3663
  %v3732 = vpop.f32.mrf.mxu0
  %v3733 = vadd.f32 0.0, %v3732
  %3734 = vmatmul.f32.gmra.mxu0 %v3665
  %v3735 = vpop.f32.mrf.mxu0
  %v3736 = vadd.f32 0.0, %v3735
  %3737 = vmatmul.f32.gmra.mxu0 %v3667
  %v3738 = vpop.f32.mrf.mxu0
  %v3739 = vadd.f32 0.0, %v3738
  %3740 = vdwg.mxu0
  %v3741 = vsel %vm39, %v3709, -1e+30
  %v3742 = vsel %vm40, %v3712, -1e+30
  %v3743 = vsel %vm41, %v3715, -1e+30
  %v3744 = vsel %vm42, %v3718, -1e+30
  %v3745 = vsel %vm43, %v3721, -1e+30
  %v3746 = vsel %vm44, %v3724, -1e+30
  %v3747 = vsel %vm45, %v3727, -1e+30
  %v3748 = vsel %vm46, %v3730, -1e+30
  %v3749 = vsel %vm47, %v3733, -1e+30
  %v3750 = vsel %vm48, %v3736, -1e+30
  %v3751 = vsel %vm49, %v3739, -1e+30
  %v3752 = vsel %vm639, %v3741, -inf
  %3753 = vmax.xlane.f32.xlu0 %v3752
  %v3754 = vpop.xlane.xlu0 %3753
  %v3755 = vsel %vm639, %v3742, -inf
  %3756 = vmax.xlane.f32.xlu0 %v3755
  %v3757 = vpop.xlane.xlu0 %3756
  %v3758 = vsel %vm639, %v3743, -inf
  %3759 = vmax.xlane.f32.xlu0 %v3758
  %v3760 = vpop.xlane.xlu0 %3759
  %v3761 = vsel %vm639, %v3744, -inf
  %3762 = vmax.xlane.f32.xlu0 %v3761
  %v3763 = vpop.xlane.xlu0 %3762
  %v3764 = vsel %vm639, %v3745, -inf
  %3765 = vmax.xlane.f32.xlu0 %v3764
  %v3766 = vpop.xlane.xlu0 %3765
  %v3767 = vsel %vm639, %v3746, -inf
  %3768 = vmax.xlane.f32.xlu0 %v3767
  %v3769 = vpop.xlane.xlu0 %3768
  %v3770 = vsel %vm639, %v3747, -inf
  %3771 = vmax.xlane.f32.xlu0 %v3770
  %v3772 = vpop.xlane.xlu0 %3771
  %v3773 = vsel %vm639, %v3748, -inf
  %3774 = vmax.xlane.f32.xlu0 %v3773
  %v3775 = vpop.xlane.xlu0 %3774
  %v3776 = vsel %vm639, %v3749, -inf
  %3777 = vmax.xlane.f32.xlu0 %v3776
  %v3778 = vpop.xlane.xlu0 %3777
  %v3779 = vsel %vm639, %v3750, -inf
  %3780 = vmax.xlane.f32.xlu0 %v3779
  %v3781 = vpop.xlane.xlu0 %3780
  %v3782 = vsel %vm670, %v3751, -inf
  %3783 = vmax.xlane.f32.xlu0 %v3782
  %v3784 = vpop.xlane.xlu0 %3783
  %v3785 = vsub.f32 %v3741, %v3754
  %v3786 = vsub.f32 %v3742, %v3757
  %v3787 = vsub.f32 %v3743, %v3760
  %v3788 = vsub.f32 %v3744, %v3763
  %v3789 = vsub.f32 %v3745, %v3766
  %v3790 = vsub.f32 %v3746, %v3769
  %v3791 = vsub.f32 %v3747, %v3772
  %v3792 = vsub.f32 %v3748, %v3775
  %v3793 = vsub.f32 %v3749, %v3778
  %v3794 = vsub.f32 %v3750, %v3781
  %v3795 = vsub.f32 %v3751, %v3784
  %v3796 = vpack.c.bf16 %v3786, %v3785
  %v3797 = vpack.c.bf16 %v3788, %v3787
  %v3798 = vpack.c.bf16 %v3790, %v3789
  %v3799 = vpack.c.bf16 %v3792, %v3791
  %v3800 = vpack.c.bf16 %v3794, %v3793
  %v3801 = vpack.c.bf16 %v3795, %v3795
  %v3802 = vunpack.c.l.bf16 %v3796
  %v3803 = vunpack.c.h.bf16 %v3796
  %v3804 = vunpack.c.l.bf16 %v3797
  %v3805 = vunpack.c.h.bf16 %v3797
  %v3806 = vunpack.c.l.bf16 %v3798
  %v3807 = vunpack.c.h.bf16 %v3798
  %v3808 = vunpack.c.l.bf16 %v3799
  %v3809 = vunpack.c.h.bf16 %v3799
  %v3810 = vunpack.c.l.bf16 %v3800
  %v3811 = vunpack.c.h.bf16 %v3800
  %v3812 = vunpack.c.l.bf16 %v3801
  %v3813 = vmul.f32 %v3802, 1.442695
  %v3814 = vpow.pop %v3813
  %v3815 = vmul.f32 %v3803, 1.442695
  %v3816 = vpow.pop %v3815
  %v3817 = vmul.f32 %v3804, 1.442695
  %v3818 = vpow.pop %v3817
  %v3819 = vmul.f32 %v3805, 1.442695
  %v3820 = vpow.pop %v3819
  %v3821 = vmul.f32 %v3806, 1.442695
  %v3822 = vpow.pop %v3821
  %v3823 = vmul.f32 %v3807, 1.442695
  %v3824 = vpow.pop %v3823
  %v3825 = vmul.f32 %v3808, 1.442695
  %v3826 = vpow.pop %v3825
  %v3827 = vmul.f32 %v3809, 1.442695
  %v3828 = vpow.pop %v3827
  %v3829 = vmul.f32 %v3810, 1.442695
  %v3830 = vpow.pop %v3829
  %v3831 = vmul.f32 %v3811, 1.442695
  %v3832 = vpow.pop %v3831
  %v3833 = vmul.f32 %v3812, 1.442695
  %v3834 = vpow.pop %v3833
  %v3835 = vpack.c.bf16 %v3816, %v3814
  %v3836 = vpack.c.bf16 %v3820, %v3818
  %v3837 = vpack.c.bf16 %v3824, %v3822
  %v3838 = vpack.c.bf16 %v3828, %v3826
  %v3839 = vpack.c.bf16 %v3832, %v3830
  %v3840 = vpack.c.bf16 %v3834, %v3834
  %v3841 = vunpack.c.l.bf16 %v3835
  %v3842 = vunpack.c.h.bf16 %v3835
  %v3843 = vunpack.c.l.bf16 %v3836
  %v3844 = vunpack.c.h.bf16 %v3836
  %v3845 = vunpack.c.l.bf16 %v3837
  %v3846 = vunpack.c.h.bf16 %v3837
  %v3847 = vunpack.c.l.bf16 %v3838
  %v3848 = vunpack.c.h.bf16 %v3838
  %v3849 = vunpack.c.l.bf16 %v3839
  %v3850 = vunpack.c.h.bf16 %v3839
  %v3851 = vunpack.c.l.bf16 %v3840
  %v3852 = vsel %vm639, %v3841, 0.0
  %3853 = vadd.xlane.f32.xlu0 %v3852
  %v3854 = vpop.xlane.xlu0 %3853
  %v3855 = vsel %vm639, %v3842, 0.0
  %3856 = vadd.xlane.f32.xlu0 %v3855
  %v3857 = vpop.xlane.xlu0 %3856
  %v3858 = vsel %vm639, %v3843, 0.0
  %3859 = vadd.xlane.f32.xlu0 %v3858
  %v3860 = vpop.xlane.xlu0 %3859
  %v3861 = vsel %vm639, %v3844, 0.0
  %3862 = vadd.xlane.f32.xlu0 %v3861
  %v3863 = vpop.xlane.xlu0 %3862
  %v3864 = vsel %vm639, %v3845, 0.0
  %3865 = vadd.xlane.f32.xlu0 %v3864
  %v3866 = vpop.xlane.xlu0 %3865
  %v3867 = vsel %vm639, %v3846, 0.0
  %3868 = vadd.xlane.f32.xlu0 %v3867
  %v3869 = vpop.xlane.xlu0 %3868
  %v3870 = vsel %vm639, %v3847, 0.0
  %3871 = vadd.xlane.f32.xlu0 %v3870
  %v3872 = vpop.xlane.xlu0 %3871
  %v3873 = vsel %vm639, %v3848, 0.0
  %3874 = vadd.xlane.f32.xlu0 %v3873
  %v3875 = vpop.xlane.xlu0 %3874
  %v3876 = vsel %vm639, %v3849, 0.0
  %3877 = vadd.xlane.f32.xlu0 %v3876
  %v3878 = vpop.xlane.xlu0 %3877
  %v3879 = vsel %vm639, %v3850, 0.0
  %3880 = vadd.xlane.f32.xlu0 %v3879
  %v3881 = vpop.xlane.xlu0 %3880
  %v3882 = vsel %vm670, %v3851, 0.0
  %3883 = vadd.xlane.f32.xlu0 %v3882
  %v3884 = vpop.xlane.xlu0 %3883
  %v3885 = vrcp.pop %v3854
  %v3886 = vrcp.pop %v3857
  %v3887 = vrcp.pop %v3860
  %v3888 = vrcp.pop %v3863
  %v3889 = vrcp.pop %v3866
  %v3890 = vrcp.pop %v3869
  %v3891 = vrcp.pop %v3872
  %v3892 = vrcp.pop %v3875
  %v3893 = vrcp.pop %v3878
  %v3894 = vrcp.pop %v3881
  %v3895 = vrcp.pop %v3884
  %3896 = vrot.lane.b32.xlu0 %v3510, 32
  %v3897 = vpop.permute.xlu0 %3896
  %3898 = vrot.lane.b32.xlu0 %v3511, 32
  %v3899 = vpop.permute.xlu0 %3898
  %3900 = vrot.lane.b32.xlu0 %v3512, 32
  %v3901 = vpop.permute.xlu0 %3900
  %3902 = vrot.lane.b32.xlu0 %v3513, 32
  %v3903 = vpop.permute.xlu0 %3902
  %3904 = vrot.lane.b32.xlu0 %v3514, 32
  %v3905 = vpop.permute.xlu0 %3904
  %3906 = vrot.lane.b32.xlu0 %v3515, 32
  %v3907 = vpop.permute.xlu0 %3906
  %v3914 = vsel %vm639, %v3835, 0
  %v3917 = vsel %vm639, %v3836, 0
  %v3920 = vsel %vm639, %v3837, 0
  %v3923 = vsel %vm639, %v3838, 0
  %v3926 = vsel %vm639, %v3839, 0
  %v3929 = vsel %vm639, %v3840, 0
  %v3932 = vand.u32 %v3907, %v850
  %3934 = vmatpush.bf16.msra.mxu0 0
  %3935 = vmatpush.bf16.msra.mxu0 0
  %3936 = vmatpush.bf16.msra.mxu0 %v3932
  %3937 = vmatpush.bf16.msra.mxu0 %v3905
  %3938 = vmatpush.bf16.msra.mxu0 %v3903
  %3939 = vmatpush.bf16.msra.mxu0 %v3901
  %3940 = vmatpush.bf16.msra.mxu0 %v3899
  %3941 = vmatpush.bf16.msra.mxu0 %v3897
  %3942 = vmatmul.bf16.gmra.mxu0 %v3914
  %v3943 = vpop.f32.mrf.mxu0
  %v3944 = vadd.f32 0.0, %v3943
  %v3945 = vpop.f32.mrf.mxu0
  %v3946 = vadd.f32 0.0, %v3945
  %3947 = vmatmul.bf16.gmra.mxu0 %v3917
  %v3948 = vpop.f32.mrf.mxu0
  %v3949 = vadd.f32 0.0, %v3948
  %v3950 = vpop.f32.mrf.mxu0
  %v3951 = vadd.f32 0.0, %v3950
  %3952 = vmatmul.bf16.gmra.mxu0 %v3920
  %v3953 = vpop.f32.mrf.mxu0
  %v3954 = vadd.f32 0.0, %v3953
  %v3955 = vpop.f32.mrf.mxu0
  %v3956 = vadd.f32 0.0, %v3955
  %3957 = vmatmul.bf16.gmra.mxu0 %v3923
  %v3958 = vpop.f32.mrf.mxu0
  %v3959 = vadd.f32 0.0, %v3958
  %v3960 = vpop.f32.mrf.mxu0
  %v3961 = vadd.f32 0.0, %v3960
  %3962 = vmatmul.bf16.gmra.mxu0 %v3926
  %v3963 = vpop.f32.mrf.mxu0
  %v3964 = vadd.f32 0.0, %v3963
  %v3965 = vpop.f32.mrf.mxu0
  %v3966 = vadd.f32 0.0, %v3965
  %3967 = vmatmul.bf16.gmra.mxu0 %v3929
  %v3968 = vpop.f32.mrf.mxu0
  %v3969 = vadd.f32 0.0, %v3968
  %v3970 = vpop.f32.mrf.mxu0
  %3971 = vdwg.mxu0
  %v3972 = vmul.f32 %v3944, %v3885
  %v3973 = vmul.f32 %v3946, %v3886
  %v3974 = vmul.f32 %v3949, %v3887
  %v3975 = vmul.f32 %v3951, %v3888
  %v3976 = vmul.f32 %v3954, %v3889
  %v3977 = vmul.f32 %v3956, %v3890
  %v3978 = vmul.f32 %v3959, %v3891
  %v3979 = vmul.f32 %v3961, %v3892
  %v3980 = vmul.f32 %v3964, %v3893
  %v3981 = vmul.f32 %v3966, %v3894
  %v3982 = vmul.f32 %v3969, %v3895
  %v3983 = vadd.f32 %v3592, %v3972
  %v3984 = vadd.f32 %v3593, %v3973
  %v3985 = vadd.f32 %v3594, %v3974
  %v3986 = vadd.f32 %v3595, %v3975
  %v3987 = vadd.f32 %v3596, %v3976
  %v3988 = vadd.f32 %v3597, %v3977
  %v3989 = vadd.f32 %v3598, %v3978
  %v3990 = vadd.f32 %v3599, %v3979
  %v3991 = vadd.f32 %v3600, %v3980
  %v3992 = vadd.f32 %v3601, %v3981
  %v3993 = vadd.f32 %v3602, %v3982
  %3994 = vrot.lane.b32.xlu0 %v3129, 112
  %v3995 = vpop.permute.xlu0 %3994
  %3996 = vrot.lane.b32.xlu0 %v3131, 112
  %v3997 = vpop.permute.xlu0 %3996
  %3998 = vrot.lane.b32.xlu0 %v3134, 112
  %v3999 = vpop.permute.xlu0 %3998
  %4000 = vrot.lane.b32.xlu0 %v3136, 112
  %v4001 = vpop.permute.xlu0 %4000
  %4002 = vrot.lane.b32.xlu0 %v3139, 112
  %v4003 = vpop.permute.xlu0 %4002
  %4004 = vrot.lane.b32.xlu0 %v3141, 112
  %v4005 = vpop.permute.xlu0 %4004
  %4006 = vrot.lane.b32.xlu0 %v3144, 112
  %v4007 = vpop.permute.xlu0 %4006
  %4008 = vrot.lane.b32.xlu0 %v3146, 112
  %v4009 = vpop.permute.xlu0 %4008
  %4010 = vrot.lane.b32.xlu0 %v3149, 112
  %v4011 = vpop.permute.xlu0 %4010
  %4012 = vrot.lane.b32.xlu0 %v3151, 112
  %v4013 = vpop.permute.xlu0 %4012
  %4014 = vrot.lane.b32.xlu0 %v3154, 112
  %v4015 = vpop.permute.xlu0 %4014
  %4016 = vrot.lane.b32.xlu0 %v3129, 80
  %v4017 = vpop.permute.xlu0 %4016
  %4018 = vrot.lane.b32.xlu0 %v3131, 80
  %v4019 = vpop.permute.xlu0 %4018
  %4020 = vrot.lane.b32.xlu0 %v3134, 80
  %v4021 = vpop.permute.xlu0 %4020
  %4022 = vrot.lane.b32.xlu0 %v3136, 80
  %v4023 = vpop.permute.xlu0 %4022
  %4024 = vrot.lane.b32.xlu0 %v3139, 80
  %v4025 = vpop.permute.xlu0 %4024
  %4026 = vrot.lane.b32.xlu0 %v3141, 80
  %v4027 = vpop.permute.xlu0 %4026
  %4028 = vrot.lane.b32.xlu0 %v3144, 80
  %v4029 = vpop.permute.xlu0 %4028
  %4030 = vrot.lane.b32.xlu0 %v3146, 80
  %v4031 = vpop.permute.xlu0 %4030
  %4032 = vrot.lane.b32.xlu0 %v3149, 80
  %v4033 = vpop.permute.xlu0 %4032
  %4034 = vrot.lane.b32.xlu0 %v3151, 80
  %v4035 = vpop.permute.xlu0 %4034
  %4036 = vrot.lane.b32.xlu0 %v3154, 80
  %v4037 = vpop.permute.xlu0 %4036
  %v4038 = vsel %vm533, %v3995, 0
  %v4040 = vsel %vm533, %v3997, 0
  %v4042 = vsel %vm533, %v3999, 0
  %v4044 = vsel %vm533, %v4001, 0
  %v4046 = vsel %vm533, %v4003, 0
  %v4048 = vsel %vm533, %v4005, 0
  %v4050 = vsel %vm533, %v4007, 0
  %v4052 = vsel %vm533, %v4009, 0
  %v4054 = vsel %vm533, %v4011, 0
  %v4056 = vsel %vm533, %v4013, 0
  %v4058 = vsel %vm533, %v4015, 0
  %v4060 = vsel %vm533, %v4017, 0
  %v4062 = vsel %vm533, %v4019, 0
  %v4064 = vsel %vm533, %v4021, 0
  %v4066 = vsel %vm533, %v4023, 0
  %v4068 = vsel %vm533, %v4025, 0
  %v4070 = vsel %vm533, %v4027, 0
  %v4072 = vsel %vm533, %v4029, 0
  %v4074 = vsel %vm533, %v4031, 0
  %v4076 = vsel %vm533, %v4033, 0
  %v4078 = vsel %vm533, %v4035, 0
  %v4080 = vsel %vm533, %v4037, 0
  %4082 = vmatpush.xpose.msra.mxu0 0.0
  %4083 = vmatpush.xpose.msra.mxu0 0.0
  %4084 = vmatpush.xpose.msra.mxu0 0.0
  %4085 = vmatpush.xpose.msra.mxu0 0.0
  %4086 = vmatpush.xpose.msra.mxu0 0.0
  %4087 = vmatpush.xpose.msra.mxu0 %v4080
  %4088 = vmatpush.xpose.msra.mxu0 %v4078
  %4089 = vmatpush.xpose.msra.mxu0 %v4076
  %4090 = vmatpush.xpose.msra.mxu0 %v4074
  %4091 = vmatpush.xpose.msra.mxu0 %v4072
  %4092 = vmatpush.xpose.msra.mxu0 %v4070
  %4093 = vmatpush.xpose.msra.mxu0 %v4068
  %4094 = vmatpush.xpose.msra.mxu0 %v4066
  %4095 = vmatpush.xpose.msra.mxu0 %v4064
  %4096 = vmatpush.xpose.msra.mxu0 %v4062
  %4097 = vmatpush.xpose.msra.mxu0 %v4060
  %4098 = vmatmul.f32.gmra.mxu0 %v4038
  %v4099 = vpop.f32.mrf.mxu0
  %v4100 = vadd.f32 0.0, %v4099
  %4101 = vmatmul.f32.gmra.mxu0 %v4040
  %v4102 = vpop.f32.mrf.mxu0
  %v4103 = vadd.f32 0.0, %v4102
  %4104 = vmatmul.f32.gmra.mxu0 %v4042
  %v4105 = vpop.f32.mrf.mxu0
  %v4106 = vadd.f32 0.0, %v4105
  %4107 = vmatmul.f32.gmra.mxu0 %v4044
  %v4108 = vpop.f32.mrf.mxu0
  %v4109 = vadd.f32 0.0, %v4108
  %4110 = vmatmul.f32.gmra.mxu0 %v4046
  %v4111 = vpop.f32.mrf.mxu0
  %v4112 = vadd.f32 0.0, %v4111
  %4113 = vmatmul.f32.gmra.mxu0 %v4048
  %v4114 = vpop.f32.mrf.mxu0
  %v4115 = vadd.f32 0.0, %v4114
  %4116 = vmatmul.f32.gmra.mxu0 %v4050
  %v4117 = vpop.f32.mrf.mxu0
  %v4118 = vadd.f32 0.0, %v4117
  %4119 = vmatmul.f32.gmra.mxu0 %v4052
  %v4120 = vpop.f32.mrf.mxu0
  %v4121 = vadd.f32 0.0, %v4120
  %4122 = vmatmul.f32.gmra.mxu0 %v4054
  %v4123 = vpop.f32.mrf.mxu0
  %v4124 = vadd.f32 0.0, %v4123
  %4125 = vmatmul.f32.gmra.mxu0 %v4056
  %v4126 = vpop.f32.mrf.mxu0
  %v4127 = vadd.f32 0.0, %v4126
  %4128 = vmatmul.f32.gmra.mxu0 %v4058
  %v4129 = vpop.f32.mrf.mxu0
  %v4130 = vadd.f32 0.0, %v4129
  %4131 = vdwg.mxu0
  %v4132 = vsel %vm39, %v4100, -1e+30
  %v4133 = vsel %vm40, %v4103, -1e+30
  %v4134 = vsel %vm41, %v4106, -1e+30
  %v4135 = vsel %vm42, %v4109, -1e+30
  %v4136 = vsel %vm43, %v4112, -1e+30
  %v4137 = vsel %vm44, %v4115, -1e+30
  %v4138 = vsel %vm45, %v4118, -1e+30
  %v4139 = vsel %vm46, %v4121, -1e+30
  %v4140 = vsel %vm47, %v4124, -1e+30
  %v4141 = vsel %vm48, %v4127, -1e+30
  %v4142 = vsel %vm49, %v4130, -1e+30
  %v4143 = vsel %vm639, %v4132, -inf
  %4144 = vmax.xlane.f32.xlu0 %v4143
  %v4145 = vpop.xlane.xlu0 %4144
  %v4146 = vsel %vm639, %v4133, -inf
  %4147 = vmax.xlane.f32.xlu0 %v4146
  %v4148 = vpop.xlane.xlu0 %4147
  %v4149 = vsel %vm639, %v4134, -inf
  %4150 = vmax.xlane.f32.xlu0 %v4149
  %v4151 = vpop.xlane.xlu0 %4150
  %v4152 = vsel %vm639, %v4135, -inf
  %4153 = vmax.xlane.f32.xlu0 %v4152
  %v4154 = vpop.xlane.xlu0 %4153
  %v4155 = vsel %vm639, %v4136, -inf
  %4156 = vmax.xlane.f32.xlu0 %v4155
  %v4157 = vpop.xlane.xlu0 %4156
  %v4158 = vsel %vm639, %v4137, -inf
  %4159 = vmax.xlane.f32.xlu0 %v4158
  %v4160 = vpop.xlane.xlu0 %4159
  %v4161 = vsel %vm639, %v4138, -inf
  %4162 = vmax.xlane.f32.xlu0 %v4161
  %v4163 = vpop.xlane.xlu0 %4162
  %v4164 = vsel %vm639, %v4139, -inf
  %4165 = vmax.xlane.f32.xlu0 %v4164
  %v4166 = vpop.xlane.xlu0 %4165
  %v4167 = vsel %vm639, %v4140, -inf
  %4168 = vmax.xlane.f32.xlu0 %v4167
  %v4169 = vpop.xlane.xlu0 %4168
  %v4170 = vsel %vm639, %v4141, -inf
  %4171 = vmax.xlane.f32.xlu0 %v4170
  %v4172 = vpop.xlane.xlu0 %4171
  %v4173 = vsel %vm670, %v4142, -inf
  %4174 = vmax.xlane.f32.xlu0 %v4173
  %v4175 = vpop.xlane.xlu0 %4174
  %v4176 = vsub.f32 %v4132, %v4145
  %v4177 = vsub.f32 %v4133, %v4148
  %v4178 = vsub.f32 %v4134, %v4151
  %v4179 = vsub.f32 %v4135, %v4154
  %v4180 = vsub.f32 %v4136, %v4157
  %v4181 = vsub.f32 %v4137, %v4160
  %v4182 = vsub.f32 %v4138, %v4163
  %v4183 = vsub.f32 %v4139, %v4166
  %v4184 = vsub.f32 %v4140, %v4169
  %v4185 = vsub.f32 %v4141, %v4172
  %v4186 = vsub.f32 %v4142, %v4175
  %v4187 = vpack.c.bf16 %v4177, %v4176
  %v4188 = vpack.c.bf16 %v4179, %v4178
  %v4189 = vpack.c.bf16 %v4181, %v4180
  %v4190 = vpack.c.bf16 %v4183, %v4182
  %v4191 = vpack.c.bf16 %v4185, %v4184
  %v4192 = vpack.c.bf16 %v4186, %v4186
  %v4193 = vunpack.c.l.bf16 %v4187
  %v4194 = vunpack.c.h.bf16 %v4187
  %v4195 = vunpack.c.l.bf16 %v4188
  %v4196 = vunpack.c.h.bf16 %v4188
  %v4197 = vunpack.c.l.bf16 %v4189
  %v4198 = vunpack.c.h.bf16 %v4189
  %v4199 = vunpack.c.l.bf16 %v4190
  %v4200 = vunpack.c.h.bf16 %v4190
  %v4201 = vunpack.c.l.bf16 %v4191
  %v4202 = vunpack.c.h.bf16 %v4191
  %v4203 = vunpack.c.l.bf16 %v4192
  %v4204 = vmul.f32 %v4193, 1.442695
  %v4205 = vpow.pop %v4204
  %v4206 = vmul.f32 %v4194, 1.442695
  %v4207 = vpow.pop %v4206
  %v4208 = vmul.f32 %v4195, 1.442695
  %v4209 = vpow.pop %v4208
  %v4210 = vmul.f32 %v4196, 1.442695
  %v4211 = vpow.pop %v4210
  %v4212 = vmul.f32 %v4197, 1.442695
  %v4213 = vpow.pop %v4212
  %v4214 = vmul.f32 %v4198, 1.442695
  %v4215 = vpow.pop %v4214
  %v4216 = vmul.f32 %v4199, 1.442695
  %v4217 = vpow.pop %v4216
  %v4218 = vmul.f32 %v4200, 1.442695
  %v4219 = vpow.pop %v4218
  %v4220 = vmul.f32 %v4201, 1.442695
  %v4221 = vpow.pop %v4220
  %v4222 = vmul.f32 %v4202, 1.442695
  %v4223 = vpow.pop %v4222
  %v4224 = vmul.f32 %v4203, 1.442695
  %v4225 = vpow.pop %v4224
  %v4226 = vpack.c.bf16 %v4207, %v4205
  %v4227 = vpack.c.bf16 %v4211, %v4209
  %v4228 = vpack.c.bf16 %v4215, %v4213
  %v4229 = vpack.c.bf16 %v4219, %v4217
  %v4230 = vpack.c.bf16 %v4223, %v4221
  %v4231 = vpack.c.bf16 %v4225, %v4225
  %v4232 = vunpack.c.l.bf16 %v4226
  %v4233 = vunpack.c.h.bf16 %v4226
  %v4234 = vunpack.c.l.bf16 %v4227
  %v4235 = vunpack.c.h.bf16 %v4227
  %v4236 = vunpack.c.l.bf16 %v4228
  %v4237 = vunpack.c.h.bf16 %v4228
  %v4238 = vunpack.c.l.bf16 %v4229
  %v4239 = vunpack.c.h.bf16 %v4229
  %v4240 = vunpack.c.l.bf16 %v4230
  %v4241 = vunpack.c.h.bf16 %v4230
  %v4242 = vunpack.c.l.bf16 %v4231
  %v4243 = vsel %vm639, %v4232, 0.0
  %4244 = vadd.xlane.f32.xlu0 %v4243
  %v4245 = vpop.xlane.xlu0 %4244
  %v4246 = vsel %vm639, %v4233, 0.0
  %4247 = vadd.xlane.f32.xlu0 %v4246
  %v4248 = vpop.xlane.xlu0 %4247
  %v4249 = vsel %vm639, %v4234, 0.0
  %4250 = vadd.xlane.f32.xlu0 %v4249
  %v4251 = vpop.xlane.xlu0 %4250
  %v4252 = vsel %vm639, %v4235, 0.0
  %4253 = vadd.xlane.f32.xlu0 %v4252
  %v4254 = vpop.xlane.xlu0 %4253
  %v4255 = vsel %vm639, %v4236, 0.0
  %4256 = vadd.xlane.f32.xlu0 %v4255
  %v4257 = vpop.xlane.xlu0 %4256
  %v4258 = vsel %vm639, %v4237, 0.0
  %4259 = vadd.xlane.f32.xlu0 %v4258
  %v4260 = vpop.xlane.xlu0 %4259
  %v4261 = vsel %vm639, %v4238, 0.0
  %4262 = vadd.xlane.f32.xlu0 %v4261
  %v4263 = vpop.xlane.xlu0 %4262
  %v4264 = vsel %vm639, %v4239, 0.0
  %4265 = vadd.xlane.f32.xlu0 %v4264
  %v4266 = vpop.xlane.xlu0 %4265
  %v4267 = vsel %vm639, %v4240, 0.0
  %4268 = vadd.xlane.f32.xlu0 %v4267
  %v4269 = vpop.xlane.xlu0 %4268
  %v4270 = vsel %vm639, %v4241, 0.0
  %4271 = vadd.xlane.f32.xlu0 %v4270
  %v4272 = vpop.xlane.xlu0 %4271
  %v4273 = vsel %vm670, %v4242, 0.0
  %4274 = vadd.xlane.f32.xlu0 %v4273
  %v4275 = vpop.xlane.xlu0 %4274
  %v4276 = vrcp.pop %v4245
  %v4277 = vrcp.pop %v4248
  %v4278 = vrcp.pop %v4251
  %v4279 = vrcp.pop %v4254
  %v4280 = vrcp.pop %v4257
  %v4281 = vrcp.pop %v4260
  %v4282 = vrcp.pop %v4263
  %v4283 = vrcp.pop %v4266
  %v4284 = vrcp.pop %v4269
  %v4285 = vrcp.pop %v4272
  %v4286 = vrcp.pop %v4275
  %v4287 = vunpack.c.h.b16 %v3195
  %v4288 = vunpack.c.h.b16 %v3196
  %v4289 = vunpack.c.h.b16 %v3197
  %v4290 = vunpack.c.h.b16 %v3198
  %v4291 = vunpack.c.h.b16 %v3199
  %v4292 = vunpack.c.h.b16 %v3200
  %v4293 = vunpack.c.h.b16 %v3201
  %v4294 = vunpack.c.h.b16 %v3202
  %v4295 = vunpack.c.h.b16 %v3203
  %v4296 = vunpack.c.h.b16 %v3204
  %v4297 = vunpack.c.h.b16 %v3205
  %v4298 = vpack.c.b16 %v4288, %v4287
  %v4299 = vpack.c.b16 %v4290, %v4289
  %v4300 = vpack.c.b16 %v4292, %v4291
  %v4301 = vpack.c.b16 %v4294, %v4293
  %v4302 = vpack.c.b16 %v4296, %v4295
  %v4303 = vpack.c.b16 %v4297, %v4297
  %v4310 = vsel %vm639, %v4226, 0
  %v4313 = vsel %vm639, %v4227, 0
  %v4316 = vsel %vm639, %v4228, 0
  %v4319 = vsel %vm639, %v4229, 0
  %v4322 = vsel %vm639, %v4230, 0
  %v4325 = vsel %vm639, %v4231, 0
  %v4328 = vand.u32 %v4303, %v850
  %4330 = vmatpush.bf16.msra.mxu0 0
  %4331 = vmatpush.bf16.msra.mxu0 0
  %4332 = vmatpush.bf16.msra.mxu0 %v4328
  %4333 = vmatpush.bf16.msra.mxu0 %v4302
  %4334 = vmatpush.bf16.msra.mxu0 %v4301
  %4335 = vmatpush.bf16.msra.mxu0 %v4300
  %4336 = vmatpush.bf16.msra.mxu0 %v4299
  %4337 = vmatpush.bf16.msra.mxu0 %v4298
  %4338 = vmatmul.bf16.gmra.mxu0 %v4310
  %v4339 = vpop.f32.mrf.mxu0
  %v4340 = vadd.f32 0.0, %v4339
  %v4341 = vpop.f32.mrf.mxu0
  %v4342 = vadd.f32 0.0, %v4341
  %4343 = vmatmul.bf16.gmra.mxu0 %v4313
  %v4344 = vpop.f32.mrf.mxu0
  %v4345 = vadd.f32 0.0, %v4344
  %v4346 = vpop.f32.mrf.mxu0
  %v4347 = vadd.f32 0.0, %v4346
  %4348 = vmatmul.bf16.gmra.mxu0 %v4316
  %v4349 = vpop.f32.mrf.mxu0
  %v4350 = vadd.f32 0.0, %v4349
  %v4351 = vpop.f32.mrf.mxu0
  %v4352 = vadd.f32 0.0, %v4351
  %4353 = vmatmul.bf16.gmra.mxu0 %v4319
  %v4354 = vpop.f32.mrf.mxu0
  %v4355 = vadd.f32 0.0, %v4354
  %v4356 = vpop.f32.mrf.mxu0
  %v4357 = vadd.f32 0.0, %v4356
  %4358 = vmatmul.bf16.gmra.mxu0 %v4322
  %v4359 = vpop.f32.mrf.mxu0
  %v4360 = vadd.f32 0.0, %v4359
  %v4361 = vpop.f32.mrf.mxu0
  %v4362 = vadd.f32 0.0, %v4361
  %4363 = vmatmul.bf16.gmra.mxu0 %v4325
  %v4364 = vpop.f32.mrf.mxu0
  %v4365 = vadd.f32 0.0, %v4364
  %v4366 = vpop.f32.mrf.mxu0
  %4367 = vdwg.mxu0
  %v4368 = vmul.f32 %v4340, %v4276
  %v4369 = vmul.f32 %v4342, %v4277
  %v4370 = vmul.f32 %v4345, %v4278
  %v4371 = vmul.f32 %v4347, %v4279
  %v4372 = vmul.f32 %v4350, %v4280
  %v4373 = vmul.f32 %v4352, %v4281
  %v4374 = vmul.f32 %v4355, %v4282
  %v4375 = vmul.f32 %v4357, %v4283
  %v4376 = vmul.f32 %v4360, %v4284
  %v4377 = vmul.f32 %v4362, %v4285
  %v4378 = vmul.f32 %v4365, %v4286
  %v4379 = vadd.f32 %v3983, %v4368
  %v4380 = vadd.f32 %v3984, %v4369
  %v4381 = vadd.f32 %v3985, %v4370
  %v4382 = vadd.f32 %v3986, %v4371
  %v4383 = vadd.f32 %v3987, %v4372
  %v4384 = vadd.f32 %v3988, %v4373
  %v4385 = vadd.f32 %v3989, %v4374
  %v4386 = vadd.f32 %v3990, %v4375
  %v4387 = vadd.f32 %v3991, %v4376
  %v4388 = vadd.f32 %v3992, %v4377
  %v4389 = vadd.f32 %v3993, %v4378
  %4390 = vrot.lane.b32.xlu0 %v3129, 104
  %v4391 = vpop.permute.xlu0 %4390
  %4392 = vrot.lane.b32.xlu0 %v3131, 104
  %v4393 = vpop.permute.xlu0 %4392
  %4394 = vrot.lane.b32.xlu0 %v3134, 104
  %v4395 = vpop.permute.xlu0 %4394
  %4396 = vrot.lane.b32.xlu0 %v3136, 104
  %v4397 = vpop.permute.xlu0 %4396
  %4398 = vrot.lane.b32.xlu0 %v3139, 104
  %v4399 = vpop.permute.xlu0 %4398
  %4400 = vrot.lane.b32.xlu0 %v3141, 104
  %v4401 = vpop.permute.xlu0 %4400
  %4402 = vrot.lane.b32.xlu0 %v3144, 104
  %v4403 = vpop.permute.xlu0 %4402
  %4404 = vrot.lane.b32.xlu0 %v3146, 104
  %v4405 = vpop.permute.xlu0 %4404
  %4406 = vrot.lane.b32.xlu0 %v3149, 104
  %v4407 = vpop.permute.xlu0 %4406
  %4408 = vrot.lane.b32.xlu0 %v3151, 104
  %v4409 = vpop.permute.xlu0 %4408
  %4410 = vrot.lane.b32.xlu0 %v3154, 104
  %v4411 = vpop.permute.xlu0 %4410
  %4412 = vrot.lane.b32.xlu0 %v3129, 72
  %v4413 = vpop.permute.xlu0 %4412
  %4414 = vrot.lane.b32.xlu0 %v3131, 72
  %v4415 = vpop.permute.xlu0 %4414
  %4416 = vrot.lane.b32.xlu0 %v3134, 72
  %v4417 = vpop.permute.xlu0 %4416
  %4418 = vrot.lane.b32.xlu0 %v3136, 72
  %v4419 = vpop.permute.xlu0 %4418
  %4420 = vrot.lane.b32.xlu0 %v3139, 72
  %v4421 = vpop.permute.xlu0 %4420
  %4422 = vrot.lane.b32.xlu0 %v3141, 72
  %v4423 = vpop.permute.xlu0 %4422
  %4424 = vrot.lane.b32.xlu0 %v3144, 72
  %v4425 = vpop.permute.xlu0 %4424
  %4426 = vrot.lane.b32.xlu0 %v3146, 72
  %v4427 = vpop.permute.xlu0 %4426
  %4428 = vrot.lane.b32.xlu0 %v3149, 72
  %v4429 = vpop.permute.xlu0 %4428
  %4430 = vrot.lane.b32.xlu0 %v3151, 72
  %v4431 = vpop.permute.xlu0 %4430
  %4432 = vrot.lane.b32.xlu0 %v3154, 72
  %v4433 = vpop.permute.xlu0 %4432
  %v4434 = vsel %vm533, %v4391, 0
  %v4436 = vsel %vm533, %v4393, 0
  %v4438 = vsel %vm533, %v4395, 0
  %v4440 = vsel %vm533, %v4397, 0
  %v4442 = vsel %vm533, %v4399, 0
  %v4444 = vsel %vm533, %v4401, 0
  %v4446 = vsel %vm533, %v4403, 0
  %v4448 = vsel %vm533, %v4405, 0
  %v4450 = vsel %vm533, %v4407, 0
  %v4452 = vsel %vm533, %v4409, 0
  %v4454 = vsel %vm533, %v4411, 0
  %v4456 = vsel %vm533, %v4413, 0
  %v4458 = vsel %vm533, %v4415, 0
  %v4460 = vsel %vm533, %v4417, 0
  %v4462 = vsel %vm533, %v4419, 0
  %v4464 = vsel %vm533, %v4421, 0
  %v4466 = vsel %vm533, %v4423, 0
  %v4468 = vsel %vm533, %v4425, 0
  %v4470 = vsel %vm533, %v4427, 0
  %v4472 = vsel %vm533, %v4429, 0
  %v4474 = vsel %vm533, %v4431, 0
  %v4476 = vsel %vm533, %v4433, 0
  %4478 = vmatpush.xpose.msra.mxu0 0.0
  %4479 = vmatpush.xpose.msra.mxu0 0.0
  %4480 = vmatpush.xpose.msra.mxu0 0.0
  %4481 = vmatpush.xpose.msra.mxu0 0.0
  %4482 = vmatpush.xpose.msra.mxu0 0.0
  %4483 = vmatpush.xpose.msra.mxu0 %v4476
  %4484 = vmatpush.xpose.msra.mxu0 %v4474
  %4485 = vmatpush.xpose.msra.mxu0 %v4472
  %4486 = vmatpush.xpose.msra.mxu0 %v4470
  %4487 = vmatpush.xpose.msra.mxu0 %v4468
  %4488 = vmatpush.xpose.msra.mxu0 %v4466
  %4489 = vmatpush.xpose.msra.mxu0 %v4464
  %4490 = vmatpush.xpose.msra.mxu0 %v4462
  %4491 = vmatpush.xpose.msra.mxu0 %v4460
  %4492 = vmatpush.xpose.msra.mxu0 %v4458
  %4493 = vmatpush.xpose.msra.mxu0 %v4456
  %4494 = vmatmul.f32.gmra.mxu0 %v4434
  %v4495 = vpop.f32.mrf.mxu0
  %v4496 = vadd.f32 0.0, %v4495
  %4497 = vmatmul.f32.gmra.mxu0 %v4436
  %v4498 = vpop.f32.mrf.mxu0
  %v4499 = vadd.f32 0.0, %v4498
  %4500 = vmatmul.f32.gmra.mxu0 %v4438
  %v4501 = vpop.f32.mrf.mxu0
  %v4502 = vadd.f32 0.0, %v4501
  %4503 = vmatmul.f32.gmra.mxu0 %v4440
  %v4504 = vpop.f32.mrf.mxu0
  %v4505 = vadd.f32 0.0, %v4504
  %4506 = vmatmul.f32.gmra.mxu0 %v4442
  %v4507 = vpop.f32.mrf.mxu0
  %v4508 = vadd.f32 0.0, %v4507
  %4509 = vmatmul.f32.gmra.mxu0 %v4444
  %v4510 = vpop.f32.mrf.mxu0
  %v4511 = vadd.f32 0.0, %v4510
  %4512 = vmatmul.f32.gmra.mxu0 %v4446
  %v4513 = vpop.f32.mrf.mxu0
  %v4514 = vadd.f32 0.0, %v4513
  %4515 = vmatmul.f32.gmra.mxu0 %v4448
  %v4516 = vpop.f32.mrf.mxu0
  %v4517 = vadd.f32 0.0, %v4516
  %4518 = vmatmul.f32.gmra.mxu0 %v4450
  %v4519 = vpop.f32.mrf.mxu0
  %v4520 = vadd.f32 0.0, %v4519
  %4521 = vmatmul.f32.gmra.mxu0 %v4452
  %v4522 = vpop.f32.mrf.mxu0
  %v4523 = vadd.f32 0.0, %v4522
  %4524 = vmatmul.f32.gmra.mxu0 %v4454
  %v4525 = vpop.f32.mrf.mxu0
  %v4526 = vadd.f32 0.0, %v4525
  %4527 = vdwg.mxu0
  %v4528 = vsel %vm39, %v4496, -1e+30
  %v4529 = vsel %vm40, %v4499, -1e+30
  %v4530 = vsel %vm41, %v4502, -1e+30
  %v4531 = vsel %vm42, %v4505, -1e+30
  %v4532 = vsel %vm43, %v4508, -1e+30
  %v4533 = vsel %vm44, %v4511, -1e+30
  %v4534 = vsel %vm45, %v4514, -1e+30
  %v4535 = vsel %vm46, %v4517, -1e+30
  %v4536 = vsel %vm47, %v4520, -1e+30
  %v4537 = vsel %vm48, %v4523, -1e+30
  %v4538 = vsel %vm49, %v4526, -1e+30
  %v4539 = vsel %vm639, %v4528, -inf
  %4540 = vmax.xlane.f32.xlu0 %v4539
  %v4541 = vpop.xlane.xlu0 %4540
  %v4542 = vsel %vm639, %v4529, -inf
  %4543 = vmax.xlane.f32.xlu0 %v4542
  %v4544 = vpop.xlane.xlu0 %4543
  %v4545 = vsel %vm639, %v4530, -inf
  %4546 = vmax.xlane.f32.xlu0 %v4545
  %v4547 = vpop.xlane.xlu0 %4546
  %v4548 = vsel %vm639, %v4531, -inf
  %4549 = vmax.xlane.f32.xlu0 %v4548
  %v4550 = vpop.xlane.xlu0 %4549
  %v4551 = vsel %vm639, %v4532, -inf
  %4552 = vmax.xlane.f32.xlu0 %v4551
  %v4553 = vpop.xlane.xlu0 %4552
  %v4554 = vsel %vm639, %v4533, -inf
  %4555 = vmax.xlane.f32.xlu0 %v4554
  %v4556 = vpop.xlane.xlu0 %4555
  %v4557 = vsel %vm639, %v4534, -inf
  %4558 = vmax.xlane.f32.xlu0 %v4557
  %v4559 = vpop.xlane.xlu0 %4558
  %v4560 = vsel %vm639, %v4535, -inf
  %4561 = vmax.xlane.f32.xlu0 %v4560
  %v4562 = vpop.xlane.xlu0 %4561
  %v4563 = vsel %vm639, %v4536, -inf
  %4564 = vmax.xlane.f32.xlu0 %v4563
  %v4565 = vpop.xlane.xlu0 %4564
  %v4566 = vsel %vm639, %v4537, -inf
  %4567 = vmax.xlane.f32.xlu0 %v4566
  %v4568 = vpop.xlane.xlu0 %4567
  %v4569 = vsel %vm670, %v4538, -inf
  %4570 = vmax.xlane.f32.xlu0 %v4569
  %v4571 = vpop.xlane.xlu0 %4570
  %v4572 = vsub.f32 %v4528, %v4541
  %v4573 = vsub.f32 %v4529, %v4544
  %v4574 = vsub.f32 %v4530, %v4547
  %v4575 = vsub.f32 %v4531, %v4550
  %v4576 = vsub.f32 %v4532, %v4553
  %v4577 = vsub.f32 %v4533, %v4556
  %v4578 = vsub.f32 %v4534, %v4559
  %v4579 = vsub.f32 %v4535, %v4562
  %v4580 = vsub.f32 %v4536, %v4565
  %v4581 = vsub.f32 %v4537, %v4568
  %v4582 = vsub.f32 %v4538, %v4571
  %v4583 = vpack.c.bf16 %v4573, %v4572
  %v4584 = vpack.c.bf16 %v4575, %v4574
  %v4585 = vpack.c.bf16 %v4577, %v4576
  %v4586 = vpack.c.bf16 %v4579, %v4578
  %v4587 = vpack.c.bf16 %v4581, %v4580
  %v4588 = vpack.c.bf16 %v4582, %v4582
  %v4589 = vunpack.c.l.bf16 %v4583
  %v4590 = vunpack.c.h.bf16 %v4583
  %v4591 = vunpack.c.l.bf16 %v4584
  %v4592 = vunpack.c.h.bf16 %v4584
  %v4593 = vunpack.c.l.bf16 %v4585
  %v4594 = vunpack.c.h.bf16 %v4585
  %v4595 = vunpack.c.l.bf16 %v4586
  %v4596 = vunpack.c.h.bf16 %v4586
  %v4597 = vunpack.c.l.bf16 %v4587
  %v4598 = vunpack.c.h.bf16 %v4587
  %v4599 = vunpack.c.l.bf16 %v4588
  %v4600 = vmul.f32 %v4589, 1.442695
  %v4601 = vpow.pop %v4600
  %v4602 = vmul.f32 %v4590, 1.442695
  %v4603 = vpow.pop %v4602
  %v4604 = vmul.f32 %v4591, 1.442695
  %v4605 = vpow.pop %v4604
  %v4606 = vmul.f32 %v4592, 1.442695
  %v4607 = vpow.pop %v4606
  %v4608 = vmul.f32 %v4593, 1.442695
  %v4609 = vpow.pop %v4608
  %v4610 = vmul.f32 %v4594, 1.442695
  %v4611 = vpow.pop %v4610
  %v4612 = vmul.f32 %v4595, 1.442695
  %v4613 = vpow.pop %v4612
  %v4614 = vmul.f32 %v4596, 1.442695
  %v4615 = vpow.pop %v4614
  %v4616 = vmul.f32 %v4597, 1.442695
  %v4617 = vpow.pop %v4616
  %v4618 = vmul.f32 %v4598, 1.442695
  %v4619 = vpow.pop %v4618
  %v4620 = vmul.f32 %v4599, 1.442695
  %v4621 = vpow.pop %v4620
  %v4622 = vpack.c.bf16 %v4603, %v4601
  %v4623 = vpack.c.bf16 %v4607, %v4605
  %v4624 = vpack.c.bf16 %v4611, %v4609
  %v4625 = vpack.c.bf16 %v4615, %v4613
  %v4626 = vpack.c.bf16 %v4619, %v4617
  %v4627 = vpack.c.bf16 %v4621, %v4621
  %v4628 = vunpack.c.l.bf16 %v4622
  %v4629 = vunpack.c.h.bf16 %v4622
  %v4630 = vunpack.c.l.bf16 %v4623
  %v4631 = vunpack.c.h.bf16 %v4623
  %v4632 = vunpack.c.l.bf16 %v4624
  %v4633 = vunpack.c.h.bf16 %v4624
  %v4634 = vunpack.c.l.bf16 %v4625
  %v4635 = vunpack.c.h.bf16 %v4625
  %v4636 = vunpack.c.l.bf16 %v4626
  %v4637 = vunpack.c.h.bf16 %v4626
  %v4638 = vunpack.c.l.bf16 %v4627
  %v4639 = vsel %vm639, %v4628, 0.0
  %4640 = vadd.xlane.f32.xlu0 %v4639
  %v4641 = vpop.xlane.xlu0 %4640
  %v4642 = vsel %vm639, %v4629, 0.0
  %4643 = vadd.xlane.f32.xlu0 %v4642
  %v4644 = vpop.xlane.xlu0 %4643
  %v4645 = vsel %vm639, %v4630, 0.0
  %4646 = vadd.xlane.f32.xlu0 %v4645
  %v4647 = vpop.xlane.xlu0 %4646
  %v4648 = vsel %vm639, %v4631, 0.0
  %4649 = vadd.xlane.f32.xlu0 %v4648
  %v4650 = vpop.xlane.xlu0 %4649
  %v4651 = vsel %vm639, %v4632, 0.0
  %4652 = vadd.xlane.f32.xlu0 %v4651
  %v4653 = vpop.xlane.xlu0 %4652
  %v4654 = vsel %vm639, %v4633, 0.0
  %4655 = vadd.xlane.f32.xlu0 %v4654
  %v4656 = vpop.xlane.xlu0 %4655
  %v4657 = vsel %vm639, %v4634, 0.0
  %4658 = vadd.xlane.f32.xlu0 %v4657
  %v4659 = vpop.xlane.xlu0 %4658
  %v4660 = vsel %vm639, %v4635, 0.0
  %4661 = vadd.xlane.f32.xlu0 %v4660
  %v4662 = vpop.xlane.xlu0 %4661
  %v4663 = vsel %vm639, %v4636, 0.0
  %4664 = vadd.xlane.f32.xlu0 %v4663
  %v4665 = vpop.xlane.xlu0 %4664
  %v4666 = vsel %vm639, %v4637, 0.0
  %4667 = vadd.xlane.f32.xlu0 %v4666
  %v4668 = vpop.xlane.xlu0 %4667
  %v4669 = vsel %vm670, %v4638, 0.0
  %4670 = vadd.xlane.f32.xlu0 %v4669
  %v4671 = vpop.xlane.xlu0 %4670
  %v4672 = vrcp.pop %v4641
  %v4673 = vrcp.pop %v4644
  %v4674 = vrcp.pop %v4647
  %v4675 = vrcp.pop %v4650
  %v4676 = vrcp.pop %v4653
  %v4677 = vrcp.pop %v4656
  %v4678 = vrcp.pop %v4659
  %v4679 = vrcp.pop %v4662
  %v4680 = vrcp.pop %v4665
  %v4681 = vrcp.pop %v4668
  %v4682 = vrcp.pop %v4671
  %4683 = vrot.lane.b32.xlu0 %v4298, 96
  %v4684 = vpop.permute.xlu0 %4683
  %4685 = vrot.lane.b32.xlu0 %v4299, 96
  %v4686 = vpop.permute.xlu0 %4685
  %4687 = vrot.lane.b32.xlu0 %v4300, 96
  %v4688 = vpop.permute.xlu0 %4687
  %4689 = vrot.lane.b32.xlu0 %v4301, 96
  %v4690 = vpop.permute.xlu0 %4689
  %4691 = vrot.lane.b32.xlu0 %v4302, 96
  %v4692 = vpop.permute.xlu0 %4691
  %4693 = vrot.lane.b32.xlu0 %v4303, 96
  %v4694 = vpop.permute.xlu0 %4693
  %v4701 = vsel %vm639, %v4622, 0
  %v4704 = vsel %vm639, %v4623, 0
  %v4707 = vsel %vm639, %v4624, 0
  %v4710 = vsel %vm639, %v4625, 0
  %v4713 = vsel %vm639, %v4626, 0
  %v4716 = vsel %vm639, %v4627, 0
  %v4719 = vand.u32 %v4694, %v850
  %4721 = vmatpush.bf16.msra.mxu0 0
  %4722 = vmatpush.bf16.msra.mxu0 0
  %4723 = vmatpush.bf16.msra.mxu0 %v4719
  %4724 = vmatpush.bf16.msra.mxu0 %v4692
  %4725 = vmatpush.bf16.msra.mxu0 %v4690
  %4726 = vmatpush.bf16.msra.mxu0 %v4688
  %4727 = vmatpush.bf16.msra.mxu0 %v4686
  %4728 = vmatpush.bf16.msra.mxu0 %v4684
  %4729 = vmatmul.bf16.gmra.mxu0 %v4701
  %v4730 = vpop.f32.mrf.mxu0
  %v4731 = vadd.f32 0.0, %v4730
  %v4732 = vpop.f32.mrf.mxu0
  %v4733 = vadd.f32 0.0, %v4732
  %4734 = vmatmul.bf16.gmra.mxu0 %v4704
  %v4735 = vpop.f32.mrf.mxu0
  %v4736 = vadd.f32 0.0, %v4735
  %v4737 = vpop.f32.mrf.mxu0
  %v4738 = vadd.f32 0.0, %v4737
  %4739 = vmatmul.bf16.gmra.mxu0 %v4707
  %v4740 = vpop.f32.mrf.mxu0
  %v4741 = vadd.f32 0.0, %v4740
  %v4742 = vpop.f32.mrf.mxu0
  %v4743 = vadd.f32 0.0, %v4742
  %4744 = vmatmul.bf16.gmra.mxu0 %v4710
  %v4745 = vpop.f32.mrf.mxu0
  %v4746 = vadd.f32 0.0, %v4745
  %v4747 = vpop.f32.mrf.mxu0
  %v4748 = vadd.f32 0.0, %v4747
  %4749 = vmatmul.bf16.gmra.mxu0 %v4713
  %v4750 = vpop.f32.mrf.mxu0
  %v4751 = vadd.f32 0.0, %v4750
  %v4752 = vpop.f32.mrf.mxu0
  %v4753 = vadd.f32 0.0, %v4752
  %4754 = vmatmul.bf16.gmra.mxu0 %v4716
  %v4755 = vpop.f32.mrf.mxu0
  %v4756 = vadd.f32 0.0, %v4755
  %v4757 = vpop.f32.mrf.mxu0
  %4758 = vdwg.mxu0
  %v4759 = vmul.f32 %v4731, %v4672
  %v4760 = vmul.f32 %v4733, %v4673
  %v4761 = vmul.f32 %v4736, %v4674
  %v4762 = vmul.f32 %v4738, %v4675
  %v4763 = vmul.f32 %v4741, %v4676
  %v4764 = vmul.f32 %v4743, %v4677
  %v4765 = vmul.f32 %v4746, %v4678
  %v4766 = vmul.f32 %v4748, %v4679
  %v4767 = vmul.f32 %v4751, %v4680
  %v4768 = vmul.f32 %v4753, %v4681
  %v4769 = vmul.f32 %v4756, %v4682
  %v4770 = vadd.f32 %v4379, %v4759
  %v4771 = vadd.f32 %v4380, %v4760
  %v4772 = vadd.f32 %v4381, %v4761
  %v4773 = vadd.f32 %v4382, %v4762
  %v4774 = vadd.f32 %v4383, %v4763
  %v4775 = vadd.f32 %v4384, %v4764
  %v4776 = vadd.f32 %v4385, %v4765
  %v4777 = vadd.f32 %v4386, %v4766
  %v4778 = vadd.f32 %v4387, %v4767
  %v4779 = vadd.f32 %v4388, %v4768
  %v4780 = vadd.f32 %v4389, %v4769
  %v4781 = vadd.f32 %v2791, %v4770
  %v4782 = vadd.f32 %v2792, %v4771
  %v4783 = vadd.f32 %v2793, %v4772
  %v4784 = vadd.f32 %v2794, %v4773
  %v4785 = vadd.f32 %v2795, %v4774
  %v4786 = vadd.f32 %v2796, %v4775
  %v4787 = vadd.f32 %v2797, %v4776
  %v4788 = vadd.f32 %v2798, %v4777
  %v4789 = vadd.f32 %v2799, %v4778
  %v4790 = vadd.f32 %v2800, %v4779
  %v4791 = vadd.f32 %v2801, %v4780
  %v4792 = vperm.slane %v52, 3
  %v4793 = vadd.f32 %v4781, %v4792
  %v4794 = vadd.f32 %v4782, %v4792
  %v4795 = vadd.f32 %v4783, %v4792
  %v4796 = vadd.f32 %v4784, %v4792
  %v4797 = vadd.f32 %v4785, %v4792
  %v4798 = vadd.f32 %v4786, %v4792
  %v4799 = vadd.f32 %v4787, %v4792
  %v4800 = vadd.f32 %v4788, %v4792
  %v4801 = vadd.f32 %v4789, %v4792
  %v4802 = vadd.f32 %v4790, %v4792
  %v4803 = vadd.f32 %v4791, %v4792
  %v4804 = vsel %vm88, %v4793, 0.0
  %4805 = vadd.xlane.f32.xlu0 %v4804
  %v4806 = vpop.xlane.xlu0 %4805
  %v4807 = vsel %vm88, %v4794, 0.0
  %4808 = vadd.xlane.f32.xlu0 %v4807
  %v4809 = vpop.xlane.xlu0 %4808
  %v4810 = vsel %vm88, %v4795, 0.0
  %4811 = vadd.xlane.f32.xlu0 %v4810
  %v4812 = vpop.xlane.xlu0 %4811
  %v4813 = vsel %vm88, %v4796, 0.0
  %4814 = vadd.xlane.f32.xlu0 %v4813
  %v4815 = vpop.xlane.xlu0 %4814
  %v4816 = vsel %vm88, %v4797, 0.0
  %4817 = vadd.xlane.f32.xlu0 %v4816
  %v4818 = vpop.xlane.xlu0 %4817
  %v4819 = vsel %vm88, %v4798, 0.0
  %4820 = vadd.xlane.f32.xlu0 %v4819
  %v4821 = vpop.xlane.xlu0 %4820
  %v4822 = vsel %vm88, %v4799, 0.0
  %4823 = vadd.xlane.f32.xlu0 %v4822
  %v4824 = vpop.xlane.xlu0 %4823
  %v4825 = vsel %vm88, %v4800, 0.0
  %4826 = vadd.xlane.f32.xlu0 %v4825
  %v4827 = vpop.xlane.xlu0 %4826
  %v4828 = vsel %vm88, %v4801, 0.0
  %4829 = vadd.xlane.f32.xlu0 %v4828
  %v4830 = vpop.xlane.xlu0 %4829
  %v4831 = vsel %vm88, %v4802, 0.0
  %4832 = vadd.xlane.f32.xlu0 %v4831
  %v4833 = vpop.xlane.xlu0 %4832
  %v4834 = vsel %vm119, %v4803, 0.0
  %4835 = vadd.xlane.f32.xlu0 %v4834
  %v4836 = vpop.xlane.xlu0 %4835
  %v4837 = vmul.f32 %v4806, %v129
  %v4838 = vmul.f32 %v4809, %v129
  %v4839 = vmul.f32 %v4812, %v129
  %v4840 = vmul.f32 %v4815, %v129
  %v4841 = vmul.f32 %v4818, %v129
  %v4842 = vmul.f32 %v4821, %v129
  %v4843 = vmul.f32 %v4824, %v129
  %v4844 = vmul.f32 %v4827, %v129
  %v4845 = vmul.f32 %v4830, %v129
  %v4846 = vmul.f32 %v4833, %v129
  %v4847 = vmul.f32 %v4836, %v129
  %v4848 = vsub.f32 %v4793, %v4837
  %v4849 = vsub.f32 %v4794, %v4838
  %v4850 = vsub.f32 %v4795, %v4839
  %v4851 = vsub.f32 %v4796, %v4840
  %v4852 = vsub.f32 %v4797, %v4841
  %v4853 = vsub.f32 %v4798, %v4842
  %v4854 = vsub.f32 %v4799, %v4843
  %v4855 = vsub.f32 %v4800, %v4844
  %v4856 = vsub.f32 %v4801, %v4845
  %v4857 = vsub.f32 %v4802, %v4846
  %v4858 = vsub.f32 %v4803, %v4847
  %v4859 = vmul.f32 %v4848, %v4848
  %v4860 = vmul.f32 %v4849, %v4849
  %v4861 = vmul.f32 %v4850, %v4850
  %v4862 = vmul.f32 %v4851, %v4851
  %v4863 = vmul.f32 %v4852, %v4852
  %v4864 = vmul.f32 %v4853, %v4853
  %v4865 = vmul.f32 %v4854, %v4854
  %v4866 = vmul.f32 %v4855, %v4855
  %v4867 = vmul.f32 %v4856, %v4856
  %v4868 = vmul.f32 %v4857, %v4857
  %v4869 = vmul.f32 %v4858, %v4858
  %v4870 = vsel %vm88, %v4859, 0.0
  %4871 = vadd.xlane.f32.xlu0 %v4870
  %v4872 = vpop.xlane.xlu0 %4871
  %v4873 = vsel %vm88, %v4860, 0.0
  %4874 = vadd.xlane.f32.xlu0 %v4873
  %v4875 = vpop.xlane.xlu0 %4874
  %v4876 = vsel %vm88, %v4861, 0.0
  %4877 = vadd.xlane.f32.xlu0 %v4876
  %v4878 = vpop.xlane.xlu0 %4877
  %v4879 = vsel %vm88, %v4862, 0.0
  %4880 = vadd.xlane.f32.xlu0 %v4879
  %v4881 = vpop.xlane.xlu0 %4880
  %v4882 = vsel %vm88, %v4863, 0.0
  %4883 = vadd.xlane.f32.xlu0 %v4882
  %v4884 = vpop.xlane.xlu0 %4883
  %v4885 = vsel %vm88, %v4864, 0.0
  %4886 = vadd.xlane.f32.xlu0 %v4885
  %v4887 = vpop.xlane.xlu0 %4886
  %v4888 = vsel %vm88, %v4865, 0.0
  %4889 = vadd.xlane.f32.xlu0 %v4888
  %v4890 = vpop.xlane.xlu0 %4889
  %v4891 = vsel %vm88, %v4866, 0.0
  %4892 = vadd.xlane.f32.xlu0 %v4891
  %v4893 = vpop.xlane.xlu0 %4892
  %v4894 = vsel %vm88, %v4867, 0.0
  %4895 = vadd.xlane.f32.xlu0 %v4894
  %v4896 = vpop.xlane.xlu0 %4895
  %v4897 = vsel %vm88, %v4868, 0.0
  %4898 = vadd.xlane.f32.xlu0 %v4897
  %v4899 = vpop.xlane.xlu0 %4898
  %v4900 = vsel %vm119, %v4869, 0.0
  %4901 = vadd.xlane.f32.xlu0 %v4900
  %v4902 = vpop.xlane.xlu0 %4901
  %v4903 = vmul.f32 %v4872, %v129
  %v4904 = vmul.f32 %v4875, %v129
  %v4905 = vmul.f32 %v4878, %v129
  %v4906 = vmul.f32 %v4881, %v129
  %v4907 = vmul.f32 %v4884, %v129
  %v4908 = vmul.f32 %v4887, %v129
  %v4909 = vmul.f32 %v4890, %v129
  %v4910 = vmul.f32 %v4893, %v129
  %v4911 = vmul.f32 %v4896, %v129
  %v4912 = vmul.f32 %v4899, %v129
  %v4913 = vmul.f32 %v4902, %v129
  %v4914 = vadd.f32 %v4903, 1e-05
  %v4915 = vadd.f32 %v4904, 1e-05
  %v4916 = vadd.f32 %v4905, 1e-05
  %v4917 = vadd.f32 %v4906, 1e-05
  %v4918 = vadd.f32 %v4907, 1e-05
  %v4919 = vadd.f32 %v4908, 1e-05
  %v4920 = vadd.f32 %v4909, 1e-05
  %v4921 = vadd.f32 %v4910, 1e-05
  %v4922 = vadd.f32 %v4911, 1e-05
  %v4923 = vadd.f32 %v4912, 1e-05
  %v4924 = vadd.f32 %v4913, 1e-05
  %v4925 = vrsqrt.pop %v4914
  %v4926 = vmul.f32 %v4925, %v4914
  %v4927 = vmul.f32 %v4926, %v4925
  %v4928 = vmul.f32 0.5, %v4927
  %v4929 = vsub.f32 1.5, %v4928
  %v4930 = vmul.f32 %v4925, %v4929
  %vm4931 = vweird.f32 %v4914
  %vm4932 = vweird.f32 %v4925
  %vm4933 = vmor %vm4931, %vm4932
  %v4934 = vsel %vm4933, %v4925, %v4930
  %v4935 = vrsqrt.pop %v4915
  %v4936 = vmul.f32 %v4935, %v4915
  %v4937 = vmul.f32 %v4936, %v4935
  %v4938 = vmul.f32 0.5, %v4937
  %v4939 = vsub.f32 1.5, %v4938
  %v4940 = vmul.f32 %v4935, %v4939
  %vm4941 = vweird.f32 %v4915
  %vm4942 = vweird.f32 %v4935
  %vm4943 = vmor %vm4941, %vm4942
  %v4944 = vsel %vm4943, %v4935, %v4940
  %v4945 = vrsqrt.pop %v4916
  %v4946 = vmul.f32 %v4945, %v4916
  %v4947 = vmul.f32 %v4946, %v4945
  %v4948 = vmul.f32 0.5, %v4947
  %v4949 = vsub.f32 1.5, %v4948
  %v4950 = vmul.f32 %v4945, %v4949
  %vm4951 = vweird.f32 %v4916
  %vm4952 = vweird.f32 %v4945
  %vm4953 = vmor %vm4951, %vm4952
  %v4954 = vsel %vm4953, %v4945, %v4950
  %v4955 = vrsqrt.pop %v4917
  %v4956 = vmul.f32 %v4955, %v4917
  %v4957 = vmul.f32 %v4956, %v4955
  %v4958 = vmul.f32 0.5, %v4957
  %v4959 = vsub.f32 1.5, %v4958
  %v4960 = vmul.f32 %v4955, %v4959
  %vm4961 = vweird.f32 %v4917
  %vm4962 = vweird.f32 %v4955
  %vm4963 = vmor %vm4961, %vm4962
  %v4964 = vsel %vm4963, %v4955, %v4960
  %v4965 = vrsqrt.pop %v4918
  %v4966 = vmul.f32 %v4965, %v4918
  %v4967 = vmul.f32 %v4966, %v4965
  %v4968 = vmul.f32 0.5, %v4967
  %v4969 = vsub.f32 1.5, %v4968
  %v4970 = vmul.f32 %v4965, %v4969
  %vm4971 = vweird.f32 %v4918
  %vm4972 = vweird.f32 %v4965
  %vm4973 = vmor %vm4971, %vm4972
  %v4974 = vsel %vm4973, %v4965, %v4970
  %v4975 = vrsqrt.pop %v4919
  %v4976 = vmul.f32 %v4975, %v4919
  %v4977 = vmul.f32 %v4976, %v4975
  %v4978 = vmul.f32 0.5, %v4977
  %v4979 = vsub.f32 1.5, %v4978
  %v4980 = vmul.f32 %v4975, %v4979
  %vm4981 = vweird.f32 %v4919
  %vm4982 = vweird.f32 %v4975
  %vm4983 = vmor %vm4981, %vm4982
  %v4984 = vsel %vm4983, %v4975, %v4980
  %v4985 = vrsqrt.pop %v4920
  %v4986 = vmul.f32 %v4985, %v4920
  %v4987 = vmul.f32 %v4986, %v4985
  %v4988 = vmul.f32 0.5, %v4987
  %v4989 = vsub.f32 1.5, %v4988
  %v4990 = vmul.f32 %v4985, %v4989
  %vm4991 = vweird.f32 %v4920
  %vm4992 = vweird.f32 %v4985
  %vm4993 = vmor %vm4991, %vm4992
  %v4994 = vsel %vm4993, %v4985, %v4990
  %v4995 = vrsqrt.pop %v4921
  %v4996 = vmul.f32 %v4995, %v4921
  %v4997 = vmul.f32 %v4996, %v4995
  %v4998 = vmul.f32 0.5, %v4997
  %v4999 = vsub.f32 1.5, %v4998
  %v5000 = vmul.f32 %v4995, %v4999
  %vm5001 = vweird.f32 %v4921
  %vm5002 = vweird.f32 %v4995
  %vm5003 = vmor %vm5001, %vm5002
  %v5004 = vsel %vm5003, %v4995, %v5000
  %v5005 = vrsqrt.pop %v4922
  %v5006 = vmul.f32 %v5005, %v4922
  %v5007 = vmul.f32 %v5006, %v5005
  %v5008 = vmul.f32 0.5, %v5007
  %v5009 = vsub.f32 1.5, %v5008
  %v5010 = vmul.f32 %v5005, %v5009
  %vm5011 = vweird.f32 %v4922
  %vm5012 = vweird.f32 %v5005
  %vm5013 = vmor %vm5011, %vm5012
  %v5014 = vsel %vm5013, %v5005, %v5010
  %v5015 = vrsqrt.pop %v4923
  %v5016 = vmul.f32 %v5015, %v4923
  %v5017 = vmul.f32 %v5016, %v5015
  %v5018 = vmul.f32 0.5, %v5017
  %v5019 = vsub.f32 1.5, %v5018
  %v5020 = vmul.f32 %v5015, %v5019
  %vm5021 = vweird.f32 %v4923
  %vm5022 = vweird.f32 %v5015
  %vm5023 = vmor %vm5021, %vm5022
  %v5024 = vsel %vm5023, %v5015, %v5020
  %v5025 = vrsqrt.pop %v4924
  %v5026 = vmul.f32 %v5025, %v4924
  %v5027 = vmul.f32 %v5026, %v5025
  %v5028 = vmul.f32 0.5, %v5027
  %v5029 = vsub.f32 1.5, %v5028
  %v5030 = vmul.f32 %v5025, %v5029
  %vm5031 = vweird.f32 %v4924
  %vm5032 = vweird.f32 %v5025
  %vm5033 = vmor %vm5031, %vm5032
  %v5034 = vsel %vm5033, %v5025, %v5030
  %v5035 = vmul.f32 %v4848, %v4934
  %v5036 = vmul.f32 %v4849, %v4944
  %v5037 = vmul.f32 %v4850, %v4954
  %v5038 = vmul.f32 %v4851, %v4964
  %v5039 = vmul.f32 %v4852, %v4974
  %v5040 = vmul.f32 %v4853, %v4984
  %v5041 = vmul.f32 %v4854, %v4994
  %v5042 = vmul.f32 %v4855, %v5004
  %v5043 = vmul.f32 %v4856, %v5014
  %v5044 = vmul.f32 %v4857, %v5024
  %v5045 = vmul.f32 %v4858, %v5034
  %v5046 = vperm.slane %v52, 4
  %v5047 = vmul.f32 %v5035, %v5046
  %v5048 = vmul.f32 %v5036, %v5046
  %v5049 = vmul.f32 %v5037, %v5046
  %v5050 = vmul.f32 %v5038, %v5046
  %v5051 = vmul.f32 %v5039, %v5046
  %v5052 = vmul.f32 %v5040, %v5046
  %v5053 = vmul.f32 %v5041, %v5046
  %v5054 = vmul.f32 %v5042, %v5046
  %v5055 = vmul.f32 %v5043, %v5046
  %v5056 = vmul.f32 %v5044, %v5046
  %v5057 = vmul.f32 %v5045, %v5046
  %v5058 = vperm.slane %v52, 5
  %v5059 = vadd.f32 %v5047, %v5058
  %v5060 = vadd.f32 %v5048, %v5058
  %v5061 = vadd.f32 %v5049, %v5058
  %v5062 = vadd.f32 %v5050, %v5058
  %v5063 = vadd.f32 %v5051, %v5058
  %v5064 = vadd.f32 %v5052, %v5058
  %v5065 = vadd.f32 %v5053, %v5058
  %v5066 = vadd.f32 %v5054, %v5058
  %v5067 = vadd.f32 %v5055, %v5058
  %v5068 = vadd.f32 %v5056, %v5058
  %v5069 = vadd.f32 %v5057, %v5058
  %v5070 = vpack.c.bf16 %v5060, %v5059
  %v5071 = vpack.c.bf16 %v5062, %v5061
  %v5072 = vpack.c.bf16 %v5064, %v5063
  %v5073 = vpack.c.bf16 %v5066, %v5065
  %v5074 = vpack.c.bf16 %v5068, %v5067
  %v5075 = vpack.c.bf16 %v5069, %v5069
  %s5076 = scalar_lea.vmem %s4, 16
  %v5077 = vld [vmem:[%s5076] sm:$0xf]
  %v5078 = vld [vmem:[%s5076 + $0x4] sm:$0xf]
  %v5079 = vld [vmem:[%s5076 + $0x8] sm:$0xf]
  %v5080 = vld [vmem:[%s5076 + $0xc] sm:$0xf]
  %v5081 = vperm.slane %v52, 6
  %v5086 = vunpack.c.l.b16 %v5077
  %v5087 = vunpack.c.l.b16 %v5078
  %v5088 = vunpack.c.l.b16 %v5079
  %v5089 = vunpack.c.l.b16 %v5080
  %v5090 = vpack.c.b16 %v5087, %v5086
  %v5091 = vpack.c.b16 %v5089, %v5088
  %v5095 = vsel %vm88, %v5070, 0
  %v5098 = vsel %vm88, %v5071, 0
  %v5101 = vsel %vm88, %v5072, 0
  %v5104 = vsel %vm88, %v5073, 0
  %v5107 = vsel %vm88, %v5074, 0
  %v5110 = vsel %vm88, %v5075, 0
  %5112 = vmatpush.bf16.msra.mxu0 0
  %5113 = vmatpush.bf16.msra.mxu0 0
  %5114 = vmatpush.bf16.msra.mxu0 0
  %5115 = vmatpush.bf16.msra.mxu0 0
  %5116 = vmatpush.bf16.msra.mxu0 0
  %5117 = vmatpush.bf16.msra.mxu0 0
  %5118 = vmatpush.bf16.msra.mxu0 %v5091
  %5119 = vmatpush.bf16.msra.mxu0 %v5090
  %5120 = vmatmul.bf16.gmra.mxu0 %v5095
  %v5121 = vpop.f32.mrf.mxu0
  %v5122 = vadd.f32 %v5081, %v5121
  %v5123 = vpop.f32.mrf.mxu0
  %v5124 = vadd.f32 %v5081, %v5123
  %5125 = vmatmul.bf16.gmra.mxu0 %v5098
  %v5126 = vpop.f32.mrf.mxu0
  %v5127 = vadd.f32 %v5081, %v5126
  %v5128 = vpop.f32.mrf.mxu0
  %v5129 = vadd.f32 %v5081, %v5128
  %5130 = vmatmul.bf16.gmra.mxu0 %v5101
  %v5131 = vpop.f32.mrf.mxu0
  %v5132 = vadd.f32 %v5081, %v5131
  %v5133 = vpop.f32.mrf.mxu0
  %v5134 = vadd.f32 %v5081, %v5133
  %5135 = vmatmul.bf16.gmra.mxu0 %v5104
  %v5136 = vpop.f32.mrf.mxu0
  %v5137 = vadd.f32 %v5081, %v5136
  %v5138 = vpop.f32.mrf.mxu0
  %v5139 = vadd.f32 %v5081, %v5138
  %5140 = vmatmul.bf16.gmra.mxu0 %v5107
  %v5141 = vpop.f32.mrf.mxu0
  %v5142 = vadd.f32 %v5081, %v5141
  %v5143 = vpop.f32.mrf.mxu0
  %v5144 = vadd.f32 %v5081, %v5143
  %5145 = vmatmul.bf16.gmra.mxu0 %v5110
  %v5146 = vpop.f32.mrf.mxu0
  %v5147 = vadd.f32 %v5081, %v5146
  %v5148 = vpop.f32.mrf.mxu0
  %5149 = vdwg.mxu0
  %v5150 = vpack.c.bf16 %v5122, %v5122
  %v5151 = vpack.c.bf16 %v5124, %v5124
  %v5152 = vpack.c.bf16 %v5127, %v5127
  %v5153 = vpack.c.bf16 %v5129, %v5129
  %v5154 = vpack.c.bf16 %v5132, %v5132
  %v5155 = vpack.c.bf16 %v5134, %v5134
  %v5156 = vpack.c.bf16 %v5137, %v5137
  %v5157 = vpack.c.bf16 %v5139, %v5139
  %v5158 = vpack.c.bf16 %v5142, %v5142
  %v5159 = vpack.c.bf16 %v5144, %v5144
  %v5160 = vpack.c.bf16 %v5147, %v5147
  %v5161 = vunpack.c.l.bf16 %v5150
  %v5162 = vunpack.c.l.bf16 %v5151
  %v5163 = vunpack.c.l.bf16 %v5152
  %v5164 = vunpack.c.l.bf16 %v5153
  %v5165 = vunpack.c.l.bf16 %v5154
  %v5166 = vunpack.c.l.bf16 %v5155
  %v5167 = vunpack.c.l.bf16 %v5156
  %v5168 = vunpack.c.l.bf16 %v5157
  %v5169 = vunpack.c.l.bf16 %v5158
  %v5170 = vunpack.c.l.bf16 %v5159
  %v5171 = vunpack.c.l.bf16 %v5160
  %v5172 = vmul.f32 %v5161, 1.703125
  %v5173 = vmul.f32 %v5162, 1.703125
  %v5174 = vmul.f32 %v5163, 1.703125
  %v5175 = vmul.f32 %v5164, 1.703125
  %v5176 = vmul.f32 %v5165, 1.703125
  %v5177 = vmul.f32 %v5166, 1.703125
  %v5178 = vmul.f32 %v5167, 1.703125
  %v5179 = vmul.f32 %v5168, 1.703125
  %v5180 = vmul.f32 %v5169, 1.703125
  %v5181 = vmul.f32 %v5170, 1.703125
  %v5182 = vmul.f32 %v5171, 1.703125
  %v5183 = vpack.c.bf16 %v5172, %v5172
  %v5184 = vpack.c.bf16 %v5173, %v5173
  %v5185 = vpack.c.bf16 %v5174, %v5174
  %v5186 = vpack.c.bf16 %v5175, %v5175
  %v5187 = vpack.c.bf16 %v5176, %v5176
  %v5188 = vpack.c.bf16 %v5177, %v5177
  %v5189 = vpack.c.bf16 %v5178, %v5178
  %v5190 = vpack.c.bf16 %v5179, %v5179
  %v5191 = vpack.c.bf16 %v5180, %v5180
  %v5192 = vpack.c.bf16 %v5181, %v5181
  %v5193 = vpack.c.bf16 %v5182, %v5182
  %v5194 = vxor.u32 %v5183, 2147516416
  %v5195 = vxor.u32 %v5184, 2147516416
  %v5196 = vxor.u32 %v5185, 2147516416
  %v5197 = vxor.u32 %v5186, 2147516416
  %v5198 = vxor.u32 %v5187, 2147516416
  %v5199 = vxor.u32 %v5188, 2147516416
  %v5200 = vxor.u32 %v5189, 2147516416
  %v5201 = vxor.u32 %v5190, 2147516416
  %v5202 = vxor.u32 %v5191, 2147516416
  %v5203 = vxor.u32 %v5192, 2147516416
  %v5204 = vxor.u32 %v5193, 2147516416
  %v5205 = vunpack.c.l.bf16 %v5194
  %v5206 = vunpack.c.l.bf16 %v5195
  %v5207 = vunpack.c.l.bf16 %v5196
  %v5208 = vunpack.c.l.bf16 %v5197
  %v5209 = vunpack.c.l.bf16 %v5198
  %v5210 = vunpack.c.l.bf16 %v5199
  %v5211 = vunpack.c.l.bf16 %v5200
  %v5212 = vunpack.c.l.bf16 %v5201
  %v5213 = vunpack.c.l.bf16 %v5202
  %v5214 = vunpack.c.l.bf16 %v5203
  %v5215 = vunpack.c.l.bf16 %v5204
  %v5216 = vmul.f32 %v5205, 1.442695
  %v5217 = vpow.pop %v5216
  %v5218 = vmul.f32 %v5206, 1.442695
  %v5219 = vpow.pop %v5218
  %v5220 = vmul.f32 %v5207, 1.442695
  %v5221 = vpow.pop %v5220
  %v5222 = vmul.f32 %v5208, 1.442695
  %v5223 = vpow.pop %v5222
  %v5224 = vmul.f32 %v5209, 1.442695
  %v5225 = vpow.pop %v5224
  %v5226 = vmul.f32 %v5210, 1.442695
  %v5227 = vpow.pop %v5226
  %v5228 = vmul.f32 %v5211, 1.442695
  %v5229 = vpow.pop %v5228
  %v5230 = vmul.f32 %v5212, 1.442695
  %v5231 = vpow.pop %v5230
  %v5232 = vmul.f32 %v5213, 1.442695
  %v5233 = vpow.pop %v5232
  %v5234 = vmul.f32 %v5214, 1.442695
  %v5235 = vpow.pop %v5234
  %v5236 = vmul.f32 %v5215, 1.442695
  %v5237 = vpow.pop %v5236
  %v5238 = vpack.c.bf16 %v5217, %v5217
  %v5239 = vpack.c.bf16 %v5219, %v5219
  %v5240 = vpack.c.bf16 %v5221, %v5221
  %v5241 = vpack.c.bf16 %v5223, %v5223
  %v5242 = vpack.c.bf16 %v5225, %v5225
  %v5243 = vpack.c.bf16 %v5227, %v5227
  %v5244 = vpack.c.bf16 %v5229, %v5229
  %v5245 = vpack.c.bf16 %v5231, %v5231
  %v5246 = vpack.c.bf16 %v5233, %v5233
  %v5247 = vpack.c.bf16 %v5235, %v5235
  %v5248 = vpack.c.bf16 %v5237, %v5237
  %v5249 = vunpack.c.l.bf16 %v5238
  %v5250 = vunpack.c.l.bf16 %v5239
  %v5251 = vunpack.c.l.bf16 %v5240
  %v5252 = vunpack.c.l.bf16 %v5241
  %v5253 = vunpack.c.l.bf16 %v5242
  %v5254 = vunpack.c.l.bf16 %v5243
  %v5255 = vunpack.c.l.bf16 %v5244
  %v5256 = vunpack.c.l.bf16 %v5245
  %v5257 = vunpack.c.l.bf16 %v5246
  %v5258 = vunpack.c.l.bf16 %v5247
  %v5259 = vunpack.c.l.bf16 %v5248
  %v5260 = vadd.f32 %v5249, 1.0
  %v5261 = vadd.f32 %v5250, 1.0
  %v5262 = vadd.f32 %v5251, 1.0
  %v5263 = vadd.f32 %v5252, 1.0
  %v5264 = vadd.f32 %v5253, 1.0
  %v5265 = vadd.f32 %v5254, 1.0
  %v5266 = vadd.f32 %v5255, 1.0
  %v5267 = vadd.f32 %v5256, 1.0
  %v5268 = vadd.f32 %v5257, 1.0
  %v5269 = vadd.f32 %v5258, 1.0
  %v5270 = vadd.f32 %v5259, 1.0
  %v5271 = vpack.c.bf16 %v5260, %v5260
  %v5272 = vpack.c.bf16 %v5261, %v5261
  %v5273 = vpack.c.bf16 %v5262, %v5262
  %v5274 = vpack.c.bf16 %v5263, %v5263
  %v5275 = vpack.c.bf16 %v5264, %v5264
  %v5276 = vpack.c.bf16 %v5265, %v5265
  %v5277 = vpack.c.bf16 %v5266, %v5266
  %v5278 = vpack.c.bf16 %v5267, %v5267
  %v5279 = vpack.c.bf16 %v5268, %v5268
  %v5280 = vpack.c.bf16 %v5269, %v5269
  %v5281 = vpack.c.bf16 %v5270, %v5270
  %v5282 = vunpack.c.h.bf16 %v5271
  %v5283 = vunpack.c.l.bf16 %v5271
  %v5284 = vrcp.pop %v5282
  %v5285 = vmul.f32 %v2581, %v5284
  %v5286 = vrcp.pop %v5283
  %v5287 = vmul.f32 %v2582, %v5286
  %v5288 = vpack.c.bf16 %v5285, %v5287
  %v5289 = vunpack.c.h.bf16 %v5272
  %v5290 = vunpack.c.l.bf16 %v5272
  %v5291 = vrcp.pop %v5289
  %v5292 = vmul.f32 %v2581, %v5291
  %v5293 = vrcp.pop %v5290
  %v5294 = vmul.f32 %v2582, %v5293
  %v5295 = vpack.c.bf16 %v5292, %v5294
  %v5296 = vunpack.c.h.bf16 %v5273
  %v5297 = vunpack.c.l.bf16 %v5273
  %v5298 = vrcp.pop %v5296
  %v5299 = vmul.f32 %v2581, %v5298
  %v5300 = vrcp.pop %v5297
  %v5301 = vmul.f32 %v2582, %v5300
  %v5302 = vpack.c.bf16 %v5299, %v5301
  %v5303 = vunpack.c.h.bf16 %v5274
  %v5304 = vunpack.c.l.bf16 %v5274
  %v5305 = vrcp.pop %v5303
  %v5306 = vmul.f32 %v2581, %v5305
  %v5307 = vrcp.pop %v5304
  %v5308 = vmul.f32 %v2582, %v5307
  %v5309 = vpack.c.bf16 %v5306, %v5308
  %v5310 = vunpack.c.h.bf16 %v5275
  %v5311 = vunpack.c.l.bf16 %v5275
  %v5312 = vrcp.pop %v5310
  %v5313 = vmul.f32 %v2581, %v5312
  %v5314 = vrcp.pop %v5311
  %v5315 = vmul.f32 %v2582, %v5314
  %v5316 = vpack.c.bf16 %v5313, %v5315
  %v5317 = vunpack.c.h.bf16 %v5276
  %v5318 = vunpack.c.l.bf16 %v5276
  %v5319 = vrcp.pop %v5317
  %v5320 = vmul.f32 %v2581, %v5319
  %v5321 = vrcp.pop %v5318
  %v5322 = vmul.f32 %v2582, %v5321
  %v5323 = vpack.c.bf16 %v5320, %v5322
  %v5324 = vunpack.c.h.bf16 %v5277
  %v5325 = vunpack.c.l.bf16 %v5277
  %v5326 = vrcp.pop %v5324
  %v5327 = vmul.f32 %v2581, %v5326
  %v5328 = vrcp.pop %v5325
  %v5329 = vmul.f32 %v2582, %v5328
  %v5330 = vpack.c.bf16 %v5327, %v5329
  %v5331 = vunpack.c.h.bf16 %v5278
  %v5332 = vunpack.c.l.bf16 %v5278
  %v5333 = vrcp.pop %v5331
  %v5334 = vmul.f32 %v2581, %v5333
  %v5335 = vrcp.pop %v5332
  %v5336 = vmul.f32 %v2582, %v5335
  %v5337 = vpack.c.bf16 %v5334, %v5336
  %v5338 = vunpack.c.h.bf16 %v5279
  %v5339 = vunpack.c.l.bf16 %v5279
  %v5340 = vrcp.pop %v5338
  %v5341 = vmul.f32 %v2581, %v5340
  %v5342 = vrcp.pop %v5339
  %v5343 = vmul.f32 %v2582, %v5342
  %v5344 = vpack.c.bf16 %v5341, %v5343
  %v5345 = vunpack.c.h.bf16 %v5280
  %v5346 = vunpack.c.l.bf16 %v5280
  %v5347 = vrcp.pop %v5345
  %v5348 = vmul.f32 %v2581, %v5347
  %v5349 = vrcp.pop %v5346
  %v5350 = vmul.f32 %v2582, %v5349
  %v5351 = vpack.c.bf16 %v5348, %v5350
  %v5352 = vunpack.c.h.bf16 %v5281
  %v5353 = vunpack.c.l.bf16 %v5281
  %v5354 = vrcp.pop %v5352
  %v5355 = vmul.f32 %v2581, %v5354
  %v5356 = vrcp.pop %v5353
  %v5357 = vmul.f32 %v2582, %v5356
  %v5358 = vpack.c.bf16 %v5355, %v5357
  %v5359 = vunpack.c.l.bf16 %v5288
  %v5360 = vunpack.c.l.bf16 %v5295
  %v5361 = vunpack.c.l.bf16 %v5302
  %v5362 = vunpack.c.l.bf16 %v5309
  %v5363 = vunpack.c.l.bf16 %v5316
  %v5364 = vunpack.c.l.bf16 %v5323
  %v5365 = vunpack.c.l.bf16 %v5330
  %v5366 = vunpack.c.l.bf16 %v5337
  %v5367 = vunpack.c.l.bf16 %v5344
  %v5368 = vunpack.c.l.bf16 %v5351
  %v5369 = vunpack.c.l.bf16 %v5358
  %v5370 = vmul.f32 %v5161, %v5359
  %v5371 = vmul.f32 %v5162, %v5360
  %v5372 = vmul.f32 %v5163, %v5361
  %v5373 = vmul.f32 %v5164, %v5362
  %v5374 = vmul.f32 %v5165, %v5363
  %v5375 = vmul.f32 %v5166, %v5364
  %v5376 = vmul.f32 %v5167, %v5365
  %v5377 = vmul.f32 %v5168, %v5366
  %v5378 = vmul.f32 %v5169, %v5367
  %v5379 = vmul.f32 %v5170, %v5368
  %v5380 = vmul.f32 %v5171, %v5369
  %v5381 = vpack.c.bf16 %v5371, %v5370
  %v5382 = vpack.c.bf16 %v5373, %v5372
  %v5383 = vpack.c.bf16 %v5375, %v5374
  %v5384 = vpack.c.bf16 %v5377, %v5376
  %v5385 = vpack.c.bf16 %v5379, %v5378
  %v5386 = vpack.c.bf16 %v5380, %v5380
  %s5387 = scalar_lea.vmem %s5, 64
  %v5388 = vld [vmem:[%s5387] sm:$0xf]
  %v5389 = vld [vmem:[%s5387 + $0x4] sm:$0xf]
  %v5390 = vld [vmem:[%s5387 + $0x8] sm:$0xf]
  %v5391 = vld [vmem:[%s5387 + $0xc] sm:$0xf]
  %v5392 = vld [vmem:[%s5387 + $0x10] sm:$0xf]
  %v5393 = vld [vmem:[%s5387 + $0x14] sm:$0xf]
  %v5394 = vld [vmem:[%s5387 + $0x18] sm:$0xf]
  %v5395 = vld [vmem:[%s5387 + $0x1c] sm:$0xf]
  %v5396 = vld [vmem:[%s5387 + $0x20] sm:$0xf]
  %v5397 = vld [vmem:[%s5387 + $0x24] sm:$0xf]
  %v5398 = vld [vmem:[%s5387 + $0x28] sm:$0xf]
  %v5399 = vld [vmem:[%s5387 + $0x2c] sm:$0xf]
  %v5400 = vld [vmem:[%s5387 + $0x30] sm:$0xf]
  %v5401 = vld [vmem:[%s5387 + $0x34] sm:$0xf]
  %v5402 = vld [vmem:[%s5387 + $0x38] sm:$0xf]
  %v5403 = vld [vmem:[%s5387 + $0x3c] sm:$0xf]
  %v5404 = vperm.slane %v52, 7
  %v5421 = vunpack.c.l.b16 %v5388
  %v5422 = vunpack.c.l.b16 %v5389
  %v5423 = vunpack.c.l.b16 %v5390
  %v5424 = vunpack.c.l.b16 %v5391
  %v5425 = vunpack.c.l.b16 %v5392
  %v5426 = vunpack.c.l.b16 %v5393
  %v5427 = vunpack.c.l.b16 %v5394
  %v5428 = vunpack.c.l.b16 %v5395
  %v5429 = vunpack.c.l.b16 %v5396
  %v5430 = vunpack.c.l.b16 %v5397
  %v5431 = vunpack.c.l.b16 %v5398
  %v5432 = vunpack.c.l.b16 %v5399
  %v5433 = vunpack.c.l.b16 %v5400
  %v5434 = vunpack.c.l.b16 %v5401
  %v5435 = vunpack.c.l.b16 %v5402
  %v5436 = vunpack.c.l.b16 %v5403
  %v5437 = vpack.c.b16 %v5422, %v5421
  %v5438 = vpack.c.b16 %v5424, %v5423
  %v5439 = vpack.c.b16 %v5426, %v5425
  %v5440 = vpack.c.b16 %v5428, %v5427
  %v5441 = vpack.c.b16 %v5430, %v5429
  %v5442 = vpack.c.b16 %v5432, %v5431
  %v5443 = vpack.c.b16 %v5434, %v5433
  %v5444 = vpack.c.b16 %v5436, %v5435
  %5453 = vmatpush.bf16.msra.mxu0 %v5444
  %5454 = vmatpush.bf16.msra.mxu0 %v5443
  %5455 = vmatpush.bf16.msra.mxu0 %v5442
  %5456 = vmatpush.bf16.msra.mxu0 %v5441
  %5457 = vmatpush.bf16.msra.mxu0 %v5440
  %5458 = vmatpush.bf16.msra.mxu0 %v5439
  %5459 = vmatpush.bf16.msra.mxu0 %v5438
  %5460 = vmatpush.bf16.msra.mxu0 %v5437
  %5461 = vmatmul.bf16.gmra.mxu0 %v5381
  %v5462 = vpop.f32.mrf.mxu0
  %v5463 = vadd.f32 %v5404, %v5462
  %v5464 = vpop.f32.mrf.mxu0
  %v5465 = vadd.f32 %v5404, %v5464
  %5466 = vmatmul.bf16.gmra.mxu0 %v5382
  %v5467 = vpop.f32.mrf.mxu0
  %v5468 = vadd.f32 %v5404, %v5467
  %v5469 = vpop.f32.mrf.mxu0
  %v5470 = vadd.f32 %v5404, %v5469
  %5471 = vmatmul.bf16.gmra.mxu0 %v5383
  %v5472 = vpop.f32.mrf.mxu0
  %v5473 = vadd.f32 %v5404, %v5472
  %v5474 = vpop.f32.mrf.mxu0
  %v5475 = vadd.f32 %v5404, %v5474
  %5476 = vmatmul.bf16.gmra.mxu0 %v5384
  %v5477 = vpop.f32.mrf.mxu0
  %v5478 = vadd.f32 %v5404, %v5477
  %v5479 = vpop.f32.mrf.mxu0
  %v5480 = vadd.f32 %v5404, %v5479
  %5481 = vmatmul.bf16.gmra.mxu0 %v5385
  %v5482 = vpop.f32.mrf.mxu0
  %v5483 = vadd.f32 %v5404, %v5482
  %v5484 = vpop.f32.mrf.mxu0
  %v5485 = vadd.f32 %v5404, %v5484
  %5486 = vmatmul.bf16.gmra.mxu0 %v5386
  %v5487 = vpop.f32.mrf.mxu0
  %v5488 = vadd.f32 %v5404, %v5487
  %v5489 = vpop.f32.mrf.mxu0
  %5490 = vdwg.mxu0
  %v5491 = vadd.f32 %v4793, %v5463
  %v5492 = vadd.f32 %v4794, %v5465
  %v5493 = vadd.f32 %v4795, %v5468
  %v5494 = vadd.f32 %v4796, %v5470
  %v5495 = vadd.f32 %v4797, %v5473
  %v5496 = vadd.f32 %v4798, %v5475
  %v5497 = vadd.f32 %v4799, %v5478
  %v5498 = vadd.f32 %v4800, %v5480
  %v5499 = vadd.f32 %v4801, %v5483
  %v5500 = vadd.f32 %v4802, %v5485
  %v5501 = vadd.f32 %v4803, %v5488
  %v5502 = vsel %vm88, %v5491, 0.0
  %5503 = vadd.xlane.f32.xlu0 %v5502
  %v5504 = vpop.xlane.xlu0 %5503
  %v5505 = vsel %vm88, %v5492, 0.0
  %5506 = vadd.xlane.f32.xlu0 %v5505
  %v5507 = vpop.xlane.xlu0 %5506
  %v5508 = vsel %vm88, %v5493, 0.0
  %5509 = vadd.xlane.f32.xlu0 %v5508
  %v5510 = vpop.xlane.xlu0 %5509
  %v5511 = vsel %vm88, %v5494, 0.0
  %5512 = vadd.xlane.f32.xlu0 %v5511
  %v5513 = vpop.xlane.xlu0 %5512
  %v5514 = vsel %vm88, %v5495, 0.0
  %5515 = vadd.xlane.f32.xlu0 %v5514
  %v5516 = vpop.xlane.xlu0 %5515
  %v5517 = vsel %vm88, %v5496, 0.0
  %5518 = vadd.xlane.f32.xlu0 %v5517
  %v5519 = vpop.xlane.xlu0 %5518
  %v5520 = vsel %vm88, %v5497, 0.0
  %5521 = vadd.xlane.f32.xlu0 %v5520
  %v5522 = vpop.xlane.xlu0 %5521
  %v5523 = vsel %vm88, %v5498, 0.0
  %5524 = vadd.xlane.f32.xlu0 %v5523
  %v5525 = vpop.xlane.xlu0 %5524
  %v5526 = vsel %vm88, %v5499, 0.0
  %5527 = vadd.xlane.f32.xlu0 %v5526
  %v5528 = vpop.xlane.xlu0 %5527
  %v5529 = vsel %vm88, %v5500, 0.0
  %5530 = vadd.xlane.f32.xlu0 %v5529
  %v5531 = vpop.xlane.xlu0 %5530
  %v5532 = vsel %vm119, %v5501, 0.0
  %5533 = vadd.xlane.f32.xlu0 %v5532
  %v5534 = vpop.xlane.xlu0 %5533
  %v5535 = vmul.f32 %v5504, %v129
  %v5536 = vmul.f32 %v5507, %v129
  %v5537 = vmul.f32 %v5510, %v129
  %v5538 = vmul.f32 %v5513, %v129
  %v5539 = vmul.f32 %v5516, %v129
  %v5540 = vmul.f32 %v5519, %v129
  %v5541 = vmul.f32 %v5522, %v129
  %v5542 = vmul.f32 %v5525, %v129
  %v5543 = vmul.f32 %v5528, %v129
  %v5544 = vmul.f32 %v5531, %v129
  %v5545 = vmul.f32 %v5534, %v129
  %v5546 = vsub.f32 %v5491, %v5535
  %v5547 = vsub.f32 %v5492, %v5536
  %v5548 = vsub.f32 %v5493, %v5537
  %v5549 = vsub.f32 %v5494, %v5538
  %v5550 = vsub.f32 %v5495, %v5539
  %v5551 = vsub.f32 %v5496, %v5540
  %v5552 = vsub.f32 %v5497, %v5541
  %v5553 = vsub.f32 %v5498, %v5542
  %v5554 = vsub.f32 %v5499, %v5543
  %v5555 = vsub.f32 %v5500, %v5544
  %v5556 = vsub.f32 %v5501, %v5545
  %v5557 = vmul.f32 %v5546, %v5546
  %v5558 = vmul.f32 %v5547, %v5547
  %v5559 = vmul.f32 %v5548, %v5548
  %v5560 = vmul.f32 %v5549, %v5549
  %v5561 = vmul.f32 %v5550, %v5550
  %v5562 = vmul.f32 %v5551, %v5551
  %v5563 = vmul.f32 %v5552, %v5552
  %v5564 = vmul.f32 %v5553, %v5553
  %v5565 = vmul.f32 %v5554, %v5554
  %v5566 = vmul.f32 %v5555, %v5555
  %v5567 = vmul.f32 %v5556, %v5556
  %v5568 = vsel %vm88, %v5557, 0.0
  %5569 = vadd.xlane.f32.xlu0 %v5568
  %v5570 = vpop.xlane.xlu0 %5569
  %v5571 = vsel %vm88, %v5558, 0.0
  %5572 = vadd.xlane.f32.xlu0 %v5571
  %v5573 = vpop.xlane.xlu0 %5572
  %v5574 = vsel %vm88, %v5559, 0.0
  %5575 = vadd.xlane.f32.xlu0 %v5574
  %v5576 = vpop.xlane.xlu0 %5575
  %v5577 = vsel %vm88, %v5560, 0.0
  %5578 = vadd.xlane.f32.xlu0 %v5577
  %v5579 = vpop.xlane.xlu0 %5578
  %v5580 = vsel %vm88, %v5561, 0.0
  %5581 = vadd.xlane.f32.xlu0 %v5580
  %v5582 = vpop.xlane.xlu0 %5581
  %v5583 = vsel %vm88, %v5562, 0.0
  %5584 = vadd.xlane.f32.xlu0 %v5583
  %v5585 = vpop.xlane.xlu0 %5584
  %v5586 = vsel %vm88, %v5563, 0.0
  %5587 = vadd.xlane.f32.xlu0 %v5586
  %v5588 = vpop.xlane.xlu0 %5587
  %v5589 = vsel %vm88, %v5564, 0.0
  %5590 = vadd.xlane.f32.xlu0 %v5589
  %v5591 = vpop.xlane.xlu0 %5590
  %v5592 = vsel %vm88, %v5565, 0.0
  %5593 = vadd.xlane.f32.xlu0 %v5592
  %v5594 = vpop.xlane.xlu0 %5593
  %v5595 = vsel %vm88, %v5566, 0.0
  %5596 = vadd.xlane.f32.xlu0 %v5595
  %v5597 = vpop.xlane.xlu0 %5596
  %v5598 = vsel %vm119, %v5567, 0.0
  %5599 = vadd.xlane.f32.xlu0 %v5598
  %v5600 = vpop.xlane.xlu0 %5599
  %v5601 = vmul.f32 %v5570, %v129
  %v5602 = vmul.f32 %v5573, %v129
  %v5603 = vmul.f32 %v5576, %v129
  %v5604 = vmul.f32 %v5579, %v129
  %v5605 = vmul.f32 %v5582, %v129
  %v5606 = vmul.f32 %v5585, %v129
  %v5607 = vmul.f32 %v5588, %v129
  %v5608 = vmul.f32 %v5591, %v129
  %v5609 = vmul.f32 %v5594, %v129
  %v5610 = vmul.f32 %v5597, %v129
  %v5611 = vmul.f32 %v5600, %v129
  %v5612 = vadd.f32 %v5601, 1e-05
  %v5613 = vadd.f32 %v5602, 1e-05
  %v5614 = vadd.f32 %v5603, 1e-05
  %v5615 = vadd.f32 %v5604, 1e-05
  %v5616 = vadd.f32 %v5605, 1e-05
  %v5617 = vadd.f32 %v5606, 1e-05
  %v5618 = vadd.f32 %v5607, 1e-05
  %v5619 = vadd.f32 %v5608, 1e-05
  %v5620 = vadd.f32 %v5609, 1e-05
  %v5621 = vadd.f32 %v5610, 1e-05
  %v5622 = vadd.f32 %v5611, 1e-05
  %v5623 = vrsqrt.pop %v5612
  %v5624 = vmul.f32 %v5623, %v5612
  %v5625 = vmul.f32 %v5624, %v5623
  %v5626 = vmul.f32 0.5, %v5625
  %v5627 = vsub.f32 1.5, %v5626
  %v5628 = vmul.f32 %v5623, %v5627
  %vm5629 = vweird.f32 %v5612
  %vm5630 = vweird.f32 %v5623
  %vm5631 = vmor %vm5629, %vm5630
  %v5632 = vsel %vm5631, %v5623, %v5628
  %v5633 = vrsqrt.pop %v5613
  %v5634 = vmul.f32 %v5633, %v5613
  %v5635 = vmul.f32 %v5634, %v5633
  %v5636 = vmul.f32 0.5, %v5635
  %v5637 = vsub.f32 1.5, %v5636
  %v5638 = vmul.f32 %v5633, %v5637
  %vm5639 = vweird.f32 %v5613
  %vm5640 = vweird.f32 %v5633
  %vm5641 = vmor %vm5639, %vm5640
  %v5642 = vsel %vm5641, %v5633, %v5638
  %v5643 = vrsqrt.pop %v5614
  %v5644 = vmul.f32 %v5643, %v5614
  %v5645 = vmul.f32 %v5644, %v5643
  %v5646 = vmul.f32 0.5, %v5645
  %v5647 = vsub.f32 1.5, %v5646
  %v5648 = vmul.f32 %v5643, %v5647
  %vm5649 = vweird.f32 %v5614
  %vm5650 = vweird.f32 %v5643
  %vm5651 = vmor %vm5649, %vm5650
  %v5652 = vsel %vm5651, %v5643, %v5648
  %v5653 = vrsqrt.pop %v5615
  %v5654 = vmul.f32 %v5653, %v5615
  %v5655 = vmul.f32 %v5654, %v5653
  %v5656 = vmul.f32 0.5, %v5655
  %v5657 = vsub.f32 1.5, %v5656
  %v5658 = vmul.f32 %v5653, %v5657
  %vm5659 = vweird.f32 %v5615
  %vm5660 = vweird.f32 %v5653
  %vm5661 = vmor %vm5659, %vm5660
  %v5662 = vsel %vm5661, %v5653, %v5658
  %v5663 = vrsqrt.pop %v5616
  %v5664 = vmul.f32 %v5663, %v5616
  %v5665 = vmul.f32 %v5664, %v5663
  %v5666 = vmul.f32 0.5, %v5665
  %v5667 = vsub.f32 1.5, %v5666
  %v5668 = vmul.f32 %v5663, %v5667
  %vm5669 = vweird.f32 %v5616
  %vm5670 = vweird.f32 %v5663
  %vm5671 = vmor %vm5669, %vm5670
  %v5672 = vsel %vm5671, %v5663, %v5668
  %v5673 = vrsqrt.pop %v5617
  %v5674 = vmul.f32 %v5673, %v5617
  %v5675 = vmul.f32 %v5674, %v5673
  %v5676 = vmul.f32 0.5, %v5675
  %v5677 = vsub.f32 1.5, %v5676
  %v5678 = vmul.f32 %v5673, %v5677
  %vm5679 = vweird.f32 %v5617
  %vm5680 = vweird.f32 %v5673
  %vm5681 = vmor %vm5679, %vm5680
  %v5682 = vsel %vm5681, %v5673, %v5678
  %v5683 = vrsqrt.pop %v5618
  %v5684 = vmul.f32 %v5683, %v5618
  %v5685 = vmul.f32 %v5684, %v5683
  %v5686 = vmul.f32 0.5, %v5685
  %v5687 = vsub.f32 1.5, %v5686
  %v5688 = vmul.f32 %v5683, %v5687
  %vm5689 = vweird.f32 %v5618
  %vm5690 = vweird.f32 %v5683
  %vm5691 = vmor %vm5689, %vm5690
  %v5692 = vsel %vm5691, %v5683, %v5688
  %v5693 = vrsqrt.pop %v5619
  %v5694 = vmul.f32 %v5693, %v5619
  %v5695 = vmul.f32 %v5694, %v5693
  %v5696 = vmul.f32 0.5, %v5695
  %v5697 = vsub.f32 1.5, %v5696
  %v5698 = vmul.f32 %v5693, %v5697
  %vm5699 = vweird.f32 %v5619
  %vm5700 = vweird.f32 %v5693
  %vm5701 = vmor %vm5699, %vm5700
  %v5702 = vsel %vm5701, %v5693, %v5698
  %v5703 = vrsqrt.pop %v5620
  %v5704 = vmul.f32 %v5703, %v5620
  %v5705 = vmul.f32 %v5704, %v5703
  %v5706 = vmul.f32 0.5, %v5705
  %v5707 = vsub.f32 1.5, %v5706
  %v5708 = vmul.f32 %v5703, %v5707
  %vm5709 = vweird.f32 %v5620
  %vm5710 = vweird.f32 %v5703
  %vm5711 = vmor %vm5709, %vm5710
  %v5712 = vsel %vm5711, %v5703, %v5708
  %v5713 = vrsqrt.pop %v5621
  %v5714 = vmul.f32 %v5713, %v5621
  %v5715 = vmul.f32 %v5714, %v5713
  %v5716 = vmul.f32 0.5, %v5715
  %v5717 = vsub.f32 1.5, %v5716
  %v5718 = vmul.f32 %v5713, %v5717
  %vm5719 = vweird.f32 %v5621
  %vm5720 = vweird.f32 %v5713
  %vm5721 = vmor %vm5719, %vm5720
  %v5722 = vsel %vm5721, %v5713, %v5718
  %v5723 = vrsqrt.pop %v5622
  %v5724 = vmul.f32 %v5723, %v5622
  %v5725 = vmul.f32 %v5724, %v5723
  %v5726 = vmul.f32 0.5, %v5725
  %v5727 = vsub.f32 1.5, %v5726
  %v5728 = vmul.f32 %v5723, %v5727
  %vm5729 = vweird.f32 %v5622
  %vm5730 = vweird.f32 %v5723
  %vm5731 = vmor %vm5729, %vm5730
  %v5732 = vsel %vm5731, %v5723, %v5728
  %v5733 = vmul.f32 %v5546, %v5632
  %v5734 = vmul.f32 %v5547, %v5642
  %v5735 = vmul.f32 %v5548, %v5652
  %v5736 = vmul.f32 %v5549, %v5662
  %v5737 = vmul.f32 %v5550, %v5672
  %v5738 = vmul.f32 %v5551, %v5682
  %v5739 = vmul.f32 %v5552, %v5692
  %v5740 = vmul.f32 %v5553, %v5702
  %v5741 = vmul.f32 %v5554, %v5712
  %v5742 = vmul.f32 %v5555, %v5722
  %v5743 = vmul.f32 %v5556, %v5732
  %v5744 = vperm.slane %v54, 0
  %v5745 = vmul.f32 %v5733, %v5744
  %v5746 = vmul.f32 %v5734, %v5744
  %v5747 = vmul.f32 %v5735, %v5744
  %v5748 = vmul.f32 %v5736, %v5744
  %v5749 = vmul.f32 %v5737, %v5744
  %v5750 = vmul.f32 %v5738, %v5744
  %v5751 = vmul.f32 %v5739, %v5744
  %v5752 = vmul.f32 %v5740, %v5744
  %v5753 = vmul.f32 %v5741, %v5744
  %v5754 = vmul.f32 %v5742, %v5744
  %v5755 = vmul.f32 %v5743, %v5744
  %v5756 = vperm.slane %v54, 1
  %v5757 = vadd.f32 %v5745, %v5756
  %v5758 = vadd.f32 %v5746, %v5756
  %v5759 = vadd.f32 %v5747, %v5756
  %v5760 = vadd.f32 %v5748, %v5756
  %v5761 = vadd.f32 %v5749, %v5756
  %v5762 = vadd.f32 %v5750, %v5756
  %v5763 = vadd.f32 %v5751, %v5756
  %v5764 = vadd.f32 %v5752, %v5756
  %v5765 = vadd.f32 %v5753, %v5756
  %v5766 = vadd.f32 %v5754, %v5756
  %v5767 = vadd.f32 %v5755, %v5756
  %5768 = vst.msk [vmem:[%s6] sm:$0xff] %vm88, %v5757
  %5769 = vst.msk [vmem:[%s6 + $0x8] sm:$0xff] %vm88, %v5758
  %5770 = vst.msk [vmem:[%s6 + $0x10] sm:$0xff] %vm88, %v5759
  %5771 = vst.msk [vmem:[%s6 + $0x18] sm:$0xff] %vm88, %v5760
  %5772 = vst.msk [vmem:[%s6 + $0x20] sm:$0xff] %vm88, %v5761
  %5773 = vst.msk [vmem:[%s6 + $0x28] sm:$0xff] %vm88, %v5762
  %5774 = vst.msk [vmem:[%s6 + $0x30] sm:$0xff] %vm88, %v5763
  %5775 = vst.msk [vmem:[%s6 + $0x38] sm:$0xff] %vm88, %v5764
  %5776 = vst.msk [vmem:[%s6 + $0x40] sm:$0xff] %vm88, %v5765
  %5777 = vst.msk [vmem:[%s6 + $0x48] sm:$0xff] %vm88, %v5766
  %5778 = vst.msk [vmem:[%s6 + $0x50] sm:$0x1] %vm119, %v5767
  %s5779 = scalar_lea.vmem %s0, 88
  %v5780 = vld [vmem:[%s5779] sm:$0xff]
  %v5781 = vld [vmem:[%s5779 + $0x8] sm:$0xff]
  %v5782 = vld [vmem:[%s5779 + $0x10] sm:$0xff]
  %v5783 = vld [vmem:[%s5779 + $0x18] sm:$0xff]
  %v5784 = vld [vmem:[%s5779 + $0x20] sm:$0xff]
  %v5785 = vld [vmem:[%s5779 + $0x28] sm:$0xff]
  %v5786 = vld [vmem:[%s5779 + $0x30] sm:$0xff]
  %v5787 = vld [vmem:[%s5779 + $0x38] sm:$0xff]
  %v5788 = vld [vmem:[%s5779 + $0x40] sm:$0xff]
  %v5789 = vld [vmem:[%s5779 + $0x48] sm:$0xff]
  %v5790 = vld [vmem:[%s5779 + $0x50] sm:$0x1]
  %v5791 = vld [vmem:[%s1] sm:$0xff]
  %v5792 = vld [vmem:[%s1 + $0x8] sm:$0xff]
  %v5793 = vld [vmem:[%s1 + $0x10] sm:$0xff]
  %v5794 = vld [vmem:[%s1 + $0x18] sm:$0xff]
  %v5795 = vld [vmem:[%s1 + $0x20] sm:$0xff]
  %v5796 = vld [vmem:[%s1 + $0x28] sm:$0xff]
  %v5797 = vld [vmem:[%s1 + $0x30] sm:$0xff]
  %v5798 = vld [vmem:[%s1 + $0x38] sm:$0xff]
  %v5799 = vld [vmem:[%s1 + $0x40] sm:$0xff]
  %v5800 = vld [vmem:[%s1 + $0x48] sm:$0xff]
  %v5801 = vld [vmem:[%s1 + $0x50] sm:$0x1]
  %v5802 = vadd.f32 %v5780, %v5791
  %v5803 = vadd.f32 %v5781, %v5792
  %v5804 = vadd.f32 %v5782, %v5793
  %v5805 = vadd.f32 %v5783, %v5794
  %v5806 = vadd.f32 %v5784, %v5795
  %v5807 = vadd.f32 %v5785, %v5796
  %v5808 = vadd.f32 %v5786, %v5797
  %v5809 = vadd.f32 %v5787, %v5798
  %v5810 = vadd.f32 %v5788, %v5799
  %v5811 = vadd.f32 %v5789, %v5800
  %v5812 = vadd.f32 %v5790, %v5801
  %v5813 = vsel %vm88, %v5802, 0.0
  %5814 = vadd.xlane.f32.xlu0 %v5813
  %v5815 = vpop.xlane.xlu0 %5814
  %v5816 = vsel %vm88, %v5803, 0.0
  %5817 = vadd.xlane.f32.xlu0 %v5816
  %v5818 = vpop.xlane.xlu0 %5817
  %v5819 = vsel %vm88, %v5804, 0.0
  %5820 = vadd.xlane.f32.xlu0 %v5819
  %v5821 = vpop.xlane.xlu0 %5820
  %v5822 = vsel %vm88, %v5805, 0.0
  %5823 = vadd.xlane.f32.xlu0 %v5822
  %v5824 = vpop.xlane.xlu0 %5823
  %v5825 = vsel %vm88, %v5806, 0.0
  %5826 = vadd.xlane.f32.xlu0 %v5825
  %v5827 = vpop.xlane.xlu0 %5826
  %v5828 = vsel %vm88, %v5807, 0.0
  %5829 = vadd.xlane.f32.xlu0 %v5828
  %v5830 = vpop.xlane.xlu0 %5829
  %v5831 = vsel %vm88, %v5808, 0.0
  %5832 = vadd.xlane.f32.xlu0 %v5831
  %v5833 = vpop.xlane.xlu0 %5832
  %v5834 = vsel %vm88, %v5809, 0.0
  %5835 = vadd.xlane.f32.xlu0 %v5834
  %v5836 = vpop.xlane.xlu0 %5835
  %v5837 = vsel %vm88, %v5810, 0.0
  %5838 = vadd.xlane.f32.xlu0 %v5837
  %v5839 = vpop.xlane.xlu0 %5838
  %v5840 = vsel %vm88, %v5811, 0.0
  %5841 = vadd.xlane.f32.xlu0 %v5840
  %v5842 = vpop.xlane.xlu0 %5841
  %v5843 = vsel %vm119, %v5812, 0.0
  %5844 = vadd.xlane.f32.xlu0 %v5843
  %v5845 = vpop.xlane.xlu0 %5844
  %v5846 = vmul.f32 %v5815, %v129
  %v5847 = vmul.f32 %v5818, %v129
  %v5848 = vmul.f32 %v5821, %v129
  %v5849 = vmul.f32 %v5824, %v129
  %v5850 = vmul.f32 %v5827, %v129
  %v5851 = vmul.f32 %v5830, %v129
  %v5852 = vmul.f32 %v5833, %v129
  %v5853 = vmul.f32 %v5836, %v129
  %v5854 = vmul.f32 %v5839, %v129
  %v5855 = vmul.f32 %v5842, %v129
  %v5856 = vmul.f32 %v5845, %v129
  %v5857 = vsub.f32 %v5802, %v5846
  %v5858 = vsub.f32 %v5803, %v5847
  %v5859 = vsub.f32 %v5804, %v5848
  %v5860 = vsub.f32 %v5805, %v5849
  %v5861 = vsub.f32 %v5806, %v5850
  %v5862 = vsub.f32 %v5807, %v5851
  %v5863 = vsub.f32 %v5808, %v5852
  %v5864 = vsub.f32 %v5809, %v5853
  %v5865 = vsub.f32 %v5810, %v5854
  %v5866 = vsub.f32 %v5811, %v5855
  %v5867 = vsub.f32 %v5812, %v5856
  %v5868 = vmul.f32 %v5857, %v5857
  %v5869 = vmul.f32 %v5858, %v5858
  %v5870 = vmul.f32 %v5859, %v5859
  %v5871 = vmul.f32 %v5860, %v5860
  %v5872 = vmul.f32 %v5861, %v5861
  %v5873 = vmul.f32 %v5862, %v5862
  %v5874 = vmul.f32 %v5863, %v5863
  %v5875 = vmul.f32 %v5864, %v5864
  %v5876 = vmul.f32 %v5865, %v5865
  %v5877 = vmul.f32 %v5866, %v5866
  %v5878 = vmul.f32 %v5867, %v5867
  %v5879 = vsel %vm88, %v5868, 0.0
  %5880 = vadd.xlane.f32.xlu0 %v5879
  %v5881 = vpop.xlane.xlu0 %5880
  %v5882 = vsel %vm88, %v5869, 0.0
  %5883 = vadd.xlane.f32.xlu0 %v5882
  %v5884 = vpop.xlane.xlu0 %5883
  %v5885 = vsel %vm88, %v5870, 0.0
  %5886 = vadd.xlane.f32.xlu0 %v5885
  %v5887 = vpop.xlane.xlu0 %5886
  %v5888 = vsel %vm88, %v5871, 0.0
  %5889 = vadd.xlane.f32.xlu0 %v5888
  %v5890 = vpop.xlane.xlu0 %5889
  %v5891 = vsel %vm88, %v5872, 0.0
  %5892 = vadd.xlane.f32.xlu0 %v5891
  %v5893 = vpop.xlane.xlu0 %5892
  %v5894 = vsel %vm88, %v5873, 0.0
  %5895 = vadd.xlane.f32.xlu0 %v5894
  %v5896 = vpop.xlane.xlu0 %5895
  %v5897 = vsel %vm88, %v5874, 0.0
  %5898 = vadd.xlane.f32.xlu0 %v5897
  %v5899 = vpop.xlane.xlu0 %5898
  %v5900 = vsel %vm88, %v5875, 0.0
  %5901 = vadd.xlane.f32.xlu0 %v5900
  %v5902 = vpop.xlane.xlu0 %5901
  %v5903 = vsel %vm88, %v5876, 0.0
  %5904 = vadd.xlane.f32.xlu0 %v5903
  %v5905 = vpop.xlane.xlu0 %5904
  %v5906 = vsel %vm88, %v5877, 0.0
  %5907 = vadd.xlane.f32.xlu0 %v5906
  %v5908 = vpop.xlane.xlu0 %5907
  %v5909 = vsel %vm119, %v5878, 0.0
  %5910 = vadd.xlane.f32.xlu0 %v5909
  %v5911 = vpop.xlane.xlu0 %5910
  %v5912 = vmul.f32 %v5881, %v129
  %v5913 = vmul.f32 %v5884, %v129
  %v5914 = vmul.f32 %v5887, %v129
  %v5915 = vmul.f32 %v5890, %v129
  %v5916 = vmul.f32 %v5893, %v129
  %v5917 = vmul.f32 %v5896, %v129
  %v5918 = vmul.f32 %v5899, %v129
  %v5919 = vmul.f32 %v5902, %v129
  %v5920 = vmul.f32 %v5905, %v129
  %v5921 = vmul.f32 %v5908, %v129
  %v5922 = vmul.f32 %v5911, %v129
  %v5923 = vadd.f32 %v5912, 1e-05
  %v5924 = vadd.f32 %v5913, 1e-05
  %v5925 = vadd.f32 %v5914, 1e-05
  %v5926 = vadd.f32 %v5915, 1e-05
  %v5927 = vadd.f32 %v5916, 1e-05
  %v5928 = vadd.f32 %v5917, 1e-05
  %v5929 = vadd.f32 %v5918, 1e-05
  %v5930 = vadd.f32 %v5919, 1e-05
  %v5931 = vadd.f32 %v5920, 1e-05
  %v5932 = vadd.f32 %v5921, 1e-05
  %v5933 = vadd.f32 %v5922, 1e-05
  %v5934 = vrsqrt.pop %v5923
  %v5935 = vmul.f32 %v5934, %v5923
  %v5936 = vmul.f32 %v5935, %v5934
  %v5937 = vmul.f32 0.5, %v5936
  %v5938 = vsub.f32 1.5, %v5937
  %v5939 = vmul.f32 %v5934, %v5938
  %vm5940 = vweird.f32 %v5923
  %vm5941 = vweird.f32 %v5934
  %vm5942 = vmor %vm5940, %vm5941
  %v5943 = vsel %vm5942, %v5934, %v5939
  %v5944 = vrsqrt.pop %v5924
  %v5945 = vmul.f32 %v5944, %v5924
  %v5946 = vmul.f32 %v5945, %v5944
  %v5947 = vmul.f32 0.5, %v5946
  %v5948 = vsub.f32 1.5, %v5947
  %v5949 = vmul.f32 %v5944, %v5948
  %vm5950 = vweird.f32 %v5924
  %vm5951 = vweird.f32 %v5944
  %vm5952 = vmor %vm5950, %vm5951
  %v5953 = vsel %vm5952, %v5944, %v5949
  %v5954 = vrsqrt.pop %v5925
  %v5955 = vmul.f32 %v5954, %v5925
  %v5956 = vmul.f32 %v5955, %v5954
  %v5957 = vmul.f32 0.5, %v5956
  %v5958 = vsub.f32 1.5, %v5957
  %v5959 = vmul.f32 %v5954, %v5958
  %vm5960 = vweird.f32 %v5925
  %vm5961 = vweird.f32 %v5954
  %vm5962 = vmor %vm5960, %vm5961
  %v5963 = vsel %vm5962, %v5954, %v5959
  %v5964 = vrsqrt.pop %v5926
  %v5965 = vmul.f32 %v5964, %v5926
  %v5966 = vmul.f32 %v5965, %v5964
  %v5967 = vmul.f32 0.5, %v5966
  %v5968 = vsub.f32 1.5, %v5967
  %v5969 = vmul.f32 %v5964, %v5968
  %vm5970 = vweird.f32 %v5926
  %vm5971 = vweird.f32 %v5964
  %vm5972 = vmor %vm5970, %vm5971
  %v5973 = vsel %vm5972, %v5964, %v5969
  %v5974 = vrsqrt.pop %v5927
  %v5975 = vmul.f32 %v5974, %v5927
  %v5976 = vmul.f32 %v5975, %v5974
  %v5977 = vmul.f32 0.5, %v5976
  %v5978 = vsub.f32 1.5, %v5977
  %v5979 = vmul.f32 %v5974, %v5978
  %vm5980 = vweird.f32 %v5927
  %vm5981 = vweird.f32 %v5974
  %vm5982 = vmor %vm5980, %vm5981
  %v5983 = vsel %vm5982, %v5974, %v5979
  %v5984 = vrsqrt.pop %v5928
  %v5985 = vmul.f32 %v5984, %v5928
  %v5986 = vmul.f32 %v5985, %v5984
  %v5987 = vmul.f32 0.5, %v5986
  %v5988 = vsub.f32 1.5, %v5987
  %v5989 = vmul.f32 %v5984, %v5988
  %vm5990 = vweird.f32 %v5928
  %vm5991 = vweird.f32 %v5984
  %vm5992 = vmor %vm5990, %vm5991
  %v5993 = vsel %vm5992, %v5984, %v5989
  %v5994 = vrsqrt.pop %v5929
  %v5995 = vmul.f32 %v5994, %v5929
  %v5996 = vmul.f32 %v5995, %v5994
  %v5997 = vmul.f32 0.5, %v5996
  %v5998 = vsub.f32 1.5, %v5997
  %v5999 = vmul.f32 %v5994, %v5998
  %vm6000 = vweird.f32 %v5929
  %vm6001 = vweird.f32 %v5994
  %vm6002 = vmor %vm6000, %vm6001
  %v6003 = vsel %vm6002, %v5994, %v5999
  %v6004 = vrsqrt.pop %v5930
  %v6005 = vmul.f32 %v6004, %v5930
  %v6006 = vmul.f32 %v6005, %v6004
  %v6007 = vmul.f32 0.5, %v6006
  %v6008 = vsub.f32 1.5, %v6007
  %v6009 = vmul.f32 %v6004, %v6008
  %vm6010 = vweird.f32 %v5930
  %vm6011 = vweird.f32 %v6004
  %vm6012 = vmor %vm6010, %vm6011
  %v6013 = vsel %vm6012, %v6004, %v6009
  %v6014 = vrsqrt.pop %v5931
  %v6015 = vmul.f32 %v6014, %v5931
  %v6016 = vmul.f32 %v6015, %v6014
  %v6017 = vmul.f32 0.5, %v6016
  %v6018 = vsub.f32 1.5, %v6017
  %v6019 = vmul.f32 %v6014, %v6018
  %vm6020 = vweird.f32 %v5931
  %vm6021 = vweird.f32 %v6014
  %vm6022 = vmor %vm6020, %vm6021
  %v6023 = vsel %vm6022, %v6014, %v6019
  %v6024 = vrsqrt.pop %v5932
  %v6025 = vmul.f32 %v6024, %v5932
  %v6026 = vmul.f32 %v6025, %v6024
  %v6027 = vmul.f32 0.5, %v6026
  %v6028 = vsub.f32 1.5, %v6027
  %v6029 = vmul.f32 %v6024, %v6028
  %vm6030 = vweird.f32 %v5932
  %vm6031 = vweird.f32 %v6024
  %vm6032 = vmor %vm6030, %vm6031
  %v6033 = vsel %vm6032, %v6024, %v6029
  %v6034 = vrsqrt.pop %v5933
  %v6035 = vmul.f32 %v6034, %v5933
  %v6036 = vmul.f32 %v6035, %v6034
  %v6037 = vmul.f32 0.5, %v6036
  %v6038 = vsub.f32 1.5, %v6037
  %v6039 = vmul.f32 %v6034, %v6038
  %vm6040 = vweird.f32 %v5933
  %vm6041 = vweird.f32 %v6034
  %vm6042 = vmor %vm6040, %vm6041
  %v6043 = vsel %vm6042, %v6034, %v6039
  %v6044 = vmul.f32 %v5857, %v5943
  %v6045 = vmul.f32 %v5858, %v5953
  %v6046 = vmul.f32 %v5859, %v5963
  %v6047 = vmul.f32 %v5860, %v5973
  %v6048 = vmul.f32 %v5861, %v5983
  %v6049 = vmul.f32 %v5862, %v5993
  %v6050 = vmul.f32 %v5863, %v6003
  %v6051 = vmul.f32 %v5864, %v6013
  %v6052 = vmul.f32 %v5865, %v6023
  %v6053 = vmul.f32 %v5866, %v6033
  %v6054 = vmul.f32 %v5867, %v6043
  %v6055 = vmul.f32 %v6044, %v339
  %v6056 = vmul.f32 %v6045, %v339
  %v6057 = vmul.f32 %v6046, %v339
  %v6058 = vmul.f32 %v6047, %v339
  %v6059 = vmul.f32 %v6048, %v339
  %v6060 = vmul.f32 %v6049, %v339
  %v6061 = vmul.f32 %v6050, %v339
  %v6062 = vmul.f32 %v6051, %v339
  %v6063 = vmul.f32 %v6052, %v339
  %v6064 = vmul.f32 %v6053, %v339
  %v6065 = vmul.f32 %v6054, %v339
  %v6066 = vadd.f32 %v6055, %v351
  %v6067 = vadd.f32 %v6056, %v351
  %v6068 = vadd.f32 %v6057, %v351
  %v6069 = vadd.f32 %v6058, %v351
  %v6070 = vadd.f32 %v6059, %v351
  %v6071 = vadd.f32 %v6060, %v351
  %v6072 = vadd.f32 %v6061, %v351
  %v6073 = vadd.f32 %v6062, %v351
  %v6074 = vadd.f32 %v6063, %v351
  %v6075 = vadd.f32 %v6064, %v351
  %v6076 = vadd.f32 %v6065, %v351
  %v6077 = vpack.c.bf16 %v6067, %v6066
  %v6078 = vpack.c.bf16 %v6069, %v6068
  %v6079 = vpack.c.bf16 %v6071, %v6070
  %v6080 = vpack.c.bf16 %v6073, %v6072
  %v6081 = vpack.c.bf16 %v6075, %v6074
  %v6082 = vpack.c.bf16 %v6076, %v6076
  %v6083 = vld [vmem:[%s3] sm:$0xff]
  %v6084 = vld [vmem:[%s3 + $0x8] sm:$0xff]
  %v6085 = vld [vmem:[%s3 + $0x10] sm:$0xff]
  %v6086 = vld [vmem:[%s3 + $0x18] sm:$0xff]
  %v6091 = vunpack.c.l.b16 %v6083
  %v6092 = vunpack.c.h.b16 %v6083
  %v6093 = vunpack.c.l.b16 %v6084
  %v6094 = vunpack.c.h.b16 %v6084
  %v6095 = vunpack.c.l.b16 %v6085
  %v6096 = vunpack.c.h.b16 %v6085
  %v6097 = vunpack.c.l.b16 %v6086
  %v6098 = vunpack.c.h.b16 %v6086
  %v6099 = vpack.c.b16 %v6093, %v6091
  %v6100 = vpack.c.b16 %v6094, %v6092
  %v6101 = vpack.c.b16 %v6097, %v6095
  %v6102 = vpack.c.b16 %v6098, %v6096
  %v6108 = vsel %vm88, %v6077, 0
  %v6111 = vsel %vm88, %v6078, 0
  %v6114 = vsel %vm88, %v6079, 0
  %v6117 = vsel %vm88, %v6080, 0
  %v6120 = vsel %vm88, %v6081, 0
  %v6123 = vsel %vm88, %v6082, 0
  %6125 = vmatpush.bf16.msra.mxu0 0
  %6126 = vmatpush.bf16.msra.mxu0 0
  %6127 = vmatpush.bf16.msra.mxu0 0
  %6128 = vmatpush.bf16.msra.mxu0 0
  %6129 = vmatpush.bf16.msra.mxu0 0
  %6130 = vmatpush.bf16.msra.mxu0 0
  %6131 = vmatpush.bf16.msra.mxu0 %v6101
  %6132 = vmatpush.bf16.msra.mxu0 %v6099
  %6133 = vmatmul.bf16.gmra.mxu0 %v6108
  %v6134 = vpop.f32.mrf.mxu0
  %v6135 = vadd.f32 %v373, %v6134
  %v6136 = vpop.f32.mrf.mxu0
  %v6137 = vadd.f32 %v373, %v6136
  %6138 = vmatmul.bf16.gmra.mxu0 %v6111
  %v6139 = vpop.f32.mrf.mxu0
  %v6140 = vadd.f32 %v373, %v6139
  %v6141 = vpop.f32.mrf.mxu0
  %v6142 = vadd.f32 %v373, %v6141
  %6143 = vmatmul.bf16.gmra.mxu0 %v6114
  %v6144 = vpop.f32.mrf.mxu0
  %v6145 = vadd.f32 %v373, %v6144
  %v6146 = vpop.f32.mrf.mxu0
  %v6147 = vadd.f32 %v373, %v6146
  %6148 = vmatmul.bf16.gmra.mxu0 %v6117
  %v6149 = vpop.f32.mrf.mxu0
  %v6150 = vadd.f32 %v373, %v6149
  %v6151 = vpop.f32.mrf.mxu0
  %v6152 = vadd.f32 %v373, %v6151
  %6153 = vmatmul.bf16.gmra.mxu0 %v6120
  %v6154 = vpop.f32.mrf.mxu0
  %v6155 = vadd.f32 %v373, %v6154
  %v6156 = vpop.f32.mrf.mxu0
  %v6157 = vadd.f32 %v373, %v6156
  %6158 = vmatmul.bf16.gmra.mxu0 %v6123
  %v6159 = vpop.f32.mrf.mxu0
  %v6160 = vadd.f32 %v373, %v6159
  %v6161 = vpop.f32.mrf.mxu0
  %6162 = vdwg.mxu0
  %6163 = vmatpush.bf16.msra.mxu0 0
  %6164 = vmatpush.bf16.msra.mxu0 0
  %6165 = vmatpush.bf16.msra.mxu0 0
  %6166 = vmatpush.bf16.msra.mxu0 0
  %6167 = vmatpush.bf16.msra.mxu0 0
  %6168 = vmatpush.bf16.msra.mxu0 0
  %6169 = vmatpush.bf16.msra.mxu0 %v6102
  %6170 = vmatpush.bf16.msra.mxu0 %v6100
  %6171 = vmatmul.bf16.gmra.mxu0 %v6108
  %v6172 = vpop.f32.mrf.mxu0
  %v6173 = vadd.f32 %v374, %v6172
  %v6174 = vpop.f32.mrf.mxu0
  %v6175 = vadd.f32 %v374, %v6174
  %6176 = vmatmul.bf16.gmra.mxu0 %v6111
  %v6177 = vpop.f32.mrf.mxu0
  %v6178 = vadd.f32 %v374, %v6177
  %v6179 = vpop.f32.mrf.mxu0
  %v6180 = vadd.f32 %v374, %v6179
  %6181 = vmatmul.bf16.gmra.mxu0 %v6114
  %v6182 = vpop.f32.mrf.mxu0
  %v6183 = vadd.f32 %v374, %v6182
  %v6184 = vpop.f32.mrf.mxu0
  %v6185 = vadd.f32 %v374, %v6184
  %6186 = vmatmul.bf16.gmra.mxu0 %v6117
  %v6187 = vpop.f32.mrf.mxu0
  %v6188 = vadd.f32 %v374, %v6187
  %v6189 = vpop.f32.mrf.mxu0
  %v6190 = vadd.f32 %v374, %v6189
  %6191 = vmatmul.bf16.gmra.mxu0 %v6120
  %v6192 = vpop.f32.mrf.mxu0
  %v6193 = vadd.f32 %v374, %v6192
  %v6194 = vpop.f32.mrf.mxu0
  %v6195 = vadd.f32 %v374, %v6194
  %6196 = vmatmul.bf16.gmra.mxu0 %v6123
  %v6197 = vpop.f32.mrf.mxu0
  %v6198 = vadd.f32 %v374, %v6197
  %v6199 = vpop.f32.mrf.mxu0
  %6200 = vdwg.mxu0
  %v6201 = vpack.c.bf16 %v6173, %v6135
  %v6202 = vpack.c.bf16 %v6175, %v6137
  %v6203 = vpack.c.bf16 %v6178, %v6140
  %v6204 = vpack.c.bf16 %v6180, %v6142
  %v6205 = vpack.c.bf16 %v6183, %v6145
  %v6206 = vpack.c.bf16 %v6185, %v6147
  %v6207 = vpack.c.bf16 %v6188, %v6150
  %v6208 = vpack.c.bf16 %v6190, %v6152
  %v6209 = vpack.c.bf16 %v6193, %v6155
  %v6210 = vpack.c.bf16 %v6195, %v6157
  %v6211 = vpack.c.bf16 %v6198, %v6160
  %6223 = vrot.lane.b32.xlu0 %v6135, 96
  %v6224 = vpop.permute.xlu0 %6223
  %6225 = vrot.lane.b32.xlu0 %v6137, 96
  %v6226 = vpop.permute.xlu0 %6225
  %6227 = vrot.lane.b32.xlu0 %v6140, 96
  %v6228 = vpop.permute.xlu0 %6227
  %6229 = vrot.lane.b32.xlu0 %v6142, 96
  %v6230 = vpop.permute.xlu0 %6229
  %6231 = vrot.lane.b32.xlu0 %v6145, 96
  %v6232 = vpop.permute.xlu0 %6231
  %6233 = vrot.lane.b32.xlu0 %v6147, 96
  %v6234 = vpop.permute.xlu0 %6233
  %6235 = vrot.lane.b32.xlu0 %v6150, 96
  %v6236 = vpop.permute.xlu0 %6235
  %6237 = vrot.lane.b32.xlu0 %v6152, 96
  %v6238 = vpop.permute.xlu0 %6237
  %6239 = vrot.lane.b32.xlu0 %v6155, 96
  %v6240 = vpop.permute.xlu0 %6239
  %6241 = vrot.lane.b32.xlu0 %v6157, 96
  %v6242 = vpop.permute.xlu0 %6241
  %6243 = vrot.lane.b32.xlu0 %v6160, 96
  %v6244 = vpop.permute.xlu0 %6243
  %v6245 = vsel %vm533, %v6135, 0
  %v6247 = vsel %vm533, %v6137, 0
  %v6249 = vsel %vm533, %v6140, 0
  %v6251 = vsel %vm533, %v6142, 0
  %v6253 = vsel %vm533, %v6145, 0
  %v6255 = vsel %vm533, %v6147, 0
  %v6257 = vsel %vm533, %v6150, 0
  %v6259 = vsel %vm533, %v6152, 0
  %v6261 = vsel %vm533, %v6155, 0
  %v6263 = vsel %vm533, %v6157, 0
  %v6265 = vsel %vm533, %v6160, 0
  %v6267 = vsel %vm533, %v6224, 0
  %v6269 = vsel %vm533, %v6226, 0
  %v6271 = vsel %vm533, %v6228, 0
  %v6273 = vsel %vm533, %v6230, 0
  %v6275 = vsel %vm533, %v6232, 0
  %v6277 = vsel %vm533, %v6234, 0
  %v6279 = vsel %vm533, %v6236, 0
  %v6281 = vsel %vm533, %v6238, 0
  %v6283 = vsel %vm533, %v6240, 0
  %v6285 = vsel %vm533, %v6242, 0
  %v6287 = vsel %vm533, %v6244, 0
  %6289 = vmatpush.xpose.msra.mxu0 0.0
  %6290 = vmatpush.xpose.msra.mxu0 0.0
  %6291 = vmatpush.xpose.msra.mxu0 0.0
  %6292 = vmatpush.xpose.msra.mxu0 0.0
  %6293 = vmatpush.xpose.msra.mxu0 0.0
  %6294 = vmatpush.xpose.msra.mxu0 %v6287
  %6295 = vmatpush.xpose.msra.mxu0 %v6285
  %6296 = vmatpush.xpose.msra.mxu0 %v6283
  %6297 = vmatpush.xpose.msra.mxu0 %v6281
  %6298 = vmatpush.xpose.msra.mxu0 %v6279
  %6299 = vmatpush.xpose.msra.mxu0 %v6277
  %6300 = vmatpush.xpose.msra.mxu0 %v6275
  %6301 = vmatpush.xpose.msra.mxu0 %v6273
  %6302 = vmatpush.xpose.msra.mxu0 %v6271
  %6303 = vmatpush.xpose.msra.mxu0 %v6269
  %6304 = vmatpush.xpose.msra.mxu0 %v6267
  %6305 = vmatmul.f32.gmra.mxu0 %v6245
  %v6306 = vpop.f32.mrf.mxu0
  %v6307 = vadd.f32 0.0, %v6306
  %6308 = vmatmul.f32.gmra.mxu0 %v6247
  %v6309 = vpop.f32.mrf.mxu0
  %v6310 = vadd.f32 0.0, %v6309
  %6311 = vmatmul.f32.gmra.mxu0 %v6249
  %v6312 = vpop.f32.mrf.mxu0
  %v6313 = vadd.f32 0.0, %v6312
  %6314 = vmatmul.f32.gmra.mxu0 %v6251
  %v6315 = vpop.f32.mrf.mxu0
  %v6316 = vadd.f32 0.0, %v6315
  %6317 = vmatmul.f32.gmra.mxu0 %v6253
  %v6318 = vpop.f32.mrf.mxu0
  %v6319 = vadd.f32 0.0, %v6318
  %6320 = vmatmul.f32.gmra.mxu0 %v6255
  %v6321 = vpop.f32.mrf.mxu0
  %v6322 = vadd.f32 0.0, %v6321
  %6323 = vmatmul.f32.gmra.mxu0 %v6257
  %v6324 = vpop.f32.mrf.mxu0
  %v6325 = vadd.f32 0.0, %v6324
  %6326 = vmatmul.f32.gmra.mxu0 %v6259
  %v6327 = vpop.f32.mrf.mxu0
  %v6328 = vadd.f32 0.0, %v6327
  %6329 = vmatmul.f32.gmra.mxu0 %v6261
  %v6330 = vpop.f32.mrf.mxu0
  %v6331 = vadd.f32 0.0, %v6330
  %6332 = vmatmul.f32.gmra.mxu0 %v6263
  %v6333 = vpop.f32.mrf.mxu0
  %v6334 = vadd.f32 0.0, %v6333
  %6335 = vmatmul.f32.gmra.mxu0 %v6265
  %v6336 = vpop.f32.mrf.mxu0
  %v6337 = vadd.f32 0.0, %v6336
  %6338 = vdwg.mxu0
  %v6339 = vsel %vm39, %v6307, -1e+30
  %v6340 = vsel %vm40, %v6310, -1e+30
  %v6341 = vsel %vm41, %v6313, -1e+30
  %v6342 = vsel %vm42, %v6316, -1e+30
  %v6343 = vsel %vm43, %v6319, -1e+30
  %v6344 = vsel %vm44, %v6322, -1e+30
  %v6345 = vsel %vm45, %v6325, -1e+30
  %v6346 = vsel %vm46, %v6328, -1e+30
  %v6347 = vsel %vm47, %v6331, -1e+30
  %v6348 = vsel %vm48, %v6334, -1e+30
  %v6349 = vsel %vm49, %v6337, -1e+30
  %v6350 = vsel %vm639, %v6339, -inf
  %6351 = vmax.xlane.f32.xlu0 %v6350
  %v6352 = vpop.xlane.xlu0 %6351
  %v6353 = vsel %vm639, %v6340, -inf
  %6354 = vmax.xlane.f32.xlu0 %v6353
  %v6355 = vpop.xlane.xlu0 %6354
  %v6356 = vsel %vm639, %v6341, -inf
  %6357 = vmax.xlane.f32.xlu0 %v6356
  %v6358 = vpop.xlane.xlu0 %6357
  %v6359 = vsel %vm639, %v6342, -inf
  %6360 = vmax.xlane.f32.xlu0 %v6359
  %v6361 = vpop.xlane.xlu0 %6360
  %v6362 = vsel %vm639, %v6343, -inf
  %6363 = vmax.xlane.f32.xlu0 %v6362
  %v6364 = vpop.xlane.xlu0 %6363
  %v6365 = vsel %vm639, %v6344, -inf
  %6366 = vmax.xlane.f32.xlu0 %v6365
  %v6367 = vpop.xlane.xlu0 %6366
  %v6368 = vsel %vm639, %v6345, -inf
  %6369 = vmax.xlane.f32.xlu0 %v6368
  %v6370 = vpop.xlane.xlu0 %6369
  %v6371 = vsel %vm639, %v6346, -inf
  %6372 = vmax.xlane.f32.xlu0 %v6371
  %v6373 = vpop.xlane.xlu0 %6372
  %v6374 = vsel %vm639, %v6347, -inf
  %6375 = vmax.xlane.f32.xlu0 %v6374
  %v6376 = vpop.xlane.xlu0 %6375
  %v6377 = vsel %vm639, %v6348, -inf
  %6378 = vmax.xlane.f32.xlu0 %v6377
  %v6379 = vpop.xlane.xlu0 %6378
  %v6380 = vsel %vm670, %v6349, -inf
  %6381 = vmax.xlane.f32.xlu0 %v6380
  %v6382 = vpop.xlane.xlu0 %6381
  %v6383 = vsub.f32 %v6339, %v6352
  %v6384 = vsub.f32 %v6340, %v6355
  %v6385 = vsub.f32 %v6341, %v6358
  %v6386 = vsub.f32 %v6342, %v6361
  %v6387 = vsub.f32 %v6343, %v6364
  %v6388 = vsub.f32 %v6344, %v6367
  %v6389 = vsub.f32 %v6345, %v6370
  %v6390 = vsub.f32 %v6346, %v6373
  %v6391 = vsub.f32 %v6347, %v6376
  %v6392 = vsub.f32 %v6348, %v6379
  %v6393 = vsub.f32 %v6349, %v6382
  %v6394 = vpack.c.bf16 %v6384, %v6383
  %v6395 = vpack.c.bf16 %v6386, %v6385
  %v6396 = vpack.c.bf16 %v6388, %v6387
  %v6397 = vpack.c.bf16 %v6390, %v6389
  %v6398 = vpack.c.bf16 %v6392, %v6391
  %v6399 = vpack.c.bf16 %v6393, %v6393
  %v6400 = vunpack.c.l.bf16 %v6394
  %v6401 = vunpack.c.h.bf16 %v6394
  %v6402 = vunpack.c.l.bf16 %v6395
  %v6403 = vunpack.c.h.bf16 %v6395
  %v6404 = vunpack.c.l.bf16 %v6396
  %v6405 = vunpack.c.h.bf16 %v6396
  %v6406 = vunpack.c.l.bf16 %v6397
  %v6407 = vunpack.c.h.bf16 %v6397
  %v6408 = vunpack.c.l.bf16 %v6398
  %v6409 = vunpack.c.h.bf16 %v6398
  %v6410 = vunpack.c.l.bf16 %v6399
  %v6411 = vmul.f32 %v6400, 1.442695
  %v6412 = vpow.pop %v6411
  %v6413 = vmul.f32 %v6401, 1.442695
  %v6414 = vpow.pop %v6413
  %v6415 = vmul.f32 %v6402, 1.442695
  %v6416 = vpow.pop %v6415
  %v6417 = vmul.f32 %v6403, 1.442695
  %v6418 = vpow.pop %v6417
  %v6419 = vmul.f32 %v6404, 1.442695
  %v6420 = vpow.pop %v6419
  %v6421 = vmul.f32 %v6405, 1.442695
  %v6422 = vpow.pop %v6421
  %v6423 = vmul.f32 %v6406, 1.442695
  %v6424 = vpow.pop %v6423
  %v6425 = vmul.f32 %v6407, 1.442695
  %v6426 = vpow.pop %v6425
  %v6427 = vmul.f32 %v6408, 1.442695
  %v6428 = vpow.pop %v6427
  %v6429 = vmul.f32 %v6409, 1.442695
  %v6430 = vpow.pop %v6429
  %v6431 = vmul.f32 %v6410, 1.442695
  %v6432 = vpow.pop %v6431
  %v6433 = vpack.c.bf16 %v6414, %v6412
  %v6434 = vpack.c.bf16 %v6418, %v6416
  %v6435 = vpack.c.bf16 %v6422, %v6420
  %v6436 = vpack.c.bf16 %v6426, %v6424
  %v6437 = vpack.c.bf16 %v6430, %v6428
  %v6438 = vpack.c.bf16 %v6432, %v6432
  %v6439 = vunpack.c.l.bf16 %v6433
  %v6440 = vunpack.c.h.bf16 %v6433
  %v6441 = vunpack.c.l.bf16 %v6434
  %v6442 = vunpack.c.h.bf16 %v6434
  %v6443 = vunpack.c.l.bf16 %v6435
  %v6444 = vunpack.c.h.bf16 %v6435
  %v6445 = vunpack.c.l.bf16 %v6436
  %v6446 = vunpack.c.h.bf16 %v6436
  %v6447 = vunpack.c.l.bf16 %v6437
  %v6448 = vunpack.c.h.bf16 %v6437
  %v6449 = vunpack.c.l.bf16 %v6438
  %v6450 = vsel %vm639, %v6439, 0.0
  %6451 = vadd.xlane.f32.xlu0 %v6450
  %v6452 = vpop.xlane.xlu0 %6451
  %v6453 = vsel %vm639, %v6440, 0.0
  %6454 = vadd.xlane.f32.xlu0 %v6453
  %v6455 = vpop.xlane.xlu0 %6454
  %v6456 = vsel %vm639, %v6441, 0.0
  %6457 = vadd.xlane.f32.xlu0 %v6456
  %v6458 = vpop.xlane.xlu0 %6457
  %v6459 = vsel %vm639, %v6442, 0.0
  %6460 = vadd.xlane.f32.xlu0 %v6459
  %v6461 = vpop.xlane.xlu0 %6460
  %v6462 = vsel %vm639, %v6443, 0.0
  %6463 = vadd.xlane.f32.xlu0 %v6462
  %v6464 = vpop.xlane.xlu0 %6463
  %v6465 = vsel %vm639, %v6444, 0.0
  %6466 = vadd.xlane.f32.xlu0 %v6465
  %v6467 = vpop.xlane.xlu0 %6466
  %v6468 = vsel %vm639, %v6445, 0.0
  %6469 = vadd.xlane.f32.xlu0 %v6468
  %v6470 = vpop.xlane.xlu0 %6469
  %v6471 = vsel %vm639, %v6446, 0.0
  %6472 = vadd.xlane.f32.xlu0 %v6471
  %v6473 = vpop.xlane.xlu0 %6472
  %v6474 = vsel %vm639, %v6447, 0.0
  %6475 = vadd.xlane.f32.xlu0 %v6474
  %v6476 = vpop.xlane.xlu0 %6475
  %v6477 = vsel %vm639, %v6448, 0.0
  %6478 = vadd.xlane.f32.xlu0 %v6477
  %v6479 = vpop.xlane.xlu0 %6478
  %v6480 = vsel %vm670, %v6449, 0.0
  %6481 = vadd.xlane.f32.xlu0 %v6480
  %v6482 = vpop.xlane.xlu0 %6481
  %v6483 = vrcp.pop %v6452
  %v6484 = vrcp.pop %v6455
  %v6485 = vrcp.pop %v6458
  %v6486 = vrcp.pop %v6461
  %v6487 = vrcp.pop %v6464
  %v6488 = vrcp.pop %v6467
  %v6489 = vrcp.pop %v6470
  %v6490 = vrcp.pop %v6473
  %v6491 = vrcp.pop %v6476
  %v6492 = vrcp.pop %v6479
  %v6493 = vrcp.pop %v6482
  %v6505 = vunpack.c.l.b16 %v6201
  %v6506 = vunpack.c.l.b16 %v6202
  %v6507 = vunpack.c.l.b16 %v6203
  %v6508 = vunpack.c.l.b16 %v6204
  %v6509 = vunpack.c.l.b16 %v6205
  %v6510 = vunpack.c.l.b16 %v6206
  %v6511 = vunpack.c.l.b16 %v6207
  %v6512 = vunpack.c.l.b16 %v6208
  %v6513 = vunpack.c.l.b16 %v6209
  %v6514 = vunpack.c.l.b16 %v6210
  %v6515 = vunpack.c.l.b16 %v6211
  %v6516 = vpack.c.b16 %v6506, %v6505
  %v6517 = vpack.c.b16 %v6508, %v6507
  %v6518 = vpack.c.b16 %v6510, %v6509
  %v6519 = vpack.c.b16 %v6512, %v6511
  %v6520 = vpack.c.b16 %v6514, %v6513
  %v6521 = vpack.c.b16 %v6515, %v6515
  %6522 = vrot.lane.b32.xlu0 %v6516, 64
  %v6523 = vpop.permute.xlu0 %6522
  %6524 = vrot.lane.b32.xlu0 %v6517, 64
  %v6525 = vpop.permute.xlu0 %6524
  %6526 = vrot.lane.b32.xlu0 %v6518, 64
  %v6527 = vpop.permute.xlu0 %6526
  %6528 = vrot.lane.b32.xlu0 %v6519, 64
  %v6529 = vpop.permute.xlu0 %6528
  %6530 = vrot.lane.b32.xlu0 %v6520, 64
  %v6531 = vpop.permute.xlu0 %6530
  %6532 = vrot.lane.b32.xlu0 %v6521, 64
  %v6533 = vpop.permute.xlu0 %6532
  %v6540 = vsel %vm639, %v6433, 0
  %v6543 = vsel %vm639, %v6434, 0
  %v6546 = vsel %vm639, %v6435, 0
  %v6549 = vsel %vm639, %v6436, 0
  %v6552 = vsel %vm639, %v6437, 0
  %v6555 = vsel %vm639, %v6438, 0
  %v6558 = vand.u32 %v6533, %v850
  %6560 = vmatpush.bf16.msra.mxu0 0
  %6561 = vmatpush.bf16.msra.mxu0 0
  %6562 = vmatpush.bf16.msra.mxu0 %v6558
  %6563 = vmatpush.bf16.msra.mxu0 %v6531
  %6564 = vmatpush.bf16.msra.mxu0 %v6529
  %6565 = vmatpush.bf16.msra.mxu0 %v6527
  %6566 = vmatpush.bf16.msra.mxu0 %v6525
  %6567 = vmatpush.bf16.msra.mxu0 %v6523
  %6568 = vmatmul.bf16.gmra.mxu0 %v6540
  %v6569 = vpop.f32.mrf.mxu0
  %v6570 = vadd.f32 0.0, %v6569
  %v6571 = vpop.f32.mrf.mxu0
  %v6572 = vadd.f32 0.0, %v6571
  %6573 = vmatmul.bf16.gmra.mxu0 %v6543
  %v6574 = vpop.f32.mrf.mxu0
  %v6575 = vadd.f32 0.0, %v6574
  %v6576 = vpop.f32.mrf.mxu0
  %v6577 = vadd.f32 0.0, %v6576
  %6578 = vmatmul.bf16.gmra.mxu0 %v6546
  %v6579 = vpop.f32.mrf.mxu0
  %v6580 = vadd.f32 0.0, %v6579
  %v6581 = vpop.f32.mrf.mxu0
  %v6582 = vadd.f32 0.0, %v6581
  %6583 = vmatmul.bf16.gmra.mxu0 %v6549
  %v6584 = vpop.f32.mrf.mxu0
  %v6585 = vadd.f32 0.0, %v6584
  %v6586 = vpop.f32.mrf.mxu0
  %v6587 = vadd.f32 0.0, %v6586
  %6588 = vmatmul.bf16.gmra.mxu0 %v6552
  %v6589 = vpop.f32.mrf.mxu0
  %v6590 = vadd.f32 0.0, %v6589
  %v6591 = vpop.f32.mrf.mxu0
  %v6592 = vadd.f32 0.0, %v6591
  %6593 = vmatmul.bf16.gmra.mxu0 %v6555
  %v6594 = vpop.f32.mrf.mxu0
  %v6595 = vadd.f32 0.0, %v6594
  %v6596 = vpop.f32.mrf.mxu0
  %6597 = vdwg.mxu0
  %v6598 = vmul.f32 %v6570, %v6483
  %v6599 = vmul.f32 %v6572, %v6484
  %v6600 = vmul.f32 %v6575, %v6485
  %v6601 = vmul.f32 %v6577, %v6486
  %v6602 = vmul.f32 %v6580, %v6487
  %v6603 = vmul.f32 %v6582, %v6488
  %v6604 = vmul.f32 %v6585, %v6489
  %v6605 = vmul.f32 %v6587, %v6490
  %v6606 = vmul.f32 %v6590, %v6491
  %v6607 = vmul.f32 %v6592, %v6492
  %v6608 = vmul.f32 %v6595, %v6493
  %6609 = vrot.lane.b32.xlu0 %v6135, 120
  %v6610 = vpop.permute.xlu0 %6609
  %6611 = vrot.lane.b32.xlu0 %v6137, 120
  %v6612 = vpop.permute.xlu0 %6611
  %6613 = vrot.lane.b32.xlu0 %v6140, 120
  %v6614 = vpop.permute.xlu0 %6613
  %6615 = vrot.lane.b32.xlu0 %v6142, 120
  %v6616 = vpop.permute.xlu0 %6615
  %6617 = vrot.lane.b32.xlu0 %v6145, 120
  %v6618 = vpop.permute.xlu0 %6617
  %6619 = vrot.lane.b32.xlu0 %v6147, 120
  %v6620 = vpop.permute.xlu0 %6619
  %6621 = vrot.lane.b32.xlu0 %v6150, 120
  %v6622 = vpop.permute.xlu0 %6621
  %6623 = vrot.lane.b32.xlu0 %v6152, 120
  %v6624 = vpop.permute.xlu0 %6623
  %6625 = vrot.lane.b32.xlu0 %v6155, 120
  %v6626 = vpop.permute.xlu0 %6625
  %6627 = vrot.lane.b32.xlu0 %v6157, 120
  %v6628 = vpop.permute.xlu0 %6627
  %6629 = vrot.lane.b32.xlu0 %v6160, 120
  %v6630 = vpop.permute.xlu0 %6629
  %6631 = vrot.lane.b32.xlu0 %v6135, 88
  %v6632 = vpop.permute.xlu0 %6631
  %6633 = vrot.lane.b32.xlu0 %v6137, 88
  %v6634 = vpop.permute.xlu0 %6633
  %6635 = vrot.lane.b32.xlu0 %v6140, 88
  %v6636 = vpop.permute.xlu0 %6635
  %6637 = vrot.lane.b32.xlu0 %v6142, 88
  %v6638 = vpop.permute.xlu0 %6637
  %6639 = vrot.lane.b32.xlu0 %v6145, 88
  %v6640 = vpop.permute.xlu0 %6639
  %6641 = vrot.lane.b32.xlu0 %v6147, 88
  %v6642 = vpop.permute.xlu0 %6641
  %6643 = vrot.lane.b32.xlu0 %v6150, 88
  %v6644 = vpop.permute.xlu0 %6643
  %6645 = vrot.lane.b32.xlu0 %v6152, 88
  %v6646 = vpop.permute.xlu0 %6645
  %6647 = vrot.lane.b32.xlu0 %v6155, 88
  %v6648 = vpop.permute.xlu0 %6647
  %6649 = vrot.lane.b32.xlu0 %v6157, 88
  %v6650 = vpop.permute.xlu0 %6649
  %6651 = vrot.lane.b32.xlu0 %v6160, 88
  %v6652 = vpop.permute.xlu0 %6651
  %v6653 = vsel %vm533, %v6610, 0
  %v6655 = vsel %vm533, %v6612, 0
  %v6657 = vsel %vm533, %v6614, 0
  %v6659 = vsel %vm533, %v6616, 0
  %v6661 = vsel %vm533, %v6618, 0
  %v6663 = vsel %vm533, %v6620, 0
  %v6665 = vsel %vm533, %v6622, 0
  %v6667 = vsel %vm533, %v6624, 0
  %v6669 = vsel %vm533, %v6626, 0
  %v6671 = vsel %vm533, %v6628, 0
  %v6673 = vsel %vm533, %v6630, 0
  %v6675 = vsel %vm533, %v6632, 0
  %v6677 = vsel %vm533, %v6634, 0
  %v6679 = vsel %vm533, %v6636, 0
  %v6681 = vsel %vm533, %v6638, 0
  %v6683 = vsel %vm533, %v6640, 0
  %v6685 = vsel %vm533, %v6642, 0
  %v6687 = vsel %vm533, %v6644, 0
  %v6689 = vsel %vm533, %v6646, 0
  %v6691 = vsel %vm533, %v6648, 0
  %v6693 = vsel %vm533, %v6650, 0
  %v6695 = vsel %vm533, %v6652, 0
  %6697 = vmatpush.xpose.msra.mxu0 0.0
  %6698 = vmatpush.xpose.msra.mxu0 0.0
  %6699 = vmatpush.xpose.msra.mxu0 0.0
  %6700 = vmatpush.xpose.msra.mxu0 0.0
  %6701 = vmatpush.xpose.msra.mxu0 0.0
  %6702 = vmatpush.xpose.msra.mxu0 %v6695
  %6703 = vmatpush.xpose.msra.mxu0 %v6693
  %6704 = vmatpush.xpose.msra.mxu0 %v6691
  %6705 = vmatpush.xpose.msra.mxu0 %v6689
  %6706 = vmatpush.xpose.msra.mxu0 %v6687
  %6707 = vmatpush.xpose.msra.mxu0 %v6685
  %6708 = vmatpush.xpose.msra.mxu0 %v6683
  %6709 = vmatpush.xpose.msra.mxu0 %v6681
  %6710 = vmatpush.xpose.msra.mxu0 %v6679
  %6711 = vmatpush.xpose.msra.mxu0 %v6677
  %6712 = vmatpush.xpose.msra.mxu0 %v6675
  %6713 = vmatmul.f32.gmra.mxu0 %v6653
  %v6714 = vpop.f32.mrf.mxu0
  %v6715 = vadd.f32 0.0, %v6714
  %6716 = vmatmul.f32.gmra.mxu0 %v6655
  %v6717 = vpop.f32.mrf.mxu0
  %v6718 = vadd.f32 0.0, %v6717
  %6719 = vmatmul.f32.gmra.mxu0 %v6657
  %v6720 = vpop.f32.mrf.mxu0
  %v6721 = vadd.f32 0.0, %v6720
  %6722 = vmatmul.f32.gmra.mxu0 %v6659
  %v6723 = vpop.f32.mrf.mxu0
  %v6724 = vadd.f32 0.0, %v6723
  %6725 = vmatmul.f32.gmra.mxu0 %v6661
  %v6726 = vpop.f32.mrf.mxu0
  %v6727 = vadd.f32 0.0, %v6726
  %6728 = vmatmul.f32.gmra.mxu0 %v6663
  %v6729 = vpop.f32.mrf.mxu0
  %v6730 = vadd.f32 0.0, %v6729
  %6731 = vmatmul.f32.gmra.mxu0 %v6665
  %v6732 = vpop.f32.mrf.mxu0
  %v6733 = vadd.f32 0.0, %v6732
  %6734 = vmatmul.f32.gmra.mxu0 %v6667
  %v6735 = vpop.f32.mrf.mxu0
  %v6736 = vadd.f32 0.0, %v6735
  %6737 = vmatmul.f32.gmra.mxu0 %v6669
  %v6738 = vpop.f32.mrf.mxu0
  %v6739 = vadd.f32 0.0, %v6738
  %6740 = vmatmul.f32.gmra.mxu0 %v6671
  %v6741 = vpop.f32.mrf.mxu0
  %v6742 = vadd.f32 0.0, %v6741
  %6743 = vmatmul.f32.gmra.mxu0 %v6673
  %v6744 = vpop.f32.mrf.mxu0
  %v6745 = vadd.f32 0.0, %v6744
  %6746 = vdwg.mxu0
  %v6747 = vsel %vm39, %v6715, -1e+30
  %v6748 = vsel %vm40, %v6718, -1e+30
  %v6749 = vsel %vm41, %v6721, -1e+30
  %v6750 = vsel %vm42, %v6724, -1e+30
  %v6751 = vsel %vm43, %v6727, -1e+30
  %v6752 = vsel %vm44, %v6730, -1e+30
  %v6753 = vsel %vm45, %v6733, -1e+30
  %v6754 = vsel %vm46, %v6736, -1e+30
  %v6755 = vsel %vm47, %v6739, -1e+30
  %v6756 = vsel %vm48, %v6742, -1e+30
  %v6757 = vsel %vm49, %v6745, -1e+30
  %v6758 = vsel %vm639, %v6747, -inf
  %6759 = vmax.xlane.f32.xlu0 %v6758
  %v6760 = vpop.xlane.xlu0 %6759
  %v6761 = vsel %vm639, %v6748, -inf
  %6762 = vmax.xlane.f32.xlu0 %v6761
  %v6763 = vpop.xlane.xlu0 %6762
  %v6764 = vsel %vm639, %v6749, -inf
  %6765 = vmax.xlane.f32.xlu0 %v6764
  %v6766 = vpop.xlane.xlu0 %6765
  %v6767 = vsel %vm639, %v6750, -inf
  %6768 = vmax.xlane.f32.xlu0 %v6767
  %v6769 = vpop.xlane.xlu0 %6768
  %v6770 = vsel %vm639, %v6751, -inf
  %6771 = vmax.xlane.f32.xlu0 %v6770
  %v6772 = vpop.xlane.xlu0 %6771
  %v6773 = vsel %vm639, %v6752, -inf
  %6774 = vmax.xlane.f32.xlu0 %v6773
  %v6775 = vpop.xlane.xlu0 %6774
  %v6776 = vsel %vm639, %v6753, -inf
  %6777 = vmax.xlane.f32.xlu0 %v6776
  %v6778 = vpop.xlane.xlu0 %6777
  %v6779 = vsel %vm639, %v6754, -inf
  %6780 = vmax.xlane.f32.xlu0 %v6779
  %v6781 = vpop.xlane.xlu0 %6780
  %v6782 = vsel %vm639, %v6755, -inf
  %6783 = vmax.xlane.f32.xlu0 %v6782
  %v6784 = vpop.xlane.xlu0 %6783
  %v6785 = vsel %vm639, %v6756, -inf
  %6786 = vmax.xlane.f32.xlu0 %v6785
  %v6787 = vpop.xlane.xlu0 %6786
  %v6788 = vsel %vm670, %v6757, -inf
  %6789 = vmax.xlane.f32.xlu0 %v6788
  %v6790 = vpop.xlane.xlu0 %6789
  %v6791 = vsub.f32 %v6747, %v6760
  %v6792 = vsub.f32 %v6748, %v6763
  %v6793 = vsub.f32 %v6749, %v6766
  %v6794 = vsub.f32 %v6750, %v6769
  %v6795 = vsub.f32 %v6751, %v6772
  %v6796 = vsub.f32 %v6752, %v6775
  %v6797 = vsub.f32 %v6753, %v6778
  %v6798 = vsub.f32 %v6754, %v6781
  %v6799 = vsub.f32 %v6755, %v6784
  %v6800 = vsub.f32 %v6756, %v6787
  %v6801 = vsub.f32 %v6757, %v6790
  %v6802 = vpack.c.bf16 %v6792, %v6791
  %v6803 = vpack.c.bf16 %v6794, %v6793
  %v6804 = vpack.c.bf16 %v6796, %v6795
  %v6805 = vpack.c.bf16 %v6798, %v6797
  %v6806 = vpack.c.bf16 %v6800, %v6799
  %v6807 = vpack.c.bf16 %v6801, %v6801
  %v6808 = vunpack.c.l.bf16 %v6802
  %v6809 = vunpack.c.h.bf16 %v6802
  %v6810 = vunpack.c.l.bf16 %v6803
  %v6811 = vunpack.c.h.bf16 %v6803
  %v6812 = vunpack.c.l.bf16 %v6804
  %v6813 = vunpack.c.h.bf16 %v6804
  %v6814 = vunpack.c.l.bf16 %v6805
  %v6815 = vunpack.c.h.bf16 %v6805
  %v6816 = vunpack.c.l.bf16 %v6806
  %v6817 = vunpack.c.h.bf16 %v6806
  %v6818 = vunpack.c.l.bf16 %v6807
  %v6819 = vmul.f32 %v6808, 1.442695
  %v6820 = vpow.pop %v6819
  %v6821 = vmul.f32 %v6809, 1.442695
  %v6822 = vpow.pop %v6821
  %v6823 = vmul.f32 %v6810, 1.442695
  %v6824 = vpow.pop %v6823
  %v6825 = vmul.f32 %v6811, 1.442695
  %v6826 = vpow.pop %v6825
  %v6827 = vmul.f32 %v6812, 1.442695
  %v6828 = vpow.pop %v6827
  %v6829 = vmul.f32 %v6813, 1.442695
  %v6830 = vpow.pop %v6829
  %v6831 = vmul.f32 %v6814, 1.442695
  %v6832 = vpow.pop %v6831
  %v6833 = vmul.f32 %v6815, 1.442695
  %v6834 = vpow.pop %v6833
  %v6835 = vmul.f32 %v6816, 1.442695
  %v6836 = vpow.pop %v6835
  %v6837 = vmul.f32 %v6817, 1.442695
  %v6838 = vpow.pop %v6837
  %v6839 = vmul.f32 %v6818, 1.442695
  %v6840 = vpow.pop %v6839
  %v6841 = vpack.c.bf16 %v6822, %v6820
  %v6842 = vpack.c.bf16 %v6826, %v6824
  %v6843 = vpack.c.bf16 %v6830, %v6828
  %v6844 = vpack.c.bf16 %v6834, %v6832
  %v6845 = vpack.c.bf16 %v6838, %v6836
  %v6846 = vpack.c.bf16 %v6840, %v6840
  %v6847 = vunpack.c.l.bf16 %v6841
  %v6848 = vunpack.c.h.bf16 %v6841
  %v6849 = vunpack.c.l.bf16 %v6842
  %v6850 = vunpack.c.h.bf16 %v6842
  %v6851 = vunpack.c.l.bf16 %v6843
  %v6852 = vunpack.c.h.bf16 %v6843
  %v6853 = vunpack.c.l.bf16 %v6844
  %v6854 = vunpack.c.h.bf16 %v6844
  %v6855 = vunpack.c.l.bf16 %v6845
  %v6856 = vunpack.c.h.bf16 %v6845
  %v6857 = vunpack.c.l.bf16 %v6846
  %v6858 = vsel %vm639, %v6847, 0.0
  %6859 = vadd.xlane.f32.xlu0 %v6858
  %v6860 = vpop.xlane.xlu0 %6859
  %v6861 = vsel %vm639, %v6848, 0.0
  %6862 = vadd.xlane.f32.xlu0 %v6861
  %v6863 = vpop.xlane.xlu0 %6862
  %v6864 = vsel %vm639, %v6849, 0.0
  %6865 = vadd.xlane.f32.xlu0 %v6864
  %v6866 = vpop.xlane.xlu0 %6865
  %v6867 = vsel %vm639, %v6850, 0.0
  %6868 = vadd.xlane.f32.xlu0 %v6867
  %v6869 = vpop.xlane.xlu0 %6868
  %v6870 = vsel %vm639, %v6851, 0.0
  %6871 = vadd.xlane.f32.xlu0 %v6870
  %v6872 = vpop.xlane.xlu0 %6871
  %v6873 = vsel %vm639, %v6852, 0.0
  %6874 = vadd.xlane.f32.xlu0 %v6873
  %v6875 = vpop.xlane.xlu0 %6874
  %v6876 = vsel %vm639, %v6853, 0.0
  %6877 = vadd.xlane.f32.xlu0 %v6876
  %v6878 = vpop.xlane.xlu0 %6877
  %v6879 = vsel %vm639, %v6854, 0.0
  %6880 = vadd.xlane.f32.xlu0 %v6879
  %v6881 = vpop.xlane.xlu0 %6880
  %v6882 = vsel %vm639, %v6855, 0.0
  %6883 = vadd.xlane.f32.xlu0 %v6882
  %v6884 = vpop.xlane.xlu0 %6883
  %v6885 = vsel %vm639, %v6856, 0.0
  %6886 = vadd.xlane.f32.xlu0 %v6885
  %v6887 = vpop.xlane.xlu0 %6886
  %v6888 = vsel %vm670, %v6857, 0.0
  %6889 = vadd.xlane.f32.xlu0 %v6888
  %v6890 = vpop.xlane.xlu0 %6889
  %v6891 = vrcp.pop %v6860
  %v6892 = vrcp.pop %v6863
  %v6893 = vrcp.pop %v6866
  %v6894 = vrcp.pop %v6869
  %v6895 = vrcp.pop %v6872
  %v6896 = vrcp.pop %v6875
  %v6897 = vrcp.pop %v6878
  %v6898 = vrcp.pop %v6881
  %v6899 = vrcp.pop %v6884
  %v6900 = vrcp.pop %v6887
  %v6901 = vrcp.pop %v6890
  %6902 = vrot.lane.b32.xlu0 %v6516, 32
  %v6903 = vpop.permute.xlu0 %6902
  %6904 = vrot.lane.b32.xlu0 %v6517, 32
  %v6905 = vpop.permute.xlu0 %6904
  %6906 = vrot.lane.b32.xlu0 %v6518, 32
  %v6907 = vpop.permute.xlu0 %6906
  %6908 = vrot.lane.b32.xlu0 %v6519, 32
  %v6909 = vpop.permute.xlu0 %6908
  %6910 = vrot.lane.b32.xlu0 %v6520, 32
  %v6911 = vpop.permute.xlu0 %6910
  %6912 = vrot.lane.b32.xlu0 %v6521, 32
  %v6913 = vpop.permute.xlu0 %6912
  %v6920 = vsel %vm639, %v6841, 0
  %v6923 = vsel %vm639, %v6842, 0
  %v6926 = vsel %vm639, %v6843, 0
  %v6929 = vsel %vm639, %v6844, 0
  %v6932 = vsel %vm639, %v6845, 0
  %v6935 = vsel %vm639, %v6846, 0
  %v6938 = vand.u32 %v6913, %v850
  %6940 = vmatpush.bf16.msra.mxu0 0
  %6941 = vmatpush.bf16.msra.mxu0 0
  %6942 = vmatpush.bf16.msra.mxu0 %v6938
  %6943 = vmatpush.bf16.msra.mxu0 %v6911
  %6944 = vmatpush.bf16.msra.mxu0 %v6909
  %6945 = vmatpush.bf16.msra.mxu0 %v6907
  %6946 = vmatpush.bf16.msra.mxu0 %v6905
  %6947 = vmatpush.bf16.msra.mxu0 %v6903
  %6948 = vmatmul.bf16.gmra.mxu0 %v6920
  %v6949 = vpop.f32.mrf.mxu0
  %v6950 = vadd.f32 0.0, %v6949
  %v6951 = vpop.f32.mrf.mxu0
  %v6952 = vadd.f32 0.0, %v6951
  %6953 = vmatmul.bf16.gmra.mxu0 %v6923
  %v6954 = vpop.f32.mrf.mxu0
  %v6955 = vadd.f32 0.0, %v6954
  %v6956 = vpop.f32.mrf.mxu0
  %v6957 = vadd.f32 0.0, %v6956
  %6958 = vmatmul.bf16.gmra.mxu0 %v6926
  %v6959 = vpop.f32.mrf.mxu0
  %v6960 = vadd.f32 0.0, %v6959
  %v6961 = vpop.f32.mrf.mxu0
  %v6962 = vadd.f32 0.0, %v6961
  %6963 = vmatmul.bf16.gmra.mxu0 %v6929
  %v6964 = vpop.f32.mrf.mxu0
  %v6965 = vadd.f32 0.0, %v6964
  %v6966 = vpop.f32.mrf.mxu0
  %v6967 = vadd.f32 0.0, %v6966
  %6968 = vmatmul.bf16.gmra.mxu0 %v6932
  %v6969 = vpop.f32.mrf.mxu0
  %v6970 = vadd.f32 0.0, %v6969
  %v6971 = vpop.f32.mrf.mxu0
  %v6972 = vadd.f32 0.0, %v6971
  %6973 = vmatmul.bf16.gmra.mxu0 %v6935
  %v6974 = vpop.f32.mrf.mxu0
  %v6975 = vadd.f32 0.0, %v6974
  %v6976 = vpop.f32.mrf.mxu0
  %6977 = vdwg.mxu0
  %v6978 = vmul.f32 %v6950, %v6891
  %v6979 = vmul.f32 %v6952, %v6892
  %v6980 = vmul.f32 %v6955, %v6893
  %v6981 = vmul.f32 %v6957, %v6894
  %v6982 = vmul.f32 %v6960, %v6895
  %v6983 = vmul.f32 %v6962, %v6896
  %v6984 = vmul.f32 %v6965, %v6897
  %v6985 = vmul.f32 %v6967, %v6898
  %v6986 = vmul.f32 %v6970, %v6899
  %v6987 = vmul.f32 %v6972, %v6900
  %v6988 = vmul.f32 %v6975, %v6901
  %v6989 = vadd.f32 %v6598, %v6978
  %v6990 = vadd.f32 %v6599, %v6979
  %v6991 = vadd.f32 %v6600, %v6980
  %v6992 = vadd.f32 %v6601, %v6981
  %v6993 = vadd.f32 %v6602, %v6982
  %v6994 = vadd.f32 %v6603, %v6983
  %v6995 = vadd.f32 %v6604, %v6984
  %v6996 = vadd.f32 %v6605, %v6985
  %v6997 = vadd.f32 %v6606, %v6986
  %v6998 = vadd.f32 %v6607, %v6987
  %v6999 = vadd.f32 %v6608, %v6988
  %7000 = vrot.lane.b32.xlu0 %v6135, 112
  %v7001 = vpop.permute.xlu0 %7000
  %7002 = vrot.lane.b32.xlu0 %v6137, 112
  %v7003 = vpop.permute.xlu0 %7002
  %7004 = vrot.lane.b32.xlu0 %v6140, 112
  %v7005 = vpop.permute.xlu0 %7004
  %7006 = vrot.lane.b32.xlu0 %v6142, 112
  %v7007 = vpop.permute.xlu0 %7006
  %7008 = vrot.lane.b32.xlu0 %v6145, 112
  %v7009 = vpop.permute.xlu0 %7008
  %7010 = vrot.lane.b32.xlu0 %v6147, 112
  %v7011 = vpop.permute.xlu0 %7010
  %7012 = vrot.lane.b32.xlu0 %v6150, 112
  %v7013 = vpop.permute.xlu0 %7012
  %7014 = vrot.lane.b32.xlu0 %v6152, 112
  %v7015 = vpop.permute.xlu0 %7014
  %7016 = vrot.lane.b32.xlu0 %v6155, 112
  %v7017 = vpop.permute.xlu0 %7016
  %7018 = vrot.lane.b32.xlu0 %v6157, 112
  %v7019 = vpop.permute.xlu0 %7018
  %7020 = vrot.lane.b32.xlu0 %v6160, 112
  %v7021 = vpop.permute.xlu0 %7020
  %7022 = vrot.lane.b32.xlu0 %v6135, 80
  %v7023 = vpop.permute.xlu0 %7022
  %7024 = vrot.lane.b32.xlu0 %v6137, 80
  %v7025 = vpop.permute.xlu0 %7024
  %7026 = vrot.lane.b32.xlu0 %v6140, 80
  %v7027 = vpop.permute.xlu0 %7026
  %7028 = vrot.lane.b32.xlu0 %v6142, 80
  %v7029 = vpop.permute.xlu0 %7028
  %7030 = vrot.lane.b32.xlu0 %v6145, 80
  %v7031 = vpop.permute.xlu0 %7030
  %7032 = vrot.lane.b32.xlu0 %v6147, 80
  %v7033 = vpop.permute.xlu0 %7032
  %7034 = vrot.lane.b32.xlu0 %v6150, 80
  %v7035 = vpop.permute.xlu0 %7034
  %7036 = vrot.lane.b32.xlu0 %v6152, 80
  %v7037 = vpop.permute.xlu0 %7036
  %7038 = vrot.lane.b32.xlu0 %v6155, 80
  %v7039 = vpop.permute.xlu0 %7038
  %7040 = vrot.lane.b32.xlu0 %v6157, 80
  %v7041 = vpop.permute.xlu0 %7040
  %7042 = vrot.lane.b32.xlu0 %v6160, 80
  %v7043 = vpop.permute.xlu0 %7042
  %v7044 = vsel %vm533, %v7001, 0
  %v7046 = vsel %vm533, %v7003, 0
  %v7048 = vsel %vm533, %v7005, 0
  %v7050 = vsel %vm533, %v7007, 0
  %v7052 = vsel %vm533, %v7009, 0
  %v7054 = vsel %vm533, %v7011, 0
  %v7056 = vsel %vm533, %v7013, 0
  %v7058 = vsel %vm533, %v7015, 0
  %v7060 = vsel %vm533, %v7017, 0
  %v7062 = vsel %vm533, %v7019, 0
  %v7064 = vsel %vm533, %v7021, 0
  %v7066 = vsel %vm533, %v7023, 0
  %v7068 = vsel %vm533, %v7025, 0
  %v7070 = vsel %vm533, %v7027, 0
  %v7072 = vsel %vm533, %v7029, 0
  %v7074 = vsel %vm533, %v7031, 0
  %v7076 = vsel %vm533, %v7033, 0
  %v7078 = vsel %vm533, %v7035, 0
  %v7080 = vsel %vm533, %v7037, 0
  %v7082 = vsel %vm533, %v7039, 0
  %v7084 = vsel %vm533, %v7041, 0
  %v7086 = vsel %vm533, %v7043, 0
  %7088 = vmatpush.xpose.msra.mxu0 0.0
  %7089 = vmatpush.xpose.msra.mxu0 0.0
  %7090 = vmatpush.xpose.msra.mxu0 0.0
  %7091 = vmatpush.xpose.msra.mxu0 0.0
  %7092 = vmatpush.xpose.msra.mxu0 0.0
  %7093 = vmatpush.xpose.msra.mxu0 %v7086
  %7094 = vmatpush.xpose.msra.mxu0 %v7084
  %7095 = vmatpush.xpose.msra.mxu0 %v7082
  %7096 = vmatpush.xpose.msra.mxu0 %v7080
  %7097 = vmatpush.xpose.msra.mxu0 %v7078
  %7098 = vmatpush.xpose.msra.mxu0 %v7076
  %7099 = vmatpush.xpose.msra.mxu0 %v7074
  %7100 = vmatpush.xpose.msra.mxu0 %v7072
  %7101 = vmatpush.xpose.msra.mxu0 %v7070
  %7102 = vmatpush.xpose.msra.mxu0 %v7068
  %7103 = vmatpush.xpose.msra.mxu0 %v7066
  %7104 = vmatmul.f32.gmra.mxu0 %v7044
  %v7105 = vpop.f32.mrf.mxu0
  %v7106 = vadd.f32 0.0, %v7105
  %7107 = vmatmul.f32.gmra.mxu0 %v7046
  %v7108 = vpop.f32.mrf.mxu0
  %v7109 = vadd.f32 0.0, %v7108
  %7110 = vmatmul.f32.gmra.mxu0 %v7048
  %v7111 = vpop.f32.mrf.mxu0
  %v7112 = vadd.f32 0.0, %v7111
  %7113 = vmatmul.f32.gmra.mxu0 %v7050
  %v7114 = vpop.f32.mrf.mxu0
  %v7115 = vadd.f32 0.0, %v7114
  %7116 = vmatmul.f32.gmra.mxu0 %v7052
  %v7117 = vpop.f32.mrf.mxu0
  %v7118 = vadd.f32 0.0, %v7117
  %7119 = vmatmul.f32.gmra.mxu0 %v7054
  %v7120 = vpop.f32.mrf.mxu0
  %v7121 = vadd.f32 0.0, %v7120
  %7122 = vmatmul.f32.gmra.mxu0 %v7056
  %v7123 = vpop.f32.mrf.mxu0
  %v7124 = vadd.f32 0.0, %v7123
  %7125 = vmatmul.f32.gmra.mxu0 %v7058
  %v7126 = vpop.f32.mrf.mxu0
  %v7127 = vadd.f32 0.0, %v7126
  %7128 = vmatmul.f32.gmra.mxu0 %v7060
  %v7129 = vpop.f32.mrf.mxu0
  %v7130 = vadd.f32 0.0, %v7129
  %7131 = vmatmul.f32.gmra.mxu0 %v7062
  %v7132 = vpop.f32.mrf.mxu0
  %v7133 = vadd.f32 0.0, %v7132
  %7134 = vmatmul.f32.gmra.mxu0 %v7064
  %v7135 = vpop.f32.mrf.mxu0
  %v7136 = vadd.f32 0.0, %v7135
  %7137 = vdwg.mxu0
  %v7138 = vsel %vm39, %v7106, -1e+30
  %v7139 = vsel %vm40, %v7109, -1e+30
  %v7140 = vsel %vm41, %v7112, -1e+30
  %v7141 = vsel %vm42, %v7115, -1e+30
  %v7142 = vsel %vm43, %v7118, -1e+30
  %v7143 = vsel %vm44, %v7121, -1e+30
  %v7144 = vsel %vm45, %v7124, -1e+30
  %v7145 = vsel %vm46, %v7127, -1e+30
  %v7146 = vsel %vm47, %v7130, -1e+30
  %v7147 = vsel %vm48, %v7133, -1e+30
  %v7148 = vsel %vm49, %v7136, -1e+30
  %v7149 = vsel %vm639, %v7138, -inf
  %7150 = vmax.xlane.f32.xlu0 %v7149
  %v7151 = vpop.xlane.xlu0 %7150
  %v7152 = vsel %vm639, %v7139, -inf
  %7153 = vmax.xlane.f32.xlu0 %v7152
  %v7154 = vpop.xlane.xlu0 %7153
  %v7155 = vsel %vm639, %v7140, -inf
  %7156 = vmax.xlane.f32.xlu0 %v7155
  %v7157 = vpop.xlane.xlu0 %7156
  %v7158 = vsel %vm639, %v7141, -inf
  %7159 = vmax.xlane.f32.xlu0 %v7158
  %v7160 = vpop.xlane.xlu0 %7159
  %v7161 = vsel %vm639, %v7142, -inf
  %7162 = vmax.xlane.f32.xlu0 %v7161
  %v7163 = vpop.xlane.xlu0 %7162
  %v7164 = vsel %vm639, %v7143, -inf
  %7165 = vmax.xlane.f32.xlu0 %v7164
  %v7166 = vpop.xlane.xlu0 %7165
  %v7167 = vsel %vm639, %v7144, -inf
  %7168 = vmax.xlane.f32.xlu0 %v7167
  %v7169 = vpop.xlane.xlu0 %7168
  %v7170 = vsel %vm639, %v7145, -inf
  %7171 = vmax.xlane.f32.xlu0 %v7170
  %v7172 = vpop.xlane.xlu0 %7171
  %v7173 = vsel %vm639, %v7146, -inf
  %7174 = vmax.xlane.f32.xlu0 %v7173
  %v7175 = vpop.xlane.xlu0 %7174
  %v7176 = vsel %vm639, %v7147, -inf
  %7177 = vmax.xlane.f32.xlu0 %v7176
  %v7178 = vpop.xlane.xlu0 %7177
  %v7179 = vsel %vm670, %v7148, -inf
  %7180 = vmax.xlane.f32.xlu0 %v7179
  %v7181 = vpop.xlane.xlu0 %7180
  %v7182 = vsub.f32 %v7138, %v7151
  %v7183 = vsub.f32 %v7139, %v7154
  %v7184 = vsub.f32 %v7140, %v7157
  %v7185 = vsub.f32 %v7141, %v7160
  %v7186 = vsub.f32 %v7142, %v7163
  %v7187 = vsub.f32 %v7143, %v7166
  %v7188 = vsub.f32 %v7144, %v7169
  %v7189 = vsub.f32 %v7145, %v7172
  %v7190 = vsub.f32 %v7146, %v7175
  %v7191 = vsub.f32 %v7147, %v7178
  %v7192 = vsub.f32 %v7148, %v7181
  %v7193 = vpack.c.bf16 %v7183, %v7182
  %v7194 = vpack.c.bf16 %v7185, %v7184
  %v7195 = vpack.c.bf16 %v7187, %v7186
  %v7196 = vpack.c.bf16 %v7189, %v7188
  %v7197 = vpack.c.bf16 %v7191, %v7190
  %v7198 = vpack.c.bf16 %v7192, %v7192
  %v7199 = vunpack.c.l.bf16 %v7193
  %v7200 = vunpack.c.h.bf16 %v7193
  %v7201 = vunpack.c.l.bf16 %v7194
  %v7202 = vunpack.c.h.bf16 %v7194
  %v7203 = vunpack.c.l.bf16 %v7195
  %v7204 = vunpack.c.h.bf16 %v7195
  %v7205 = vunpack.c.l.bf16 %v7196
  %v7206 = vunpack.c.h.bf16 %v7196
  %v7207 = vunpack.c.l.bf16 %v7197
  %v7208 = vunpack.c.h.bf16 %v7197
  %v7209 = vunpack.c.l.bf16 %v7198
  %v7210 = vmul.f32 %v7199, 1.442695
  %v7211 = vpow.pop %v7210
  %v7212 = vmul.f32 %v7200, 1.442695
  %v7213 = vpow.pop %v7212
  %v7214 = vmul.f32 %v7201, 1.442695
  %v7215 = vpow.pop %v7214
  %v7216 = vmul.f32 %v7202, 1.442695
  %v7217 = vpow.pop %v7216
  %v7218 = vmul.f32 %v7203, 1.442695
  %v7219 = vpow.pop %v7218
  %v7220 = vmul.f32 %v7204, 1.442695
  %v7221 = vpow.pop %v7220
  %v7222 = vmul.f32 %v7205, 1.442695
  %v7223 = vpow.pop %v7222
  %v7224 = vmul.f32 %v7206, 1.442695
  %v7225 = vpow.pop %v7224
  %v7226 = vmul.f32 %v7207, 1.442695
  %v7227 = vpow.pop %v7226
  %v7228 = vmul.f32 %v7208, 1.442695
  %v7229 = vpow.pop %v7228
  %v7230 = vmul.f32 %v7209, 1.442695
  %v7231 = vpow.pop %v7230
  %v7232 = vpack.c.bf16 %v7213, %v7211
  %v7233 = vpack.c.bf16 %v7217, %v7215
  %v7234 = vpack.c.bf16 %v7221, %v7219
  %v7235 = vpack.c.bf16 %v7225, %v7223
  %v7236 = vpack.c.bf16 %v7229, %v7227
  %v7237 = vpack.c.bf16 %v7231, %v7231
  %v7238 = vunpack.c.l.bf16 %v7232
  %v7239 = vunpack.c.h.bf16 %v7232
  %v7240 = vunpack.c.l.bf16 %v7233
  %v7241 = vunpack.c.h.bf16 %v7233
  %v7242 = vunpack.c.l.bf16 %v7234
  %v7243 = vunpack.c.h.bf16 %v7234
  %v7244 = vunpack.c.l.bf16 %v7235
  %v7245 = vunpack.c.h.bf16 %v7235
  %v7246 = vunpack.c.l.bf16 %v7236
  %v7247 = vunpack.c.h.bf16 %v7236
  %v7248 = vunpack.c.l.bf16 %v7237
  %v7249 = vsel %vm639, %v7238, 0.0
  %7250 = vadd.xlane.f32.xlu0 %v7249
  %v7251 = vpop.xlane.xlu0 %7250
  %v7252 = vsel %vm639, %v7239, 0.0
  %7253 = vadd.xlane.f32.xlu0 %v7252
  %v7254 = vpop.xlane.xlu0 %7253
  %v7255 = vsel %vm639, %v7240, 0.0
  %7256 = vadd.xlane.f32.xlu0 %v7255
  %v7257 = vpop.xlane.xlu0 %7256
  %v7258 = vsel %vm639, %v7241, 0.0
  %7259 = vadd.xlane.f32.xlu0 %v7258
  %v7260 = vpop.xlane.xlu0 %7259
  %v7261 = vsel %vm639, %v7242, 0.0
  %7262 = vadd.xlane.f32.xlu0 %v7261
  %v7263 = vpop.xlane.xlu0 %7262
  %v7264 = vsel %vm639, %v7243, 0.0
  %7265 = vadd.xlane.f32.xlu0 %v7264
  %v7266 = vpop.xlane.xlu0 %7265
  %v7267 = vsel %vm639, %v7244, 0.0
  %7268 = vadd.xlane.f32.xlu0 %v7267
  %v7269 = vpop.xlane.xlu0 %7268
  %v7270 = vsel %vm639, %v7245, 0.0
  %7271 = vadd.xlane.f32.xlu0 %v7270
  %v7272 = vpop.xlane.xlu0 %7271
  %v7273 = vsel %vm639, %v7246, 0.0
  %7274 = vadd.xlane.f32.xlu0 %v7273
  %v7275 = vpop.xlane.xlu0 %7274
  %v7276 = vsel %vm639, %v7247, 0.0
  %7277 = vadd.xlane.f32.xlu0 %v7276
  %v7278 = vpop.xlane.xlu0 %7277
  %v7279 = vsel %vm670, %v7248, 0.0
  %7280 = vadd.xlane.f32.xlu0 %v7279
  %v7281 = vpop.xlane.xlu0 %7280
  %v7282 = vrcp.pop %v7251
  %v7283 = vrcp.pop %v7254
  %v7284 = vrcp.pop %v7257
  %v7285 = vrcp.pop %v7260
  %v7286 = vrcp.pop %v7263
  %v7287 = vrcp.pop %v7266
  %v7288 = vrcp.pop %v7269
  %v7289 = vrcp.pop %v7272
  %v7290 = vrcp.pop %v7275
  %v7291 = vrcp.pop %v7278
  %v7292 = vrcp.pop %v7281
  %v7293 = vunpack.c.h.b16 %v6201
  %v7294 = vunpack.c.h.b16 %v6202
  %v7295 = vunpack.c.h.b16 %v6203
  %v7296 = vunpack.c.h.b16 %v6204
  %v7297 = vunpack.c.h.b16 %v6205
  %v7298 = vunpack.c.h.b16 %v6206
  %v7299 = vunpack.c.h.b16 %v6207
  %v7300 = vunpack.c.h.b16 %v6208
  %v7301 = vunpack.c.h.b16 %v6209
  %v7302 = vunpack.c.h.b16 %v6210
  %v7303 = vunpack.c.h.b16 %v6211
  %v7304 = vpack.c.b16 %v7294, %v7293
  %v7305 = vpack.c.b16 %v7296, %v7295
  %v7306 = vpack.c.b16 %v7298, %v7297
  %v7307 = vpack.c.b16 %v7300, %v7299
  %v7308 = vpack.c.b16 %v7302, %v7301
  %v7309 = vpack.c.b16 %v7303, %v7303
  %v7316 = vsel %vm639, %v7232, 0
  %v7319 = vsel %vm639, %v7233, 0
  %v7322 = vsel %vm639, %v7234, 0
  %v7325 = vsel %vm639, %v7235, 0
  %v7328 = vsel %vm639, %v7236, 0
  %v7331 = vsel %vm639, %v7237, 0
  %v7334 = vand.u32 %v7309, %v850
  %7336 = vmatpush.bf16.msra.mxu0 0
  %7337 = vmatpush.bf16.msra.mxu0 0
  %7338 = vmatpush.bf16.msra.mxu0 %v7334
  %7339 = vmatpush.bf16.msra.mxu0 %v7308
  %7340 = vmatpush.bf16.msra.mxu0 %v7307
  %7341 = vmatpush.bf16.msra.mxu0 %v7306
  %7342 = vmatpush.bf16.msra.mxu0 %v7305
  %7343 = vmatpush.bf16.msra.mxu0 %v7304
  %7344 = vmatmul.bf16.gmra.mxu0 %v7316
  %v7345 = vpop.f32.mrf.mxu0
  %v7346 = vadd.f32 0.0, %v7345
  %v7347 = vpop.f32.mrf.mxu0
  %v7348 = vadd.f32 0.0, %v7347
  %7349 = vmatmul.bf16.gmra.mxu0 %v7319
  %v7350 = vpop.f32.mrf.mxu0
  %v7351 = vadd.f32 0.0, %v7350
  %v7352 = vpop.f32.mrf.mxu0
  %v7353 = vadd.f32 0.0, %v7352
  %7354 = vmatmul.bf16.gmra.mxu0 %v7322
  %v7355 = vpop.f32.mrf.mxu0
  %v7356 = vadd.f32 0.0, %v7355
  %v7357 = vpop.f32.mrf.mxu0
  %v7358 = vadd.f32 0.0, %v7357
  %7359 = vmatmul.bf16.gmra.mxu0 %v7325
  %v7360 = vpop.f32.mrf.mxu0
  %v7361 = vadd.f32 0.0, %v7360
  %v7362 = vpop.f32.mrf.mxu0
  %v7363 = vadd.f32 0.0, %v7362
  %7364 = vmatmul.bf16.gmra.mxu0 %v7328
  %v7365 = vpop.f32.mrf.mxu0
  %v7366 = vadd.f32 0.0, %v7365
  %v7367 = vpop.f32.mrf.mxu0
  %v7368 = vadd.f32 0.0, %v7367
  %7369 = vmatmul.bf16.gmra.mxu0 %v7331
  %v7370 = vpop.f32.mrf.mxu0
  %v7371 = vadd.f32 0.0, %v7370
  %v7372 = vpop.f32.mrf.mxu0
  %7373 = vdwg.mxu0
  %v7374 = vmul.f32 %v7346, %v7282
  %v7375 = vmul.f32 %v7348, %v7283
  %v7376 = vmul.f32 %v7351, %v7284
  %v7377 = vmul.f32 %v7353, %v7285
  %v7378 = vmul.f32 %v7356, %v7286
  %v7379 = vmul.f32 %v7358, %v7287
  %v7380 = vmul.f32 %v7361, %v7288
  %v7381 = vmul.f32 %v7363, %v7289
  %v7382 = vmul.f32 %v7366, %v7290
  %v7383 = vmul.f32 %v7368, %v7291
  %v7384 = vmul.f32 %v7371, %v7292
  %v7385 = vadd.f32 %v6989, %v7374
  %v7386 = vadd.f32 %v6990, %v7375
  %v7387 = vadd.f32 %v6991, %v7376
  %v7388 = vadd.f32 %v6992, %v7377
  %v7389 = vadd.f32 %v6993, %v7378
  %v7390 = vadd.f32 %v6994, %v7379
  %v7391 = vadd.f32 %v6995, %v7380
  %v7392 = vadd.f32 %v6996, %v7381
  %v7393 = vadd.f32 %v6997, %v7382
  %v7394 = vadd.f32 %v6998, %v7383
  %v7395 = vadd.f32 %v6999, %v7384
  %7396 = vrot.lane.b32.xlu0 %v6135, 104
  %v7397 = vpop.permute.xlu0 %7396
  %7398 = vrot.lane.b32.xlu0 %v6137, 104
  %v7399 = vpop.permute.xlu0 %7398
  %7400 = vrot.lane.b32.xlu0 %v6140, 104
  %v7401 = vpop.permute.xlu0 %7400
  %7402 = vrot.lane.b32.xlu0 %v6142, 104
  %v7403 = vpop.permute.xlu0 %7402
  %7404 = vrot.lane.b32.xlu0 %v6145, 104
  %v7405 = vpop.permute.xlu0 %7404
  %7406 = vrot.lane.b32.xlu0 %v6147, 104
  %v7407 = vpop.permute.xlu0 %7406
  %7408 = vrot.lane.b32.xlu0 %v6150, 104
  %v7409 = vpop.permute.xlu0 %7408
  %7410 = vrot.lane.b32.xlu0 %v6152, 104
  %v7411 = vpop.permute.xlu0 %7410
  %7412 = vrot.lane.b32.xlu0 %v6155, 104
  %v7413 = vpop.permute.xlu0 %7412
  %7414 = vrot.lane.b32.xlu0 %v6157, 104
  %v7415 = vpop.permute.xlu0 %7414
  %7416 = vrot.lane.b32.xlu0 %v6160, 104
  %v7417 = vpop.permute.xlu0 %7416
  %7418 = vrot.lane.b32.xlu0 %v6135, 72
  %v7419 = vpop.permute.xlu0 %7418
  %7420 = vrot.lane.b32.xlu0 %v6137, 72
  %v7421 = vpop.permute.xlu0 %7420
  %7422 = vrot.lane.b32.xlu0 %v6140, 72
  %v7423 = vpop.permute.xlu0 %7422
  %7424 = vrot.lane.b32.xlu0 %v6142, 72
  %v7425 = vpop.permute.xlu0 %7424
  %7426 = vrot.lane.b32.xlu0 %v6145, 72
  %v7427 = vpop.permute.xlu0 %7426
  %7428 = vrot.lane.b32.xlu0 %v6147, 72
  %v7429 = vpop.permute.xlu0 %7428
  %7430 = vrot.lane.b32.xlu0 %v6150, 72
  %v7431 = vpop.permute.xlu0 %7430
  %7432 = vrot.lane.b32.xlu0 %v6152, 72
  %v7433 = vpop.permute.xlu0 %7432
  %7434 = vrot.lane.b32.xlu0 %v6155, 72
  %v7435 = vpop.permute.xlu0 %7434
  %7436 = vrot.lane.b32.xlu0 %v6157, 72
  %v7437 = vpop.permute.xlu0 %7436
  %7438 = vrot.lane.b32.xlu0 %v6160, 72
  %v7439 = vpop.permute.xlu0 %7438
  %v7440 = vsel %vm533, %v7397, 0
  %v7442 = vsel %vm533, %v7399, 0
  %v7444 = vsel %vm533, %v7401, 0
  %v7446 = vsel %vm533, %v7403, 0
  %v7448 = vsel %vm533, %v7405, 0
  %v7450 = vsel %vm533, %v7407, 0
  %v7452 = vsel %vm533, %v7409, 0
  %v7454 = vsel %vm533, %v7411, 0
  %v7456 = vsel %vm533, %v7413, 0
  %v7458 = vsel %vm533, %v7415, 0
  %v7460 = vsel %vm533, %v7417, 0
  %v7462 = vsel %vm533, %v7419, 0
  %v7464 = vsel %vm533, %v7421, 0
  %v7466 = vsel %vm533, %v7423, 0
  %v7468 = vsel %vm533, %v7425, 0
  %v7470 = vsel %vm533, %v7427, 0
  %v7472 = vsel %vm533, %v7429, 0
  %v7474 = vsel %vm533, %v7431, 0
  %v7476 = vsel %vm533, %v7433, 0
  %v7478 = vsel %vm533, %v7435, 0
  %v7480 = vsel %vm533, %v7437, 0
  %v7482 = vsel %vm533, %v7439, 0
  %7484 = vmatpush.xpose.msra.mxu0 0.0
  %7485 = vmatpush.xpose.msra.mxu0 0.0
  %7486 = vmatpush.xpose.msra.mxu0 0.0
  %7487 = vmatpush.xpose.msra.mxu0 0.0
  %7488 = vmatpush.xpose.msra.mxu0 0.0
  %7489 = vmatpush.xpose.msra.mxu0 %v7482
  %7490 = vmatpush.xpose.msra.mxu0 %v7480
  %7491 = vmatpush.xpose.msra.mxu0 %v7478
  %7492 = vmatpush.xpose.msra.mxu0 %v7476
  %7493 = vmatpush.xpose.msra.mxu0 %v7474
  %7494 = vmatpush.xpose.msra.mxu0 %v7472
  %7495 = vmatpush.xpose.msra.mxu0 %v7470
  %7496 = vmatpush.xpose.msra.mxu0 %v7468
  %7497 = vmatpush.xpose.msra.mxu0 %v7466
  %7498 = vmatpush.xpose.msra.mxu0 %v7464
  %7499 = vmatpush.xpose.msra.mxu0 %v7462
  %7500 = vmatmul.f32.gmra.mxu0 %v7440
  %v7501 = vpop.f32.mrf.mxu0
  %v7502 = vadd.f32 0.0, %v7501
  %7503 = vmatmul.f32.gmra.mxu0 %v7442
  %v7504 = vpop.f32.mrf.mxu0
  %v7505 = vadd.f32 0.0, %v7504
  %7506 = vmatmul.f32.gmra.mxu0 %v7444
  %v7507 = vpop.f32.mrf.mxu0
  %v7508 = vadd.f32 0.0, %v7507
  %7509 = vmatmul.f32.gmra.mxu0 %v7446
  %v7510 = vpop.f32.mrf.mxu0
  %v7511 = vadd.f32 0.0, %v7510
  %7512 = vmatmul.f32.gmra.mxu0 %v7448
  %v7513 = vpop.f32.mrf.mxu0
  %v7514 = vadd.f32 0.0, %v7513
  %7515 = vmatmul.f32.gmra.mxu0 %v7450
  %v7516 = vpop.f32.mrf.mxu0
  %v7517 = vadd.f32 0.0, %v7516
  %7518 = vmatmul.f32.gmra.mxu0 %v7452
  %v7519 = vpop.f32.mrf.mxu0
  %v7520 = vadd.f32 0.0, %v7519
  %7521 = vmatmul.f32.gmra.mxu0 %v7454
  %v7522 = vpop.f32.mrf.mxu0
  %v7523 = vadd.f32 0.0, %v7522
  %7524 = vmatmul.f32.gmra.mxu0 %v7456
  %v7525 = vpop.f32.mrf.mxu0
  %v7526 = vadd.f32 0.0, %v7525
  %7527 = vmatmul.f32.gmra.mxu0 %v7458
  %v7528 = vpop.f32.mrf.mxu0
  %v7529 = vadd.f32 0.0, %v7528
  %7530 = vmatmul.f32.gmra.mxu0 %v7460
  %v7531 = vpop.f32.mrf.mxu0
  %v7532 = vadd.f32 0.0, %v7531
  %7533 = vdwg.mxu0
  %v7534 = vsel %vm39, %v7502, -1e+30
  %v7535 = vsel %vm40, %v7505, -1e+30
  %v7536 = vsel %vm41, %v7508, -1e+30
  %v7537 = vsel %vm42, %v7511, -1e+30
  %v7538 = vsel %vm43, %v7514, -1e+30
  %v7539 = vsel %vm44, %v7517, -1e+30
  %v7540 = vsel %vm45, %v7520, -1e+30
  %v7541 = vsel %vm46, %v7523, -1e+30
  %v7542 = vsel %vm47, %v7526, -1e+30
  %v7543 = vsel %vm48, %v7529, -1e+30
  %v7544 = vsel %vm49, %v7532, -1e+30
  %v7545 = vsel %vm639, %v7534, -inf
  %7546 = vmax.xlane.f32.xlu0 %v7545
  %v7547 = vpop.xlane.xlu0 %7546
  %v7548 = vsel %vm639, %v7535, -inf
  %7549 = vmax.xlane.f32.xlu0 %v7548
  %v7550 = vpop.xlane.xlu0 %7549
  %v7551 = vsel %vm639, %v7536, -inf
  %7552 = vmax.xlane.f32.xlu0 %v7551
  %v7553 = vpop.xlane.xlu0 %7552
  %v7554 = vsel %vm639, %v7537, -inf
  %7555 = vmax.xlane.f32.xlu0 %v7554
  %v7556 = vpop.xlane.xlu0 %7555
  %v7557 = vsel %vm639, %v7538, -inf
  %7558 = vmax.xlane.f32.xlu0 %v7557
  %v7559 = vpop.xlane.xlu0 %7558
  %v7560 = vsel %vm639, %v7539, -inf
  %7561 = vmax.xlane.f32.xlu0 %v7560
  %v7562 = vpop.xlane.xlu0 %7561
  %v7563 = vsel %vm639, %v7540, -inf
  %7564 = vmax.xlane.f32.xlu0 %v7563
  %v7565 = vpop.xlane.xlu0 %7564
  %v7566 = vsel %vm639, %v7541, -inf
  %7567 = vmax.xlane.f32.xlu0 %v7566
  %v7568 = vpop.xlane.xlu0 %7567
  %v7569 = vsel %vm639, %v7542, -inf
  %7570 = vmax.xlane.f32.xlu0 %v7569
  %v7571 = vpop.xlane.xlu0 %7570
  %v7572 = vsel %vm639, %v7543, -inf
  %7573 = vmax.xlane.f32.xlu0 %v7572
  %v7574 = vpop.xlane.xlu0 %7573
  %v7575 = vsel %vm670, %v7544, -inf
  %7576 = vmax.xlane.f32.xlu0 %v7575
  %v7577 = vpop.xlane.xlu0 %7576
  %v7578 = vsub.f32 %v7534, %v7547
  %v7579 = vsub.f32 %v7535, %v7550
  %v7580 = vsub.f32 %v7536, %v7553
  %v7581 = vsub.f32 %v7537, %v7556
  %v7582 = vsub.f32 %v7538, %v7559
  %v7583 = vsub.f32 %v7539, %v7562
  %v7584 = vsub.f32 %v7540, %v7565
  %v7585 = vsub.f32 %v7541, %v7568
  %v7586 = vsub.f32 %v7542, %v7571
  %v7587 = vsub.f32 %v7543, %v7574
  %v7588 = vsub.f32 %v7544, %v7577
  %v7589 = vpack.c.bf16 %v7579, %v7578
  %v7590 = vpack.c.bf16 %v7581, %v7580
  %v7591 = vpack.c.bf16 %v7583, %v7582
  %v7592 = vpack.c.bf16 %v7585, %v7584
  %v7593 = vpack.c.bf16 %v7587, %v7586
  %v7594 = vpack.c.bf16 %v7588, %v7588
  %v7595 = vunpack.c.l.bf16 %v7589
  %v7596 = vunpack.c.h.bf16 %v7589
  %v7597 = vunpack.c.l.bf16 %v7590
  %v7598 = vunpack.c.h.bf16 %v7590
  %v7599 = vunpack.c.l.bf16 %v7591
  %v7600 = vunpack.c.h.bf16 %v7591
  %v7601 = vunpack.c.l.bf16 %v7592
  %v7602 = vunpack.c.h.bf16 %v7592
  %v7603 = vunpack.c.l.bf16 %v7593
  %v7604 = vunpack.c.h.bf16 %v7593
  %v7605 = vunpack.c.l.bf16 %v7594
  %v7606 = vmul.f32 %v7595, 1.442695
  %v7607 = vpow.pop %v7606
  %v7608 = vmul.f32 %v7596, 1.442695
  %v7609 = vpow.pop %v7608
  %v7610 = vmul.f32 %v7597, 1.442695
  %v7611 = vpow.pop %v7610
  %v7612 = vmul.f32 %v7598, 1.442695
  %v7613 = vpow.pop %v7612
  %v7614 = vmul.f32 %v7599, 1.442695
  %v7615 = vpow.pop %v7614
  %v7616 = vmul.f32 %v7600, 1.442695
  %v7617 = vpow.pop %v7616
  %v7618 = vmul.f32 %v7601, 1.442695
  %v7619 = vpow.pop %v7618
  %v7620 = vmul.f32 %v7602, 1.442695
  %v7621 = vpow.pop %v7620
  %v7622 = vmul.f32 %v7603, 1.442695
  %v7623 = vpow.pop %v7622
  %v7624 = vmul.f32 %v7604, 1.442695
  %v7625 = vpow.pop %v7624
  %v7626 = vmul.f32 %v7605, 1.442695
  %v7627 = vpow.pop %v7626
  %v7628 = vpack.c.bf16 %v7609, %v7607
  %v7629 = vpack.c.bf16 %v7613, %v7611
  %v7630 = vpack.c.bf16 %v7617, %v7615
  %v7631 = vpack.c.bf16 %v7621, %v7619
  %v7632 = vpack.c.bf16 %v7625, %v7623
  %v7633 = vpack.c.bf16 %v7627, %v7627
  %v7634 = vunpack.c.l.bf16 %v7628
  %v7635 = vunpack.c.h.bf16 %v7628
  %v7636 = vunpack.c.l.bf16 %v7629
  %v7637 = vunpack.c.h.bf16 %v7629
  %v7638 = vunpack.c.l.bf16 %v7630
  %v7639 = vunpack.c.h.bf16 %v7630
  %v7640 = vunpack.c.l.bf16 %v7631
  %v7641 = vunpack.c.h.bf16 %v7631
  %v7642 = vunpack.c.l.bf16 %v7632
  %v7643 = vunpack.c.h.bf16 %v7632
  %v7644 = vunpack.c.l.bf16 %v7633
  %v7645 = vsel %vm639, %v7634, 0.0
  %7646 = vadd.xlane.f32.xlu0 %v7645
  %v7647 = vpop.xlane.xlu0 %7646
  %v7648 = vsel %vm639, %v7635, 0.0
  %7649 = vadd.xlane.f32.xlu0 %v7648
  %v7650 = vpop.xlane.xlu0 %7649
  %v7651 = vsel %vm639, %v7636, 0.0
  %7652 = vadd.xlane.f32.xlu0 %v7651
  %v7653 = vpop.xlane.xlu0 %7652
  %v7654 = vsel %vm639, %v7637, 0.0
  %7655 = vadd.xlane.f32.xlu0 %v7654
  %v7656 = vpop.xlane.xlu0 %7655
  %v7657 = vsel %vm639, %v7638, 0.0
  %7658 = vadd.xlane.f32.xlu0 %v7657
  %v7659 = vpop.xlane.xlu0 %7658
  %v7660 = vsel %vm639, %v7639, 0.0
  %7661 = vadd.xlane.f32.xlu0 %v7660
  %v7662 = vpop.xlane.xlu0 %7661
  %v7663 = vsel %vm639, %v7640, 0.0
  %7664 = vadd.xlane.f32.xlu0 %v7663
  %v7665 = vpop.xlane.xlu0 %7664
  %v7666 = vsel %vm639, %v7641, 0.0
  %7667 = vadd.xlane.f32.xlu0 %v7666
  %v7668 = vpop.xlane.xlu0 %7667
  %v7669 = vsel %vm639, %v7642, 0.0
  %7670 = vadd.xlane.f32.xlu0 %v7669
  %v7671 = vpop.xlane.xlu0 %7670
  %v7672 = vsel %vm639, %v7643, 0.0
  %7673 = vadd.xlane.f32.xlu0 %v7672
  %v7674 = vpop.xlane.xlu0 %7673
  %v7675 = vsel %vm670, %v7644, 0.0
  %7676 = vadd.xlane.f32.xlu0 %v7675
  %v7677 = vpop.xlane.xlu0 %7676
  %v7678 = vrcp.pop %v7647
  %v7679 = vrcp.pop %v7650
  %v7680 = vrcp.pop %v7653
  %v7681 = vrcp.pop %v7656
  %v7682 = vrcp.pop %v7659
  %v7683 = vrcp.pop %v7662
  %v7684 = vrcp.pop %v7665
  %v7685 = vrcp.pop %v7668
  %v7686 = vrcp.pop %v7671
  %v7687 = vrcp.pop %v7674
  %v7688 = vrcp.pop %v7677
  %7689 = vrot.lane.b32.xlu0 %v7304, 96
  %v7690 = vpop.permute.xlu0 %7689
  %7691 = vrot.lane.b32.xlu0 %v7305, 96
  %v7692 = vpop.permute.xlu0 %7691
  %7693 = vrot.lane.b32.xlu0 %v7306, 96
  %v7694 = vpop.permute.xlu0 %7693
  %7695 = vrot.lane.b32.xlu0 %v7307, 96
  %v7696 = vpop.permute.xlu0 %7695
  %7697 = vrot.lane.b32.xlu0 %v7308, 96
  %v7698 = vpop.permute.xlu0 %7697
  %7699 = vrot.lane.b32.xlu0 %v7309, 96
  %v7700 = vpop.permute.xlu0 %7699
  %v7707 = vsel %vm639, %v7628, 0
  %v7710 = vsel %vm639, %v7629, 0
  %v7713 = vsel %vm639, %v7630, 0
  %v7716 = vsel %vm639, %v7631, 0
  %v7719 = vsel %vm639, %v7632, 0
  %v7722 = vsel %vm639, %v7633, 0
  %v7725 = vand.u32 %v7700, %v850
  %7727 = vmatpush.bf16.msra.mxu0 0
  %7728 = vmatpush.bf16.msra.mxu0 0
  %7729 = vmatpush.bf16.msra.mxu0 %v7725
  %7730 = vmatpush.bf16.msra.mxu0 %v7698
  %7731 = vmatpush.bf16.msra.mxu0 %v7696
  %7732 = vmatpush.bf16.msra.mxu0 %v7694
  %7733 = vmatpush.bf16.msra.mxu0 %v7692
  %7734 = vmatpush.bf16.msra.mxu0 %v7690
  %7735 = vmatmul.bf16.gmra.mxu0 %v7707
  %v7736 = vpop.f32.mrf.mxu0
  %v7737 = vadd.f32 0.0, %v7736
  %v7738 = vpop.f32.mrf.mxu0
  %v7739 = vadd.f32 0.0, %v7738
  %7740 = vmatmul.bf16.gmra.mxu0 %v7710
  %v7741 = vpop.f32.mrf.mxu0
  %v7742 = vadd.f32 0.0, %v7741
  %v7743 = vpop.f32.mrf.mxu0
  %v7744 = vadd.f32 0.0, %v7743
  %7745 = vmatmul.bf16.gmra.mxu0 %v7713
  %v7746 = vpop.f32.mrf.mxu0
  %v7747 = vadd.f32 0.0, %v7746
  %v7748 = vpop.f32.mrf.mxu0
  %v7749 = vadd.f32 0.0, %v7748
  %7750 = vmatmul.bf16.gmra.mxu0 %v7716
  %v7751 = vpop.f32.mrf.mxu0
  %v7752 = vadd.f32 0.0, %v7751
  %v7753 = vpop.f32.mrf.mxu0
  %v7754 = vadd.f32 0.0, %v7753
  %7755 = vmatmul.bf16.gmra.mxu0 %v7719
  %v7756 = vpop.f32.mrf.mxu0
  %v7757 = vadd.f32 0.0, %v7756
  %v7758 = vpop.f32.mrf.mxu0
  %v7759 = vadd.f32 0.0, %v7758
  %7760 = vmatmul.bf16.gmra.mxu0 %v7722
  %v7761 = vpop.f32.mrf.mxu0
  %v7762 = vadd.f32 0.0, %v7761
  %v7763 = vpop.f32.mrf.mxu0
  %7764 = vdwg.mxu0
  %v7765 = vmul.f32 %v7737, %v7678
  %v7766 = vmul.f32 %v7739, %v7679
  %v7767 = vmul.f32 %v7742, %v7680
  %v7768 = vmul.f32 %v7744, %v7681
  %v7769 = vmul.f32 %v7747, %v7682
  %v7770 = vmul.f32 %v7749, %v7683
  %v7771 = vmul.f32 %v7752, %v7684
  %v7772 = vmul.f32 %v7754, %v7685
  %v7773 = vmul.f32 %v7757, %v7686
  %v7774 = vmul.f32 %v7759, %v7687
  %v7775 = vmul.f32 %v7762, %v7688
  %v7776 = vadd.f32 %v7385, %v7765
  %v7777 = vadd.f32 %v7386, %v7766
  %v7778 = vadd.f32 %v7387, %v7767
  %v7779 = vadd.f32 %v7388, %v7768
  %v7780 = vadd.f32 %v7389, %v7769
  %v7781 = vadd.f32 %v7390, %v7770
  %v7782 = vadd.f32 %v7391, %v7771
  %v7783 = vadd.f32 %v7392, %v7772
  %v7784 = vadd.f32 %v7393, %v7773
  %v7785 = vadd.f32 %v7394, %v7774
  %v7786 = vadd.f32 %v7395, %v7775
  %v7787 = vadd.f32 %v5802, %v7776
  %v7788 = vadd.f32 %v5803, %v7777
  %v7789 = vadd.f32 %v5804, %v7778
  %v7790 = vadd.f32 %v5805, %v7779
  %v7791 = vadd.f32 %v5806, %v7780
  %v7792 = vadd.f32 %v5807, %v7781
  %v7793 = vadd.f32 %v5808, %v7782
  %v7794 = vadd.f32 %v5809, %v7783
  %v7795 = vadd.f32 %v5810, %v7784
  %v7796 = vadd.f32 %v5811, %v7785
  %v7797 = vadd.f32 %v5812, %v7786
  %v7798 = vadd.f32 %v7787, %v2092
  %v7799 = vadd.f32 %v7788, %v2092
  %v7800 = vadd.f32 %v7789, %v2092
  %v7801 = vadd.f32 %v7790, %v2092
  %v7802 = vadd.f32 %v7791, %v2092
  %v7803 = vadd.f32 %v7792, %v2092
  %v7804 = vadd.f32 %v7793, %v2092
  %v7805 = vadd.f32 %v7794, %v2092
  %v7806 = vadd.f32 %v7795, %v2092
  %v7807 = vadd.f32 %v7796, %v2092
  %v7808 = vadd.f32 %v7797, %v2092
  %v7809 = vsel %vm88, %v7798, 0.0
  %7810 = vadd.xlane.f32.xlu0 %v7809
  %v7811 = vpop.xlane.xlu0 %7810
  %v7812 = vsel %vm88, %v7799, 0.0
  %7813 = vadd.xlane.f32.xlu0 %v7812
  %v7814 = vpop.xlane.xlu0 %7813
  %v7815 = vsel %vm88, %v7800, 0.0
  %7816 = vadd.xlane.f32.xlu0 %v7815
  %v7817 = vpop.xlane.xlu0 %7816
  %v7818 = vsel %vm88, %v7801, 0.0
  %7819 = vadd.xlane.f32.xlu0 %v7818
  %v7820 = vpop.xlane.xlu0 %7819
  %v7821 = vsel %vm88, %v7802, 0.0
  %7822 = vadd.xlane.f32.xlu0 %v7821
  %v7823 = vpop.xlane.xlu0 %7822
  %v7824 = vsel %vm88, %v7803, 0.0
  %7825 = vadd.xlane.f32.xlu0 %v7824
  %v7826 = vpop.xlane.xlu0 %7825
  %v7827 = vsel %vm88, %v7804, 0.0
  %7828 = vadd.xlane.f32.xlu0 %v7827
  %v7829 = vpop.xlane.xlu0 %7828
  %v7830 = vsel %vm88, %v7805, 0.0
  %7831 = vadd.xlane.f32.xlu0 %v7830
  %v7832 = vpop.xlane.xlu0 %7831
  %v7833 = vsel %vm88, %v7806, 0.0
  %7834 = vadd.xlane.f32.xlu0 %v7833
  %v7835 = vpop.xlane.xlu0 %7834
  %v7836 = vsel %vm88, %v7807, 0.0
  %7837 = vadd.xlane.f32.xlu0 %v7836
  %v7838 = vpop.xlane.xlu0 %7837
  %v7839 = vsel %vm119, %v7808, 0.0
  %7840 = vadd.xlane.f32.xlu0 %v7839
  %v7841 = vpop.xlane.xlu0 %7840
  %v7842 = vmul.f32 %v7811, %v129
  %v7843 = vmul.f32 %v7814, %v129
  %v7844 = vmul.f32 %v7817, %v129
  %v7845 = vmul.f32 %v7820, %v129
  %v7846 = vmul.f32 %v7823, %v129
  %v7847 = vmul.f32 %v7826, %v129
  %v7848 = vmul.f32 %v7829, %v129
  %v7849 = vmul.f32 %v7832, %v129
  %v7850 = vmul.f32 %v7835, %v129
  %v7851 = vmul.f32 %v7838, %v129
  %v7852 = vmul.f32 %v7841, %v129
  %v7853 = vsub.f32 %v7798, %v7842
  %v7854 = vsub.f32 %v7799, %v7843
  %v7855 = vsub.f32 %v7800, %v7844
  %v7856 = vsub.f32 %v7801, %v7845
  %v7857 = vsub.f32 %v7802, %v7846
  %v7858 = vsub.f32 %v7803, %v7847
  %v7859 = vsub.f32 %v7804, %v7848
  %v7860 = vsub.f32 %v7805, %v7849
  %v7861 = vsub.f32 %v7806, %v7850
  %v7862 = vsub.f32 %v7807, %v7851
  %v7863 = vsub.f32 %v7808, %v7852
  %v7864 = vmul.f32 %v7853, %v7853
  %v7865 = vmul.f32 %v7854, %v7854
  %v7866 = vmul.f32 %v7855, %v7855
  %v7867 = vmul.f32 %v7856, %v7856
  %v7868 = vmul.f32 %v7857, %v7857
  %v7869 = vmul.f32 %v7858, %v7858
  %v7870 = vmul.f32 %v7859, %v7859
  %v7871 = vmul.f32 %v7860, %v7860
  %v7872 = vmul.f32 %v7861, %v7861
  %v7873 = vmul.f32 %v7862, %v7862
  %v7874 = vmul.f32 %v7863, %v7863
  %v7875 = vsel %vm88, %v7864, 0.0
  %7876 = vadd.xlane.f32.xlu0 %v7875
  %v7877 = vpop.xlane.xlu0 %7876
  %v7878 = vsel %vm88, %v7865, 0.0
  %7879 = vadd.xlane.f32.xlu0 %v7878
  %v7880 = vpop.xlane.xlu0 %7879
  %v7881 = vsel %vm88, %v7866, 0.0
  %7882 = vadd.xlane.f32.xlu0 %v7881
  %v7883 = vpop.xlane.xlu0 %7882
  %v7884 = vsel %vm88, %v7867, 0.0
  %7885 = vadd.xlane.f32.xlu0 %v7884
  %v7886 = vpop.xlane.xlu0 %7885
  %v7887 = vsel %vm88, %v7868, 0.0
  %7888 = vadd.xlane.f32.xlu0 %v7887
  %v7889 = vpop.xlane.xlu0 %7888
  %v7890 = vsel %vm88, %v7869, 0.0
  %7891 = vadd.xlane.f32.xlu0 %v7890
  %v7892 = vpop.xlane.xlu0 %7891
  %v7893 = vsel %vm88, %v7870, 0.0
  %7894 = vadd.xlane.f32.xlu0 %v7893
  %v7895 = vpop.xlane.xlu0 %7894
  %v7896 = vsel %vm88, %v7871, 0.0
  %7897 = vadd.xlane.f32.xlu0 %v7896
  %v7898 = vpop.xlane.xlu0 %7897
  %v7899 = vsel %vm88, %v7872, 0.0
  %7900 = vadd.xlane.f32.xlu0 %v7899
  %v7901 = vpop.xlane.xlu0 %7900
  %v7902 = vsel %vm88, %v7873, 0.0
  %7903 = vadd.xlane.f32.xlu0 %v7902
  %v7904 = vpop.xlane.xlu0 %7903
  %v7905 = vsel %vm119, %v7874, 0.0
  %7906 = vadd.xlane.f32.xlu0 %v7905
  %v7907 = vpop.xlane.xlu0 %7906
  %v7908 = vmul.f32 %v7877, %v129
  %v7909 = vmul.f32 %v7880, %v129
  %v7910 = vmul.f32 %v7883, %v129
  %v7911 = vmul.f32 %v7886, %v129
  %v7912 = vmul.f32 %v7889, %v129
  %v7913 = vmul.f32 %v7892, %v129
  %v7914 = vmul.f32 %v7895, %v129
  %v7915 = vmul.f32 %v7898, %v129
  %v7916 = vmul.f32 %v7901, %v129
  %v7917 = vmul.f32 %v7904, %v129
  %v7918 = vmul.f32 %v7907, %v129
  %v7919 = vadd.f32 %v7908, 1e-05
  %v7920 = vadd.f32 %v7909, 1e-05
  %v7921 = vadd.f32 %v7910, 1e-05
  %v7922 = vadd.f32 %v7911, 1e-05
  %v7923 = vadd.f32 %v7912, 1e-05
  %v7924 = vadd.f32 %v7913, 1e-05
  %v7925 = vadd.f32 %v7914, 1e-05
  %v7926 = vadd.f32 %v7915, 1e-05
  %v7927 = vadd.f32 %v7916, 1e-05
  %v7928 = vadd.f32 %v7917, 1e-05
  %v7929 = vadd.f32 %v7918, 1e-05
  %v7930 = vrsqrt.pop %v7919
  %v7931 = vmul.f32 %v7930, %v7919
  %v7932 = vmul.f32 %v7931, %v7930
  %v7933 = vmul.f32 0.5, %v7932
  %v7934 = vsub.f32 1.5, %v7933
  %v7935 = vmul.f32 %v7930, %v7934
  %vm7936 = vweird.f32 %v7919
  %vm7937 = vweird.f32 %v7930
  %vm7938 = vmor %vm7936, %vm7937
  %v7939 = vsel %vm7938, %v7930, %v7935
  %v7940 = vrsqrt.pop %v7920
  %v7941 = vmul.f32 %v7940, %v7920
  %v7942 = vmul.f32 %v7941, %v7940
  %v7943 = vmul.f32 0.5, %v7942
  %v7944 = vsub.f32 1.5, %v7943
  %v7945 = vmul.f32 %v7940, %v7944
  %vm7946 = vweird.f32 %v7920
  %vm7947 = vweird.f32 %v7940
  %vm7948 = vmor %vm7946, %vm7947
  %v7949 = vsel %vm7948, %v7940, %v7945
  %v7950 = vrsqrt.pop %v7921
  %v7951 = vmul.f32 %v7950, %v7921
  %v7952 = vmul.f32 %v7951, %v7950
  %v7953 = vmul.f32 0.5, %v7952
  %v7954 = vsub.f32 1.5, %v7953
  %v7955 = vmul.f32 %v7950, %v7954
  %vm7956 = vweird.f32 %v7921
  %vm7957 = vweird.f32 %v7950
  %vm7958 = vmor %vm7956, %vm7957
  %v7959 = vsel %vm7958, %v7950, %v7955
  %v7960 = vrsqrt.pop %v7922
  %v7961 = vmul.f32 %v7960, %v7922
  %v7962 = vmul.f32 %v7961, %v7960
  %v7963 = vmul.f32 0.5, %v7962
  %v7964 = vsub.f32 1.5, %v7963
  %v7965 = vmul.f32 %v7960, %v7964
  %vm7966 = vweird.f32 %v7922
  %vm7967 = vweird.f32 %v7960
  %vm7968 = vmor %vm7966, %vm7967
  %v7969 = vsel %vm7968, %v7960, %v7965
  %v7970 = vrsqrt.pop %v7923
  %v7971 = vmul.f32 %v7970, %v7923
  %v7972 = vmul.f32 %v7971, %v7970
  %v7973 = vmul.f32 0.5, %v7972
  %v7974 = vsub.f32 1.5, %v7973
  %v7975 = vmul.f32 %v7970, %v7974
  %vm7976 = vweird.f32 %v7923
  %vm7977 = vweird.f32 %v7970
  %vm7978 = vmor %vm7976, %vm7977
  %v7979 = vsel %vm7978, %v7970, %v7975
  %v7980 = vrsqrt.pop %v7924
  %v7981 = vmul.f32 %v7980, %v7924
  %v7982 = vmul.f32 %v7981, %v7980
  %v7983 = vmul.f32 0.5, %v7982
  %v7984 = vsub.f32 1.5, %v7983
  %v7985 = vmul.f32 %v7980, %v7984
  %vm7986 = vweird.f32 %v7924
  %vm7987 = vweird.f32 %v7980
  %vm7988 = vmor %vm7986, %vm7987
  %v7989 = vsel %vm7988, %v7980, %v7985
  %v7990 = vrsqrt.pop %v7925
  %v7991 = vmul.f32 %v7990, %v7925
  %v7992 = vmul.f32 %v7991, %v7990
  %v7993 = vmul.f32 0.5, %v7992
  %v7994 = vsub.f32 1.5, %v7993
  %v7995 = vmul.f32 %v7990, %v7994
  %vm7996 = vweird.f32 %v7925
  %vm7997 = vweird.f32 %v7990
  %vm7998 = vmor %vm7996, %vm7997
  %v7999 = vsel %vm7998, %v7990, %v7995
  %v8000 = vrsqrt.pop %v7926
  %v8001 = vmul.f32 %v8000, %v7926
  %v8002 = vmul.f32 %v8001, %v8000
  %v8003 = vmul.f32 0.5, %v8002
  %v8004 = vsub.f32 1.5, %v8003
  %v8005 = vmul.f32 %v8000, %v8004
  %vm8006 = vweird.f32 %v7926
  %vm8007 = vweird.f32 %v8000
  %vm8008 = vmor %vm8006, %vm8007
  %v8009 = vsel %vm8008, %v8000, %v8005
  %v8010 = vrsqrt.pop %v7927
  %v8011 = vmul.f32 %v8010, %v7927
  %v8012 = vmul.f32 %v8011, %v8010
  %v8013 = vmul.f32 0.5, %v8012
  %v8014 = vsub.f32 1.5, %v8013
  %v8015 = vmul.f32 %v8010, %v8014
  %vm8016 = vweird.f32 %v7927
  %vm8017 = vweird.f32 %v8010
  %vm8018 = vmor %vm8016, %vm8017
  %v8019 = vsel %vm8018, %v8010, %v8015
  %v8020 = vrsqrt.pop %v7928
  %v8021 = vmul.f32 %v8020, %v7928
  %v8022 = vmul.f32 %v8021, %v8020
  %v8023 = vmul.f32 0.5, %v8022
  %v8024 = vsub.f32 1.5, %v8023
  %v8025 = vmul.f32 %v8020, %v8024
  %vm8026 = vweird.f32 %v7928
  %vm8027 = vweird.f32 %v8020
  %vm8028 = vmor %vm8026, %vm8027
  %v8029 = vsel %vm8028, %v8020, %v8025
  %v8030 = vrsqrt.pop %v7929
  %v8031 = vmul.f32 %v8030, %v7929
  %v8032 = vmul.f32 %v8031, %v8030
  %v8033 = vmul.f32 0.5, %v8032
  %v8034 = vsub.f32 1.5, %v8033
  %v8035 = vmul.f32 %v8030, %v8034
  %vm8036 = vweird.f32 %v7929
  %vm8037 = vweird.f32 %v8030
  %vm8038 = vmor %vm8036, %vm8037
  %v8039 = vsel %vm8038, %v8030, %v8035
  %v8040 = vmul.f32 %v7853, %v7939
  %v8041 = vmul.f32 %v7854, %v7949
  %v8042 = vmul.f32 %v7855, %v7959
  %v8043 = vmul.f32 %v7856, %v7969
  %v8044 = vmul.f32 %v7857, %v7979
  %v8045 = vmul.f32 %v7858, %v7989
  %v8046 = vmul.f32 %v7859, %v7999
  %v8047 = vmul.f32 %v7860, %v8009
  %v8048 = vmul.f32 %v7861, %v8019
  %v8049 = vmul.f32 %v7862, %v8029
  %v8050 = vmul.f32 %v7863, %v8039
  %v8051 = vmul.f32 %v8040, %v2346
  %v8052 = vmul.f32 %v8041, %v2346
  %v8053 = vmul.f32 %v8042, %v2346
  %v8054 = vmul.f32 %v8043, %v2346
  %v8055 = vmul.f32 %v8044, %v2346
  %v8056 = vmul.f32 %v8045, %v2346
  %v8057 = vmul.f32 %v8046, %v2346
  %v8058 = vmul.f32 %v8047, %v2346
  %v8059 = vmul.f32 %v8048, %v2346
  %v8060 = vmul.f32 %v8049, %v2346
  %v8061 = vmul.f32 %v8050, %v2346
  %v8062 = vadd.f32 %v8051, %v2358
  %v8063 = vadd.f32 %v8052, %v2358
  %v8064 = vadd.f32 %v8053, %v2358
  %v8065 = vadd.f32 %v8054, %v2358
  %v8066 = vadd.f32 %v8055, %v2358
  %v8067 = vadd.f32 %v8056, %v2358
  %v8068 = vadd.f32 %v8057, %v2358
  %v8069 = vadd.f32 %v8058, %v2358
  %v8070 = vadd.f32 %v8059, %v2358
  %v8071 = vadd.f32 %v8060, %v2358
  %v8072 = vadd.f32 %v8061, %v2358
  %v8073 = vpack.c.bf16 %v8063, %v8062
  %v8074 = vpack.c.bf16 %v8065, %v8064
  %v8075 = vpack.c.bf16 %v8067, %v8066
  %v8076 = vpack.c.bf16 %v8069, %v8068
  %v8077 = vpack.c.bf16 %v8071, %v8070
  %v8078 = vpack.c.bf16 %v8072, %v8072
  %v8079 = vld [vmem:[%s4] sm:$0xf]
  %v8080 = vld [vmem:[%s4 + $0x4] sm:$0xf]
  %v8081 = vld [vmem:[%s4 + $0x8] sm:$0xf]
  %v8082 = vld [vmem:[%s4 + $0xc] sm:$0xf]
  %v8087 = vunpack.c.l.b16 %v8079
  %v8088 = vunpack.c.l.b16 %v8080
  %v8089 = vunpack.c.l.b16 %v8081
  %v8090 = vunpack.c.l.b16 %v8082
  %v8091 = vpack.c.b16 %v8088, %v8087
  %v8092 = vpack.c.b16 %v8090, %v8089
  %v8096 = vsel %vm88, %v8073, 0
  %v8099 = vsel %vm88, %v8074, 0
  %v8102 = vsel %vm88, %v8075, 0
  %v8105 = vsel %vm88, %v8076, 0
  %v8108 = vsel %vm88, %v8077, 0
  %v8111 = vsel %vm88, %v8078, 0
  %8113 = vmatpush.bf16.msra.mxu0 0
  %8114 = vmatpush.bf16.msra.mxu0 0
  %8115 = vmatpush.bf16.msra.mxu0 0
  %8116 = vmatpush.bf16.msra.mxu0 0
  %8117 = vmatpush.bf16.msra.mxu0 0
  %8118 = vmatpush.bf16.msra.mxu0 0
  %8119 = vmatpush.bf16.msra.mxu0 %v8092
  %8120 = vmatpush.bf16.msra.mxu0 %v8091
  %8121 = vmatmul.bf16.gmra.mxu0 %v8096
  %v8122 = vpop.f32.mrf.mxu0
  %v8123 = vadd.f32 %v2380, %v8122
  %v8124 = vpop.f32.mrf.mxu0
  %v8125 = vadd.f32 %v2380, %v8124
  %8126 = vmatmul.bf16.gmra.mxu0 %v8099
  %v8127 = vpop.f32.mrf.mxu0
  %v8128 = vadd.f32 %v2380, %v8127
  %v8129 = vpop.f32.mrf.mxu0
  %v8130 = vadd.f32 %v2380, %v8129
  %8131 = vmatmul.bf16.gmra.mxu0 %v8102
  %v8132 = vpop.f32.mrf.mxu0
  %v8133 = vadd.f32 %v2380, %v8132
  %v8134 = vpop.f32.mrf.mxu0
  %v8135 = vadd.f32 %v2380, %v8134
  %8136 = vmatmul.bf16.gmra.mxu0 %v8105
  %v8137 = vpop.f32.mrf.mxu0
  %v8138 = vadd.f32 %v2380, %v8137
  %v8139 = vpop.f32.mrf.mxu0
  %v8140 = vadd.f32 %v2380, %v8139
  %8141 = vmatmul.bf16.gmra.mxu0 %v8108
  %v8142 = vpop.f32.mrf.mxu0
  %v8143 = vadd.f32 %v2380, %v8142
  %v8144 = vpop.f32.mrf.mxu0
  %v8145 = vadd.f32 %v2380, %v8144
  %8146 = vmatmul.bf16.gmra.mxu0 %v8111
  %v8147 = vpop.f32.mrf.mxu0
  %v8148 = vadd.f32 %v2380, %v8147
  %v8149 = vpop.f32.mrf.mxu0
  %8150 = vdwg.mxu0
  %v8151 = vpack.c.bf16 %v8123, %v8123
  %v8152 = vpack.c.bf16 %v8125, %v8125
  %v8153 = vpack.c.bf16 %v8128, %v8128
  %v8154 = vpack.c.bf16 %v8130, %v8130
  %v8155 = vpack.c.bf16 %v8133, %v8133
  %v8156 = vpack.c.bf16 %v8135, %v8135
  %v8157 = vpack.c.bf16 %v8138, %v8138
  %v8158 = vpack.c.bf16 %v8140, %v8140
  %v8159 = vpack.c.bf16 %v8143, %v8143
  %v8160 = vpack.c.bf16 %v8145, %v8145
  %v8161 = vpack.c.bf16 %v8148, %v8148
  %v8162 = vunpack.c.l.bf16 %v8151
  %v8163 = vunpack.c.l.bf16 %v8152
  %v8164 = vunpack.c.l.bf16 %v8153
  %v8165 = vunpack.c.l.bf16 %v8154
  %v8166 = vunpack.c.l.bf16 %v8155
  %v8167 = vunpack.c.l.bf16 %v8156
  %v8168 = vunpack.c.l.bf16 %v8157
  %v8169 = vunpack.c.l.bf16 %v8158
  %v8170 = vunpack.c.l.bf16 %v8159
  %v8171 = vunpack.c.l.bf16 %v8160
  %v8172 = vunpack.c.l.bf16 %v8161
  %v8173 = vmul.f32 %v8162, 1.703125
  %v8174 = vmul.f32 %v8163, 1.703125
  %v8175 = vmul.f32 %v8164, 1.703125
  %v8176 = vmul.f32 %v8165, 1.703125
  %v8177 = vmul.f32 %v8166, 1.703125
  %v8178 = vmul.f32 %v8167, 1.703125
  %v8179 = vmul.f32 %v8168, 1.703125
  %v8180 = vmul.f32 %v8169, 1.703125
  %v8181 = vmul.f32 %v8170, 1.703125
  %v8182 = vmul.f32 %v8171, 1.703125
  %v8183 = vmul.f32 %v8172, 1.703125
  %v8184 = vpack.c.bf16 %v8173, %v8173
  %v8185 = vpack.c.bf16 %v8174, %v8174
  %v8186 = vpack.c.bf16 %v8175, %v8175
  %v8187 = vpack.c.bf16 %v8176, %v8176
  %v8188 = vpack.c.bf16 %v8177, %v8177
  %v8189 = vpack.c.bf16 %v8178, %v8178
  %v8190 = vpack.c.bf16 %v8179, %v8179
  %v8191 = vpack.c.bf16 %v8180, %v8180
  %v8192 = vpack.c.bf16 %v8181, %v8181
  %v8193 = vpack.c.bf16 %v8182, %v8182
  %v8194 = vpack.c.bf16 %v8183, %v8183
  %v8195 = vxor.u32 %v8184, 2147516416
  %v8196 = vxor.u32 %v8185, 2147516416
  %v8197 = vxor.u32 %v8186, 2147516416
  %v8198 = vxor.u32 %v8187, 2147516416
  %v8199 = vxor.u32 %v8188, 2147516416
  %v8200 = vxor.u32 %v8189, 2147516416
  %v8201 = vxor.u32 %v8190, 2147516416
  %v8202 = vxor.u32 %v8191, 2147516416
  %v8203 = vxor.u32 %v8192, 2147516416
  %v8204 = vxor.u32 %v8193, 2147516416
  %v8205 = vxor.u32 %v8194, 2147516416
  %v8206 = vunpack.c.l.bf16 %v8195
  %v8207 = vunpack.c.l.bf16 %v8196
  %v8208 = vunpack.c.l.bf16 %v8197
  %v8209 = vunpack.c.l.bf16 %v8198
  %v8210 = vunpack.c.l.bf16 %v8199
  %v8211 = vunpack.c.l.bf16 %v8200
  %v8212 = vunpack.c.l.bf16 %v8201
  %v8213 = vunpack.c.l.bf16 %v8202
  %v8214 = vunpack.c.l.bf16 %v8203
  %v8215 = vunpack.c.l.bf16 %v8204
  %v8216 = vunpack.c.l.bf16 %v8205
  %v8217 = vmul.f32 %v8206, 1.442695
  %v8218 = vpow.pop %v8217
  %v8219 = vmul.f32 %v8207, 1.442695
  %v8220 = vpow.pop %v8219
  %v8221 = vmul.f32 %v8208, 1.442695
  %v8222 = vpow.pop %v8221
  %v8223 = vmul.f32 %v8209, 1.442695
  %v8224 = vpow.pop %v8223
  %v8225 = vmul.f32 %v8210, 1.442695
  %v8226 = vpow.pop %v8225
  %v8227 = vmul.f32 %v8211, 1.442695
  %v8228 = vpow.pop %v8227
  %v8229 = vmul.f32 %v8212, 1.442695
  %v8230 = vpow.pop %v8229
  %v8231 = vmul.f32 %v8213, 1.442695
  %v8232 = vpow.pop %v8231
  %v8233 = vmul.f32 %v8214, 1.442695
  %v8234 = vpow.pop %v8233
  %v8235 = vmul.f32 %v8215, 1.442695
  %v8236 = vpow.pop %v8235
  %v8237 = vmul.f32 %v8216, 1.442695
  %v8238 = vpow.pop %v8237
  %v8239 = vpack.c.bf16 %v8218, %v8218
  %v8240 = vpack.c.bf16 %v8220, %v8220
  %v8241 = vpack.c.bf16 %v8222, %v8222
  %v8242 = vpack.c.bf16 %v8224, %v8224
  %v8243 = vpack.c.bf16 %v8226, %v8226
  %v8244 = vpack.c.bf16 %v8228, %v8228
  %v8245 = vpack.c.bf16 %v8230, %v8230
  %v8246 = vpack.c.bf16 %v8232, %v8232
  %v8247 = vpack.c.bf16 %v8234, %v8234
  %v8248 = vpack.c.bf16 %v8236, %v8236
  %v8249 = vpack.c.bf16 %v8238, %v8238
  %v8250 = vunpack.c.l.bf16 %v8239
  %v8251 = vunpack.c.l.bf16 %v8240
  %v8252 = vunpack.c.l.bf16 %v8241
  %v8253 = vunpack.c.l.bf16 %v8242
  %v8254 = vunpack.c.l.bf16 %v8243
  %v8255 = vunpack.c.l.bf16 %v8244
  %v8256 = vunpack.c.l.bf16 %v8245
  %v8257 = vunpack.c.l.bf16 %v8246
  %v8258 = vunpack.c.l.bf16 %v8247
  %v8259 = vunpack.c.l.bf16 %v8248
  %v8260 = vunpack.c.l.bf16 %v8249
  %v8261 = vadd.f32 %v8250, 1.0
  %v8262 = vadd.f32 %v8251, 1.0
  %v8263 = vadd.f32 %v8252, 1.0
  %v8264 = vadd.f32 %v8253, 1.0
  %v8265 = vadd.f32 %v8254, 1.0
  %v8266 = vadd.f32 %v8255, 1.0
  %v8267 = vadd.f32 %v8256, 1.0
  %v8268 = vadd.f32 %v8257, 1.0
  %v8269 = vadd.f32 %v8258, 1.0
  %v8270 = vadd.f32 %v8259, 1.0
  %v8271 = vadd.f32 %v8260, 1.0
  %v8272 = vpack.c.bf16 %v8261, %v8261
  %v8273 = vpack.c.bf16 %v8262, %v8262
  %v8274 = vpack.c.bf16 %v8263, %v8263
  %v8275 = vpack.c.bf16 %v8264, %v8264
  %v8276 = vpack.c.bf16 %v8265, %v8265
  %v8277 = vpack.c.bf16 %v8266, %v8266
  %v8278 = vpack.c.bf16 %v8267, %v8267
  %v8279 = vpack.c.bf16 %v8268, %v8268
  %v8280 = vpack.c.bf16 %v8269, %v8269
  %v8281 = vpack.c.bf16 %v8270, %v8270
  %v8282 = vpack.c.bf16 %v8271, %v8271
  %v8283 = vunpack.c.h.bf16 %v8272
  %v8284 = vunpack.c.l.bf16 %v8272
  %v8285 = vrcp.pop %v8283
  %v8286 = vmul.f32 %v2581, %v8285
  %v8287 = vrcp.pop %v8284
  %v8288 = vmul.f32 %v2582, %v8287
  %v8289 = vpack.c.bf16 %v8286, %v8288
  %v8290 = vunpack.c.h.bf16 %v8273
  %v8291 = vunpack.c.l.bf16 %v8273
  %v8292 = vrcp.pop %v8290
  %v8293 = vmul.f32 %v2581, %v8292
  %v8294 = vrcp.pop %v8291
  %v8295 = vmul.f32 %v2582, %v8294
  %v8296 = vpack.c.bf16 %v8293, %v8295
  %v8297 = vunpack.c.h.bf16 %v8274
  %v8298 = vunpack.c.l.bf16 %v8274
  %v8299 = vrcp.pop %v8297
  %v8300 = vmul.f32 %v2581, %v8299
  %v8301 = vrcp.pop %v8298
  %v8302 = vmul.f32 %v2582, %v8301
  %v8303 = vpack.c.bf16 %v8300, %v8302
  %v8304 = vunpack.c.h.bf16 %v8275
  %v8305 = vunpack.c.l.bf16 %v8275
  %v8306 = vrcp.pop %v8304
  %v8307 = vmul.f32 %v2581, %v8306
  %v8308 = vrcp.pop %v8305
  %v8309 = vmul.f32 %v2582, %v8308
  %v8310 = vpack.c.bf16 %v8307, %v8309
  %v8311 = vunpack.c.h.bf16 %v8276
  %v8312 = vunpack.c.l.bf16 %v8276
  %v8313 = vrcp.pop %v8311
  %v8314 = vmul.f32 %v2581, %v8313
  %v8315 = vrcp.pop %v8312
  %v8316 = vmul.f32 %v2582, %v8315
  %v8317 = vpack.c.bf16 %v8314, %v8316
  %v8318 = vunpack.c.h.bf16 %v8277
  %v8319 = vunpack.c.l.bf16 %v8277
  %v8320 = vrcp.pop %v8318
  %v8321 = vmul.f32 %v2581, %v8320
  %v8322 = vrcp.pop %v8319
  %v8323 = vmul.f32 %v2582, %v8322
  %v8324 = vpack.c.bf16 %v8321, %v8323
  %v8325 = vunpack.c.h.bf16 %v8278
  %v8326 = vunpack.c.l.bf16 %v8278
  %v8327 = vrcp.pop %v8325
  %v8328 = vmul.f32 %v2581, %v8327
  %v8329 = vrcp.pop %v8326
  %v8330 = vmul.f32 %v2582, %v8329
  %v8331 = vpack.c.bf16 %v8328, %v8330
  %v8332 = vunpack.c.h.bf16 %v8279
  %v8333 = vunpack.c.l.bf16 %v8279
  %v8334 = vrcp.pop %v8332
  %v8335 = vmul.f32 %v2581, %v8334
  %v8336 = vrcp.pop %v8333
  %v8337 = vmul.f32 %v2582, %v8336
  %v8338 = vpack.c.bf16 %v8335, %v8337
  %v8339 = vunpack.c.h.bf16 %v8280
  %v8340 = vunpack.c.l.bf16 %v8280
  %v8341 = vrcp.pop %v8339
  %v8342 = vmul.f32 %v2581, %v8341
  %v8343 = vrcp.pop %v8340
  %v8344 = vmul.f32 %v2582, %v8343
  %v8345 = vpack.c.bf16 %v8342, %v8344
  %v8346 = vunpack.c.h.bf16 %v8281
  %v8347 = vunpack.c.l.bf16 %v8281
  %v8348 = vrcp.pop %v8346
  %v8349 = vmul.f32 %v2581, %v8348
  %v8350 = vrcp.pop %v8347
  %v8351 = vmul.f32 %v2582, %v8350
  %v8352 = vpack.c.bf16 %v8349, %v8351
  %v8353 = vunpack.c.h.bf16 %v8282
  %v8354 = vunpack.c.l.bf16 %v8282
  %v8355 = vrcp.pop %v8353
  %v8356 = vmul.f32 %v2581, %v8355
  %v8357 = vrcp.pop %v8354
  %v8358 = vmul.f32 %v2582, %v8357
  %v8359 = vpack.c.bf16 %v8356, %v8358
  %v8360 = vunpack.c.l.bf16 %v8289
  %v8361 = vunpack.c.l.bf16 %v8296
  %v8362 = vunpack.c.l.bf16 %v8303
  %v8363 = vunpack.c.l.bf16 %v8310
  %v8364 = vunpack.c.l.bf16 %v8317
  %v8365 = vunpack.c.l.bf16 %v8324
  %v8366 = vunpack.c.l.bf16 %v8331
  %v8367 = vunpack.c.l.bf16 %v8338
  %v8368 = vunpack.c.l.bf16 %v8345
  %v8369 = vunpack.c.l.bf16 %v8352
  %v8370 = vunpack.c.l.bf16 %v8359
  %v8371 = vmul.f32 %v8162, %v8360
  %v8372 = vmul.f32 %v8163, %v8361
  %v8373 = vmul.f32 %v8164, %v8362
  %v8374 = vmul.f32 %v8165, %v8363
  %v8375 = vmul.f32 %v8166, %v8364
  %v8376 = vmul.f32 %v8167, %v8365
  %v8377 = vmul.f32 %v8168, %v8366
  %v8378 = vmul.f32 %v8169, %v8367
  %v8379 = vmul.f32 %v8170, %v8368
  %v8380 = vmul.f32 %v8171, %v8369
  %v8381 = vmul.f32 %v8172, %v8370
  %v8382 = vpack.c.bf16 %v8372, %v8371
  %v8383 = vpack.c.bf16 %v8374, %v8373
  %v8384 = vpack.c.bf16 %v8376, %v8375
  %v8385 = vpack.c.bf16 %v8378, %v8377
  %v8386 = vpack.c.bf16 %v8380, %v8379
  %v8387 = vpack.c.bf16 %v8381, %v8381
  %v8388 = vld [vmem:[%s5] sm:$0xf]
  %v8389 = vld [vmem:[%s5 + $0x4] sm:$0xf]
  %v8390 = vld [vmem:[%s5 + $0x8] sm:$0xf]
  %v8391 = vld [vmem:[%s5 + $0xc] sm:$0xf]
  %v8392 = vld [vmem:[%s5 + $0x10] sm:$0xf]
  %v8393 = vld [vmem:[%s5 + $0x14] sm:$0xf]
  %v8394 = vld [vmem:[%s5 + $0x18] sm:$0xf]
  %v8395 = vld [vmem:[%s5 + $0x1c] sm:$0xf]
  %v8396 = vld [vmem:[%s5 + $0x20] sm:$0xf]
  %v8397 = vld [vmem:[%s5 + $0x24] sm:$0xf]
  %v8398 = vld [vmem:[%s5 + $0x28] sm:$0xf]
  %v8399 = vld [vmem:[%s5 + $0x2c] sm:$0xf]
  %v8400 = vld [vmem:[%s5 + $0x30] sm:$0xf]
  %v8401 = vld [vmem:[%s5 + $0x34] sm:$0xf]
  %v8402 = vld [vmem:[%s5 + $0x38] sm:$0xf]
  %v8403 = vld [vmem:[%s5 + $0x3c] sm:$0xf]
  %v8420 = vunpack.c.l.b16 %v8388
  %v8421 = vunpack.c.l.b16 %v8389
  %v8422 = vunpack.c.l.b16 %v8390
  %v8423 = vunpack.c.l.b16 %v8391
  %v8424 = vunpack.c.l.b16 %v8392
  %v8425 = vunpack.c.l.b16 %v8393
  %v8426 = vunpack.c.l.b16 %v8394
  %v8427 = vunpack.c.l.b16 %v8395
  %v8428 = vunpack.c.l.b16 %v8396
  %v8429 = vunpack.c.l.b16 %v8397
  %v8430 = vunpack.c.l.b16 %v8398
  %v8431 = vunpack.c.l.b16 %v8399
  %v8432 = vunpack.c.l.b16 %v8400
  %v8433 = vunpack.c.l.b16 %v8401
  %v8434 = vunpack.c.l.b16 %v8402
  %v8435 = vunpack.c.l.b16 %v8403
  %v8436 = vpack.c.b16 %v8421, %v8420
  %v8437 = vpack.c.b16 %v8423, %v8422
  %v8438 = vpack.c.b16 %v8425, %v8424
  %v8439 = vpack.c.b16 %v8427, %v8426
  %v8440 = vpack.c.b16 %v8429, %v8428
  %v8441 = vpack.c.b16 %v8431, %v8430
  %v8442 = vpack.c.b16 %v8433, %v8432
  %v8443 = vpack.c.b16 %v8435, %v8434
  %8452 = vmatpush.bf16.msra.mxu0 %v8443
  %8453 = vmatpush.bf16.msra.mxu0 %v8442
  %8454 = vmatpush.bf16.msra.mxu0 %v8441
  %8455 = vmatpush.bf16.msra.mxu0 %v8440
  %8456 = vmatpush.bf16.msra.mxu0 %v8439
  %8457 = vmatpush.bf16.msra.mxu0 %v8438
  %8458 = vmatpush.bf16.msra.mxu0 %v8437
  %8459 = vmatpush.bf16.msra.mxu0 %v8436
  %8460 = vmatmul.bf16.gmra.mxu0 %v8382
  %v8461 = vpop.f32.mrf.mxu0
  %v8462 = vadd.f32 %v2704, %v8461
  %v8463 = vpop.f32.mrf.mxu0
  %v8464 = vadd.f32 %v2704, %v8463
  %8465 = vmatmul.bf16.gmra.mxu0 %v8383
  %v8466 = vpop.f32.mrf.mxu0
  %v8467 = vadd.f32 %v2704, %v8466
  %v8468 = vpop.f32.mrf.mxu0
  %v8469 = vadd.f32 %v2704, %v8468
  %8470 = vmatmul.bf16.gmra.mxu0 %v8384
  %v8471 = vpop.f32.mrf.mxu0
  %v8472 = vadd.f32 %v2704, %v8471
  %v8473 = vpop.f32.mrf.mxu0
  %v8474 = vadd.f32 %v2704, %v8473
  %8475 = vmatmul.bf16.gmra.mxu0 %v8385
  %v8476 = vpop.f32.mrf.mxu0
  %v8477 = vadd.f32 %v2704, %v8476
  %v8478 = vpop.f32.mrf.mxu0
  %v8479 = vadd.f32 %v2704, %v8478
  %8480 = vmatmul.bf16.gmra.mxu0 %v8386
  %v8481 = vpop.f32.mrf.mxu0
  %v8482 = vadd.f32 %v2704, %v8481
  %v8483 = vpop.f32.mrf.mxu0
  %v8484 = vadd.f32 %v2704, %v8483
  %8485 = vmatmul.bf16.gmra.mxu0 %v8387
  %v8486 = vpop.f32.mrf.mxu0
  %v8487 = vadd.f32 %v2704, %v8486
  %v8488 = vpop.f32.mrf.mxu0
  %8489 = vdwg.mxu0
  %v8490 = vadd.f32 %v7798, %v8462
  %v8491 = vadd.f32 %v7799, %v8464
  %v8492 = vadd.f32 %v7800, %v8467
  %v8493 = vadd.f32 %v7801, %v8469
  %v8494 = vadd.f32 %v7802, %v8472
  %v8495 = vadd.f32 %v7803, %v8474
  %v8496 = vadd.f32 %v7804, %v8477
  %v8497 = vadd.f32 %v7805, %v8479
  %v8498 = vadd.f32 %v7806, %v8482
  %v8499 = vadd.f32 %v7807, %v8484
  %v8500 = vadd.f32 %v7808, %v8487
  %v8501 = vsel %vm88, %v8490, 0.0
  %8502 = vadd.xlane.f32.xlu0 %v8501
  %v8503 = vpop.xlane.xlu0 %8502
  %v8504 = vsel %vm88, %v8491, 0.0
  %8505 = vadd.xlane.f32.xlu0 %v8504
  %v8506 = vpop.xlane.xlu0 %8505
  %v8507 = vsel %vm88, %v8492, 0.0
  %8508 = vadd.xlane.f32.xlu0 %v8507
  %v8509 = vpop.xlane.xlu0 %8508
  %v8510 = vsel %vm88, %v8493, 0.0
  %8511 = vadd.xlane.f32.xlu0 %v8510
  %v8512 = vpop.xlane.xlu0 %8511
  %v8513 = vsel %vm88, %v8494, 0.0
  %8514 = vadd.xlane.f32.xlu0 %v8513
  %v8515 = vpop.xlane.xlu0 %8514
  %v8516 = vsel %vm88, %v8495, 0.0
  %8517 = vadd.xlane.f32.xlu0 %v8516
  %v8518 = vpop.xlane.xlu0 %8517
  %v8519 = vsel %vm88, %v8496, 0.0
  %8520 = vadd.xlane.f32.xlu0 %v8519
  %v8521 = vpop.xlane.xlu0 %8520
  %v8522 = vsel %vm88, %v8497, 0.0
  %8523 = vadd.xlane.f32.xlu0 %v8522
  %v8524 = vpop.xlane.xlu0 %8523
  %v8525 = vsel %vm88, %v8498, 0.0
  %8526 = vadd.xlane.f32.xlu0 %v8525
  %v8527 = vpop.xlane.xlu0 %8526
  %v8528 = vsel %vm88, %v8499, 0.0
  %8529 = vadd.xlane.f32.xlu0 %v8528
  %v8530 = vpop.xlane.xlu0 %8529
  %v8531 = vsel %vm119, %v8500, 0.0
  %8532 = vadd.xlane.f32.xlu0 %v8531
  %v8533 = vpop.xlane.xlu0 %8532
  %v8534 = vmul.f32 %v8503, %v129
  %v8535 = vmul.f32 %v8506, %v129
  %v8536 = vmul.f32 %v8509, %v129
  %v8537 = vmul.f32 %v8512, %v129
  %v8538 = vmul.f32 %v8515, %v129
  %v8539 = vmul.f32 %v8518, %v129
  %v8540 = vmul.f32 %v8521, %v129
  %v8541 = vmul.f32 %v8524, %v129
  %v8542 = vmul.f32 %v8527, %v129
  %v8543 = vmul.f32 %v8530, %v129
  %v8544 = vmul.f32 %v8533, %v129
  %v8545 = vsub.f32 %v8490, %v8534
  %v8546 = vsub.f32 %v8491, %v8535
  %v8547 = vsub.f32 %v8492, %v8536
  %v8548 = vsub.f32 %v8493, %v8537
  %v8549 = vsub.f32 %v8494, %v8538
  %v8550 = vsub.f32 %v8495, %v8539
  %v8551 = vsub.f32 %v8496, %v8540
  %v8552 = vsub.f32 %v8497, %v8541
  %v8553 = vsub.f32 %v8498, %v8542
  %v8554 = vsub.f32 %v8499, %v8543
  %v8555 = vsub.f32 %v8500, %v8544
  %v8556 = vmul.f32 %v8545, %v8545
  %v8557 = vmul.f32 %v8546, %v8546
  %v8558 = vmul.f32 %v8547, %v8547
  %v8559 = vmul.f32 %v8548, %v8548
  %v8560 = vmul.f32 %v8549, %v8549
  %v8561 = vmul.f32 %v8550, %v8550
  %v8562 = vmul.f32 %v8551, %v8551
  %v8563 = vmul.f32 %v8552, %v8552
  %v8564 = vmul.f32 %v8553, %v8553
  %v8565 = vmul.f32 %v8554, %v8554
  %v8566 = vmul.f32 %v8555, %v8555
  %v8567 = vsel %vm88, %v8556, 0.0
  %8568 = vadd.xlane.f32.xlu0 %v8567
  %v8569 = vpop.xlane.xlu0 %8568
  %v8570 = vsel %vm88, %v8557, 0.0
  %8571 = vadd.xlane.f32.xlu0 %v8570
  %v8572 = vpop.xlane.xlu0 %8571
  %v8573 = vsel %vm88, %v8558, 0.0
  %8574 = vadd.xlane.f32.xlu0 %v8573
  %v8575 = vpop.xlane.xlu0 %8574
  %v8576 = vsel %vm88, %v8559, 0.0
  %8577 = vadd.xlane.f32.xlu0 %v8576
  %v8578 = vpop.xlane.xlu0 %8577
  %v8579 = vsel %vm88, %v8560, 0.0
  %8580 = vadd.xlane.f32.xlu0 %v8579
  %v8581 = vpop.xlane.xlu0 %8580
  %v8582 = vsel %vm88, %v8561, 0.0
  %8583 = vadd.xlane.f32.xlu0 %v8582
  %v8584 = vpop.xlane.xlu0 %8583
  %v8585 = vsel %vm88, %v8562, 0.0
  %8586 = vadd.xlane.f32.xlu0 %v8585
  %v8587 = vpop.xlane.xlu0 %8586
  %v8588 = vsel %vm88, %v8563, 0.0
  %8589 = vadd.xlane.f32.xlu0 %v8588
  %v8590 = vpop.xlane.xlu0 %8589
  %v8591 = vsel %vm88, %v8564, 0.0
  %8592 = vadd.xlane.f32.xlu0 %v8591
  %v8593 = vpop.xlane.xlu0 %8592
  %v8594 = vsel %vm88, %v8565, 0.0
  %8595 = vadd.xlane.f32.xlu0 %v8594
  %v8596 = vpop.xlane.xlu0 %8595
  %v8597 = vsel %vm119, %v8566, 0.0
  %8598 = vadd.xlane.f32.xlu0 %v8597
  %v8599 = vpop.xlane.xlu0 %8598
  %v8600 = vmul.f32 %v8569, %v129
  %v8601 = vmul.f32 %v8572, %v129
  %v8602 = vmul.f32 %v8575, %v129
  %v8603 = vmul.f32 %v8578, %v129
  %v8604 = vmul.f32 %v8581, %v129
  %v8605 = vmul.f32 %v8584, %v129
  %v8606 = vmul.f32 %v8587, %v129
  %v8607 = vmul.f32 %v8590, %v129
  %v8608 = vmul.f32 %v8593, %v129
  %v8609 = vmul.f32 %v8596, %v129
  %v8610 = vmul.f32 %v8599, %v129
  %v8611 = vadd.f32 %v8600, 1e-05
  %v8612 = vadd.f32 %v8601, 1e-05
  %v8613 = vadd.f32 %v8602, 1e-05
  %v8614 = vadd.f32 %v8603, 1e-05
  %v8615 = vadd.f32 %v8604, 1e-05
  %v8616 = vadd.f32 %v8605, 1e-05
  %v8617 = vadd.f32 %v8606, 1e-05
  %v8618 = vadd.f32 %v8607, 1e-05
  %v8619 = vadd.f32 %v8608, 1e-05
  %v8620 = vadd.f32 %v8609, 1e-05
  %v8621 = vadd.f32 %v8610, 1e-05
  %v8622 = vrsqrt.pop %v8611
  %v8623 = vmul.f32 %v8622, %v8611
  %v8624 = vmul.f32 %v8623, %v8622
  %v8625 = vmul.f32 0.5, %v8624
  %v8626 = vsub.f32 1.5, %v8625
  %v8627 = vmul.f32 %v8622, %v8626
  %vm8628 = vweird.f32 %v8611
  %vm8629 = vweird.f32 %v8622
  %vm8630 = vmor %vm8628, %vm8629
  %v8631 = vsel %vm8630, %v8622, %v8627
  %v8632 = vrsqrt.pop %v8612
  %v8633 = vmul.f32 %v8632, %v8612
  %v8634 = vmul.f32 %v8633, %v8632
  %v8635 = vmul.f32 0.5, %v8634
  %v8636 = vsub.f32 1.5, %v8635
  %v8637 = vmul.f32 %v8632, %v8636
  %vm8638 = vweird.f32 %v8612
  %vm8639 = vweird.f32 %v8632
  %vm8640 = vmor %vm8638, %vm8639
  %v8641 = vsel %vm8640, %v8632, %v8637
  %v8642 = vrsqrt.pop %v8613
  %v8643 = vmul.f32 %v8642, %v8613
  %v8644 = vmul.f32 %v8643, %v8642
  %v8645 = vmul.f32 0.5, %v8644
  %v8646 = vsub.f32 1.5, %v8645
  %v8647 = vmul.f32 %v8642, %v8646
  %vm8648 = vweird.f32 %v8613
  %vm8649 = vweird.f32 %v8642
  %vm8650 = vmor %vm8648, %vm8649
  %v8651 = vsel %vm8650, %v8642, %v8647
  %v8652 = vrsqrt.pop %v8614
  %v8653 = vmul.f32 %v8652, %v8614
  %v8654 = vmul.f32 %v8653, %v8652
  %v8655 = vmul.f32 0.5, %v8654
  %v8656 = vsub.f32 1.5, %v8655
  %v8657 = vmul.f32 %v8652, %v8656
  %vm8658 = vweird.f32 %v8614
  %vm8659 = vweird.f32 %v8652
  %vm8660 = vmor %vm8658, %vm8659
  %v8661 = vsel %vm8660, %v8652, %v8657
  %v8662 = vrsqrt.pop %v8615
  %v8663 = vmul.f32 %v8662, %v8615
  %v8664 = vmul.f32 %v8663, %v8662
  %v8665 = vmul.f32 0.5, %v8664
  %v8666 = vsub.f32 1.5, %v8665
  %v8667 = vmul.f32 %v8662, %v8666
  %vm8668 = vweird.f32 %v8615
  %vm8669 = vweird.f32 %v8662
  %vm8670 = vmor %vm8668, %vm8669
  %v8671 = vsel %vm8670, %v8662, %v8667
  %v8672 = vrsqrt.pop %v8616
  %v8673 = vmul.f32 %v8672, %v8616
  %v8674 = vmul.f32 %v8673, %v8672
  %v8675 = vmul.f32 0.5, %v8674
  %v8676 = vsub.f32 1.5, %v8675
  %v8677 = vmul.f32 %v8672, %v8676
  %vm8678 = vweird.f32 %v8616
  %vm8679 = vweird.f32 %v8672
  %vm8680 = vmor %vm8678, %vm8679
  %v8681 = vsel %vm8680, %v8672, %v8677
  %v8682 = vrsqrt.pop %v8617
  %v8683 = vmul.f32 %v8682, %v8617
  %v8684 = vmul.f32 %v8683, %v8682
  %v8685 = vmul.f32 0.5, %v8684
  %v8686 = vsub.f32 1.5, %v8685
  %v8687 = vmul.f32 %v8682, %v8686
  %vm8688 = vweird.f32 %v8617
  %vm8689 = vweird.f32 %v8682
  %vm8690 = vmor %vm8688, %vm8689
  %v8691 = vsel %vm8690, %v8682, %v8687
  %v8692 = vrsqrt.pop %v8618
  %v8693 = vmul.f32 %v8692, %v8618
  %v8694 = vmul.f32 %v8693, %v8692
  %v8695 = vmul.f32 0.5, %v8694
  %v8696 = vsub.f32 1.5, %v8695
  %v8697 = vmul.f32 %v8692, %v8696
  %vm8698 = vweird.f32 %v8618
  %vm8699 = vweird.f32 %v8692
  %vm8700 = vmor %vm8698, %vm8699
  %v8701 = vsel %vm8700, %v8692, %v8697
  %v8702 = vrsqrt.pop %v8619
  %v8703 = vmul.f32 %v8702, %v8619
  %v8704 = vmul.f32 %v8703, %v8702
  %v8705 = vmul.f32 0.5, %v8704
  %v8706 = vsub.f32 1.5, %v8705
  %v8707 = vmul.f32 %v8702, %v8706
  %vm8708 = vweird.f32 %v8619
  %vm8709 = vweird.f32 %v8702
  %vm8710 = vmor %vm8708, %vm8709
  %v8711 = vsel %vm8710, %v8702, %v8707
  %v8712 = vrsqrt.pop %v8620
  %v8713 = vmul.f32 %v8712, %v8620
  %v8714 = vmul.f32 %v8713, %v8712
  %v8715 = vmul.f32 0.5, %v8714
  %v8716 = vsub.f32 1.5, %v8715
  %v8717 = vmul.f32 %v8712, %v8716
  %vm8718 = vweird.f32 %v8620
  %vm8719 = vweird.f32 %v8712
  %vm8720 = vmor %vm8718, %vm8719
  %v8721 = vsel %vm8720, %v8712, %v8717
  %v8722 = vrsqrt.pop %v8621
  %v8723 = vmul.f32 %v8722, %v8621
  %v8724 = vmul.f32 %v8723, %v8722
  %v8725 = vmul.f32 0.5, %v8724
  %v8726 = vsub.f32 1.5, %v8725
  %v8727 = vmul.f32 %v8722, %v8726
  %vm8728 = vweird.f32 %v8621
  %vm8729 = vweird.f32 %v8722
  %vm8730 = vmor %vm8728, %vm8729
  %v8731 = vsel %vm8730, %v8722, %v8727
  %v8732 = vmul.f32 %v8545, %v8631
  %v8733 = vmul.f32 %v8546, %v8641
  %v8734 = vmul.f32 %v8547, %v8651
  %v8735 = vmul.f32 %v8548, %v8661
  %v8736 = vmul.f32 %v8549, %v8671
  %v8737 = vmul.f32 %v8550, %v8681
  %v8738 = vmul.f32 %v8551, %v8691
  %v8739 = vmul.f32 %v8552, %v8701
  %v8740 = vmul.f32 %v8553, %v8711
  %v8741 = vmul.f32 %v8554, %v8721
  %v8742 = vmul.f32 %v8555, %v8731
  %v8743 = vmul.f32 %v8732, %v3044
  %v8744 = vmul.f32 %v8733, %v3044
  %v8745 = vmul.f32 %v8734, %v3044
  %v8746 = vmul.f32 %v8735, %v3044
  %v8747 = vmul.f32 %v8736, %v3044
  %v8748 = vmul.f32 %v8737, %v3044
  %v8749 = vmul.f32 %v8738, %v3044
  %v8750 = vmul.f32 %v8739, %v3044
  %v8751 = vmul.f32 %v8740, %v3044
  %v8752 = vmul.f32 %v8741, %v3044
  %v8753 = vmul.f32 %v8742, %v3044
  %v8754 = vadd.f32 %v8743, %v3056
  %v8755 = vadd.f32 %v8744, %v3056
  %v8756 = vadd.f32 %v8745, %v3056
  %v8757 = vadd.f32 %v8746, %v3056
  %v8758 = vadd.f32 %v8747, %v3056
  %v8759 = vadd.f32 %v8748, %v3056
  %v8760 = vadd.f32 %v8749, %v3056
  %v8761 = vadd.f32 %v8750, %v3056
  %v8762 = vadd.f32 %v8751, %v3056
  %v8763 = vadd.f32 %v8752, %v3056
  %v8764 = vadd.f32 %v8753, %v3056
  %v8765 = vpack.c.bf16 %v8755, %v8754
  %v8766 = vpack.c.bf16 %v8757, %v8756
  %v8767 = vpack.c.bf16 %v8759, %v8758
  %v8768 = vpack.c.bf16 %v8761, %v8760
  %v8769 = vpack.c.bf16 %v8763, %v8762
  %v8770 = vpack.c.bf16 %v8764, %v8764
  %v8771 = vld [vmem:[%s3074] sm:$0xff]
  %v8772 = vld [vmem:[%s3074 + $0x8] sm:$0xff]
  %v8773 = vld [vmem:[%s3074 + $0x10] sm:$0xff]
  %v8774 = vld [vmem:[%s3074 + $0x18] sm:$0xff]
  %v8779 = vunpack.c.l.b16 %v8771
  %v8780 = vunpack.c.h.b16 %v8771
  %v8781 = vunpack.c.l.b16 %v8772
  %v8782 = vunpack.c.h.b16 %v8772
  %v8783 = vunpack.c.l.b16 %v8773
  %v8784 = vunpack.c.h.b16 %v8773
  %v8785 = vunpack.c.l.b16 %v8774
  %v8786 = vunpack.c.h.b16 %v8774
  %v8787 = vpack.c.b16 %v8781, %v8779
  %v8788 = vpack.c.b16 %v8782, %v8780
  %v8789 = vpack.c.b16 %v8785, %v8783
  %v8790 = vpack.c.b16 %v8786, %v8784
  %v8796 = vsel %vm88, %v8765, 0
  %v8799 = vsel %vm88, %v8766, 0
  %v8802 = vsel %vm88, %v8767, 0
  %v8805 = vsel %vm88, %v8768, 0
  %v8808 = vsel %vm88, %v8769, 0
  %v8811 = vsel %vm88, %v8770, 0
  %8813 = vmatpush.bf16.msra.mxu0 0
  %8814 = vmatpush.bf16.msra.mxu0 0
  %8815 = vmatpush.bf16.msra.mxu0 0
  %8816 = vmatpush.bf16.msra.mxu0 0
  %8817 = vmatpush.bf16.msra.mxu0 0
  %8818 = vmatpush.bf16.msra.mxu0 0
  %8819 = vmatpush.bf16.msra.mxu0 %v8789
  %8820 = vmatpush.bf16.msra.mxu0 %v8787
  %8821 = vmatmul.bf16.gmra.mxu0 %v8796
  %v8822 = vpop.f32.mrf.mxu0
  %v8823 = vadd.f32 %v3079, %v8822
  %v8824 = vpop.f32.mrf.mxu0
  %v8825 = vadd.f32 %v3079, %v8824
  %8826 = vmatmul.bf16.gmra.mxu0 %v8799
  %v8827 = vpop.f32.mrf.mxu0
  %v8828 = vadd.f32 %v3079, %v8827
  %v8829 = vpop.f32.mrf.mxu0
  %v8830 = vadd.f32 %v3079, %v8829
  %8831 = vmatmul.bf16.gmra.mxu0 %v8802
  %v8832 = vpop.f32.mrf.mxu0
  %v8833 = vadd.f32 %v3079, %v8832
  %v8834 = vpop.f32.mrf.mxu0
  %v8835 = vadd.f32 %v3079, %v8834
  %8836 = vmatmul.bf16.gmra.mxu0 %v8805
  %v8837 = vpop.f32.mrf.mxu0
  %v8838 = vadd.f32 %v3079, %v8837
  %v8839 = vpop.f32.mrf.mxu0
  %v8840 = vadd.f32 %v3079, %v8839
  %8841 = vmatmul.bf16.gmra.mxu0 %v8808
  %v8842 = vpop.f32.mrf.mxu0
  %v8843 = vadd.f32 %v3079, %v8842
  %v8844 = vpop.f32.mrf.mxu0
  %v8845 = vadd.f32 %v3079, %v8844
  %8846 = vmatmul.bf16.gmra.mxu0 %v8811
  %v8847 = vpop.f32.mrf.mxu0
  %v8848 = vadd.f32 %v3079, %v8847
  %v8849 = vpop.f32.mrf.mxu0
  %8850 = vdwg.mxu0
  %8851 = vmatpush.bf16.msra.mxu0 0
  %8852 = vmatpush.bf16.msra.mxu0 0
  %8853 = vmatpush.bf16.msra.mxu0 0
  %8854 = vmatpush.bf16.msra.mxu0 0
  %8855 = vmatpush.bf16.msra.mxu0 0
  %8856 = vmatpush.bf16.msra.mxu0 0
  %8857 = vmatpush.bf16.msra.mxu0 %v8790
  %8858 = vmatpush.bf16.msra.mxu0 %v8788
  %8859 = vmatmul.bf16.gmra.mxu0 %v8796
  %v8860 = vpop.f32.mrf.mxu0
  %v8861 = vadd.f32 %v3080, %v8860
  %v8862 = vpop.f32.mrf.mxu0
  %v8863 = vadd.f32 %v3080, %v8862
  %8864 = vmatmul.bf16.gmra.mxu0 %v8799
  %v8865 = vpop.f32.mrf.mxu0
  %v8866 = vadd.f32 %v3080, %v8865
  %v8867 = vpop.f32.mrf.mxu0
  %v8868 = vadd.f32 %v3080, %v8867
  %8869 = vmatmul.bf16.gmra.mxu0 %v8802
  %v8870 = vpop.f32.mrf.mxu0
  %v8871 = vadd.f32 %v3080, %v8870
  %v8872 = vpop.f32.mrf.mxu0
  %v8873 = vadd.f32 %v3080, %v8872
  %8874 = vmatmul.bf16.gmra.mxu0 %v8805
  %v8875 = vpop.f32.mrf.mxu0
  %v8876 = vadd.f32 %v3080, %v8875
  %v8877 = vpop.f32.mrf.mxu0
  %v8878 = vadd.f32 %v3080, %v8877
  %8879 = vmatmul.bf16.gmra.mxu0 %v8808
  %v8880 = vpop.f32.mrf.mxu0
  %v8881 = vadd.f32 %v3080, %v8880
  %v8882 = vpop.f32.mrf.mxu0
  %v8883 = vadd.f32 %v3080, %v8882
  %8884 = vmatmul.bf16.gmra.mxu0 %v8811
  %v8885 = vpop.f32.mrf.mxu0
  %v8886 = vadd.f32 %v3080, %v8885
  %v8887 = vpop.f32.mrf.mxu0
  %8888 = vdwg.mxu0
  %v8889 = vpack.c.bf16 %v8861, %v8823
  %v8890 = vpack.c.bf16 %v8863, %v8825
  %v8891 = vpack.c.bf16 %v8866, %v8828
  %v8892 = vpack.c.bf16 %v8868, %v8830
  %v8893 = vpack.c.bf16 %v8871, %v8833
  %v8894 = vpack.c.bf16 %v8873, %v8835
  %v8895 = vpack.c.bf16 %v8876, %v8838
  %v8896 = vpack.c.bf16 %v8878, %v8840
  %v8897 = vpack.c.bf16 %v8881, %v8843
  %v8898 = vpack.c.bf16 %v8883, %v8845
  %v8899 = vpack.c.bf16 %v8886, %v8848
  %8911 = vrot.lane.b32.xlu0 %v8823, 96
  %v8912 = vpop.permute.xlu0 %8911
  %8913 = vrot.lane.b32.xlu0 %v8825, 96
  %v8914 = vpop.permute.xlu0 %8913
  %8915 = vrot.lane.b32.xlu0 %v8828, 96
  %v8916 = vpop.permute.xlu0 %8915
  %8917 = vrot.lane.b32.xlu0 %v8830, 96
  %v8918 = vpop.permute.xlu0 %8917
  %8919 = vrot.lane.b32.xlu0 %v8833, 96
  %v8920 = vpop.permute.xlu0 %8919
  %8921 = vrot.lane.b32.xlu0 %v8835, 96
  %v8922 = vpop.permute.xlu0 %8921
  %8923 = vrot.lane.b32.xlu0 %v8838, 96
  %v8924 = vpop.permute.xlu0 %8923
  %8925 = vrot.lane.b32.xlu0 %v8840, 96
  %v8926 = vpop.permute.xlu0 %8925
  %8927 = vrot.lane.b32.xlu0 %v8843, 96
  %v8928 = vpop.permute.xlu0 %8927
  %8929 = vrot.lane.b32.xlu0 %v8845, 96
  %v8930 = vpop.permute.xlu0 %8929
  %8931 = vrot.lane.b32.xlu0 %v8848, 96
  %v8932 = vpop.permute.xlu0 %8931
  %v8933 = vsel %vm533, %v8823, 0
  %v8935 = vsel %vm533, %v8825, 0
  %v8937 = vsel %vm533, %v8828, 0
  %v8939 = vsel %vm533, %v8830, 0
  %v8941 = vsel %vm533, %v8833, 0
  %v8943 = vsel %vm533, %v8835, 0
  %v8945 = vsel %vm533, %v8838, 0
  %v8947 = vsel %vm533, %v8840, 0
  %v8949 = vsel %vm533, %v8843, 0
  %v8951 = vsel %vm533, %v8845, 0
  %v8953 = vsel %vm533, %v8848, 0
  %v8955 = vsel %vm533, %v8912, 0
  %v8957 = vsel %vm533, %v8914, 0
  %v8959 = vsel %vm533, %v8916, 0
  %v8961 = vsel %vm533, %v8918, 0
  %v8963 = vsel %vm533, %v8920, 0
  %v8965 = vsel %vm533, %v8922, 0
  %v8967 = vsel %vm533, %v8924, 0
  %v8969 = vsel %vm533, %v8926, 0
  %v8971 = vsel %vm533, %v8928, 0
  %v8973 = vsel %vm533, %v8930, 0
  %v8975 = vsel %vm533, %v8932, 0
  %8977 = vmatpush.xpose.msra.mxu0 0.0
  %8978 = vmatpush.xpose.msra.mxu0 0.0
  %8979 = vmatpush.xpose.msra.mxu0 0.0
  %8980 = vmatpush.xpose.msra.mxu0 0.0
  %8981 = vmatpush.xpose.msra.mxu0 0.0
  %8982 = vmatpush.xpose.msra.mxu0 %v8975
  %8983 = vmatpush.xpose.msra.mxu0 %v8973
  %8984 = vmatpush.xpose.msra.mxu0 %v8971
  %8985 = vmatpush.xpose.msra.mxu0 %v8969
  %8986 = vmatpush.xpose.msra.mxu0 %v8967
  %8987 = vmatpush.xpose.msra.mxu0 %v8965
  %8988 = vmatpush.xpose.msra.mxu0 %v8963
  %8989 = vmatpush.xpose.msra.mxu0 %v8961
  %8990 = vmatpush.xpose.msra.mxu0 %v8959
  %8991 = vmatpush.xpose.msra.mxu0 %v8957
  %8992 = vmatpush.xpose.msra.mxu0 %v8955
  %8993 = vmatmul.f32.gmra.mxu0 %v8933
  %v8994 = vpop.f32.mrf.mxu0
  %v8995 = vadd.f32 0.0, %v8994
  %8996 = vmatmul.f32.gmra.mxu0 %v8935
  %v8997 = vpop.f32.mrf.mxu0
  %v8998 = vadd.f32 0.0, %v8997
  %8999 = vmatmul.f32.gmra.mxu0 %v8937
  %v9000 = vpop.f32.mrf.mxu0
  %v9001 = vadd.f32 0.0, %v9000
  %9002 = vmatmul.f32.gmra.mxu0 %v8939
  %v9003 = vpop.f32.mrf.mxu0
  %v9004 = vadd.f32 0.0, %v9003
  %9005 = vmatmul.f32.gmra.mxu0 %v8941
  %v9006 = vpop.f32.mrf.mxu0
  %v9007 = vadd.f32 0.0, %v9006
  %9008 = vmatmul.f32.gmra.mxu0 %v8943
  %v9009 = vpop.f32.mrf.mxu0
  %v9010 = vadd.f32 0.0, %v9009
  %9011 = vmatmul.f32.gmra.mxu0 %v8945
  %v9012 = vpop.f32.mrf.mxu0
  %v9013 = vadd.f32 0.0, %v9012
  %9014 = vmatmul.f32.gmra.mxu0 %v8947
  %v9015 = vpop.f32.mrf.mxu0
  %v9016 = vadd.f32 0.0, %v9015
  %9017 = vmatmul.f32.gmra.mxu0 %v8949
  %v9018 = vpop.f32.mrf.mxu0
  %v9019 = vadd.f32 0.0, %v9018
  %9020 = vmatmul.f32.gmra.mxu0 %v8951
  %v9021 = vpop.f32.mrf.mxu0
  %v9022 = vadd.f32 0.0, %v9021
  %9023 = vmatmul.f32.gmra.mxu0 %v8953
  %v9024 = vpop.f32.mrf.mxu0
  %v9025 = vadd.f32 0.0, %v9024
  %9026 = vdwg.mxu0
  %v9027 = vsel %vm39, %v8995, -1e+30
  %v9028 = vsel %vm40, %v8998, -1e+30
  %v9029 = vsel %vm41, %v9001, -1e+30
  %v9030 = vsel %vm42, %v9004, -1e+30
  %v9031 = vsel %vm43, %v9007, -1e+30
  %v9032 = vsel %vm44, %v9010, -1e+30
  %v9033 = vsel %vm45, %v9013, -1e+30
  %v9034 = vsel %vm46, %v9016, -1e+30
  %v9035 = vsel %vm47, %v9019, -1e+30
  %v9036 = vsel %vm48, %v9022, -1e+30
  %v9037 = vsel %vm49, %v9025, -1e+30
  %v9038 = vsel %vm639, %v9027, -inf
  %9039 = vmax.xlane.f32.xlu0 %v9038
  %v9040 = vpop.xlane.xlu0 %9039
  %v9041 = vsel %vm639, %v9028, -inf
  %9042 = vmax.xlane.f32.xlu0 %v9041
  %v9043 = vpop.xlane.xlu0 %9042
  %v9044 = vsel %vm639, %v9029, -inf
  %9045 = vmax.xlane.f32.xlu0 %v9044
  %v9046 = vpop.xlane.xlu0 %9045
  %v9047 = vsel %vm639, %v9030, -inf
  %9048 = vmax.xlane.f32.xlu0 %v9047
  %v9049 = vpop.xlane.xlu0 %9048
  %v9050 = vsel %vm639, %v9031, -inf
  %9051 = vmax.xlane.f32.xlu0 %v9050
  %v9052 = vpop.xlane.xlu0 %9051
  %v9053 = vsel %vm639, %v9032, -inf
  %9054 = vmax.xlane.f32.xlu0 %v9053
  %v9055 = vpop.xlane.xlu0 %9054
  %v9056 = vsel %vm639, %v9033, -inf
  %9057 = vmax.xlane.f32.xlu0 %v9056
  %v9058 = vpop.xlane.xlu0 %9057
  %v9059 = vsel %vm639, %v9034, -inf
  %9060 = vmax.xlane.f32.xlu0 %v9059
  %v9061 = vpop.xlane.xlu0 %9060
  %v9062 = vsel %vm639, %v9035, -inf
  %9063 = vmax.xlane.f32.xlu0 %v9062
  %v9064 = vpop.xlane.xlu0 %9063
  %v9065 = vsel %vm639, %v9036, -inf
  %9066 = vmax.xlane.f32.xlu0 %v9065
  %v9067 = vpop.xlane.xlu0 %9066
  %v9068 = vsel %vm670, %v9037, -inf
  %9069 = vmax.xlane.f32.xlu0 %v9068
  %v9070 = vpop.xlane.xlu0 %9069
  %v9071 = vsub.f32 %v9027, %v9040
  %v9072 = vsub.f32 %v9028, %v9043
  %v9073 = vsub.f32 %v9029, %v9046
  %v9074 = vsub.f32 %v9030, %v9049
  %v9075 = vsub.f32 %v9031, %v9052
  %v9076 = vsub.f32 %v9032, %v9055
  %v9077 = vsub.f32 %v9033, %v9058
  %v9078 = vsub.f32 %v9034, %v9061
  %v9079 = vsub.f32 %v9035, %v9064
  %v9080 = vsub.f32 %v9036, %v9067
  %v9081 = vsub.f32 %v9037, %v9070
  %v9082 = vpack.c.bf16 %v9072, %v9071
  %v9083 = vpack.c.bf16 %v9074, %v9073
  %v9084 = vpack.c.bf16 %v9076, %v9075
  %v9085 = vpack.c.bf16 %v9078, %v9077
  %v9086 = vpack.c.bf16 %v9080, %v9079
  %v9087 = vpack.c.bf16 %v9081, %v9081
  %v9088 = vunpack.c.l.bf16 %v9082
  %v9089 = vunpack.c.h.bf16 %v9082
  %v9090 = vunpack.c.l.bf16 %v9083
  %v9091 = vunpack.c.h.bf16 %v9083
  %v9092 = vunpack.c.l.bf16 %v9084
  %v9093 = vunpack.c.h.bf16 %v9084
  %v9094 = vunpack.c.l.bf16 %v9085
  %v9095 = vunpack.c.h.bf16 %v9085
  %v9096 = vunpack.c.l.bf16 %v9086
  %v9097 = vunpack.c.h.bf16 %v9086
  %v9098 = vunpack.c.l.bf16 %v9087
  %v9099 = vmul.f32 %v9088, 1.442695
  %v9100 = vpow.pop %v9099
  %v9101 = vmul.f32 %v9089, 1.442695
  %v9102 = vpow.pop %v9101
  %v9103 = vmul.f32 %v9090, 1.442695
  %v9104 = vpow.pop %v9103
  %v9105 = vmul.f32 %v9091, 1.442695
  %v9106 = vpow.pop %v9105
  %v9107 = vmul.f32 %v9092, 1.442695
  %v9108 = vpow.pop %v9107
  %v9109 = vmul.f32 %v9093, 1.442695
  %v9110 = vpow.pop %v9109
  %v9111 = vmul.f32 %v9094, 1.442695
  %v9112 = vpow.pop %v9111
  %v9113 = vmul.f32 %v9095, 1.442695
  %v9114 = vpow.pop %v9113
  %v9115 = vmul.f32 %v9096, 1.442695
  %v9116 = vpow.pop %v9115
  %v9117 = vmul.f32 %v9097, 1.442695
  %v9118 = vpow.pop %v9117
  %v9119 = vmul.f32 %v9098, 1.442695
  %v9120 = vpow.pop %v9119
  %v9121 = vpack.c.bf16 %v9102, %v9100
  %v9122 = vpack.c.bf16 %v9106, %v9104
  %v9123 = vpack.c.bf16 %v9110, %v9108
  %v9124 = vpack.c.bf16 %v9114, %v9112
  %v9125 = vpack.c.bf16 %v9118, %v9116
  %v9126 = vpack.c.bf16 %v9120, %v9120
  %v9127 = vunpack.c.l.bf16 %v9121
  %v9128 = vunpack.c.h.bf16 %v9121
  %v9129 = vunpack.c.l.bf16 %v9122
  %v9130 = vunpack.c.h.bf16 %v9122
  %v9131 = vunpack.c.l.bf16 %v9123
  %v9132 = vunpack.c.h.bf16 %v9123
  %v9133 = vunpack.c.l.bf16 %v9124
  %v9134 = vunpack.c.h.bf16 %v9124
  %v9135 = vunpack.c.l.bf16 %v9125
  %v9136 = vunpack.c.h.bf16 %v9125
  %v9137 = vunpack.c.l.bf16 %v9126
  %v9138 = vsel %vm639, %v9127, 0.0
  %9139 = vadd.xlane.f32.xlu0 %v9138
  %v9140 = vpop.xlane.xlu0 %9139
  %v9141 = vsel %vm639, %v9128, 0.0
  %9142 = vadd.xlane.f32.xlu0 %v9141
  %v9143 = vpop.xlane.xlu0 %9142
  %v9144 = vsel %vm639, %v9129, 0.0
  %9145 = vadd.xlane.f32.xlu0 %v9144
  %v9146 = vpop.xlane.xlu0 %9145
  %v9147 = vsel %vm639, %v9130, 0.0
  %9148 = vadd.xlane.f32.xlu0 %v9147
  %v9149 = vpop.xlane.xlu0 %9148
  %v9150 = vsel %vm639, %v9131, 0.0
  %9151 = vadd.xlane.f32.xlu0 %v9150
  %v9152 = vpop.xlane.xlu0 %9151
  %v9153 = vsel %vm639, %v9132, 0.0
  %9154 = vadd.xlane.f32.xlu0 %v9153
  %v9155 = vpop.xlane.xlu0 %9154
  %v9156 = vsel %vm639, %v9133, 0.0
  %9157 = vadd.xlane.f32.xlu0 %v9156
  %v9158 = vpop.xlane.xlu0 %9157
  %v9159 = vsel %vm639, %v9134, 0.0
  %9160 = vadd.xlane.f32.xlu0 %v9159
  %v9161 = vpop.xlane.xlu0 %9160
  %v9162 = vsel %vm639, %v9135, 0.0
  %9163 = vadd.xlane.f32.xlu0 %v9162
  %v9164 = vpop.xlane.xlu0 %9163
  %v9165 = vsel %vm639, %v9136, 0.0
  %9166 = vadd.xlane.f32.xlu0 %v9165
  %v9167 = vpop.xlane.xlu0 %9166
  %v9168 = vsel %vm670, %v9137, 0.0
  %9169 = vadd.xlane.f32.xlu0 %v9168
  %v9170 = vpop.xlane.xlu0 %9169
  %v9171 = vrcp.pop %v9140
  %v9172 = vrcp.pop %v9143
  %v9173 = vrcp.pop %v9146
  %v9174 = vrcp.pop %v9149
  %v9175 = vrcp.pop %v9152
  %v9176 = vrcp.pop %v9155
  %v9177 = vrcp.pop %v9158
  %v9178 = vrcp.pop %v9161
  %v9179 = vrcp.pop %v9164
  %v9180 = vrcp.pop %v9167
  %v9181 = vrcp.pop %v9170
  %v9193 = vunpack.c.l.b16 %v8889
  %v9194 = vunpack.c.l.b16 %v8890
  %v9195 = vunpack.c.l.b16 %v8891
  %v9196 = vunpack.c.l.b16 %v8892
  %v9197 = vunpack.c.l.b16 %v8893
  %v9198 = vunpack.c.l.b16 %v8894
  %v9199 = vunpack.c.l.b16 %v8895
  %v9200 = vunpack.c.l.b16 %v8896
  %v9201 = vunpack.c.l.b16 %v8897
  %v9202 = vunpack.c.l.b16 %v8898
  %v9203 = vunpack.c.l.b16 %v8899
  %v9204 = vpack.c.b16 %v9194, %v9193
  %v9205 = vpack.c.b16 %v9196, %v9195
  %v9206 = vpack.c.b16 %v9198, %v9197
  %v9207 = vpack.c.b16 %v9200, %v9199
  %v9208 = vpack.c.b16 %v9202, %v9201
  %v9209 = vpack.c.b16 %v9203, %v9203
  %9210 = vrot.lane.b32.xlu0 %v9204, 64
  %v9211 = vpop.permute.xlu0 %9210
  %9212 = vrot.lane.b32.xlu0 %v9205, 64
  %v9213 = vpop.permute.xlu0 %9212
  %9214 = vrot.lane.b32.xlu0 %v9206, 64
  %v9215 = vpop.permute.xlu0 %9214
  %9216 = vrot.lane.b32.xlu0 %v9207, 64
  %v9217 = vpop.permute.xlu0 %9216
  %9218 = vrot.lane.b32.xlu0 %v9208, 64
  %v9219 = vpop.permute.xlu0 %9218
  %9220 = vrot.lane.b32.xlu0 %v9209, 64
  %v9221 = vpop.permute.xlu0 %9220
  %v9228 = vsel %vm639, %v9121, 0
  %v9231 = vsel %vm639, %v9122, 0
  %v9234 = vsel %vm639, %v9123, 0
  %v9237 = vsel %vm639, %v9124, 0
  %v9240 = vsel %vm639, %v9125, 0
  %v9243 = vsel %vm639, %v9126, 0
  %v9246 = vand.u32 %v9221, %v850
  %9248 = vmatpush.bf16.msra.mxu0 0
  %9249 = vmatpush.bf16.msra.mxu0 0
  %9250 = vmatpush.bf16.msra.mxu0 %v9246
  %9251 = vmatpush.bf16.msra.mxu0 %v9219
  %9252 = vmatpush.bf16.msra.mxu0 %v9217
  %9253 = vmatpush.bf16.msra.mxu0 %v9215
  %9254 = vmatpush.bf16.msra.mxu0 %v9213
  %9255 = vmatpush.bf16.msra.mxu0 %v9211
  %9256 = vmatmul.bf16.gmra.mxu0 %v9228
  %v9257 = vpop.f32.mrf.mxu0
  %v9258 = vadd.f32 0.0, %v9257
  %v9259 = vpop.f32.mrf.mxu0
  %v9260 = vadd.f32 0.0, %v9259
  %9261 = vmatmul.bf16.gmra.mxu0 %v9231
  %v9262 = vpop.f32.mrf.mxu0
  %v9263 = vadd.f32 0.0, %v9262
  %v9264 = vpop.f32.mrf.mxu0
  %v9265 = vadd.f32 0.0, %v9264
  %9266 = vmatmul.bf16.gmra.mxu0 %v9234
  %v9267 = vpop.f32.mrf.mxu0
  %v9268 = vadd.f32 0.0, %v9267
  %v9269 = vpop.f32.mrf.mxu0
  %v9270 = vadd.f32 0.0, %v9269
  %9271 = vmatmul.bf16.gmra.mxu0 %v9237
  %v9272 = vpop.f32.mrf.mxu0
  %v9273 = vadd.f32 0.0, %v9272
  %v9274 = vpop.f32.mrf.mxu0
  %v9275 = vadd.f32 0.0, %v9274
  %9276 = vmatmul.bf16.gmra.mxu0 %v9240
  %v9277 = vpop.f32.mrf.mxu0
  %v9278 = vadd.f32 0.0, %v9277
  %v9279 = vpop.f32.mrf.mxu0
  %v9280 = vadd.f32 0.0, %v9279
  %9281 = vmatmul.bf16.gmra.mxu0 %v9243
  %v9282 = vpop.f32.mrf.mxu0
  %v9283 = vadd.f32 0.0, %v9282
  %v9284 = vpop.f32.mrf.mxu0
  %9285 = vdwg.mxu0
  %v9286 = vmul.f32 %v9258, %v9171
  %v9287 = vmul.f32 %v9260, %v9172
  %v9288 = vmul.f32 %v9263, %v9173
  %v9289 = vmul.f32 %v9265, %v9174
  %v9290 = vmul.f32 %v9268, %v9175
  %v9291 = vmul.f32 %v9270, %v9176
  %v9292 = vmul.f32 %v9273, %v9177
  %v9293 = vmul.f32 %v9275, %v9178
  %v9294 = vmul.f32 %v9278, %v9179
  %v9295 = vmul.f32 %v9280, %v9180
  %v9296 = vmul.f32 %v9283, %v9181
  %9297 = vrot.lane.b32.xlu0 %v8823, 120
  %v9298 = vpop.permute.xlu0 %9297
  %9299 = vrot.lane.b32.xlu0 %v8825, 120
  %v9300 = vpop.permute.xlu0 %9299
  %9301 = vrot.lane.b32.xlu0 %v8828, 120
  %v9302 = vpop.permute.xlu0 %9301
  %9303 = vrot.lane.b32.xlu0 %v8830, 120
  %v9304 = vpop.permute.xlu0 %9303
  %9305 = vrot.lane.b32.xlu0 %v8833, 120
  %v9306 = vpop.permute.xlu0 %9305
  %9307 = vrot.lane.b32.xlu0 %v8835, 120
  %v9308 = vpop.permute.xlu0 %9307
  %9309 = vrot.lane.b32.xlu0 %v8838, 120
  %v9310 = vpop.permute.xlu0 %9309
  %9311 = vrot.lane.b32.xlu0 %v8840, 120
  %v9312 = vpop.permute.xlu0 %9311
  %9313 = vrot.lane.b32.xlu0 %v8843, 120
  %v9314 = vpop.permute.xlu0 %9313
  %9315 = vrot.lane.b32.xlu0 %v8845, 120
  %v9316 = vpop.permute.xlu0 %9315
  %9317 = vrot.lane.b32.xlu0 %v8848, 120
  %v9318 = vpop.permute.xlu0 %9317
  %9319 = vrot.lane.b32.xlu0 %v8823, 88
  %v9320 = vpop.permute.xlu0 %9319
  %9321 = vrot.lane.b32.xlu0 %v8825, 88
  %v9322 = vpop.permute.xlu0 %9321
  %9323 = vrot.lane.b32.xlu0 %v8828, 88
  %v9324 = vpop.permute.xlu0 %9323
  %9325 = vrot.lane.b32.xlu0 %v8830, 88
  %v9326 = vpop.permute.xlu0 %9325
  %9327 = vrot.lane.b32.xlu0 %v8833, 88
  %v9328 = vpop.permute.xlu0 %9327
  %9329 = vrot.lane.b32.xlu0 %v8835, 88
  %v9330 = vpop.permute.xlu0 %9329
  %9331 = vrot.lane.b32.xlu0 %v8838, 88
  %v9332 = vpop.permute.xlu0 %9331
  %9333 = vrot.lane.b32.xlu0 %v8840, 88
  %v9334 = vpop.permute.xlu0 %9333
  %9335 = vrot.lane.b32.xlu0 %v8843, 88
  %v9336 = vpop.permute.xlu0 %9335
  %9337 = vrot.lane.b32.xlu0 %v8845, 88
  %v9338 = vpop.permute.xlu0 %9337
  %9339 = vrot.lane.b32.xlu0 %v8848, 88
  %v9340 = vpop.permute.xlu0 %9339
  %v9341 = vsel %vm533, %v9298, 0
  %v9343 = vsel %vm533, %v9300, 0
  %v9345 = vsel %vm533, %v9302, 0
  %v9347 = vsel %vm533, %v9304, 0
  %v9349 = vsel %vm533, %v9306, 0
  %v9351 = vsel %vm533, %v9308, 0
  %v9353 = vsel %vm533, %v9310, 0
  %v9355 = vsel %vm533, %v9312, 0
  %v9357 = vsel %vm533, %v9314, 0
  %v9359 = vsel %vm533, %v9316, 0
  %v9361 = vsel %vm533, %v9318, 0
  %v9363 = vsel %vm533, %v9320, 0
  %v9365 = vsel %vm533, %v9322, 0
  %v9367 = vsel %vm533, %v9324, 0
  %v9369 = vsel %vm533, %v9326, 0
  %v9371 = vsel %vm533, %v9328, 0
  %v9373 = vsel %vm533, %v9330, 0
  %v9375 = vsel %vm533, %v9332, 0
  %v9377 = vsel %vm533, %v9334, 0
  %v9379 = vsel %vm533, %v9336, 0
  %v9381 = vsel %vm533, %v9338, 0
  %v9383 = vsel %vm533, %v9340, 0
  %9385 = vmatpush.xpose.msra.mxu0 0.0
  %9386 = vmatpush.xpose.msra.mxu0 0.0
  %9387 = vmatpush.xpose.msra.mxu0 0.0
  %9388 = vmatpush.xpose.msra.mxu0 0.0
  %9389 = vmatpush.xpose.msra.mxu0 0.0
  %9390 = vmatpush.xpose.msra.mxu0 %v9383
  %9391 = vmatpush.xpose.msra.mxu0 %v9381
  %9392 = vmatpush.xpose.msra.mxu0 %v9379
  %9393 = vmatpush.xpose.msra.mxu0 %v9377
  %9394 = vmatpush.xpose.msra.mxu0 %v9375
  %9395 = vmatpush.xpose.msra.mxu0 %v9373
  %9396 = vmatpush.xpose.msra.mxu0 %v9371
  %9397 = vmatpush.xpose.msra.mxu0 %v9369
  %9398 = vmatpush.xpose.msra.mxu0 %v9367
  %9399 = vmatpush.xpose.msra.mxu0 %v9365
  %9400 = vmatpush.xpose.msra.mxu0 %v9363
  %9401 = vmatmul.f32.gmra.mxu0 %v9341
  %v9402 = vpop.f32.mrf.mxu0
  %v9403 = vadd.f32 0.0, %v9402
  %9404 = vmatmul.f32.gmra.mxu0 %v9343
  %v9405 = vpop.f32.mrf.mxu0
  %v9406 = vadd.f32 0.0, %v9405
  %9407 = vmatmul.f32.gmra.mxu0 %v9345
  %v9408 = vpop.f32.mrf.mxu0
  %v9409 = vadd.f32 0.0, %v9408
  %9410 = vmatmul.f32.gmra.mxu0 %v9347
  %v9411 = vpop.f32.mrf.mxu0
  %v9412 = vadd.f32 0.0, %v9411
  %9413 = vmatmul.f32.gmra.mxu0 %v9349
  %v9414 = vpop.f32.mrf.mxu0
  %v9415 = vadd.f32 0.0, %v9414
  %9416 = vmatmul.f32.gmra.mxu0 %v9351
  %v9417 = vpop.f32.mrf.mxu0
  %v9418 = vadd.f32 0.0, %v9417
  %9419 = vmatmul.f32.gmra.mxu0 %v9353
  %v9420 = vpop.f32.mrf.mxu0
  %v9421 = vadd.f32 0.0, %v9420
  %9422 = vmatmul.f32.gmra.mxu0 %v9355
  %v9423 = vpop.f32.mrf.mxu0
  %v9424 = vadd.f32 0.0, %v9423
  %9425 = vmatmul.f32.gmra.mxu0 %v9357
  %v9426 = vpop.f32.mrf.mxu0
  %v9427 = vadd.f32 0.0, %v9426
  %9428 = vmatmul.f32.gmra.mxu0 %v9359
  %v9429 = vpop.f32.mrf.mxu0
  %v9430 = vadd.f32 0.0, %v9429
  %9431 = vmatmul.f32.gmra.mxu0 %v9361
  %v9432 = vpop.f32.mrf.mxu0
  %v9433 = vadd.f32 0.0, %v9432
  %9434 = vdwg.mxu0
  %v9435 = vsel %vm39, %v9403, -1e+30
  %v9436 = vsel %vm40, %v9406, -1e+30
  %v9437 = vsel %vm41, %v9409, -1e+30
  %v9438 = vsel %vm42, %v9412, -1e+30
  %v9439 = vsel %vm43, %v9415, -1e+30
  %v9440 = vsel %vm44, %v9418, -1e+30
  %v9441 = vsel %vm45, %v9421, -1e+30
  %v9442 = vsel %vm46, %v9424, -1e+30
  %v9443 = vsel %vm47, %v9427, -1e+30
  %v9444 = vsel %vm48, %v9430, -1e+30
  %v9445 = vsel %vm49, %v9433, -1e+30
  %v9446 = vsel %vm639, %v9435, -inf
  %9447 = vmax.xlane.f32.xlu0 %v9446
  %v9448 = vpop.xlane.xlu0 %9447
  %v9449 = vsel %vm639, %v9436, -inf
  %9450 = vmax.xlane.f32.xlu0 %v9449
  %v9451 = vpop.xlane.xlu0 %9450
  %v9452 = vsel %vm639, %v9437, -inf
  %9453 = vmax.xlane.f32.xlu0 %v9452
  %v9454 = vpop.xlane.xlu0 %9453
  %v9455 = vsel %vm639, %v9438, -inf
  %9456 = vmax.xlane.f32.xlu0 %v9455
  %v9457 = vpop.xlane.xlu0 %9456
  %v9458 = vsel %vm639, %v9439, -inf
  %9459 = vmax.xlane.f32.xlu0 %v9458
  %v9460 = vpop.xlane.xlu0 %9459
  %v9461 = vsel %vm639, %v9440, -inf
  %9462 = vmax.xlane.f32.xlu0 %v9461
  %v9463 = vpop.xlane.xlu0 %9462
  %v9464 = vsel %vm639, %v9441, -inf
  %9465 = vmax.xlane.f32.xlu0 %v9464
  %v9466 = vpop.xlane.xlu0 %9465
  %v9467 = vsel %vm639, %v9442, -inf
  %9468 = vmax.xlane.f32.xlu0 %v9467
  %v9469 = vpop.xlane.xlu0 %9468
  %v9470 = vsel %vm639, %v9443, -inf
  %9471 = vmax.xlane.f32.xlu0 %v9470
  %v9472 = vpop.xlane.xlu0 %9471
  %v9473 = vsel %vm639, %v9444, -inf
  %9474 = vmax.xlane.f32.xlu0 %v9473
  %v9475 = vpop.xlane.xlu0 %9474
  %v9476 = vsel %vm670, %v9445, -inf
  %9477 = vmax.xlane.f32.xlu0 %v9476
  %v9478 = vpop.xlane.xlu0 %9477
  %v9479 = vsub.f32 %v9435, %v9448
  %v9480 = vsub.f32 %v9436, %v9451
  %v9481 = vsub.f32 %v9437, %v9454
  %v9482 = vsub.f32 %v9438, %v9457
  %v9483 = vsub.f32 %v9439, %v9460
  %v9484 = vsub.f32 %v9440, %v9463
  %v9485 = vsub.f32 %v9441, %v9466
  %v9486 = vsub.f32 %v9442, %v9469
  %v9487 = vsub.f32 %v9443, %v9472
  %v9488 = vsub.f32 %v9444, %v9475
  %v9489 = vsub.f32 %v9445, %v9478
  %v9490 = vpack.c.bf16 %v9480, %v9479
  %v9491 = vpack.c.bf16 %v9482, %v9481
  %v9492 = vpack.c.bf16 %v9484, %v9483
  %v9493 = vpack.c.bf16 %v9486, %v9485
  %v9494 = vpack.c.bf16 %v9488, %v9487
  %v9495 = vpack.c.bf16 %v9489, %v9489
  %v9496 = vunpack.c.l.bf16 %v9490
  %v9497 = vunpack.c.h.bf16 %v9490
  %v9498 = vunpack.c.l.bf16 %v9491
  %v9499 = vunpack.c.h.bf16 %v9491
  %v9500 = vunpack.c.l.bf16 %v9492
  %v9501 = vunpack.c.h.bf16 %v9492
  %v9502 = vunpack.c.l.bf16 %v9493
  %v9503 = vunpack.c.h.bf16 %v9493
  %v9504 = vunpack.c.l.bf16 %v9494
  %v9505 = vunpack.c.h.bf16 %v9494
  %v9506 = vunpack.c.l.bf16 %v9495
  %v9507 = vmul.f32 %v9496, 1.442695
  %v9508 = vpow.pop %v9507
  %v9509 = vmul.f32 %v9497, 1.442695
  %v9510 = vpow.pop %v9509
  %v9511 = vmul.f32 %v9498, 1.442695
  %v9512 = vpow.pop %v9511
  %v9513 = vmul.f32 %v9499, 1.442695
  %v9514 = vpow.pop %v9513
  %v9515 = vmul.f32 %v9500, 1.442695
  %v9516 = vpow.pop %v9515
  %v9517 = vmul.f32 %v9501, 1.442695
  %v9518 = vpow.pop %v9517
  %v9519 = vmul.f32 %v9502, 1.442695
  %v9520 = vpow.pop %v9519
  %v9521 = vmul.f32 %v9503, 1.442695
  %v9522 = vpow.pop %v9521
  %v9523 = vmul.f32 %v9504, 1.442695
  %v9524 = vpow.pop %v9523
  %v9525 = vmul.f32 %v9505, 1.442695
  %v9526 = vpow.pop %v9525
  %v9527 = vmul.f32 %v9506, 1.442695
  %v9528 = vpow.pop %v9527
  %v9529 = vpack.c.bf16 %v9510, %v9508
  %v9530 = vpack.c.bf16 %v9514, %v9512
  %v9531 = vpack.c.bf16 %v9518, %v9516
  %v9532 = vpack.c.bf16 %v9522, %v9520
  %v9533 = vpack.c.bf16 %v9526, %v9524
  %v9534 = vpack.c.bf16 %v9528, %v9528
  %v9535 = vunpack.c.l.bf16 %v9529
  %v9536 = vunpack.c.h.bf16 %v9529
  %v9537 = vunpack.c.l.bf16 %v9530
  %v9538 = vunpack.c.h.bf16 %v9530
  %v9539 = vunpack.c.l.bf16 %v9531
  %v9540 = vunpack.c.h.bf16 %v9531
  %v9541 = vunpack.c.l.bf16 %v9532
  %v9542 = vunpack.c.h.bf16 %v9532
  %v9543 = vunpack.c.l.bf16 %v9533
  %v9544 = vunpack.c.h.bf16 %v9533
  %v9545 = vunpack.c.l.bf16 %v9534
  %v9546 = vsel %vm639, %v9535, 0.0
  %9547 = vadd.xlane.f32.xlu0 %v9546
  %v9548 = vpop.xlane.xlu0 %9547
  %v9549 = vsel %vm639, %v9536, 0.0
  %9550 = vadd.xlane.f32.xlu0 %v9549
  %v9551 = vpop.xlane.xlu0 %9550
  %v9552 = vsel %vm639, %v9537, 0.0
  %9553 = vadd.xlane.f32.xlu0 %v9552
  %v9554 = vpop.xlane.xlu0 %9553
  %v9555 = vsel %vm639, %v9538, 0.0
  %9556 = vadd.xlane.f32.xlu0 %v9555
  %v9557 = vpop.xlane.xlu0 %9556
  %v9558 = vsel %vm639, %v9539, 0.0
  %9559 = vadd.xlane.f32.xlu0 %v9558
  %v9560 = vpop.xlane.xlu0 %9559
  %v9561 = vsel %vm639, %v9540, 0.0
  %9562 = vadd.xlane.f32.xlu0 %v9561
  %v9563 = vpop.xlane.xlu0 %9562
  %v9564 = vsel %vm639, %v9541, 0.0
  %9565 = vadd.xlane.f32.xlu0 %v9564
  %v9566 = vpop.xlane.xlu0 %9565
  %v9567 = vsel %vm639, %v9542, 0.0
  %9568 = vadd.xlane.f32.xlu0 %v9567
  %v9569 = vpop.xlane.xlu0 %9568
  %v9570 = vsel %vm639, %v9543, 0.0
  %9571 = vadd.xlane.f32.xlu0 %v9570
  %v9572 = vpop.xlane.xlu0 %9571
  %v9573 = vsel %vm639, %v9544, 0.0
  %9574 = vadd.xlane.f32.xlu0 %v9573
  %v9575 = vpop.xlane.xlu0 %9574
  %v9576 = vsel %vm670, %v9545, 0.0
  %9577 = vadd.xlane.f32.xlu0 %v9576
  %v9578 = vpop.xlane.xlu0 %9577
  %v9579 = vrcp.pop %v9548
  %v9580 = vrcp.pop %v9551
  %v9581 = vrcp.pop %v9554
  %v9582 = vrcp.pop %v9557
  %v9583 = vrcp.pop %v9560
  %v9584 = vrcp.pop %v9563
  %v9585 = vrcp.pop %v9566
  %v9586 = vrcp.pop %v9569
  %v9587 = vrcp.pop %v9572
  %v9588 = vrcp.pop %v9575
  %v9589 = vrcp.pop %v9578
  %9590 = vrot.lane.b32.xlu0 %v9204, 32
  %v9591 = vpop.permute.xlu0 %9590
  %9592 = vrot.lane.b32.xlu0 %v9205, 32
  %v9593 = vpop.permute.xlu0 %9592
  %9594 = vrot.lane.b32.xlu0 %v9206, 32
  %v9595 = vpop.permute.xlu0 %9594
  %9596 = vrot.lane.b32.xlu0 %v9207, 32
  %v9597 = vpop.permute.xlu0 %9596
  %9598 = vrot.lane.b32.xlu0 %v9208, 32
  %v9599 = vpop.permute.xlu0 %9598
  %9600 = vrot.lane.b32.xlu0 %v9209, 32
  %v9601 = vpop.permute.xlu0 %9600
  %v9608 = vsel %vm639, %v9529, 0
  %v9611 = vsel %vm639, %v9530, 0
  %v9614 = vsel %vm639, %v9531, 0
  %v9617 = vsel %vm639, %v9532, 0
  %v9620 = vsel %vm639, %v9533, 0
  %v9623 = vsel %vm639, %v9534, 0
  %v9626 = vand.u32 %v9601, %v850
  %9628 = vmatpush.bf16.msra.mxu0 0
  %9629 = vmatpush.bf16.msra.mxu0 0
  %9630 = vmatpush.bf16.msra.mxu0 %v9626
  %9631 = vmatpush.bf16.msra.mxu0 %v9599
  %9632 = vmatpush.bf16.msra.mxu0 %v9597
  %9633 = vmatpush.bf16.msra.mxu0 %v9595
  %9634 = vmatpush.bf16.msra.mxu0 %v9593
  %9635 = vmatpush.bf16.msra.mxu0 %v9591
  %9636 = vmatmul.bf16.gmra.mxu0 %v9608
  %v9637 = vpop.f32.mrf.mxu0
  %v9638 = vadd.f32 0.0, %v9637
  %v9639 = vpop.f32.mrf.mxu0
  %v9640 = vadd.f32 0.0, %v9639
  %9641 = vmatmul.bf16.gmra.mxu0 %v9611
  %v9642 = vpop.f32.mrf.mxu0
  %v9643 = vadd.f32 0.0, %v9642
  %v9644 = vpop.f32.mrf.mxu0
  %v9645 = vadd.f32 0.0, %v9644
  %9646 = vmatmul.bf16.gmra.mxu0 %v9614
  %v9647 = vpop.f32.mrf.mxu0
  %v9648 = vadd.f32 0.0, %v9647
  %v9649 = vpop.f32.mrf.mxu0
  %v9650 = vadd.f32 0.0, %v9649
  %9651 = vmatmul.bf16.gmra.mxu0 %v9617
  %v9652 = vpop.f32.mrf.mxu0
  %v9653 = vadd.f32 0.0, %v9652
  %v9654 = vpop.f32.mrf.mxu0
  %v9655 = vadd.f32 0.0, %v9654
  %9656 = vmatmul.bf16.gmra.mxu0 %v9620
  %v9657 = vpop.f32.mrf.mxu0
  %v9658 = vadd.f32 0.0, %v9657
  %v9659 = vpop.f32.mrf.mxu0
  %v9660 = vadd.f32 0.0, %v9659
  %9661 = vmatmul.bf16.gmra.mxu0 %v9623
  %v9662 = vpop.f32.mrf.mxu0
  %v9663 = vadd.f32 0.0, %v9662
  %v9664 = vpop.f32.mrf.mxu0
  %9665 = vdwg.mxu0
  %v9666 = vmul.f32 %v9638, %v9579
  %v9667 = vmul.f32 %v9640, %v9580
  %v9668 = vmul.f32 %v9643, %v9581
  %v9669 = vmul.f32 %v9645, %v9582
  %v9670 = vmul.f32 %v9648, %v9583
  %v9671 = vmul.f32 %v9650, %v9584
  %v9672 = vmul.f32 %v9653, %v9585
  %v9673 = vmul.f32 %v9655, %v9586
  %v9674 = vmul.f32 %v9658, %v9587
  %v9675 = vmul.f32 %v9660, %v9588
  %v9676 = vmul.f32 %v9663, %v9589
  %v9677 = vadd.f32 %v9286, %v9666
  %v9678 = vadd.f32 %v9287, %v9667
  %v9679 = vadd.f32 %v9288, %v9668
  %v9680 = vadd.f32 %v9289, %v9669
  %v9681 = vadd.f32 %v9290, %v9670
  %v9682 = vadd.f32 %v9291, %v9671
  %v9683 = vadd.f32 %v9292, %v9672
  %v9684 = vadd.f32 %v9293, %v9673
  %v9685 = vadd.f32 %v9294, %v9674
  %v9686 = vadd.f32 %v9295, %v9675
  %v9687 = vadd.f32 %v9296, %v9676
  %9688 = vrot.lane.b32.xlu0 %v8823, 112
  %v9689 = vpop.permute.xlu0 %9688
  %9690 = vrot.lane.b32.xlu0 %v8825, 112
  %v9691 = vpop.permute.xlu0 %9690
  %9692 = vrot.lane.b32.xlu0 %v8828, 112
  %v9693 = vpop.permute.xlu0 %9692
  %9694 = vrot.lane.b32.xlu0 %v8830, 112
  %v9695 = vpop.permute.xlu0 %9694
  %9696 = vrot.lane.b32.xlu0 %v8833, 112
  %v9697 = vpop.permute.xlu0 %9696
  %9698 = vrot.lane.b32.xlu0 %v8835, 112
  %v9699 = vpop.permute.xlu0 %9698
  %9700 = vrot.lane.b32.xlu0 %v8838, 112
  %v9701 = vpop.permute.xlu0 %9700
  %9702 = vrot.lane.b32.xlu0 %v8840, 112
  %v9703 = vpop.permute.xlu0 %9702
  %9704 = vrot.lane.b32.xlu0 %v8843, 112
  %v9705 = vpop.permute.xlu0 %9704
  %9706 = vrot.lane.b32.xlu0 %v8845, 112
  %v9707 = vpop.permute.xlu0 %9706
  %9708 = vrot.lane.b32.xlu0 %v8848, 112
  %v9709 = vpop.permute.xlu0 %9708
  %9710 = vrot.lane.b32.xlu0 %v8823, 80
  %v9711 = vpop.permute.xlu0 %9710
  %9712 = vrot.lane.b32.xlu0 %v8825, 80
  %v9713 = vpop.permute.xlu0 %9712
  %9714 = vrot.lane.b32.xlu0 %v8828, 80
  %v9715 = vpop.permute.xlu0 %9714
  %9716 = vrot.lane.b32.xlu0 %v8830, 80
  %v9717 = vpop.permute.xlu0 %9716
  %9718 = vrot.lane.b32.xlu0 %v8833, 80
  %v9719 = vpop.permute.xlu0 %9718
  %9720 = vrot.lane.b32.xlu0 %v8835, 80
  %v9721 = vpop.permute.xlu0 %9720
  %9722 = vrot.lane.b32.xlu0 %v8838, 80
  %v9723 = vpop.permute.xlu0 %9722
  %9724 = vrot.lane.b32.xlu0 %v8840, 80
  %v9725 = vpop.permute.xlu0 %9724
  %9726 = vrot.lane.b32.xlu0 %v8843, 80
  %v9727 = vpop.permute.xlu0 %9726
  %9728 = vrot.lane.b32.xlu0 %v8845, 80
  %v9729 = vpop.permute.xlu0 %9728
  %9730 = vrot.lane.b32.xlu0 %v8848, 80
  %v9731 = vpop.permute.xlu0 %9730
  %v9732 = vsel %vm533, %v9689, 0
  %v9734 = vsel %vm533, %v9691, 0
  %v9736 = vsel %vm533, %v9693, 0
  %v9738 = vsel %vm533, %v9695, 0
  %v9740 = vsel %vm533, %v9697, 0
  %v9742 = vsel %vm533, %v9699, 0
  %v9744 = vsel %vm533, %v9701, 0
  %v9746 = vsel %vm533, %v9703, 0
  %v9748 = vsel %vm533, %v9705, 0
  %v9750 = vsel %vm533, %v9707, 0
  %v9752 = vsel %vm533, %v9709, 0
  %v9754 = vsel %vm533, %v9711, 0
  %v9756 = vsel %vm533, %v9713, 0
  %v9758 = vsel %vm533, %v9715, 0
  %v9760 = vsel %vm533, %v9717, 0
  %v9762 = vsel %vm533, %v9719, 0
  %v9764 = vsel %vm533, %v9721, 0
  %v9766 = vsel %vm533, %v9723, 0
  %v9768 = vsel %vm533, %v9725, 0
  %v9770 = vsel %vm533, %v9727, 0
  %v9772 = vsel %vm533, %v9729, 0
  %v9774 = vsel %vm533, %v9731, 0
  %9776 = vmatpush.xpose.msra.mxu0 0.0
  %9777 = vmatpush.xpose.msra.mxu0 0.0
  %9778 = vmatpush.xpose.msra.mxu0 0.0
  %9779 = vmatpush.xpose.msra.mxu0 0.0
  %9780 = vmatpush.xpose.msra.mxu0 0.0
  %9781 = vmatpush.xpose.msra.mxu0 %v9774
  %9782 = vmatpush.xpose.msra.mxu0 %v9772
  %9783 = vmatpush.xpose.msra.mxu0 %v9770
  %9784 = vmatpush.xpose.msra.mxu0 %v9768
  %9785 = vmatpush.xpose.msra.mxu0 %v9766
  %9786 = vmatpush.xpose.msra.mxu0 %v9764
  %9787 = vmatpush.xpose.msra.mxu0 %v9762
  %9788 = vmatpush.xpose.msra.mxu0 %v9760
  %9789 = vmatpush.xpose.msra.mxu0 %v9758
  %9790 = vmatpush.xpose.msra.mxu0 %v9756
  %9791 = vmatpush.xpose.msra.mxu0 %v9754
  %9792 = vmatmul.f32.gmra.mxu0 %v9732
  %v9793 = vpop.f32.mrf.mxu0
  %v9794 = vadd.f32 0.0, %v9793
  %9795 = vmatmul.f32.gmra.mxu0 %v9734
  %v9796 = vpop.f32.mrf.mxu0
  %v9797 = vadd.f32 0.0, %v9796
  %9798 = vmatmul.f32.gmra.mxu0 %v9736
  %v9799 = vpop.f32.mrf.mxu0
  %v9800 = vadd.f32 0.0, %v9799
  %9801 = vmatmul.f32.gmra.mxu0 %v9738
  %v9802 = vpop.f32.mrf.mxu0
  %v9803 = vadd.f32 0.0, %v9802
  %9804 = vmatmul.f32.gmra.mxu0 %v9740
  %v9805 = vpop.f32.mrf.mxu0
  %v9806 = vadd.f32 0.0, %v9805
  %9807 = vmatmul.f32.gmra.mxu0 %v9742
  %v9808 = vpop.f32.mrf.mxu0
  %v9809 = vadd.f32 0.0, %v9808
  %9810 = vmatmul.f32.gmra.mxu0 %v9744
  %v9811 = vpop.f32.mrf.mxu0
  %v9812 = vadd.f32 0.0, %v9811
  %9813 = vmatmul.f32.gmra.mxu0 %v9746
  %v9814 = vpop.f32.mrf.mxu0
  %v9815 = vadd.f32 0.0, %v9814
  %9816 = vmatmul.f32.gmra.mxu0 %v9748
  %v9817 = vpop.f32.mrf.mxu0
  %v9818 = vadd.f32 0.0, %v9817
  %9819 = vmatmul.f32.gmra.mxu0 %v9750
  %v9820 = vpop.f32.mrf.mxu0
  %v9821 = vadd.f32 0.0, %v9820
  %9822 = vmatmul.f32.gmra.mxu0 %v9752
  %v9823 = vpop.f32.mrf.mxu0
  %v9824 = vadd.f32 0.0, %v9823
  %9825 = vdwg.mxu0
  %v9826 = vsel %vm39, %v9794, -1e+30
  %v9827 = vsel %vm40, %v9797, -1e+30
  %v9828 = vsel %vm41, %v9800, -1e+30
  %v9829 = vsel %vm42, %v9803, -1e+30
  %v9830 = vsel %vm43, %v9806, -1e+30
  %v9831 = vsel %vm44, %v9809, -1e+30
  %v9832 = vsel %vm45, %v9812, -1e+30
  %v9833 = vsel %vm46, %v9815, -1e+30
  %v9834 = vsel %vm47, %v9818, -1e+30
  %v9835 = vsel %vm48, %v9821, -1e+30
  %v9836 = vsel %vm49, %v9824, -1e+30
  %v9837 = vsel %vm639, %v9826, -inf
  %9838 = vmax.xlane.f32.xlu0 %v9837
  %v9839 = vpop.xlane.xlu0 %9838
  %v9840 = vsel %vm639, %v9827, -inf
  %9841 = vmax.xlane.f32.xlu0 %v9840
  %v9842 = vpop.xlane.xlu0 %9841
  %v9843 = vsel %vm639, %v9828, -inf
  %9844 = vmax.xlane.f32.xlu0 %v9843
  %v9845 = vpop.xlane.xlu0 %9844
  %v9846 = vsel %vm639, %v9829, -inf
  %9847 = vmax.xlane.f32.xlu0 %v9846
  %v9848 = vpop.xlane.xlu0 %9847
  %v9849 = vsel %vm639, %v9830, -inf
  %9850 = vmax.xlane.f32.xlu0 %v9849
  %v9851 = vpop.xlane.xlu0 %9850
  %v9852 = vsel %vm639, %v9831, -inf
  %9853 = vmax.xlane.f32.xlu0 %v9852
  %v9854 = vpop.xlane.xlu0 %9853
  %v9855 = vsel %vm639, %v9832, -inf
  %9856 = vmax.xlane.f32.xlu0 %v9855
  %v9857 = vpop.xlane.xlu0 %9856
  %v9858 = vsel %vm639, %v9833, -inf
  %9859 = vmax.xlane.f32.xlu0 %v9858
  %v9860 = vpop.xlane.xlu0 %9859
  %v9861 = vsel %vm639, %v9834, -inf
  %9862 = vmax.xlane.f32.xlu0 %v9861
  %v9863 = vpop.xlane.xlu0 %9862
  %v9864 = vsel %vm639, %v9835, -inf
  %9865 = vmax.xlane.f32.xlu0 %v9864
  %v9866 = vpop.xlane.xlu0 %9865
  %v9867 = vsel %vm670, %v9836, -inf
  %9868 = vmax.xlane.f32.xlu0 %v9867
  %v9869 = vpop.xlane.xlu0 %9868
  %v9870 = vsub.f32 %v9826, %v9839
  %v9871 = vsub.f32 %v9827, %v9842
  %v9872 = vsub.f32 %v9828, %v9845
  %v9873 = vsub.f32 %v9829, %v9848
  %v9874 = vsub.f32 %v9830, %v9851
  %v9875 = vsub.f32 %v9831, %v9854
  %v9876 = vsub.f32 %v9832, %v9857
  %v9877 = vsub.f32 %v9833, %v9860
  %v9878 = vsub.f32 %v9834, %v9863
  %v9879 = vsub.f32 %v9835, %v9866
  %v9880 = vsub.f32 %v9836, %v9869
  %v9881 = vpack.c.bf16 %v9871, %v9870
  %v9882 = vpack.c.bf16 %v9873, %v9872
  %v9883 = vpack.c.bf16 %v9875, %v9874
  %v9884 = vpack.c.bf16 %v9877, %v9876
  %v9885 = vpack.c.bf16 %v9879, %v9878
  %v9886 = vpack.c.bf16 %v9880, %v9880
  %v9887 = vunpack.c.l.bf16 %v9881
  %v9888 = vunpack.c.h.bf16 %v9881
  %v9889 = vunpack.c.l.bf16 %v9882
  %v9890 = vunpack.c.h.bf16 %v9882
  %v9891 = vunpack.c.l.bf16 %v9883
  %v9892 = vunpack.c.h.bf16 %v9883
  %v9893 = vunpack.c.l.bf16 %v9884
  %v9894 = vunpack.c.h.bf16 %v9884
  %v9895 = vunpack.c.l.bf16 %v9885
  %v9896 = vunpack.c.h.bf16 %v9885
  %v9897 = vunpack.c.l.bf16 %v9886
  %v9898 = vmul.f32 %v9887, 1.442695
  %v9899 = vpow.pop %v9898
  %v9900 = vmul.f32 %v9888, 1.442695
  %v9901 = vpow.pop %v9900
  %v9902 = vmul.f32 %v9889, 1.442695
  %v9903 = vpow.pop %v9902
  %v9904 = vmul.f32 %v9890, 1.442695
  %v9905 = vpow.pop %v9904
  %v9906 = vmul.f32 %v9891, 1.442695
  %v9907 = vpow.pop %v9906
  %v9908 = vmul.f32 %v9892, 1.442695
  %v9909 = vpow.pop %v9908
  %v9910 = vmul.f32 %v9893, 1.442695
  %v9911 = vpow.pop %v9910
  %v9912 = vmul.f32 %v9894, 1.442695
  %v9913 = vpow.pop %v9912
  %v9914 = vmul.f32 %v9895, 1.442695
  %v9915 = vpow.pop %v9914
  %v9916 = vmul.f32 %v9896, 1.442695
  %v9917 = vpow.pop %v9916
  %v9918 = vmul.f32 %v9897, 1.442695
  %v9919 = vpow.pop %v9918
  %v9920 = vpack.c.bf16 %v9901, %v9899
  %v9921 = vpack.c.bf16 %v9905, %v9903
  %v9922 = vpack.c.bf16 %v9909, %v9907
  %v9923 = vpack.c.bf16 %v9913, %v9911
  %v9924 = vpack.c.bf16 %v9917, %v9915
  %v9925 = vpack.c.bf16 %v9919, %v9919
  %v9926 = vunpack.c.l.bf16 %v9920
  %v9927 = vunpack.c.h.bf16 %v9920
  %v9928 = vunpack.c.l.bf16 %v9921
  %v9929 = vunpack.c.h.bf16 %v9921
  %v9930 = vunpack.c.l.bf16 %v9922
  %v9931 = vunpack.c.h.bf16 %v9922
  %v9932 = vunpack.c.l.bf16 %v9923
  %v9933 = vunpack.c.h.bf16 %v9923
  %v9934 = vunpack.c.l.bf16 %v9924
  %v9935 = vunpack.c.h.bf16 %v9924
  %v9936 = vunpack.c.l.bf16 %v9925
  %v9937 = vsel %vm639, %v9926, 0.0
  %9938 = vadd.xlane.f32.xlu0 %v9937
  %v9939 = vpop.xlane.xlu0 %9938
  %v9940 = vsel %vm639, %v9927, 0.0
  %9941 = vadd.xlane.f32.xlu0 %v9940
  %v9942 = vpop.xlane.xlu0 %9941
  %v9943 = vsel %vm639, %v9928, 0.0
  %9944 = vadd.xlane.f32.xlu0 %v9943
  %v9945 = vpop.xlane.xlu0 %9944
  %v9946 = vsel %vm639, %v9929, 0.0
  %9947 = vadd.xlane.f32.xlu0 %v9946
  %v9948 = vpop.xlane.xlu0 %9947
  %v9949 = vsel %vm639, %v9930, 0.0
  %9950 = vadd.xlane.f32.xlu0 %v9949
  %v9951 = vpop.xlane.xlu0 %9950
  %v9952 = vsel %vm639, %v9931, 0.0
  %9953 = vadd.xlane.f32.xlu0 %v9952
  %v9954 = vpop.xlane.xlu0 %9953
  %v9955 = vsel %vm639, %v9932, 0.0
  %9956 = vadd.xlane.f32.xlu0 %v9955
  %v9957 = vpop.xlane.xlu0 %9956
  %v9958 = vsel %vm639, %v9933, 0.0
  %9959 = vadd.xlane.f32.xlu0 %v9958
  %v9960 = vpop.xlane.xlu0 %9959
  %v9961 = vsel %vm639, %v9934, 0.0
  %9962 = vadd.xlane.f32.xlu0 %v9961
  %v9963 = vpop.xlane.xlu0 %9962
  %v9964 = vsel %vm639, %v9935, 0.0
  %9965 = vadd.xlane.f32.xlu0 %v9964
  %v9966 = vpop.xlane.xlu0 %9965
  %v9967 = vsel %vm670, %v9936, 0.0
  %9968 = vadd.xlane.f32.xlu0 %v9967
  %v9969 = vpop.xlane.xlu0 %9968
  %v9970 = vrcp.pop %v9939
  %v9971 = vrcp.pop %v9942
  %v9972 = vrcp.pop %v9945
  %v9973 = vrcp.pop %v9948
  %v9974 = vrcp.pop %v9951
  %v9975 = vrcp.pop %v9954
  %v9976 = vrcp.pop %v9957
  %v9977 = vrcp.pop %v9960
  %v9978 = vrcp.pop %v9963
  %v9979 = vrcp.pop %v9966
  %v9980 = vrcp.pop %v9969
  %v9981 = vunpack.c.h.b16 %v8889
  %v9982 = vunpack.c.h.b16 %v8890
  %v9983 = vunpack.c.h.b16 %v8891
  %v9984 = vunpack.c.h.b16 %v8892
  %v9985 = vunpack.c.h.b16 %v8893
  %v9986 = vunpack.c.h.b16 %v8894
  %v9987 = vunpack.c.h.b16 %v8895
  %v9988 = vunpack.c.h.b16 %v8896
  %v9989 = vunpack.c.h.b16 %v8897
  %v9990 = vunpack.c.h.b16 %v8898
  %v9991 = vunpack.c.h.b16 %v8899
  %v9992 = vpack.c.b16 %v9982, %v9981
  %v9993 = vpack.c.b16 %v9984, %v9983
  %v9994 = vpack.c.b16 %v9986, %v9985
  %v9995 = vpack.c.b16 %v9988, %v9987
  %v9996 = vpack.c.b16 %v9990, %v9989
  %v9997 = vpack.c.b16 %v9991, %v9991
  %v10004 = vsel %vm639, %v9920, 0
  %v10007 = vsel %vm639, %v9921, 0
  %v10010 = vsel %vm639, %v9922, 0
  %v10013 = vsel %vm639, %v9923, 0
  %v10016 = vsel %vm639, %v9924, 0
  %v10019 = vsel %vm639, %v9925, 0
  %v10022 = vand.u32 %v9997, %v850
  %10024 = vmatpush.bf16.msra.mxu0 0
  %10025 = vmatpush.bf16.msra.mxu0 0
  %10026 = vmatpush.bf16.msra.mxu0 %v10022
  %10027 = vmatpush.bf16.msra.mxu0 %v9996
  %10028 = vmatpush.bf16.msra.mxu0 %v9995
  %10029 = vmatpush.bf16.msra.mxu0 %v9994
  %10030 = vmatpush.bf16.msra.mxu0 %v9993
  %10031 = vmatpush.bf16.msra.mxu0 %v9992
  %10032 = vmatmul.bf16.gmra.mxu0 %v10004
  %v10033 = vpop.f32.mrf.mxu0
  %v10034 = vadd.f32 0.0, %v10033
  %v10035 = vpop.f32.mrf.mxu0
  %v10036 = vadd.f32 0.0, %v10035
  %10037 = vmatmul.bf16.gmra.mxu0 %v10007
  %v10038 = vpop.f32.mrf.mxu0
  %v10039 = vadd.f32 0.0, %v10038
  %v10040 = vpop.f32.mrf.mxu0
  %v10041 = vadd.f32 0.0, %v10040
  %10042 = vmatmul.bf16.gmra.mxu0 %v10010
  %v10043 = vpop.f32.mrf.mxu0
  %v10044 = vadd.f32 0.0, %v10043
  %v10045 = vpop.f32.mrf.mxu0
  %v10046 = vadd.f32 0.0, %v10045
  %10047 = vmatmul.bf16.gmra.mxu0 %v10013
  %v10048 = vpop.f32.mrf.mxu0
  %v10049 = vadd.f32 0.0, %v10048
  %v10050 = vpop.f32.mrf.mxu0
  %v10051 = vadd.f32 0.0, %v10050
  %10052 = vmatmul.bf16.gmra.mxu0 %v10016
  %v10053 = vpop.f32.mrf.mxu0
  %v10054 = vadd.f32 0.0, %v10053
  %v10055 = vpop.f32.mrf.mxu0
  %v10056 = vadd.f32 0.0, %v10055
  %10057 = vmatmul.bf16.gmra.mxu0 %v10019
  %v10058 = vpop.f32.mrf.mxu0
  %v10059 = vadd.f32 0.0, %v10058
  %v10060 = vpop.f32.mrf.mxu0
  %10061 = vdwg.mxu0
  %v10062 = vmul.f32 %v10034, %v9970
  %v10063 = vmul.f32 %v10036, %v9971
  %v10064 = vmul.f32 %v10039, %v9972
  %v10065 = vmul.f32 %v10041, %v9973
  %v10066 = vmul.f32 %v10044, %v9974
  %v10067 = vmul.f32 %v10046, %v9975
  %v10068 = vmul.f32 %v10049, %v9976
  %v10069 = vmul.f32 %v10051, %v9977
  %v10070 = vmul.f32 %v10054, %v9978
  %v10071 = vmul.f32 %v10056, %v9979
  %v10072 = vmul.f32 %v10059, %v9980
  %v10073 = vadd.f32 %v9677, %v10062
  %v10074 = vadd.f32 %v9678, %v10063
  %v10075 = vadd.f32 %v9679, %v10064
  %v10076 = vadd.f32 %v9680, %v10065
  %v10077 = vadd.f32 %v9681, %v10066
  %v10078 = vadd.f32 %v9682, %v10067
  %v10079 = vadd.f32 %v9683, %v10068
  %v10080 = vadd.f32 %v9684, %v10069
  %v10081 = vadd.f32 %v9685, %v10070
  %v10082 = vadd.f32 %v9686, %v10071
  %v10083 = vadd.f32 %v9687, %v10072
  %10084 = vrot.lane.b32.xlu0 %v8823, 104
  %v10085 = vpop.permute.xlu0 %10084
  %10086 = vrot.lane.b32.xlu0 %v8825, 104
  %v10087 = vpop.permute.xlu0 %10086
  %10088 = vrot.lane.b32.xlu0 %v8828, 104
  %v10089 = vpop.permute.xlu0 %10088
  %10090 = vrot.lane.b32.xlu0 %v8830, 104
  %v10091 = vpop.permute.xlu0 %10090
  %10092 = vrot.lane.b32.xlu0 %v8833, 104
  %v10093 = vpop.permute.xlu0 %10092
  %10094 = vrot.lane.b32.xlu0 %v8835, 104
  %v10095 = vpop.permute.xlu0 %10094
  %10096 = vrot.lane.b32.xlu0 %v8838, 104
  %v10097 = vpop.permute.xlu0 %10096
  %10098 = vrot.lane.b32.xlu0 %v8840, 104
  %v10099 = vpop.permute.xlu0 %10098
  %10100 = vrot.lane.b32.xlu0 %v8843, 104
  %v10101 = vpop.permute.xlu0 %10100
  %10102 = vrot.lane.b32.xlu0 %v8845, 104
  %v10103 = vpop.permute.xlu0 %10102
  %10104 = vrot.lane.b32.xlu0 %v8848, 104
  %v10105 = vpop.permute.xlu0 %10104
  %10106 = vrot.lane.b32.xlu0 %v8823, 72
  %v10107 = vpop.permute.xlu0 %10106
  %10108 = vrot.lane.b32.xlu0 %v8825, 72
  %v10109 = vpop.permute.xlu0 %10108
  %10110 = vrot.lane.b32.xlu0 %v8828, 72
  %v10111 = vpop.permute.xlu0 %10110
  %10112 = vrot.lane.b32.xlu0 %v8830, 72
  %v10113 = vpop.permute.xlu0 %10112
  %10114 = vrot.lane.b32.xlu0 %v8833, 72
  %v10115 = vpop.permute.xlu0 %10114
  %10116 = vrot.lane.b32.xlu0 %v8835, 72
  %v10117 = vpop.permute.xlu0 %10116
  %10118 = vrot.lane.b32.xlu0 %v8838, 72
  %v10119 = vpop.permute.xlu0 %10118
  %10120 = vrot.lane.b32.xlu0 %v8840, 72
  %v10121 = vpop.permute.xlu0 %10120
  %10122 = vrot.lane.b32.xlu0 %v8843, 72
  %v10123 = vpop.permute.xlu0 %10122
  %10124 = vrot.lane.b32.xlu0 %v8845, 72
  %v10125 = vpop.permute.xlu0 %10124
  %10126 = vrot.lane.b32.xlu0 %v8848, 72
  %v10127 = vpop.permute.xlu0 %10126
  %v10128 = vsel %vm533, %v10085, 0
  %v10130 = vsel %vm533, %v10087, 0
  %v10132 = vsel %vm533, %v10089, 0
  %v10134 = vsel %vm533, %v10091, 0
  %v10136 = vsel %vm533, %v10093, 0
  %v10138 = vsel %vm533, %v10095, 0
  %v10140 = vsel %vm533, %v10097, 0
  %v10142 = vsel %vm533, %v10099, 0
  %v10144 = vsel %vm533, %v10101, 0
  %v10146 = vsel %vm533, %v10103, 0
  %v10148 = vsel %vm533, %v10105, 0
  %v10150 = vsel %vm533, %v10107, 0
  %v10152 = vsel %vm533, %v10109, 0
  %v10154 = vsel %vm533, %v10111, 0
  %v10156 = vsel %vm533, %v10113, 0
  %v10158 = vsel %vm533, %v10115, 0
  %v10160 = vsel %vm533, %v10117, 0
  %v10162 = vsel %vm533, %v10119, 0
  %v10164 = vsel %vm533, %v10121, 0
  %v10166 = vsel %vm533, %v10123, 0
  %v10168 = vsel %vm533, %v10125, 0
  %v10170 = vsel %vm533, %v10127, 0
  %10172 = vmatpush.xpose.msra.mxu0 0.0
  %10173 = vmatpush.xpose.msra.mxu0 0.0
  %10174 = vmatpush.xpose.msra.mxu0 0.0
  %10175 = vmatpush.xpose.msra.mxu0 0.0
  %10176 = vmatpush.xpose.msra.mxu0 0.0
  %10177 = vmatpush.xpose.msra.mxu0 %v10170
  %10178 = vmatpush.xpose.msra.mxu0 %v10168
  %10179 = vmatpush.xpose.msra.mxu0 %v10166
  %10180 = vmatpush.xpose.msra.mxu0 %v10164
  %10181 = vmatpush.xpose.msra.mxu0 %v10162
  %10182 = vmatpush.xpose.msra.mxu0 %v10160
  %10183 = vmatpush.xpose.msra.mxu0 %v10158
  %10184 = vmatpush.xpose.msra.mxu0 %v10156
  %10185 = vmatpush.xpose.msra.mxu0 %v10154
  %10186 = vmatpush.xpose.msra.mxu0 %v10152
  %10187 = vmatpush.xpose.msra.mxu0 %v10150
  %10188 = vmatmul.f32.gmra.mxu0 %v10128
  %v10189 = vpop.f32.mrf.mxu0
  %v10190 = vadd.f32 0.0, %v10189
  %10191 = vmatmul.f32.gmra.mxu0 %v10130
  %v10192 = vpop.f32.mrf.mxu0
  %v10193 = vadd.f32 0.0, %v10192
  %10194 = vmatmul.f32.gmra.mxu0 %v10132
  %v10195 = vpop.f32.mrf.mxu0
  %v10196 = vadd.f32 0.0, %v10195
  %10197 = vmatmul.f32.gmra.mxu0 %v10134
  %v10198 = vpop.f32.mrf.mxu0
  %v10199 = vadd.f32 0.0, %v10198
  %10200 = vmatmul.f32.gmra.mxu0 %v10136
  %v10201 = vpop.f32.mrf.mxu0
  %v10202 = vadd.f32 0.0, %v10201
  %10203 = vmatmul.f32.gmra.mxu0 %v10138
  %v10204 = vpop.f32.mrf.mxu0
  %v10205 = vadd.f32 0.0, %v10204
  %10206 = vmatmul.f32.gmra.mxu0 %v10140
  %v10207 = vpop.f32.mrf.mxu0
  %v10208 = vadd.f32 0.0, %v10207
  %10209 = vmatmul.f32.gmra.mxu0 %v10142
  %v10210 = vpop.f32.mrf.mxu0
  %v10211 = vadd.f32 0.0, %v10210
  %10212 = vmatmul.f32.gmra.mxu0 %v10144
  %v10213 = vpop.f32.mrf.mxu0
  %v10214 = vadd.f32 0.0, %v10213
  %10215 = vmatmul.f32.gmra.mxu0 %v10146
  %v10216 = vpop.f32.mrf.mxu0
  %v10217 = vadd.f32 0.0, %v10216
  %10218 = vmatmul.f32.gmra.mxu0 %v10148
  %v10219 = vpop.f32.mrf.mxu0
  %v10220 = vadd.f32 0.0, %v10219
  %10221 = vdwg.mxu0
  %v10222 = vsel %vm39, %v10190, -1e+30
  %v10223 = vsel %vm40, %v10193, -1e+30
  %v10224 = vsel %vm41, %v10196, -1e+30
  %v10225 = vsel %vm42, %v10199, -1e+30
  %v10226 = vsel %vm43, %v10202, -1e+30
  %v10227 = vsel %vm44, %v10205, -1e+30
  %v10228 = vsel %vm45, %v10208, -1e+30
  %v10229 = vsel %vm46, %v10211, -1e+30
  %v10230 = vsel %vm47, %v10214, -1e+30
  %v10231 = vsel %vm48, %v10217, -1e+30
  %v10232 = vsel %vm49, %v10220, -1e+30
  %v10233 = vsel %vm639, %v10222, -inf
  %10234 = vmax.xlane.f32.xlu0 %v10233
  %v10235 = vpop.xlane.xlu0 %10234
  %v10236 = vsel %vm639, %v10223, -inf
  %10237 = vmax.xlane.f32.xlu0 %v10236
  %v10238 = vpop.xlane.xlu0 %10237
  %v10239 = vsel %vm639, %v10224, -inf
  %10240 = vmax.xlane.f32.xlu0 %v10239
  %v10241 = vpop.xlane.xlu0 %10240
  %v10242 = vsel %vm639, %v10225, -inf
  %10243 = vmax.xlane.f32.xlu0 %v10242
  %v10244 = vpop.xlane.xlu0 %10243
  %v10245 = vsel %vm639, %v10226, -inf
  %10246 = vmax.xlane.f32.xlu0 %v10245
  %v10247 = vpop.xlane.xlu0 %10246
  %v10248 = vsel %vm639, %v10227, -inf
  %10249 = vmax.xlane.f32.xlu0 %v10248
  %v10250 = vpop.xlane.xlu0 %10249
  %v10251 = vsel %vm639, %v10228, -inf
  %10252 = vmax.xlane.f32.xlu0 %v10251
  %v10253 = vpop.xlane.xlu0 %10252
  %v10254 = vsel %vm639, %v10229, -inf
  %10255 = vmax.xlane.f32.xlu0 %v10254
  %v10256 = vpop.xlane.xlu0 %10255
  %v10257 = vsel %vm639, %v10230, -inf
  %10258 = vmax.xlane.f32.xlu0 %v10257
  %v10259 = vpop.xlane.xlu0 %10258
  %v10260 = vsel %vm639, %v10231, -inf
  %10261 = vmax.xlane.f32.xlu0 %v10260
  %v10262 = vpop.xlane.xlu0 %10261
  %v10263 = vsel %vm670, %v10232, -inf
  %10264 = vmax.xlane.f32.xlu0 %v10263
  %v10265 = vpop.xlane.xlu0 %10264
  %v10266 = vsub.f32 %v10222, %v10235
  %v10267 = vsub.f32 %v10223, %v10238
  %v10268 = vsub.f32 %v10224, %v10241
  %v10269 = vsub.f32 %v10225, %v10244
  %v10270 = vsub.f32 %v10226, %v10247
  %v10271 = vsub.f32 %v10227, %v10250
  %v10272 = vsub.f32 %v10228, %v10253
  %v10273 = vsub.f32 %v10229, %v10256
  %v10274 = vsub.f32 %v10230, %v10259
  %v10275 = vsub.f32 %v10231, %v10262
  %v10276 = vsub.f32 %v10232, %v10265
  %v10277 = vpack.c.bf16 %v10267, %v10266
  %v10278 = vpack.c.bf16 %v10269, %v10268
  %v10279 = vpack.c.bf16 %v10271, %v10270
  %v10280 = vpack.c.bf16 %v10273, %v10272
  %v10281 = vpack.c.bf16 %v10275, %v10274
  %v10282 = vpack.c.bf16 %v10276, %v10276
  %v10283 = vunpack.c.l.bf16 %v10277
  %v10284 = vunpack.c.h.bf16 %v10277
  %v10285 = vunpack.c.l.bf16 %v10278
  %v10286 = vunpack.c.h.bf16 %v10278
  %v10287 = vunpack.c.l.bf16 %v10279
  %v10288 = vunpack.c.h.bf16 %v10279
  %v10289 = vunpack.c.l.bf16 %v10280
  %v10290 = vunpack.c.h.bf16 %v10280
  %v10291 = vunpack.c.l.bf16 %v10281
  %v10292 = vunpack.c.h.bf16 %v10281
  %v10293 = vunpack.c.l.bf16 %v10282
  %v10294 = vmul.f32 %v10283, 1.442695
  %v10295 = vpow.pop %v10294
  %v10296 = vmul.f32 %v10284, 1.442695
  %v10297 = vpow.pop %v10296
  %v10298 = vmul.f32 %v10285, 1.442695
  %v10299 = vpow.pop %v10298
  %v10300 = vmul.f32 %v10286, 1.442695
  %v10301 = vpow.pop %v10300
  %v10302 = vmul.f32 %v10287, 1.442695
  %v10303 = vpow.pop %v10302
  %v10304 = vmul.f32 %v10288, 1.442695
  %v10305 = vpow.pop %v10304
  %v10306 = vmul.f32 %v10289, 1.442695
  %v10307 = vpow.pop %v10306
  %v10308 = vmul.f32 %v10290, 1.442695
  %v10309 = vpow.pop %v10308
  %v10310 = vmul.f32 %v10291, 1.442695
  %v10311 = vpow.pop %v10310
  %v10312 = vmul.f32 %v10292, 1.442695
  %v10313 = vpow.pop %v10312
  %v10314 = vmul.f32 %v10293, 1.442695
  %v10315 = vpow.pop %v10314
  %v10316 = vpack.c.bf16 %v10297, %v10295
  %v10317 = vpack.c.bf16 %v10301, %v10299
  %v10318 = vpack.c.bf16 %v10305, %v10303
  %v10319 = vpack.c.bf16 %v10309, %v10307
  %v10320 = vpack.c.bf16 %v10313, %v10311
  %v10321 = vpack.c.bf16 %v10315, %v10315
  %v10322 = vunpack.c.l.bf16 %v10316
  %v10323 = vunpack.c.h.bf16 %v10316
  %v10324 = vunpack.c.l.bf16 %v10317
  %v10325 = vunpack.c.h.bf16 %v10317
  %v10326 = vunpack.c.l.bf16 %v10318
  %v10327 = vunpack.c.h.bf16 %v10318
  %v10328 = vunpack.c.l.bf16 %v10319
  %v10329 = vunpack.c.h.bf16 %v10319
  %v10330 = vunpack.c.l.bf16 %v10320
  %v10331 = vunpack.c.h.bf16 %v10320
  %v10332 = vunpack.c.l.bf16 %v10321
  %v10333 = vsel %vm639, %v10322, 0.0
  %10334 = vadd.xlane.f32.xlu0 %v10333
  %v10335 = vpop.xlane.xlu0 %10334
  %v10336 = vsel %vm639, %v10323, 0.0
  %10337 = vadd.xlane.f32.xlu0 %v10336
  %v10338 = vpop.xlane.xlu0 %10337
  %v10339 = vsel %vm639, %v10324, 0.0
  %10340 = vadd.xlane.f32.xlu0 %v10339
  %v10341 = vpop.xlane.xlu0 %10340
  %v10342 = vsel %vm639, %v10325, 0.0
  %10343 = vadd.xlane.f32.xlu0 %v10342
  %v10344 = vpop.xlane.xlu0 %10343
  %v10345 = vsel %vm639, %v10326, 0.0
  %10346 = vadd.xlane.f32.xlu0 %v10345
  %v10347 = vpop.xlane.xlu0 %10346
  %v10348 = vsel %vm639, %v10327, 0.0
  %10349 = vadd.xlane.f32.xlu0 %v10348
  %v10350 = vpop.xlane.xlu0 %10349
  %v10351 = vsel %vm639, %v10328, 0.0
  %10352 = vadd.xlane.f32.xlu0 %v10351
  %v10353 = vpop.xlane.xlu0 %10352
  %v10354 = vsel %vm639, %v10329, 0.0
  %10355 = vadd.xlane.f32.xlu0 %v10354
  %v10356 = vpop.xlane.xlu0 %10355
  %v10357 = vsel %vm639, %v10330, 0.0
  %10358 = vadd.xlane.f32.xlu0 %v10357
  %v10359 = vpop.xlane.xlu0 %10358
  %v10360 = vsel %vm639, %v10331, 0.0
  %10361 = vadd.xlane.f32.xlu0 %v10360
  %v10362 = vpop.xlane.xlu0 %10361
  %v10363 = vsel %vm670, %v10332, 0.0
  %10364 = vadd.xlane.f32.xlu0 %v10363
  %v10365 = vpop.xlane.xlu0 %10364
  %v10366 = vrcp.pop %v10335
  %v10367 = vrcp.pop %v10338
  %v10368 = vrcp.pop %v10341
  %v10369 = vrcp.pop %v10344
  %v10370 = vrcp.pop %v10347
  %v10371 = vrcp.pop %v10350
  %v10372 = vrcp.pop %v10353
  %v10373 = vrcp.pop %v10356
  %v10374 = vrcp.pop %v10359
  %v10375 = vrcp.pop %v10362
  %v10376 = vrcp.pop %v10365
  %10377 = vrot.lane.b32.xlu0 %v9992, 96
  %v10378 = vpop.permute.xlu0 %10377
  %10379 = vrot.lane.b32.xlu0 %v9993, 96
  %v10380 = vpop.permute.xlu0 %10379
  %10381 = vrot.lane.b32.xlu0 %v9994, 96
  %v10382 = vpop.permute.xlu0 %10381
  %10383 = vrot.lane.b32.xlu0 %v9995, 96
  %v10384 = vpop.permute.xlu0 %10383
  %10385 = vrot.lane.b32.xlu0 %v9996, 96
  %v10386 = vpop.permute.xlu0 %10385
  %10387 = vrot.lane.b32.xlu0 %v9997, 96
  %v10388 = vpop.permute.xlu0 %10387
  %v10395 = vsel %vm639, %v10316, 0
  %v10398 = vsel %vm639, %v10317, 0
  %v10401 = vsel %vm639, %v10318, 0
  %v10404 = vsel %vm639, %v10319, 0
  %v10407 = vsel %vm639, %v10320, 0
  %v10410 = vsel %vm639, %v10321, 0
  %v10413 = vand.u32 %v10388, %v850
  %10415 = vmatpush.bf16.msra.mxu0 0
  %10416 = vmatpush.bf16.msra.mxu0 0
  %10417 = vmatpush.bf16.msra.mxu0 %v10413
  %10418 = vmatpush.bf16.msra.mxu0 %v10386
  %10419 = vmatpush.bf16.msra.mxu0 %v10384
  %10420 = vmatpush.bf16.msra.mxu0 %v10382
  %10421 = vmatpush.bf16.msra.mxu0 %v10380
  %10422 = vmatpush.bf16.msra.mxu0 %v10378
  %10423 = vmatmul.bf16.gmra.mxu0 %v10395
  %v10424 = vpop.f32.mrf.mxu0
  %v10425 = vadd.f32 0.0, %v10424
  %v10426 = vpop.f32.mrf.mxu0
  %v10427 = vadd.f32 0.0, %v10426
  %10428 = vmatmul.bf16.gmra.mxu0 %v10398
  %v10429 = vpop.f32.mrf.mxu0
  %v10430 = vadd.f32 0.0, %v10429
  %v10431 = vpop.f32.mrf.mxu0
  %v10432 = vadd.f32 0.0, %v10431
  %10433 = vmatmul.bf16.gmra.mxu0 %v10401
  %v10434 = vpop.f32.mrf.mxu0
  %v10435 = vadd.f32 0.0, %v10434
  %v10436 = vpop.f32.mrf.mxu0
  %v10437 = vadd.f32 0.0, %v10436
  %10438 = vmatmul.bf16.gmra.mxu0 %v10404
  %v10439 = vpop.f32.mrf.mxu0
  %v10440 = vadd.f32 0.0, %v10439
  %v10441 = vpop.f32.mrf.mxu0
  %v10442 = vadd.f32 0.0, %v10441
  %10443 = vmatmul.bf16.gmra.mxu0 %v10407
  %v10444 = vpop.f32.mrf.mxu0
  %v10445 = vadd.f32 0.0, %v10444
  %v10446 = vpop.f32.mrf.mxu0
  %v10447 = vadd.f32 0.0, %v10446
  %10448 = vmatmul.bf16.gmra.mxu0 %v10410
  %v10449 = vpop.f32.mrf.mxu0
  %v10450 = vadd.f32 0.0, %v10449
  %v10451 = vpop.f32.mrf.mxu0
  %10452 = vdwg.mxu0
  %v10453 = vmul.f32 %v10425, %v10366
  %v10454 = vmul.f32 %v10427, %v10367
  %v10455 = vmul.f32 %v10430, %v10368
  %v10456 = vmul.f32 %v10432, %v10369
  %v10457 = vmul.f32 %v10435, %v10370
  %v10458 = vmul.f32 %v10437, %v10371
  %v10459 = vmul.f32 %v10440, %v10372
  %v10460 = vmul.f32 %v10442, %v10373
  %v10461 = vmul.f32 %v10445, %v10374
  %v10462 = vmul.f32 %v10447, %v10375
  %v10463 = vmul.f32 %v10450, %v10376
  %v10464 = vadd.f32 %v10073, %v10453
  %v10465 = vadd.f32 %v10074, %v10454
  %v10466 = vadd.f32 %v10075, %v10455
  %v10467 = vadd.f32 %v10076, %v10456
  %v10468 = vadd.f32 %v10077, %v10457
  %v10469 = vadd.f32 %v10078, %v10458
  %v10470 = vadd.f32 %v10079, %v10459
  %v10471 = vadd.f32 %v10080, %v10460
  %v10472 = vadd.f32 %v10081, %v10461
  %v10473 = vadd.f32 %v10082, %v10462
  %v10474 = vadd.f32 %v10083, %v10463
  %v10475 = vadd.f32 %v8490, %v10464
  %v10476 = vadd.f32 %v8491, %v10465
  %v10477 = vadd.f32 %v8492, %v10466
  %v10478 = vadd.f32 %v8493, %v10467
  %v10479 = vadd.f32 %v8494, %v10468
  %v10480 = vadd.f32 %v8495, %v10469
  %v10481 = vadd.f32 %v8496, %v10470
  %v10482 = vadd.f32 %v8497, %v10471
  %v10483 = vadd.f32 %v8498, %v10472
  %v10484 = vadd.f32 %v8499, %v10473
  %v10485 = vadd.f32 %v8500, %v10474
  %v10486 = vadd.f32 %v10475, %v4792
  %v10487 = vadd.f32 %v10476, %v4792
  %v10488 = vadd.f32 %v10477, %v4792
  %v10489 = vadd.f32 %v10478, %v4792
  %v10490 = vadd.f32 %v10479, %v4792
  %v10491 = vadd.f32 %v10480, %v4792
  %v10492 = vadd.f32 %v10481, %v4792
  %v10493 = vadd.f32 %v10482, %v4792
  %v10494 = vadd.f32 %v10483, %v4792
  %v10495 = vadd.f32 %v10484, %v4792
  %v10496 = vadd.f32 %v10485, %v4792
  %v10497 = vsel %vm88, %v10486, 0.0
  %10498 = vadd.xlane.f32.xlu0 %v10497
  %v10499 = vpop.xlane.xlu0 %10498
  %v10500 = vsel %vm88, %v10487, 0.0
  %10501 = vadd.xlane.f32.xlu0 %v10500
  %v10502 = vpop.xlane.xlu0 %10501
  %v10503 = vsel %vm88, %v10488, 0.0
  %10504 = vadd.xlane.f32.xlu0 %v10503
  %v10505 = vpop.xlane.xlu0 %10504
  %v10506 = vsel %vm88, %v10489, 0.0
  %10507 = vadd.xlane.f32.xlu0 %v10506
  %v10508 = vpop.xlane.xlu0 %10507
  %v10509 = vsel %vm88, %v10490, 0.0
  %10510 = vadd.xlane.f32.xlu0 %v10509
  %v10511 = vpop.xlane.xlu0 %10510
  %v10512 = vsel %vm88, %v10491, 0.0
  %10513 = vadd.xlane.f32.xlu0 %v10512
  %v10514 = vpop.xlane.xlu0 %10513
  %v10515 = vsel %vm88, %v10492, 0.0
  %10516 = vadd.xlane.f32.xlu0 %v10515
  %v10517 = vpop.xlane.xlu0 %10516
  %v10518 = vsel %vm88, %v10493, 0.0
  %10519 = vadd.xlane.f32.xlu0 %v10518
  %v10520 = vpop.xlane.xlu0 %10519
  %v10521 = vsel %vm88, %v10494, 0.0
  %10522 = vadd.xlane.f32.xlu0 %v10521
  %v10523 = vpop.xlane.xlu0 %10522
  %v10524 = vsel %vm88, %v10495, 0.0
  %10525 = vadd.xlane.f32.xlu0 %v10524
  %v10526 = vpop.xlane.xlu0 %10525
  %v10527 = vsel %vm119, %v10496, 0.0
  %10528 = vadd.xlane.f32.xlu0 %v10527
  %v10529 = vpop.xlane.xlu0 %10528
  %v10530 = vmul.f32 %v10499, %v129
  %v10531 = vmul.f32 %v10502, %v129
  %v10532 = vmul.f32 %v10505, %v129
  %v10533 = vmul.f32 %v10508, %v129
  %v10534 = vmul.f32 %v10511, %v129
  %v10535 = vmul.f32 %v10514, %v129
  %v10536 = vmul.f32 %v10517, %v129
  %v10537 = vmul.f32 %v10520, %v129
  %v10538 = vmul.f32 %v10523, %v129
  %v10539 = vmul.f32 %v10526, %v129
  %v10540 = vmul.f32 %v10529, %v129
  %v10541 = vsub.f32 %v10486, %v10530
  %v10542 = vsub.f32 %v10487, %v10531
  %v10543 = vsub.f32 %v10488, %v10532
  %v10544 = vsub.f32 %v10489, %v10533
  %v10545 = vsub.f32 %v10490, %v10534
  %v10546 = vsub.f32 %v10491, %v10535
  %v10547 = vsub.f32 %v10492, %v10536
  %v10548 = vsub.f32 %v10493, %v10537
  %v10549 = vsub.f32 %v10494, %v10538
  %v10550 = vsub.f32 %v10495, %v10539
  %v10551 = vsub.f32 %v10496, %v10540
  %v10552 = vmul.f32 %v10541, %v10541
  %v10553 = vmul.f32 %v10542, %v10542
  %v10554 = vmul.f32 %v10543, %v10543
  %v10555 = vmul.f32 %v10544, %v10544
  %v10556 = vmul.f32 %v10545, %v10545
  %v10557 = vmul.f32 %v10546, %v10546
  %v10558 = vmul.f32 %v10547, %v10547
  %v10559 = vmul.f32 %v10548, %v10548
  %v10560 = vmul.f32 %v10549, %v10549
  %v10561 = vmul.f32 %v10550, %v10550
  %v10562 = vmul.f32 %v10551, %v10551
  %v10563 = vsel %vm88, %v10552, 0.0
  %10564 = vadd.xlane.f32.xlu0 %v10563
  %v10565 = vpop.xlane.xlu0 %10564
  %v10566 = vsel %vm88, %v10553, 0.0
  %10567 = vadd.xlane.f32.xlu0 %v10566
  %v10568 = vpop.xlane.xlu0 %10567
  %v10569 = vsel %vm88, %v10554, 0.0
  %10570 = vadd.xlane.f32.xlu0 %v10569
  %v10571 = vpop.xlane.xlu0 %10570
  %v10572 = vsel %vm88, %v10555, 0.0
  %10573 = vadd.xlane.f32.xlu0 %v10572
  %v10574 = vpop.xlane.xlu0 %10573
  %v10575 = vsel %vm88, %v10556, 0.0
  %10576 = vadd.xlane.f32.xlu0 %v10575
  %v10577 = vpop.xlane.xlu0 %10576
  %v10578 = vsel %vm88, %v10557, 0.0
  %10579 = vadd.xlane.f32.xlu0 %v10578
  %v10580 = vpop.xlane.xlu0 %10579
  %v10581 = vsel %vm88, %v10558, 0.0
  %10582 = vadd.xlane.f32.xlu0 %v10581
  %v10583 = vpop.xlane.xlu0 %10582
  %v10584 = vsel %vm88, %v10559, 0.0
  %10585 = vadd.xlane.f32.xlu0 %v10584
  %v10586 = vpop.xlane.xlu0 %10585
  %v10587 = vsel %vm88, %v10560, 0.0
  %10588 = vadd.xlane.f32.xlu0 %v10587
  %v10589 = vpop.xlane.xlu0 %10588
  %v10590 = vsel %vm88, %v10561, 0.0
  %10591 = vadd.xlane.f32.xlu0 %v10590
  %v10592 = vpop.xlane.xlu0 %10591
  %v10593 = vsel %vm119, %v10562, 0.0
  %10594 = vadd.xlane.f32.xlu0 %v10593
  %v10595 = vpop.xlane.xlu0 %10594
  %v10596 = vmul.f32 %v10565, %v129
  %v10597 = vmul.f32 %v10568, %v129
  %v10598 = vmul.f32 %v10571, %v129
  %v10599 = vmul.f32 %v10574, %v129
  %v10600 = vmul.f32 %v10577, %v129
  %v10601 = vmul.f32 %v10580, %v129
  %v10602 = vmul.f32 %v10583, %v129
  %v10603 = vmul.f32 %v10586, %v129
  %v10604 = vmul.f32 %v10589, %v129
  %v10605 = vmul.f32 %v10592, %v129
  %v10606 = vmul.f32 %v10595, %v129
  %v10607 = vadd.f32 %v10596, 1e-05
  %v10608 = vadd.f32 %v10597, 1e-05
  %v10609 = vadd.f32 %v10598, 1e-05
  %v10610 = vadd.f32 %v10599, 1e-05
  %v10611 = vadd.f32 %v10600, 1e-05
  %v10612 = vadd.f32 %v10601, 1e-05
  %v10613 = vadd.f32 %v10602, 1e-05
  %v10614 = vadd.f32 %v10603, 1e-05
  %v10615 = vadd.f32 %v10604, 1e-05
  %v10616 = vadd.f32 %v10605, 1e-05
  %v10617 = vadd.f32 %v10606, 1e-05
  %v10618 = vrsqrt.pop %v10607
  %v10619 = vmul.f32 %v10618, %v10607
  %v10620 = vmul.f32 %v10619, %v10618
  %v10621 = vmul.f32 0.5, %v10620
  %v10622 = vsub.f32 1.5, %v10621
  %v10623 = vmul.f32 %v10618, %v10622
  %vm10624 = vweird.f32 %v10607
  %vm10625 = vweird.f32 %v10618
  %vm10626 = vmor %vm10624, %vm10625
  %v10627 = vsel %vm10626, %v10618, %v10623
  %v10628 = vrsqrt.pop %v10608
  %v10629 = vmul.f32 %v10628, %v10608
  %v10630 = vmul.f32 %v10629, %v10628
  %v10631 = vmul.f32 0.5, %v10630
  %v10632 = vsub.f32 1.5, %v10631
  %v10633 = vmul.f32 %v10628, %v10632
  %vm10634 = vweird.f32 %v10608
  %vm10635 = vweird.f32 %v10628
  %vm10636 = vmor %vm10634, %vm10635
  %v10637 = vsel %vm10636, %v10628, %v10633
  %v10638 = vrsqrt.pop %v10609
  %v10639 = vmul.f32 %v10638, %v10609
  %v10640 = vmul.f32 %v10639, %v10638
  %v10641 = vmul.f32 0.5, %v10640
  %v10642 = vsub.f32 1.5, %v10641
  %v10643 = vmul.f32 %v10638, %v10642
  %vm10644 = vweird.f32 %v10609
  %vm10645 = vweird.f32 %v10638
  %vm10646 = vmor %vm10644, %vm10645
  %v10647 = vsel %vm10646, %v10638, %v10643
  %v10648 = vrsqrt.pop %v10610
  %v10649 = vmul.f32 %v10648, %v10610
  %v10650 = vmul.f32 %v10649, %v10648
  %v10651 = vmul.f32 0.5, %v10650
  %v10652 = vsub.f32 1.5, %v10651
  %v10653 = vmul.f32 %v10648, %v10652
  %vm10654 = vweird.f32 %v10610
  %vm10655 = vweird.f32 %v10648
  %vm10656 = vmor %vm10654, %vm10655
  %v10657 = vsel %vm10656, %v10648, %v10653
  %v10658 = vrsqrt.pop %v10611
  %v10659 = vmul.f32 %v10658, %v10611
  %v10660 = vmul.f32 %v10659, %v10658
  %v10661 = vmul.f32 0.5, %v10660
  %v10662 = vsub.f32 1.5, %v10661
  %v10663 = vmul.f32 %v10658, %v10662
  %vm10664 = vweird.f32 %v10611
  %vm10665 = vweird.f32 %v10658
  %vm10666 = vmor %vm10664, %vm10665
  %v10667 = vsel %vm10666, %v10658, %v10663
  %v10668 = vrsqrt.pop %v10612
  %v10669 = vmul.f32 %v10668, %v10612
  %v10670 = vmul.f32 %v10669, %v10668
  %v10671 = vmul.f32 0.5, %v10670
  %v10672 = vsub.f32 1.5, %v10671
  %v10673 = vmul.f32 %v10668, %v10672
  %vm10674 = vweird.f32 %v10612
  %vm10675 = vweird.f32 %v10668
  %vm10676 = vmor %vm10674, %vm10675
  %v10677 = vsel %vm10676, %v10668, %v10673
  %v10678 = vrsqrt.pop %v10613
  %v10679 = vmul.f32 %v10678, %v10613
  %v10680 = vmul.f32 %v10679, %v10678
  %v10681 = vmul.f32 0.5, %v10680
  %v10682 = vsub.f32 1.5, %v10681
  %v10683 = vmul.f32 %v10678, %v10682
  %vm10684 = vweird.f32 %v10613
  %vm10685 = vweird.f32 %v10678
  %vm10686 = vmor %vm10684, %vm10685
  %v10687 = vsel %vm10686, %v10678, %v10683
  %v10688 = vrsqrt.pop %v10614
  %v10689 = vmul.f32 %v10688, %v10614
  %v10690 = vmul.f32 %v10689, %v10688
  %v10691 = vmul.f32 0.5, %v10690
  %v10692 = vsub.f32 1.5, %v10691
  %v10693 = vmul.f32 %v10688, %v10692
  %vm10694 = vweird.f32 %v10614
  %vm10695 = vweird.f32 %v10688
  %vm10696 = vmor %vm10694, %vm10695
  %v10697 = vsel %vm10696, %v10688, %v10693
  %v10698 = vrsqrt.pop %v10615
  %v10699 = vmul.f32 %v10698, %v10615
  %v10700 = vmul.f32 %v10699, %v10698
  %v10701 = vmul.f32 0.5, %v10700
  %v10702 = vsub.f32 1.5, %v10701
  %v10703 = vmul.f32 %v10698, %v10702
  %vm10704 = vweird.f32 %v10615
  %vm10705 = vweird.f32 %v10698
  %vm10706 = vmor %vm10704, %vm10705
  %v10707 = vsel %vm10706, %v10698, %v10703
  %v10708 = vrsqrt.pop %v10616
  %v10709 = vmul.f32 %v10708, %v10616
  %v10710 = vmul.f32 %v10709, %v10708
  %v10711 = vmul.f32 0.5, %v10710
  %v10712 = vsub.f32 1.5, %v10711
  %v10713 = vmul.f32 %v10708, %v10712
  %vm10714 = vweird.f32 %v10616
  %vm10715 = vweird.f32 %v10708
  %vm10716 = vmor %vm10714, %vm10715
  %v10717 = vsel %vm10716, %v10708, %v10713
  %v10718 = vrsqrt.pop %v10617
  %v10719 = vmul.f32 %v10718, %v10617
  %v10720 = vmul.f32 %v10719, %v10718
  %v10721 = vmul.f32 0.5, %v10720
  %v10722 = vsub.f32 1.5, %v10721
  %v10723 = vmul.f32 %v10718, %v10722
  %vm10724 = vweird.f32 %v10617
  %vm10725 = vweird.f32 %v10718
  %vm10726 = vmor %vm10724, %vm10725
  %v10727 = vsel %vm10726, %v10718, %v10723
  %v10728 = vmul.f32 %v10541, %v10627
  %v10729 = vmul.f32 %v10542, %v10637
  %v10730 = vmul.f32 %v10543, %v10647
  %v10731 = vmul.f32 %v10544, %v10657
  %v10732 = vmul.f32 %v10545, %v10667
  %v10733 = vmul.f32 %v10546, %v10677
  %v10734 = vmul.f32 %v10547, %v10687
  %v10735 = vmul.f32 %v10548, %v10697
  %v10736 = vmul.f32 %v10549, %v10707
  %v10737 = vmul.f32 %v10550, %v10717
  %v10738 = vmul.f32 %v10551, %v10727
  %v10739 = vmul.f32 %v10728, %v5046
  %v10740 = vmul.f32 %v10729, %v5046
  %v10741 = vmul.f32 %v10730, %v5046
  %v10742 = vmul.f32 %v10731, %v5046
  %v10743 = vmul.f32 %v10732, %v5046
  %v10744 = vmul.f32 %v10733, %v5046
  %v10745 = vmul.f32 %v10734, %v5046
  %v10746 = vmul.f32 %v10735, %v5046
  %v10747 = vmul.f32 %v10736, %v5046
  %v10748 = vmul.f32 %v10737, %v5046
  %v10749 = vmul.f32 %v10738, %v5046
  %v10750 = vadd.f32 %v10739, %v5058
  %v10751 = vadd.f32 %v10740, %v5058
  %v10752 = vadd.f32 %v10741, %v5058
  %v10753 = vadd.f32 %v10742, %v5058
  %v10754 = vadd.f32 %v10743, %v5058
  %v10755 = vadd.f32 %v10744, %v5058
  %v10756 = vadd.f32 %v10745, %v5058
  %v10757 = vadd.f32 %v10746, %v5058
  %v10758 = vadd.f32 %v10747, %v5058
  %v10759 = vadd.f32 %v10748, %v5058
  %v10760 = vadd.f32 %v10749, %v5058
  %v10761 = vpack.c.bf16 %v10751, %v10750
  %v10762 = vpack.c.bf16 %v10753, %v10752
  %v10763 = vpack.c.bf16 %v10755, %v10754
  %v10764 = vpack.c.bf16 %v10757, %v10756
  %v10765 = vpack.c.bf16 %v10759, %v10758
  %v10766 = vpack.c.bf16 %v10760, %v10760
  %v10767 = vld [vmem:[%s5076] sm:$0xf]
  %v10768 = vld [vmem:[%s5076 + $0x4] sm:$0xf]
  %v10769 = vld [vmem:[%s5076 + $0x8] sm:$0xf]
  %v10770 = vld [vmem:[%s5076 + $0xc] sm:$0xf]
  %v10775 = vunpack.c.l.b16 %v10767
  %v10776 = vunpack.c.l.b16 %v10768
  %v10777 = vunpack.c.l.b16 %v10769
  %v10778 = vunpack.c.l.b16 %v10770
  %v10779 = vpack.c.b16 %v10776, %v10775
  %v10780 = vpack.c.b16 %v10778, %v10777
  %v10784 = vsel %vm88, %v10761, 0
  %v10787 = vsel %vm88, %v10762, 0
  %v10790 = vsel %vm88, %v10763, 0
  %v10793 = vsel %vm88, %v10764, 0
  %v10796 = vsel %vm88, %v10765, 0
  %v10799 = vsel %vm88, %v10766, 0
  %10801 = vmatpush.bf16.msra.mxu0 0
  %10802 = vmatpush.bf16.msra.mxu0 0
  %10803 = vmatpush.bf16.msra.mxu0 0
  %10804 = vmatpush.bf16.msra.mxu0 0
  %10805 = vmatpush.bf16.msra.mxu0 0
  %10806 = vmatpush.bf16.msra.mxu0 0
  %10807 = vmatpush.bf16.msra.mxu0 %v10780
  %10808 = vmatpush.bf16.msra.mxu0 %v10779
  %10809 = vmatmul.bf16.gmra.mxu0 %v10784
  %v10810 = vpop.f32.mrf.mxu0
  %v10811 = vadd.f32 %v5081, %v10810
  %v10812 = vpop.f32.mrf.mxu0
  %v10813 = vadd.f32 %v5081, %v10812
  %10814 = vmatmul.bf16.gmra.mxu0 %v10787
  %v10815 = vpop.f32.mrf.mxu0
  %v10816 = vadd.f32 %v5081, %v10815
  %v10817 = vpop.f32.mrf.mxu0
  %v10818 = vadd.f32 %v5081, %v10817
  %10819 = vmatmul.bf16.gmra.mxu0 %v10790
  %v10820 = vpop.f32.mrf.mxu0
  %v10821 = vadd.f32 %v5081, %v10820
  %v10822 = vpop.f32.mrf.mxu0
  %v10823 = vadd.f32 %v5081, %v10822
  %10824 = vmatmul.bf16.gmra.mxu0 %v10793
  %v10825 = vpop.f32.mrf.mxu0
  %v10826 = vadd.f32 %v5081, %v10825
  %v10827 = vpop.f32.mrf.mxu0
  %v10828 = vadd.f32 %v5081, %v10827
  %10829 = vmatmul.bf16.gmra.mxu0 %v10796
  %v10830 = vpop.f32.mrf.mxu0
  %v10831 = vadd.f32 %v5081, %v10830
  %v10832 = vpop.f32.mrf.mxu0
  %v10833 = vadd.f32 %v5081, %v10832
  %10834 = vmatmul.bf16.gmra.mxu0 %v10799
  %v10835 = vpop.f32.mrf.mxu0
  %v10836 = vadd.f32 %v5081, %v10835
  %v10837 = vpop.f32.mrf.mxu0
  %10838 = vdwg.mxu0
  %v10839 = vpack.c.bf16 %v10811, %v10811
  %v10840 = vpack.c.bf16 %v10813, %v10813
  %v10841 = vpack.c.bf16 %v10816, %v10816
  %v10842 = vpack.c.bf16 %v10818, %v10818
  %v10843 = vpack.c.bf16 %v10821, %v10821
  %v10844 = vpack.c.bf16 %v10823, %v10823
  %v10845 = vpack.c.bf16 %v10826, %v10826
  %v10846 = vpack.c.bf16 %v10828, %v10828
  %v10847 = vpack.c.bf16 %v10831, %v10831
  %v10848 = vpack.c.bf16 %v10833, %v10833
  %v10849 = vpack.c.bf16 %v10836, %v10836
  %v10850 = vunpack.c.l.bf16 %v10839
  %v10851 = vunpack.c.l.bf16 %v10840
  %v10852 = vunpack.c.l.bf16 %v10841
  %v10853 = vunpack.c.l.bf16 %v10842
  %v10854 = vunpack.c.l.bf16 %v10843
  %v10855 = vunpack.c.l.bf16 %v10844
  %v10856 = vunpack.c.l.bf16 %v10845
  %v10857 = vunpack.c.l.bf16 %v10846
  %v10858 = vunpack.c.l.bf16 %v10847
  %v10859 = vunpack.c.l.bf16 %v10848
  %v10860 = vunpack.c.l.bf16 %v10849
  %v10861 = vmul.f32 %v10850, 1.703125
  %v10862 = vmul.f32 %v10851, 1.703125
  %v10863 = vmul.f32 %v10852, 1.703125
  %v10864 = vmul.f32 %v10853, 1.703125
  %v10865 = vmul.f32 %v10854, 1.703125
  %v10866 = vmul.f32 %v10855, 1.703125
  %v10867 = vmul.f32 %v10856, 1.703125
  %v10868 = vmul.f32 %v10857, 1.703125
  %v10869 = vmul.f32 %v10858, 1.703125
  %v10870 = vmul.f32 %v10859, 1.703125
  %v10871 = vmul.f32 %v10860, 1.703125
  %v10872 = vpack.c.bf16 %v10861, %v10861
  %v10873 = vpack.c.bf16 %v10862, %v10862
  %v10874 = vpack.c.bf16 %v10863, %v10863
  %v10875 = vpack.c.bf16 %v10864, %v10864
  %v10876 = vpack.c.bf16 %v10865, %v10865
  %v10877 = vpack.c.bf16 %v10866, %v10866
  %v10878 = vpack.c.bf16 %v10867, %v10867
  %v10879 = vpack.c.bf16 %v10868, %v10868
  %v10880 = vpack.c.bf16 %v10869, %v10869
  %v10881 = vpack.c.bf16 %v10870, %v10870
  %v10882 = vpack.c.bf16 %v10871, %v10871
  %v10883 = vxor.u32 %v10872, 2147516416
  %v10884 = vxor.u32 %v10873, 2147516416
  %v10885 = vxor.u32 %v10874, 2147516416
  %v10886 = vxor.u32 %v10875, 2147516416
  %v10887 = vxor.u32 %v10876, 2147516416
  %v10888 = vxor.u32 %v10877, 2147516416
  %v10889 = vxor.u32 %v10878, 2147516416
  %v10890 = vxor.u32 %v10879, 2147516416
  %v10891 = vxor.u32 %v10880, 2147516416
  %v10892 = vxor.u32 %v10881, 2147516416
  %v10893 = vxor.u32 %v10882, 2147516416
  %v10894 = vunpack.c.l.bf16 %v10883
  %v10895 = vunpack.c.l.bf16 %v10884
  %v10896 = vunpack.c.l.bf16 %v10885
  %v10897 = vunpack.c.l.bf16 %v10886
  %v10898 = vunpack.c.l.bf16 %v10887
  %v10899 = vunpack.c.l.bf16 %v10888
  %v10900 = vunpack.c.l.bf16 %v10889
  %v10901 = vunpack.c.l.bf16 %v10890
  %v10902 = vunpack.c.l.bf16 %v10891
  %v10903 = vunpack.c.l.bf16 %v10892
  %v10904 = vunpack.c.l.bf16 %v10893
  %v10905 = vmul.f32 %v10894, 1.442695
  %v10906 = vpow.pop %v10905
  %v10907 = vmul.f32 %v10895, 1.442695
  %v10908 = vpow.pop %v10907
  %v10909 = vmul.f32 %v10896, 1.442695
  %v10910 = vpow.pop %v10909
  %v10911 = vmul.f32 %v10897, 1.442695
  %v10912 = vpow.pop %v10911
  %v10913 = vmul.f32 %v10898, 1.442695
  %v10914 = vpow.pop %v10913
  %v10915 = vmul.f32 %v10899, 1.442695
  %v10916 = vpow.pop %v10915
  %v10917 = vmul.f32 %v10900, 1.442695
  %v10918 = vpow.pop %v10917
  %v10919 = vmul.f32 %v10901, 1.442695
  %v10920 = vpow.pop %v10919
  %v10921 = vmul.f32 %v10902, 1.442695
  %v10922 = vpow.pop %v10921
  %v10923 = vmul.f32 %v10903, 1.442695
  %v10924 = vpow.pop %v10923
  %v10925 = vmul.f32 %v10904, 1.442695
  %v10926 = vpow.pop %v10925
  %v10927 = vpack.c.bf16 %v10906, %v10906
  %v10928 = vpack.c.bf16 %v10908, %v10908
  %v10929 = vpack.c.bf16 %v10910, %v10910
  %v10930 = vpack.c.bf16 %v10912, %v10912
  %v10931 = vpack.c.bf16 %v10914, %v10914
  %v10932 = vpack.c.bf16 %v10916, %v10916
  %v10933 = vpack.c.bf16 %v10918, %v10918
  %v10934 = vpack.c.bf16 %v10920, %v10920
  %v10935 = vpack.c.bf16 %v10922, %v10922
  %v10936 = vpack.c.bf16 %v10924, %v10924
  %v10937 = vpack.c.bf16 %v10926, %v10926
  %v10938 = vunpack.c.l.bf16 %v10927
  %v10939 = vunpack.c.l.bf16 %v10928
  %v10940 = vunpack.c.l.bf16 %v10929
  %v10941 = vunpack.c.l.bf16 %v10930
  %v10942 = vunpack.c.l.bf16 %v10931
  %v10943 = vunpack.c.l.bf16 %v10932
  %v10944 = vunpack.c.l.bf16 %v10933
  %v10945 = vunpack.c.l.bf16 %v10934
  %v10946 = vunpack.c.l.bf16 %v10935
  %v10947 = vunpack.c.l.bf16 %v10936
  %v10948 = vunpack.c.l.bf16 %v10937
  %v10949 = vadd.f32 %v10938, 1.0
  %v10950 = vadd.f32 %v10939, 1.0
  %v10951 = vadd.f32 %v10940, 1.0
  %v10952 = vadd.f32 %v10941, 1.0
  %v10953 = vadd.f32 %v10942, 1.0
  %v10954 = vadd.f32 %v10943, 1.0
  %v10955 = vadd.f32 %v10944, 1.0
  %v10956 = vadd.f32 %v10945, 1.0
  %v10957 = vadd.f32 %v10946, 1.0
  %v10958 = vadd.f32 %v10947, 1.0
  %v10959 = vadd.f32 %v10948, 1.0
  %v10960 = vpack.c.bf16 %v10949, %v10949
  %v10961 = vpack.c.bf16 %v10950, %v10950
  %v10962 = vpack.c.bf16 %v10951, %v10951
  %v10963 = vpack.c.bf16 %v10952, %v10952
  %v10964 = vpack.c.bf16 %v10953, %v10953
  %v10965 = vpack.c.bf16 %v10954, %v10954
  %v10966 = vpack.c.bf16 %v10955, %v10955
  %v10967 = vpack.c.bf16 %v10956, %v10956
  %v10968 = vpack.c.bf16 %v10957, %v10957
  %v10969 = vpack.c.bf16 %v10958, %v10958
  %v10970 = vpack.c.bf16 %v10959, %v10959
  %v10971 = vunpack.c.h.bf16 %v10960
  %v10972 = vunpack.c.l.bf16 %v10960
  %v10973 = vrcp.pop %v10971
  %v10974 = vmul.f32 %v2581, %v10973
  %v10975 = vrcp.pop %v10972
  %v10976 = vmul.f32 %v2582, %v10975
  %v10977 = vpack.c.bf16 %v10974, %v10976
  %v10978 = vunpack.c.h.bf16 %v10961
  %v10979 = vunpack.c.l.bf16 %v10961
  %v10980 = vrcp.pop %v10978
  %v10981 = vmul.f32 %v2581, %v10980
  %v10982 = vrcp.pop %v10979
  %v10983 = vmul.f32 %v2582, %v10982
  %v10984 = vpack.c.bf16 %v10981, %v10983
  %v10985 = vunpack.c.h.bf16 %v10962
  %v10986 = vunpack.c.l.bf16 %v10962
  %v10987 = vrcp.pop %v10985
  %v10988 = vmul.f32 %v2581, %v10987
  %v10989 = vrcp.pop %v10986
  %v10990 = vmul.f32 %v2582, %v10989
  %v10991 = vpack.c.bf16 %v10988, %v10990
  %v10992 = vunpack.c.h.bf16 %v10963
  %v10993 = vunpack.c.l.bf16 %v10963
  %v10994 = vrcp.pop %v10992
  %v10995 = vmul.f32 %v2581, %v10994
  %v10996 = vrcp.pop %v10993
  %v10997 = vmul.f32 %v2582, %v10996
  %v10998 = vpack.c.bf16 %v10995, %v10997
  %v10999 = vunpack.c.h.bf16 %v10964
  %v11000 = vunpack.c.l.bf16 %v10964
  %v11001 = vrcp.pop %v10999
  %v11002 = vmul.f32 %v2581, %v11001
  %v11003 = vrcp.pop %v11000
  %v11004 = vmul.f32 %v2582, %v11003
  %v11005 = vpack.c.bf16 %v11002, %v11004
  %v11006 = vunpack.c.h.bf16 %v10965
  %v11007 = vunpack.c.l.bf16 %v10965
  %v11008 = vrcp.pop %v11006
  %v11009 = vmul.f32 %v2581, %v11008
  %v11010 = vrcp.pop %v11007
  %v11011 = vmul.f32 %v2582, %v11010
  %v11012 = vpack.c.bf16 %v11009, %v11011
  %v11013 = vunpack.c.h.bf16 %v10966
  %v11014 = vunpack.c.l.bf16 %v10966
  %v11015 = vrcp.pop %v11013
  %v11016 = vmul.f32 %v2581, %v11015
  %v11017 = vrcp.pop %v11014
  %v11018 = vmul.f32 %v2582, %v11017
  %v11019 = vpack.c.bf16 %v11016, %v11018
  %v11020 = vunpack.c.h.bf16 %v10967
  %v11021 = vunpack.c.l.bf16 %v10967
  %v11022 = vrcp.pop %v11020
  %v11023 = vmul.f32 %v2581, %v11022
  %v11024 = vrcp.pop %v11021
  %v11025 = vmul.f32 %v2582, %v11024
  %v11026 = vpack.c.bf16 %v11023, %v11025
  %v11027 = vunpack.c.h.bf16 %v10968
  %v11028 = vunpack.c.l.bf16 %v10968
  %v11029 = vrcp.pop %v11027
  %v11030 = vmul.f32 %v2581, %v11029
  %v11031 = vrcp.pop %v11028
  %v11032 = vmul.f32 %v2582, %v11031
  %v11033 = vpack.c.bf16 %v11030, %v11032
  %v11034 = vunpack.c.h.bf16 %v10969
  %v11035 = vunpack.c.l.bf16 %v10969
  %v11036 = vrcp.pop %v11034
  %v11037 = vmul.f32 %v2581, %v11036
  %v11038 = vrcp.pop %v11035
  %v11039 = vmul.f32 %v2582, %v11038
  %v11040 = vpack.c.bf16 %v11037, %v11039
  %v11041 = vunpack.c.h.bf16 %v10970
  %v11042 = vunpack.c.l.bf16 %v10970
  %v11043 = vrcp.pop %v11041
  %v11044 = vmul.f32 %v2581, %v11043
  %v11045 = vrcp.pop %v11042
  %v11046 = vmul.f32 %v2582, %v11045
  %v11047 = vpack.c.bf16 %v11044, %v11046
  %v11048 = vunpack.c.l.bf16 %v10977
  %v11049 = vunpack.c.l.bf16 %v10984
  %v11050 = vunpack.c.l.bf16 %v10991
  %v11051 = vunpack.c.l.bf16 %v10998
  %v11052 = vunpack.c.l.bf16 %v11005
  %v11053 = vunpack.c.l.bf16 %v11012
  %v11054 = vunpack.c.l.bf16 %v11019
  %v11055 = vunpack.c.l.bf16 %v11026
  %v11056 = vunpack.c.l.bf16 %v11033
  %v11057 = vunpack.c.l.bf16 %v11040
  %v11058 = vunpack.c.l.bf16 %v11047
  %v11059 = vmul.f32 %v10850, %v11048
  %v11060 = vmul.f32 %v10851, %v11049
  %v11061 = vmul.f32 %v10852, %v11050
  %v11062 = vmul.f32 %v10853, %v11051
  %v11063 = vmul.f32 %v10854, %v11052
  %v11064 = vmul.f32 %v10855, %v11053
  %v11065 = vmul.f32 %v10856, %v11054
  %v11066 = vmul.f32 %v10857, %v11055
  %v11067 = vmul.f32 %v10858, %v11056
  %v11068 = vmul.f32 %v10859, %v11057
  %v11069 = vmul.f32 %v10860, %v11058
  %v11070 = vpack.c.bf16 %v11060, %v11059
  %v11071 = vpack.c.bf16 %v11062, %v11061
  %v11072 = vpack.c.bf16 %v11064, %v11063
  %v11073 = vpack.c.bf16 %v11066, %v11065
  %v11074 = vpack.c.bf16 %v11068, %v11067
  %v11075 = vpack.c.bf16 %v11069, %v11069
  %v11076 = vld [vmem:[%s5387] sm:$0xf]
  %v11077 = vld [vmem:[%s5387 + $0x4] sm:$0xf]
  %v11078 = vld [vmem:[%s5387 + $0x8] sm:$0xf]
  %v11079 = vld [vmem:[%s5387 + $0xc] sm:$0xf]
  %v11080 = vld [vmem:[%s5387 + $0x10] sm:$0xf]
  %v11081 = vld [vmem:[%s5387 + $0x14] sm:$0xf]
  %v11082 = vld [vmem:[%s5387 + $0x18] sm:$0xf]
  %v11083 = vld [vmem:[%s5387 + $0x1c] sm:$0xf]
  %v11084 = vld [vmem:[%s5387 + $0x20] sm:$0xf]
  %v11085 = vld [vmem:[%s5387 + $0x24] sm:$0xf]
  %v11086 = vld [vmem:[%s5387 + $0x28] sm:$0xf]
  %v11087 = vld [vmem:[%s5387 + $0x2c] sm:$0xf]
  %v11088 = vld [vmem:[%s5387 + $0x30] sm:$0xf]
  %v11089 = vld [vmem:[%s5387 + $0x34] sm:$0xf]
  %v11090 = vld [vmem:[%s5387 + $0x38] sm:$0xf]
  %v11091 = vld [vmem:[%s5387 + $0x3c] sm:$0xf]
  %v11108 = vunpack.c.l.b16 %v11076
  %v11109 = vunpack.c.l.b16 %v11077
  %v11110 = vunpack.c.l.b16 %v11078
  %v11111 = vunpack.c.l.b16 %v11079
  %v11112 = vunpack.c.l.b16 %v11080
  %v11113 = vunpack.c.l.b16 %v11081
  %v11114 = vunpack.c.l.b16 %v11082
  %v11115 = vunpack.c.l.b16 %v11083
  %v11116 = vunpack.c.l.b16 %v11084
  %v11117 = vunpack.c.l.b16 %v11085
  %v11118 = vunpack.c.l.b16 %v11086
  %v11119 = vunpack.c.l.b16 %v11087
  %v11120 = vunpack.c.l.b16 %v11088
  %v11121 = vunpack.c.l.b16 %v11089
  %v11122 = vunpack.c.l.b16 %v11090
  %v11123 = vunpack.c.l.b16 %v11091
  %v11124 = vpack.c.b16 %v11109, %v11108
  %v11125 = vpack.c.b16 %v11111, %v11110
  %v11126 = vpack.c.b16 %v11113, %v11112
  %v11127 = vpack.c.b16 %v11115, %v11114
  %v11128 = vpack.c.b16 %v11117, %v11116
  %v11129 = vpack.c.b16 %v11119, %v11118
  %v11130 = vpack.c.b16 %v11121, %v11120
  %v11131 = vpack.c.b16 %v11123, %v11122
  %11140 = vmatpush.bf16.msra.mxu0 %v11131
  %11141 = vmatpush.bf16.msra.mxu0 %v11130
  %11142 = vmatpush.bf16.msra.mxu0 %v11129
  %11143 = vmatpush.bf16.msra.mxu0 %v11128
  %11144 = vmatpush.bf16.msra.mxu0 %v11127
  %11145 = vmatpush.bf16.msra.mxu0 %v11126
  %11146 = vmatpush.bf16.msra.mxu0 %v11125
  %11147 = vmatpush.bf16.msra.mxu0 %v11124
  %11148 = vmatmul.bf16.gmra.mxu0 %v11070
  %v11149 = vpop.f32.mrf.mxu0
  %v11150 = vadd.f32 %v5404, %v11149
  %v11151 = vpop.f32.mrf.mxu0
  %v11152 = vadd.f32 %v5404, %v11151
  %11153 = vmatmul.bf16.gmra.mxu0 %v11071
  %v11154 = vpop.f32.mrf.mxu0
  %v11155 = vadd.f32 %v5404, %v11154
  %v11156 = vpop.f32.mrf.mxu0
  %v11157 = vadd.f32 %v5404, %v11156
  %11158 = vmatmul.bf16.gmra.mxu0 %v11072
  %v11159 = vpop.f32.mrf.mxu0
  %v11160 = vadd.f32 %v5404, %v11159
  %v11161 = vpop.f32.mrf.mxu0
  %v11162 = vadd.f32 %v5404, %v11161
  %11163 = vmatmul.bf16.gmra.mxu0 %v11073
  %v11164 = vpop.f32.mrf.mxu0
  %v11165 = vadd.f32 %v5404, %v11164
  %v11166 = vpop.f32.mrf.mxu0
  %v11167 = vadd.f32 %v5404, %v11166
  %11168 = vmatmul.bf16.gmra.mxu0 %v11074
  %v11169 = vpop.f32.mrf.mxu0
  %v11170 = vadd.f32 %v5404, %v11169
  %v11171 = vpop.f32.mrf.mxu0
  %v11172 = vadd.f32 %v5404, %v11171
  %11173 = vmatmul.bf16.gmra.mxu0 %v11075
  %v11174 = vpop.f32.mrf.mxu0
  %v11175 = vadd.f32 %v5404, %v11174
  %v11176 = vpop.f32.mrf.mxu0
  %11177 = vdwg.mxu0
  %v11178 = vadd.f32 %v10486, %v11150
  %v11179 = vadd.f32 %v10487, %v11152
  %v11180 = vadd.f32 %v10488, %v11155
  %v11181 = vadd.f32 %v10489, %v11157
  %v11182 = vadd.f32 %v10490, %v11160
  %v11183 = vadd.f32 %v10491, %v11162
  %v11184 = vadd.f32 %v10492, %v11165
  %v11185 = vadd.f32 %v10493, %v11167
  %v11186 = vadd.f32 %v10494, %v11170
  %v11187 = vadd.f32 %v10495, %v11172
  %v11188 = vadd.f32 %v10496, %v11175
  %v11189 = vsel %vm88, %v11178, 0.0
  %11190 = vadd.xlane.f32.xlu0 %v11189
  %v11191 = vpop.xlane.xlu0 %11190
  %v11192 = vsel %vm88, %v11179, 0.0
  %11193 = vadd.xlane.f32.xlu0 %v11192
  %v11194 = vpop.xlane.xlu0 %11193
  %v11195 = vsel %vm88, %v11180, 0.0
  %11196 = vadd.xlane.f32.xlu0 %v11195
  %v11197 = vpop.xlane.xlu0 %11196
  %v11198 = vsel %vm88, %v11181, 0.0
  %11199 = vadd.xlane.f32.xlu0 %v11198
  %v11200 = vpop.xlane.xlu0 %11199
  %v11201 = vsel %vm88, %v11182, 0.0
  %11202 = vadd.xlane.f32.xlu0 %v11201
  %v11203 = vpop.xlane.xlu0 %11202
  %v11204 = vsel %vm88, %v11183, 0.0
  %11205 = vadd.xlane.f32.xlu0 %v11204
  %v11206 = vpop.xlane.xlu0 %11205
  %v11207 = vsel %vm88, %v11184, 0.0
  %11208 = vadd.xlane.f32.xlu0 %v11207
  %v11209 = vpop.xlane.xlu0 %11208
  %v11210 = vsel %vm88, %v11185, 0.0
  %11211 = vadd.xlane.f32.xlu0 %v11210
  %v11212 = vpop.xlane.xlu0 %11211
  %v11213 = vsel %vm88, %v11186, 0.0
  %11214 = vadd.xlane.f32.xlu0 %v11213
  %v11215 = vpop.xlane.xlu0 %11214
  %v11216 = vsel %vm88, %v11187, 0.0
  %11217 = vadd.xlane.f32.xlu0 %v11216
  %v11218 = vpop.xlane.xlu0 %11217
  %v11219 = vsel %vm119, %v11188, 0.0
  %11220 = vadd.xlane.f32.xlu0 %v11219
  %v11221 = vpop.xlane.xlu0 %11220
  %v11222 = vmul.f32 %v11191, %v129
  %v11223 = vmul.f32 %v11194, %v129
  %v11224 = vmul.f32 %v11197, %v129
  %v11225 = vmul.f32 %v11200, %v129
  %v11226 = vmul.f32 %v11203, %v129
  %v11227 = vmul.f32 %v11206, %v129
  %v11228 = vmul.f32 %v11209, %v129
  %v11229 = vmul.f32 %v11212, %v129
  %v11230 = vmul.f32 %v11215, %v129
  %v11231 = vmul.f32 %v11218, %v129
  %v11232 = vmul.f32 %v11221, %v129
  %v11233 = vsub.f32 %v11178, %v11222
  %v11234 = vsub.f32 %v11179, %v11223
  %v11235 = vsub.f32 %v11180, %v11224
  %v11236 = vsub.f32 %v11181, %v11225
  %v11237 = vsub.f32 %v11182, %v11226
  %v11238 = vsub.f32 %v11183, %v11227
  %v11239 = vsub.f32 %v11184, %v11228
  %v11240 = vsub.f32 %v11185, %v11229
  %v11241 = vsub.f32 %v11186, %v11230
  %v11242 = vsub.f32 %v11187, %v11231
  %v11243 = vsub.f32 %v11188, %v11232
  %v11244 = vmul.f32 %v11233, %v11233
  %v11245 = vmul.f32 %v11234, %v11234
  %v11246 = vmul.f32 %v11235, %v11235
  %v11247 = vmul.f32 %v11236, %v11236
  %v11248 = vmul.f32 %v11237, %v11237
  %v11249 = vmul.f32 %v11238, %v11238
  %v11250 = vmul.f32 %v11239, %v11239
  %v11251 = vmul.f32 %v11240, %v11240
  %v11252 = vmul.f32 %v11241, %v11241
  %v11253 = vmul.f32 %v11242, %v11242
  %v11254 = vmul.f32 %v11243, %v11243
  %v11255 = vsel %vm88, %v11244, 0.0
  %11256 = vadd.xlane.f32.xlu0 %v11255
  %v11257 = vpop.xlane.xlu0 %11256
  %v11258 = vsel %vm88, %v11245, 0.0
  %11259 = vadd.xlane.f32.xlu0 %v11258
  %v11260 = vpop.xlane.xlu0 %11259
  %v11261 = vsel %vm88, %v11246, 0.0
  %11262 = vadd.xlane.f32.xlu0 %v11261
  %v11263 = vpop.xlane.xlu0 %11262
  %v11264 = vsel %vm88, %v11247, 0.0
  %11265 = vadd.xlane.f32.xlu0 %v11264
  %v11266 = vpop.xlane.xlu0 %11265
  %v11267 = vsel %vm88, %v11248, 0.0
  %11268 = vadd.xlane.f32.xlu0 %v11267
  %v11269 = vpop.xlane.xlu0 %11268
  %v11270 = vsel %vm88, %v11249, 0.0
  %11271 = vadd.xlane.f32.xlu0 %v11270
  %v11272 = vpop.xlane.xlu0 %11271
  %v11273 = vsel %vm88, %v11250, 0.0
  %11274 = vadd.xlane.f32.xlu0 %v11273
  %v11275 = vpop.xlane.xlu0 %11274
  %v11276 = vsel %vm88, %v11251, 0.0
  %11277 = vadd.xlane.f32.xlu0 %v11276
  %v11278 = vpop.xlane.xlu0 %11277
  %v11279 = vsel %vm88, %v11252, 0.0
  %11280 = vadd.xlane.f32.xlu0 %v11279
  %v11281 = vpop.xlane.xlu0 %11280
  %v11282 = vsel %vm88, %v11253, 0.0
  %11283 = vadd.xlane.f32.xlu0 %v11282
  %v11284 = vpop.xlane.xlu0 %11283
  %v11285 = vsel %vm119, %v11254, 0.0
  %11286 = vadd.xlane.f32.xlu0 %v11285
  %v11287 = vpop.xlane.xlu0 %11286
  %v11288 = vmul.f32 %v11257, %v129
  %v11289 = vmul.f32 %v11260, %v129
  %v11290 = vmul.f32 %v11263, %v129
  %v11291 = vmul.f32 %v11266, %v129
  %v11292 = vmul.f32 %v11269, %v129
  %v11293 = vmul.f32 %v11272, %v129
  %v11294 = vmul.f32 %v11275, %v129
  %v11295 = vmul.f32 %v11278, %v129
  %v11296 = vmul.f32 %v11281, %v129
  %v11297 = vmul.f32 %v11284, %v129
  %v11298 = vmul.f32 %v11287, %v129
  %v11299 = vadd.f32 %v11288, 1e-05
  %v11300 = vadd.f32 %v11289, 1e-05
  %v11301 = vadd.f32 %v11290, 1e-05
  %v11302 = vadd.f32 %v11291, 1e-05
  %v11303 = vadd.f32 %v11292, 1e-05
  %v11304 = vadd.f32 %v11293, 1e-05
  %v11305 = vadd.f32 %v11294, 1e-05
  %v11306 = vadd.f32 %v11295, 1e-05
  %v11307 = vadd.f32 %v11296, 1e-05
  %v11308 = vadd.f32 %v11297, 1e-05
  %v11309 = vadd.f32 %v11298, 1e-05
  %v11310 = vrsqrt.pop %v11299
  %v11311 = vmul.f32 %v11310, %v11299
  %v11312 = vmul.f32 %v11311, %v11310
  %v11313 = vmul.f32 0.5, %v11312
  %v11314 = vsub.f32 1.5, %v11313
  %v11315 = vmul.f32 %v11310, %v11314
  %vm11316 = vweird.f32 %v11299
  %vm11317 = vweird.f32 %v11310
  %vm11318 = vmor %vm11316, %vm11317
  %v11319 = vsel %vm11318, %v11310, %v11315
  %v11320 = vrsqrt.pop %v11300
  %v11321 = vmul.f32 %v11320, %v11300
  %v11322 = vmul.f32 %v11321, %v11320
  %v11323 = vmul.f32 0.5, %v11322
  %v11324 = vsub.f32 1.5, %v11323
  %v11325 = vmul.f32 %v11320, %v11324
  %vm11326 = vweird.f32 %v11300
  %vm11327 = vweird.f32 %v11320
  %vm11328 = vmor %vm11326, %vm11327
  %v11329 = vsel %vm11328, %v11320, %v11325
  %v11330 = vrsqrt.pop %v11301
  %v11331 = vmul.f32 %v11330, %v11301
  %v11332 = vmul.f32 %v11331, %v11330
  %v11333 = vmul.f32 0.5, %v11332
  %v11334 = vsub.f32 1.5, %v11333
  %v11335 = vmul.f32 %v11330, %v11334
  %vm11336 = vweird.f32 %v11301
  %vm11337 = vweird.f32 %v11330
  %vm11338 = vmor %vm11336, %vm11337
  %v11339 = vsel %vm11338, %v11330, %v11335
  %v11340 = vrsqrt.pop %v11302
  %v11341 = vmul.f32 %v11340, %v11302
  %v11342 = vmul.f32 %v11341, %v11340
  %v11343 = vmul.f32 0.5, %v11342
  %v11344 = vsub.f32 1.5, %v11343
  %v11345 = vmul.f32 %v11340, %v11344
  %vm11346 = vweird.f32 %v11302
  %vm11347 = vweird.f32 %v11340
  %vm11348 = vmor %vm11346, %vm11347
  %v11349 = vsel %vm11348, %v11340, %v11345
  %v11350 = vrsqrt.pop %v11303
  %v11351 = vmul.f32 %v11350, %v11303
  %v11352 = vmul.f32 %v11351, %v11350
  %v11353 = vmul.f32 0.5, %v11352
  %v11354 = vsub.f32 1.5, %v11353
  %v11355 = vmul.f32 %v11350, %v11354
  %vm11356 = vweird.f32 %v11303
  %vm11357 = vweird.f32 %v11350
  %vm11358 = vmor %vm11356, %vm11357
  %v11359 = vsel %vm11358, %v11350, %v11355
  %v11360 = vrsqrt.pop %v11304
  %v11361 = vmul.f32 %v11360, %v11304
  %v11362 = vmul.f32 %v11361, %v11360
  %v11363 = vmul.f32 0.5, %v11362
  %v11364 = vsub.f32 1.5, %v11363
  %v11365 = vmul.f32 %v11360, %v11364
  %vm11366 = vweird.f32 %v11304
  %vm11367 = vweird.f32 %v11360
  %vm11368 = vmor %vm11366, %vm11367
  %v11369 = vsel %vm11368, %v11360, %v11365
  %v11370 = vrsqrt.pop %v11305
  %v11371 = vmul.f32 %v11370, %v11305
  %v11372 = vmul.f32 %v11371, %v11370
  %v11373 = vmul.f32 0.5, %v11372
  %v11374 = vsub.f32 1.5, %v11373
  %v11375 = vmul.f32 %v11370, %v11374
  %vm11376 = vweird.f32 %v11305
  %vm11377 = vweird.f32 %v11370
  %vm11378 = vmor %vm11376, %vm11377
  %v11379 = vsel %vm11378, %v11370, %v11375
  %v11380 = vrsqrt.pop %v11306
  %v11381 = vmul.f32 %v11380, %v11306
  %v11382 = vmul.f32 %v11381, %v11380
  %v11383 = vmul.f32 0.5, %v11382
  %v11384 = vsub.f32 1.5, %v11383
  %v11385 = vmul.f32 %v11380, %v11384
  %vm11386 = vweird.f32 %v11306
  %vm11387 = vweird.f32 %v11380
  %vm11388 = vmor %vm11386, %vm11387
  %v11389 = vsel %vm11388, %v11380, %v11385
  %v11390 = vrsqrt.pop %v11307
  %v11391 = vmul.f32 %v11390, %v11307
  %v11392 = vmul.f32 %v11391, %v11390
  %v11393 = vmul.f32 0.5, %v11392
  %v11394 = vsub.f32 1.5, %v11393
  %v11395 = vmul.f32 %v11390, %v11394
  %vm11396 = vweird.f32 %v11307
  %vm11397 = vweird.f32 %v11390
  %vm11398 = vmor %vm11396, %vm11397
  %v11399 = vsel %vm11398, %v11390, %v11395
  %v11400 = vrsqrt.pop %v11308
  %v11401 = vmul.f32 %v11400, %v11308
  %v11402 = vmul.f32 %v11401, %v11400
  %v11403 = vmul.f32 0.5, %v11402
  %v11404 = vsub.f32 1.5, %v11403
  %v11405 = vmul.f32 %v11400, %v11404
  %vm11406 = vweird.f32 %v11308
  %vm11407 = vweird.f32 %v11400
  %vm11408 = vmor %vm11406, %vm11407
  %v11409 = vsel %vm11408, %v11400, %v11405
  %v11410 = vrsqrt.pop %v11309
  %v11411 = vmul.f32 %v11410, %v11309
  %v11412 = vmul.f32 %v11411, %v11410
  %v11413 = vmul.f32 0.5, %v11412
  %v11414 = vsub.f32 1.5, %v11413
  %v11415 = vmul.f32 %v11410, %v11414
  %vm11416 = vweird.f32 %v11309
  %vm11417 = vweird.f32 %v11410
  %vm11418 = vmor %vm11416, %vm11417
  %v11419 = vsel %vm11418, %v11410, %v11415
  %v11420 = vmul.f32 %v11233, %v11319
  %v11421 = vmul.f32 %v11234, %v11329
  %v11422 = vmul.f32 %v11235, %v11339
  %v11423 = vmul.f32 %v11236, %v11349
  %v11424 = vmul.f32 %v11237, %v11359
  %v11425 = vmul.f32 %v11238, %v11369
  %v11426 = vmul.f32 %v11239, %v11379
  %v11427 = vmul.f32 %v11240, %v11389
  %v11428 = vmul.f32 %v11241, %v11399
  %v11429 = vmul.f32 %v11242, %v11409
  %v11430 = vmul.f32 %v11243, %v11419
  %v11431 = vmul.f32 %v11420, %v5744
  %v11432 = vmul.f32 %v11421, %v5744
  %v11433 = vmul.f32 %v11422, %v5744
  %v11434 = vmul.f32 %v11423, %v5744
  %v11435 = vmul.f32 %v11424, %v5744
  %v11436 = vmul.f32 %v11425, %v5744
  %v11437 = vmul.f32 %v11426, %v5744
  %v11438 = vmul.f32 %v11427, %v5744
  %v11439 = vmul.f32 %v11428, %v5744
  %v11440 = vmul.f32 %v11429, %v5744
  %v11441 = vmul.f32 %v11430, %v5744
  %v11442 = vadd.f32 %v11431, %v5756
  %v11443 = vadd.f32 %v11432, %v5756
  %v11444 = vadd.f32 %v11433, %v5756
  %v11445 = vadd.f32 %v11434, %v5756
  %v11446 = vadd.f32 %v11435, %v5756
  %v11447 = vadd.f32 %v11436, %v5756
  %v11448 = vadd.f32 %v11437, %v5756
  %v11449 = vadd.f32 %v11438, %v5756
  %v11450 = vadd.f32 %v11439, %v5756
  %v11451 = vadd.f32 %v11440, %v5756
  %v11452 = vadd.f32 %v11441, %v5756
  %s11453 = scalar_lea.vmem %s6, 88
  %11454 = vst.msk [vmem:[%s11453] sm:$0xff] %vm88, %v11442
  %11455 = vst.msk [vmem:[%s11453 + $0x8] sm:$0xff] %vm88, %v11443
  %11456 = vst.msk [vmem:[%s11453 + $0x10] sm:$0xff] %vm88, %v11444
  %11457 = vst.msk [vmem:[%s11453 + $0x18] sm:$0xff] %vm88, %v11445
  %11458 = vst.msk [vmem:[%s11453 + $0x20] sm:$0xff] %vm88, %v11446
  %11459 = vst.msk [vmem:[%s11453 + $0x28] sm:$0xff] %vm88, %v11447
  %11460 = vst.msk [vmem:[%s11453 + $0x30] sm:$0xff] %vm88, %v11448
  %11461 = vst.msk [vmem:[%s11453 + $0x38] sm:$0xff] %vm88, %v11449
  %11462 = vst.msk [vmem:[%s11453 + $0x40] sm:$0xff] %vm88, %v11450
  %11463 = vst.msk [vmem:[%s11453 + $0x48] sm:$0xff] %vm88, %v11451
  %11464 = vst.msk [vmem:[%s11453 + $0x50] sm:$0x1] %vm119, %v11452
  // Predicated region
  $region26: #{tpu_custom_call.1} parent=0 // pred_check
    _
  $region27: #{tpu_custom_call.1} parent=0 // pred_check_branch
    %11466 = sbr.rel (0) target = $region29
  $region28: #{tpu_custom_call.1} parent=0 // pred_region
    _
  $region29: #{tpu_custom_call.1} parent=0 // pred_fallthru
    _
  // Predicated region
  $region30: #{tpu_custom_call.1} parent=0 // pred_check
    _
  $region31: #{tpu_custom_call.1} parent=0 // pred_check_branch
    %11468 = sbr.rel (0) target = $region33
  $region32: #{tpu_custom_call.1} parent=0 // pred_region
    _
  $region33: #{tpu_custom_call.1} parent=0 // pred_fallthru
    _

</llo_original>
